<compile_context>
chip_gen: v5e
topology: v5e:2x2
jax: 0.10.0
libtpu: 0.0.40
codegen_flags: <defaults>
</compile_context>

<pallas_src>
import jax
import jax.numpy as jnp
from jax.experimental import pallas as pl
from jax.experimental.pallas import tpu as pltpu

EPS = 1e-5  # torch LayerNorm default eps

# Row layout of the packed bias / LayerNorm-parameter buffer (16 x 1024 f32).
BIAS_ROWS = ("te_b1", "te_b2",
             "pc_b1", "pc_g", "pc_be", "pc_b2",
             "n_b1", "n_g1", "n_be1",
             "n_b2", "n_g2", "n_be2",
             "n_b3")


# ----------------------------- in-kernel helpers -----------------------------

def _silu(x):
    return x * jax.nn.sigmoid(x)


def _layernorm(h, gamma, beta):
    # One-pass variance: var = E[x^2] - mean^2 (halves the cross-lane reductions).
    mean = jnp.mean(h, axis=-1, keepdims=True)
    mean_sq = jnp.mean(h * h, axis=-1, keepdims=True)
    var = mean_sq - mean * mean
    return (h - mean) * jax.lax.rsqrt(var + EPS) * gamma + beta


# ------------------------------- fused kernel --------------------------------

def fused_predictor_kernel(
        x_ref, t_ref, pcx_ref,                       # per-batch-tile inputs
        embed_ref, te_w1, te_w2,                     # resident weights (bf16)
        pc_w1, pc_w2,
        n_w1x, n_w1t, n_w1p, n_w2, n_w3,
        bias_ref,                                    # packed (16, 1024) f32
        out_ref):
    TB = x_ref.shape[0]
    Tpad = embed_ref.shape[0]
    D = out_ref.shape[1]
    bf16, f32 = jnp.bfloat16, jnp.float32

    def row(r, n):                                   # static-slice one packed vector
        return bias_ref[r:r + 1, :n]                 # (1, n) f32

    # ---- time embedding: nn.Embedding gather as one-hot matmul (T padded to 128) --
    # NOTE: out-of-range t produces a zero embedding (benign vs. torch OOB gather).
    t_ids = t_ref[...]                                          # (TB, 1) int32
    iota = jax.lax.broadcasted_iota(jnp.int32, (TB, Tpad), 1)   # (TB, Tpad)
    onehot = (t_ids == iota).astype(bf16)
    emb = jnp.dot(onehot, embed_ref[...], preferred_element_type=f32)   # exact gather

    h = jnp.dot(emb.astype(bf16), te_w1[...], preferred_element_type=f32) + row(0, 256)
    h = _silu(h)
    te = jnp.dot(h.astype(bf16), te_w2[...], preferred_element_type=f32) + row(1, 256)

    # ---- protein conditioning: Linear -> LayerNorm -> SiLU -> (Dropout=id) -> Linear
    h = jnp.dot(pcx_ref[...].astype(bf16), pc_w1[...],
                preferred_element_type=f32) + row(2, 512)
    h = _silu(_layernorm(h, row(3, 512), row(4, 512)))
    pc = jnp.dot(h.astype(bf16), pc_w2[...], preferred_element_type=f32) + row(5, 256)

    # ---- main net; concat([x_t, te, pc]) eliminated via split partial dots --------
    h = (jnp.dot(x_ref[...].astype(bf16), n_w1x[...], preferred_element_type=f32)
         + jnp.dot(te.astype(bf16), n_w1t[...], preferred_element_type=f32)
         + jnp.dot(pc.astype(bf16), n_w1p[...], preferred_element_type=f32)
         + row(6, 1024))
    h = _silu(_layernorm(h, row(7, 1024), row(8, 1024)))

    h = jnp.dot(h.astype(bf16), n_w2[...], preferred_element_type=f32) + row(9, 1024)
    h = _silu(_layernorm(h, row(10, 1024), row(11, 1024)))

    out_ref[...] = (jnp.dot(h.astype(bf16), n_w3[...], preferred_element_type=f32)
                    + row(12, D)).astype(out_ref.dtype)


# -------------------------------- parameters ---------------------------------

def _pack_bias(vecs, input_dim):
    assert input_dim <= 1024
    pack = jnp.zeros((16, 1024), jnp.float32)
    for r, name in enumerate(BIAS_ROWS):
        v = vecs[name]
        pack = pack.at[r, :v.shape[0]].set(v)
    return pack


def init_params(key, input_dim, T, protein_dim):
    ks = jax.random.split(key, 24)
    Tpad = ((T + 127) // 128) * 128          # clean MXU / sublane K for the one-hot dot

    def w(k, shape, s=0.02):
        return (jax.random.normal(k, shape, jnp.float32) * s).astype(jnp.bfloat16)

    def vec(k, n, s=0.1, base=0.0):
        return base + jax.random.normal(k, (n,), jnp.float32) * s

    embed = jax.random.normal(ks[0], (T, 256), jnp.float32).astype(jnp.bfloat16)
    embed_pad = jnp.zeros((Tpad, 256), jnp.bfloat16).at[:T, :].set(embed)

    # first net-layer weight, pre-split along K into [x_t | te | pc] blocks
    n_w1_full = w(ks[5], (input_dim + 512, 1024))

    vecs = {
        "te_b1": vec(ks[8], 256), "te_b2": vec(ks[9], 256),
        "pc_b1": vec(ks[10], 512),
        "pc_g":  vec(ks[11], 512, base=1.0), "pc_be": vec(ks[12], 512),
        "pc_b2": vec(ks[13], 256),
        "n_b1":  vec(ks[14], 1024),
        "n_g1":  vec(ks[15], 1024, base=1.0), "n_be1": vec(ks[16], 1024),
        "n_b2":  vec(ks[17], 1024),
        "n_g2":  vec(ks[18], 1024, base=1.0), "n_be2": vec(ks[19], 1024),
        "n_b3":  vec(ks[20], input_dim),
    }

    params = {
        # TimeEmbedding
        "embed": embed_pad,
        "te_w1": w(ks[1], (256, 256)), "te_w2": w(ks[2], (256, 256)),
        # protein_cond
        "pc_w1": w(ks[3], (protein_dim, 512)), "pc_w2": w(ks[4], (512, 256)),
        # net (layer-1 weight pre-split along K)
        "n_w1x": n_w1_full[:input_dim],
        "n_w1t": n_w1_full[input_dim:input_dim + 256],
        "n_w1p": n_w1_full[input_dim + 256:],
        "n_w2":  w(ks[6], (1024, 1024)),
        "n_w3":  w(ks[7], (1024, input_dim)),
        # packed biases / LN params (kernel) + individual vectors (reference)
        "bias_pack": _pack_bias(vecs, input_dim),
    }
    params.update(vecs)
    return params


# --------------------------------- forward -----------------------------------

def diffusion_predictor_forward(params, x_t, t, protein_context, *, tile_b=128):
    B, D = x_t.shape
    P = protein_context.shape[1]

    # batch tile: multiple of 8, no larger than (padded) batch
    tile_b = max(8, min(int(tile_b), ((B + 7) // 8) * 8))
    tile_b = ((tile_b + 7) // 8) * 8
    Bp = ((B + tile_b - 1) // tile_b) * tile_b

    pad = Bp - B
    if pad:
        x_t = jnp.pad(x_t, ((0, pad), (0, 0)))
        protein_context = jnp.pad(protein_context, ((0, pad), (0, 0)))
        t = jnp.pad(t, ((0, pad),))
    t2d = t.reshape(Bp, 1).astype(jnp.int32)

    weights = (params["embed"], params["te_w1"], params["te_w2"],
               params["pc_w1"], params["pc_w2"],
               params["n_w1x"], params["n_w1t"], params["n_w1p"],
               params["n_w2"], params["n_w3"],
               params["bias_pack"])

    def rowblk(n):                               # per-grid-step batch tile
        return pl.BlockSpec((tile_b, n), lambda i: (i, 0))

    def resident(a):                             # constant index -> fetched once, stays in VMEM
        return pl.BlockSpec(a.shape, lambda i: (0, 0))

    grid = (Bp // tile_b,)

    out = pl.pallas_call(
        fused_predictor_kernel,
        out_shape=jax.ShapeDtypeStruct((Bp, D), jnp.float32),
        grid_spec=pltpu.PrefetchScalarGridSpec(
            num_scalar_prefetch=0,
            grid=grid,
            in_specs=[rowblk(D), rowblk(1), rowblk(P)]
                     + [resident(a) for a in weights],
            out_specs=rowblk(D)),
        compiler_params=pltpu.CompilerParams(
            dimension_semantics=("parallel",),       # shards batch tiles across v7x's 2 TCs
            vmem_limit_bytes=32 * 1024 * 1024),      # safe on v5e/v6e/v7x (<= 64 MiB physical)
    )(x_t, t2d, protein_context, *weights)

    return out[:B]


# ------------------------------ pure-JAX reference ----------------------------

def reference_forward(params, x_t, t, protein_context):
    f32 = lambda a: a.astype(jnp.float32)

    def ln(h, g, b):
        m = jnp.mean(h, axis=-1, keepdims=True)
        v = jnp.mean(jnp.square(h - m), axis=-1, keepdims=True)
        return (h - m) * jax.lax.rsqrt(v + EPS) * g + b

    silu = lambda x: x * jax.nn.sigmoid(x)

    emb = f32(params["embed"])[t]                                  # padded table, t < T
    h = silu(emb @ f32(params["te_w1"]) + params["te_b1"])
    te = h @ f32(params["te_w2"]) + params["te_b2"]

    h = protein_context @ f32(params["pc_w1"]) + params["pc_b1"]
    h = silu(ln(h, params["pc_g"], params["pc_be"]))
    pc = h @ f32(params["pc_w2"]) + params["pc_b2"]

    c = jnp.concatenate([x_t, te, pc], axis=-1)
    n_w1 = jnp.concatenate(
        [f32(params["n_w1x"]), f32(params["n_w1t"]), f32(params["n_w1p"])], axis=0)
    h = silu(ln(c @ n_w1 + params["n_b1"], params["n_g1"], params["n_be1"]))
    h = silu(ln(h @ f32(params["n_w2"]) + params["n_b2"], params["n_g2"], params["n_be2"]))
    return h @ f32(params["n_w3"]) + params["n_b3"]


# ----------------------------------- main -------------------------------------

if __name__ == "__main__":
    B, input_dim, T, protein_dim = 16, 32, 100, 1280

    params = init_params(jax.random.PRNGKey(0), input_dim, T, protein_dim)

    kx, kt, kp = jax.random.split(jax.random.PRNGKey(0), 3)
    x_t = jax.random.normal(kx, (B, input_dim), jnp.float32)
    t = jax.random.randint(kt, (B,), 0, T, jnp.int32)
    protein_context = jax.random.normal(kp, (B, protein_dim), jnp.float32)

    # tile_b=8 -> grid of 2 batch tiles; weights are fetched once and stay resident.
    out = diffusion_predictor_forward(params, x_t, t, protein_context, tile_b=8)
    out = jax.block_until_ready(out)

    ref = reference_forward(params, x_t, t, protein_context)
    assert out.shape == (B, input_dim), out.shape
    assert jnp.allclose(out, ref, rtol=2e-2, atol=2e-2), "kernel/ref mismatch"

    print("KERNEL_OK")
</pallas_src>

<mosaic_0001>
module attributes {stable_mosaic.version = 11 : i64} {
  func.func @fused_predictor_kernel(%arg0: i32, %arg1: memref<8x32xf32, #tpu.memory_space<vmem>>, %arg2: memref<8x1xi32, #tpu.memory_space<vmem>>, %arg3: memref<8x1280xf32, #tpu.memory_space<vmem>>, %arg4: memref<128x256xbf16, #tpu.memory_space<vmem>>, %arg5: memref<256x256xbf16, #tpu.memory_space<vmem>>, %arg6: memref<256x256xbf16, #tpu.memory_space<vmem>>, %arg7: memref<1280x512xbf16, #tpu.memory_space<vmem>>, %arg8: memref<512x256xbf16, #tpu.memory_space<vmem>>, %arg9: memref<32x1024xbf16, #tpu.memory_space<vmem>>, %arg10: memref<256x1024xbf16, #tpu.memory_space<vmem>>, %arg11: memref<256x1024xbf16, #tpu.memory_space<vmem>>, %arg12: memref<1024x1024xbf16, #tpu.memory_space<vmem>>, %arg13: memref<1024x32xbf16, #tpu.memory_space<vmem>>, %arg14: memref<16x1024xf32, #tpu.memory_space<vmem>>, %arg15: memref<8x32xf32, #tpu.memory_space<vmem>>) attributes {dimension_semantics = [#tpu.dimension_semantics<parallel>], iteration_bounds = array<i64: 2>, scalar_prefetch = 0 : i64, scratch_operands = 0 : i64, tpu.core_type = #tpu.core_type<tc>, window_params = [{transform_indices = @transform_0, window_bounds = array<i64: 8, 32>}, {transform_indices = @transform_1, window_bounds = array<i64: 8, 1>}, {transform_indices = @transform_2, window_bounds = array<i64: 8, 1280>}, {pipeline_mode = #tpu.pipeline_mode<synchronous>, transform_indices = @transform_3, window_bounds = array<i64: 128, 256>}, {pipeline_mode = #tpu.pipeline_mode<synchronous>, transform_indices = @transform_4, window_bounds = array<i64: 256, 256>}, {pipeline_mode = #tpu.pipeline_mode<synchronous>, transform_indices = @transform_5, window_bounds = array<i64: 256, 256>}, {pipeline_mode = #tpu.pipeline_mode<synchronous>, transform_indices = @transform_6, window_bounds = array<i64: 1280, 512>}, {pipeline_mode = #tpu.pipeline_mode<synchronous>, transform_indices = @transform_7, window_bounds = array<i64: 512, 256>}, {pipeline_mode = #tpu.pipeline_mode<synchronous>, transform_indices = @transform_8, window_bounds = array<i64: 32, 1024>}, {pipeline_mode = #tpu.pipeline_mode<synchronous>, transform_indices = @transform_9, window_bounds = array<i64: 256, 1024>}, {pipeline_mode = #tpu.pipeline_mode<synchronous>, transform_indices = @transform_10, window_bounds = array<i64: 256, 1024>}, {pipeline_mode = #tpu.pipeline_mode<synchronous>, transform_indices = @transform_11, window_bounds = array<i64: 1024, 1024>}, {pipeline_mode = #tpu.pipeline_mode<synchronous>, transform_indices = @transform_12, window_bounds = array<i64: 1024, 32>}, {pipeline_mode = #tpu.pipeline_mode<synchronous>, transform_indices = @transform_13, window_bounds = array<i64: 16, 1024>}, {transform_indices = @transform_14, window_bounds = array<i64: 8, 32>}]} {
    %c0 = arith.constant 0 : index
    %c0_0 = arith.constant 0 : index
    %0 = vector.load %arg2[%c0, %c0_0] : memref<8x1xi32, #tpu.memory_space<vmem>>, vector<8x1xi32>
    %1 = tpu.iota {dimensions = array<i32: 1>} : vector<8x128xi32>
    %2 = vector.broadcast %0 : vector<8x1xi32> to vector<8x128xi32>
    %3 = arith.cmpi eq, %2, %1 : vector<8x128xi32>
    %4 = arith.extui %3 : vector<8x128xi1> to vector<8x128xi32>
    %5 = arith.sitofp %4 : vector<8x128xi32> to vector<8x128xf32>
    %6 = arith.truncf %5 : vector<8x128xf32> to vector<8x128xbf16>
    %c0_1 = arith.constant 0 : index
    %c0_2 = arith.constant 0 : index
    %7 = vector.load %arg4[%c0_1, %c0_2] : memref<128x256xbf16, #tpu.memory_space<vmem>>, vector<128x256xbf16>
    %cst = arith.constant dense<0.000000e+00> : vector<8x256xf32>
    %8 = tpu.matmul %6, %7, %cst {dimension_numbers = #tpu.dot_dimension_numbers<[1], [0], [0], [1], [0, 0, 1, 1], [], []>} : vector<8x128xbf16>, vector<128x256xbf16>, vector<8x256xf32> -> vector<8x256xf32>
    %9 = arith.truncf %8 : vector<8x256xf32> to vector<8x256xbf16>
    %c0_3 = arith.constant 0 : index
    %c0_4 = arith.constant 0 : index
    %10 = vector.load %arg5[%c0_3, %c0_4] : memref<256x256xbf16, #tpu.memory_space<vmem>>, vector<256x256xbf16>
    %cst_5 = arith.constant dense<0.000000e+00> : vector<8x256xf32>
    %11 = tpu.matmul %9, %10, %cst_5 {dimension_numbers = #tpu.dot_dimension_numbers<[1], [0], [0], [1], [0, 0, 1, 1], [], []>} : vector<8x256xbf16>, vector<256x256xbf16>, vector<8x256xf32> -> vector<8x256xf32>
    %c0_6 = arith.constant 0 : index
    %c0_7 = arith.constant 0 : index
    %12 = vector.load %arg14[%c0_6, %c0_7] : memref<16x1024xf32, #tpu.memory_space<vmem>>, vector<1x256xf32>
    %13 = vector.broadcast %12 : vector<1x256xf32> to vector<8x256xf32>
    %14 = arith.addf %11, %13 : vector<8x256xf32>
    %15 = arith.negf %14 : vector<8x256xf32>
    %16 = math.exp %15 : vector<8x256xf32>
    %cst_8 = arith.constant 1.000000e+00 : f32
    %17 = vector.broadcast %cst_8 : f32 to vector<8x256xf32>
    %18 = arith.addf %17, %16 : vector<8x256xf32>
    %19 = arith.divf %17, %18 : vector<8x256xf32>
    %20 = arith.mulf %14, %19 : vector<8x256xf32>
    %21 = arith.truncf %20 : vector<8x256xf32> to vector<8x256xbf16>
    %c0_9 = arith.constant 0 : index
    %c0_10 = arith.constant 0 : index
    %22 = vector.load %arg6[%c0_9, %c0_10] : memref<256x256xbf16, #tpu.memory_space<vmem>>, vector<256x256xbf16>
    %cst_11 = arith.constant dense<0.000000e+00> : vector<8x256xf32>
    %23 = tpu.matmul %21, %22, %cst_11 {dimension_numbers = #tpu.dot_dimension_numbers<[1], [0], [0], [1], [0, 0, 1, 1], [], []>} : vector<8x256xbf16>, vector<256x256xbf16>, vector<8x256xf32> -> vector<8x256xf32>
    %c1 = arith.constant 1 : index
    %c0_12 = arith.constant 0 : index
    %24 = vector.load %arg14[%c1, %c0_12] : memref<16x1024xf32, #tpu.memory_space<vmem>>, vector<1x256xf32>
    %25 = vector.broadcast %24 : vector<1x256xf32> to vector<8x256xf32>
    %26 = arith.addf %23, %25 : vector<8x256xf32>
    %c0_13 = arith.constant 0 : index
    %c0_14 = arith.constant 0 : index
    %27 = vector.load %arg3[%c0_13, %c0_14] : memref<8x1280xf32, #tpu.memory_space<vmem>>, vector<8x1280xf32>
    %28 = arith.truncf %27 : vector<8x1280xf32> to vector<8x1280xbf16>
    %c0_15 = arith.constant 0 : index
    %c0_16 = arith.constant 0 : index
    %29 = vector.load %arg7[%c0_15, %c0_16] : memref<1280x512xbf16, #tpu.memory_space<vmem>>, vector<1280x512xbf16>
    %cst_17 = arith.constant dense<0.000000e+00> : vector<8x512xf32>
    %30 = tpu.matmul %28, %29, %cst_17 {dimension_numbers = #tpu.dot_dimension_numbers<[1], [0], [0], [1], [0, 0, 1, 1], [], []>} : vector<8x1280xbf16>, vector<1280x512xbf16>, vector<8x512xf32> -> vector<8x512xf32>
    %c2 = arith.constant 2 : index
    %c0_18 = arith.constant 0 : index
    %31 = vector.load %arg14[%c2, %c0_18] : memref<16x1024xf32, #tpu.memory_space<vmem>>, vector<1x512xf32>
    %32 = vector.broadcast %31 : vector<1x512xf32> to vector<8x512xf32>
    %33 = arith.addf %30, %32 : vector<8x512xf32>
    %c3 = arith.constant 3 : index
    %c0_19 = arith.constant 0 : index
    %34 = vector.load %arg14[%c3, %c0_19] : memref<16x1024xf32, #tpu.memory_space<vmem>>, vector<1x512xf32>
    %c4 = arith.constant 4 : index
    %c0_20 = arith.constant 0 : index
    %35 = vector.load %arg14[%c4, %c0_20] : memref<16x1024xf32, #tpu.memory_space<vmem>>, vector<1x512xf32>
    %cst_21 = arith.constant dense<0.000000e+00> : vector<8xf32>
    %36 = vector.multi_reduction <add>, %33, %cst_21 [1] : vector<8x512xf32> to vector<8xf32>
    %37 = vector.shape_cast %36 : vector<8xf32> to vector<8x1xf32>
    %cst_22 = arith.constant 5.120000e+02 : f32
    %38 = vector.broadcast %cst_22 : f32 to vector<8x1xf32>
    %39 = arith.divf %37, %38 : vector<8x1xf32>
    %40 = arith.mulf %33, %33 : vector<8x512xf32>
    %cst_23 = arith.constant dense<0.000000e+00> : vector<8xf32>
    %41 = vector.multi_reduction <add>, %40, %cst_23 [1] : vector<8x512xf32> to vector<8xf32>
    %42 = vector.shape_cast %41 : vector<8xf32> to vector<8x1xf32>
    %cst_24 = arith.constant 5.120000e+02 : f32
    %43 = vector.broadcast %cst_24 : f32 to vector<8x1xf32>
    %44 = arith.divf %42, %43 : vector<8x1xf32>
    %45 = arith.mulf %39, %39 : vector<8x1xf32>
    %46 = arith.subf %44, %45 : vector<8x1xf32>
    %47 = vector.broadcast %39 : vector<8x1xf32> to vector<8x512xf32>
    %48 = arith.subf %33, %47 : vector<8x512xf32>
    %cst_25 = arith.constant 9.99999974E-6 : f32
    %49 = vector.broadcast %cst_25 : f32 to vector<8x1xf32>
    %50 = arith.addf %46, %49 : vector<8x1xf32>
    %51 = math.rsqrt %50 : vector<8x1xf32>
    %52 = vector.broadcast %51 : vector<8x1xf32> to vector<8x512xf32>
    %53 = arith.mulf %48, %52 : vector<8x512xf32>
    %54 = vector.broadcast %34 : vector<1x512xf32> to vector<8x512xf32>
    %55 = arith.mulf %53, %54 : vector<8x512xf32>
    %56 = vector.broadcast %35 : vector<1x512xf32> to vector<8x512xf32>
    %57 = arith.addf %55, %56 : vector<8x512xf32>
    %58 = arith.negf %57 : vector<8x512xf32>
    %59 = math.exp %58 : vector<8x512xf32>
    %cst_26 = arith.constant 1.000000e+00 : f32
    %60 = vector.broadcast %cst_26 : f32 to vector<8x512xf32>
    %61 = arith.addf %60, %59 : vector<8x512xf32>
    %62 = arith.divf %60, %61 : vector<8x512xf32>
    %63 = arith.mulf %57, %62 : vector<8x512xf32>
    %64 = arith.truncf %63 : vector<8x512xf32> to vector<8x512xbf16>
    %c0_27 = arith.constant 0 : index
    %c0_28 = arith.constant 0 : index
    %65 = vector.load %arg8[%c0_27, %c0_28] : memref<512x256xbf16, #tpu.memory_space<vmem>>, vector<512x256xbf16>
    %cst_29 = arith.constant dense<0.000000e+00> : vector<8x256xf32>
    %66 = tpu.matmul %64, %65, %cst_29 {dimension_numbers = #tpu.dot_dimension_numbers<[1], [0], [0], [1], [0, 0, 1, 1], [], []>} : vector<8x512xbf16>, vector<512x256xbf16>, vector<8x256xf32> -> vector<8x256xf32>
    %c5 = arith.constant 5 : index
    %c0_30 = arith.constant 0 : index
    %67 = vector.load %arg14[%c5, %c0_30] : memref<16x1024xf32, #tpu.memory_space<vmem>>, vector<1x256xf32>
    %68 = vector.broadcast %67 : vector<1x256xf32> to vector<8x256xf32>
    %69 = arith.addf %66, %68 : vector<8x256xf32>
    %c0_31 = arith.constant 0 : index
    %c0_32 = arith.constant 0 : index
    %70 = vector.load %arg1[%c0_31, %c0_32] : memref<8x32xf32, #tpu.memory_space<vmem>>, vector<8x32xf32>
    %71 = arith.truncf %70 : vector<8x32xf32> to vector<8x32xbf16>
    %c0_33 = arith.constant 0 : index
    %c0_34 = arith.constant 0 : index
    %72 = vector.load %arg9[%c0_33, %c0_34] : memref<32x1024xbf16, #tpu.memory_space<vmem>>, vector<32x1024xbf16>
    %cst_35 = arith.constant dense<0.000000e+00> : vector<8x1024xf32>
    %73 = tpu.matmul %71, %72, %cst_35 {dimension_numbers = #tpu.dot_dimension_numbers<[1], [0], [0], [1], [0, 0, 1, 1], [], []>} : vector<8x32xbf16>, vector<32x1024xbf16>, vector<8x1024xf32> -> vector<8x1024xf32>
    %74 = arith.truncf %26 : vector<8x256xf32> to vector<8x256xbf16>
    %c0_36 = arith.constant 0 : index
    %c0_37 = arith.constant 0 : index
    %75 = vector.load %arg10[%c0_36, %c0_37] : memref<256x1024xbf16, #tpu.memory_space<vmem>>, vector<256x1024xbf16>
    %cst_38 = arith.constant dense<0.000000e+00> : vector<8x1024xf32>
    %76 = tpu.matmul %74, %75, %cst_38 {dimension_numbers = #tpu.dot_dimension_numbers<[1], [0], [0], [1], [0, 0, 1, 1], [], []>} : vector<8x256xbf16>, vector<256x1024xbf16>, vector<8x1024xf32> -> vector<8x1024xf32>
    %77 = arith.addf %73, %76 : vector<8x1024xf32>
    %78 = arith.truncf %69 : vector<8x256xf32> to vector<8x256xbf16>
    %c0_39 = arith.constant 0 : index
    %c0_40 = arith.constant 0 : index
    %79 = vector.load %arg11[%c0_39, %c0_40] : memref<256x1024xbf16, #tpu.memory_space<vmem>>, vector<256x1024xbf16>
    %cst_41 = arith.constant dense<0.000000e+00> : vector<8x1024xf32>
    %80 = tpu.matmul %78, %79, %cst_41 {dimension_numbers = #tpu.dot_dimension_numbers<[1], [0], [0], [1], [0, 0, 1, 1], [], []>} : vector<8x256xbf16>, vector<256x1024xbf16>, vector<8x1024xf32> -> vector<8x1024xf32>
    %81 = arith.addf %77, %80 : vector<8x1024xf32>
    %c6 = arith.constant 6 : index
    %c0_42 = arith.constant 0 : index
    %82 = vector.load %arg14[%c6, %c0_42] : memref<16x1024xf32, #tpu.memory_space<vmem>>, vector<1x1024xf32>
    %83 = vector.broadcast %82 : vector<1x1024xf32> to vector<8x1024xf32>
    %84 = arith.addf %81, %83 : vector<8x1024xf32>
    %c7 = arith.constant 7 : index
    %c0_43 = arith.constant 0 : index
    %85 = vector.load %arg14[%c7, %c0_43] : memref<16x1024xf32, #tpu.memory_space<vmem>>, vector<1x1024xf32>
    %c8 = arith.constant 8 : index
    %c0_44 = arith.constant 0 : index
    %86 = vector.load %arg14[%c8, %c0_44] : memref<16x1024xf32, #tpu.memory_space<vmem>>, vector<1x1024xf32>
    %cst_45 = arith.constant dense<0.000000e+00> : vector<8xf32>
    %87 = vector.multi_reduction <add>, %84, %cst_45 [1] : vector<8x1024xf32> to vector<8xf32>
    %88 = vector.shape_cast %87 : vector<8xf32> to vector<8x1xf32>
    %cst_46 = arith.constant 1.024000e+03 : f32
    %89 = vector.broadcast %cst_46 : f32 to vector<8x1xf32>
    %90 = arith.divf %88, %89 : vector<8x1xf32>
    %91 = arith.mulf %84, %84 : vector<8x1024xf32>
    %cst_47 = arith.constant dense<0.000000e+00> : vector<8xf32>
    %92 = vector.multi_reduction <add>, %91, %cst_47 [1] : vector<8x1024xf32> to vector<8xf32>
    %93 = vector.shape_cast %92 : vector<8xf32> to vector<8x1xf32>
    %cst_48 = arith.constant 1.024000e+03 : f32
    %94 = vector.broadcast %cst_48 : f32 to vector<8x1xf32>
    %95 = arith.divf %93, %94 : vector<8x1xf32>
    %96 = arith.mulf %90, %90 : vector<8x1xf32>
    %97 = arith.subf %95, %96 : vector<8x1xf32>
    %98 = vector.broadcast %90 : vector<8x1xf32> to vector<8x1024xf32>
    %99 = arith.subf %84, %98 : vector<8x1024xf32>
    %cst_49 = arith.constant 9.99999974E-6 : f32
    %100 = vector.broadcast %cst_49 : f32 to vector<8x1xf32>
    %101 = arith.addf %97, %100 : vector<8x1xf32>
    %102 = math.rsqrt %101 : vector<8x1xf32>
    %103 = vector.broadcast %102 : vector<8x1xf32> to vector<8x1024xf32>
    %104 = arith.mulf %99, %103 : vector<8x1024xf32>
    %105 = vector.broadcast %85 : vector<1x1024xf32> to vector<8x1024xf32>
    %106 = arith.mulf %104, %105 : vector<8x1024xf32>
    %107 = vector.broadcast %86 : vector<1x1024xf32> to vector<8x1024xf32>
    %108 = arith.addf %106, %107 : vector<8x1024xf32>
    %109 = arith.negf %108 : vector<8x1024xf32>
    %110 = math.exp %109 : vector<8x1024xf32>
    %cst_50 = arith.constant 1.000000e+00 : f32
    %111 = vector.broadcast %cst_50 : f32 to vector<8x1024xf32>
    %112 = arith.addf %111, %110 : vector<8x1024xf32>
    %113 = arith.divf %111, %112 : vector<8x1024xf32>
    %114 = arith.mulf %108, %113 : vector<8x1024xf32>
    %115 = arith.truncf %114 : vector<8x1024xf32> to vector<8x1024xbf16>
    %c0_51 = arith.constant 0 : index
    %c0_52 = arith.constant 0 : index
    %116 = vector.load %arg12[%c0_51, %c0_52] : memref<1024x1024xbf16, #tpu.memory_space<vmem>>, vector<1024x1024xbf16>
    %cst_53 = arith.constant dense<0.000000e+00> : vector<8x1024xf32>
    %117 = tpu.matmul %115, %116, %cst_53 {dimension_numbers = #tpu.dot_dimension_numbers<[1], [0], [0], [1], [0, 0, 1, 1], [], []>} : vector<8x1024xbf16>, vector<1024x1024xbf16>, vector<8x1024xf32> -> vector<8x1024xf32>
    %c9 = arith.constant 9 : index
    %c0_54 = arith.constant 0 : index
    %118 = vector.load %arg14[%c9, %c0_54] : memref<16x1024xf32, #tpu.memory_space<vmem>>, vector<1x1024xf32>
    %119 = vector.broadcast %118 : vector<1x1024xf32> to vector<8x1024xf32>
    %120 = arith.addf %117, %119 : vector<8x1024xf32>
    %c10 = arith.constant 10 : index
    %c0_55 = arith.constant 0 : index
    %121 = vector.load %arg14[%c10, %c0_55] : memref<16x1024xf32, #tpu.memory_space<vmem>>, vector<1x1024xf32>
    %c11 = arith.constant 11 : index
    %c0_56 = arith.constant 0 : index
    %122 = vector.load %arg14[%c11, %c0_56] : memref<16x1024xf32, #tpu.memory_space<vmem>>, vector<1x1024xf32>
    %cst_57 = arith.constant dense<0.000000e+00> : vector<8xf32>
    %123 = vector.multi_reduction <add>, %120, %cst_57 [1] : vector<8x1024xf32> to vector<8xf32>
    %124 = vector.shape_cast %123 : vector<8xf32> to vector<8x1xf32>
    %cst_58 = arith.constant 1.024000e+03 : f32
    %125 = vector.broadcast %cst_58 : f32 to vector<8x1xf32>
    %126 = arith.divf %124, %125 : vector<8x1xf32>
    %127 = arith.mulf %120, %120 : vector<8x1024xf32>
    %cst_59 = arith.constant dense<0.000000e+00> : vector<8xf32>
    %128 = vector.multi_reduction <add>, %127, %cst_59 [1] : vector<8x1024xf32> to vector<8xf32>
    %129 = vector.shape_cast %128 : vector<8xf32> to vector<8x1xf32>
    %cst_60 = arith.constant 1.024000e+03 : f32
    %130 = vector.broadcast %cst_60 : f32 to vector<8x1xf32>
    %131 = arith.divf %129, %130 : vector<8x1xf32>
    %132 = arith.mulf %126, %126 : vector<8x1xf32>
    %133 = arith.subf %131, %132 : vector<8x1xf32>
    %134 = vector.broadcast %126 : vector<8x1xf32> to vector<8x1024xf32>
    %135 = arith.subf %120, %134 : vector<8x1024xf32>
    %cst_61 = arith.constant 9.99999974E-6 : f32
    %136 = vector.broadcast %cst_61 : f32 to vector<8x1xf32>
    %137 = arith.addf %133, %136 : vector<8x1xf32>
    %138 = math.rsqrt %137 : vector<8x1xf32>
    %139 = vector.broadcast %138 : vector<8x1xf32> to vector<8x1024xf32>
    %140 = arith.mulf %135, %139 : vector<8x1024xf32>
    %141 = vector.broadcast %121 : vector<1x1024xf32> to vector<8x1024xf32>
    %142 = arith.mulf %140, %141 : vector<8x1024xf32>
    %143 = vector.broadcast %122 : vector<1x1024xf32> to vector<8x1024xf32>
    %144 = arith.addf %142, %143 : vector<8x1024xf32>
    %145 = arith.negf %144 : vector<8x1024xf32>
    %146 = math.exp %145 : vector<8x1024xf32>
    %cst_62 = arith.constant 1.000000e+00 : f32
    %147 = vector.broadcast %cst_62 : f32 to vector<8x1024xf32>
    %148 = arith.addf %147, %146 : vector<8x1024xf32>
    %149 = arith.divf %147, %148 : vector<8x1024xf32>
    %150 = arith.mulf %144, %149 : vector<8x1024xf32>
    %151 = arith.truncf %150 : vector<8x1024xf32> to vector<8x1024xbf16>
    %c0_63 = arith.constant 0 : index
    %c0_64 = arith.constant 0 : index
    %152 = vector.load %arg13[%c0_63, %c0_64] : memref<1024x32xbf16, #tpu.memory_space<vmem>>, vector<1024x32xbf16>
    %cst_65 = arith.constant dense<0.000000e+00> : vector<8x32xf32>
    %153 = tpu.matmul %151, %152, %cst_65 {dimension_numbers = #tpu.dot_dimension_numbers<[1], [0], [0], [1], [0, 0, 1, 1], [], []>} : vector<8x1024xbf16>, vector<1024x32xbf16>, vector<8x32xf32> -> vector<8x32xf32>
    %c12 = arith.constant 12 : index
    %c0_66 = arith.constant 0 : index
    %154 = vector.load %arg14[%c12, %c0_66] : memref<16x1024xf32, #tpu.memory_space<vmem>>, vector<1x32xf32>
    %155 = vector.broadcast %154 : vector<1x32xf32> to vector<8x32xf32>
    %156 = arith.addf %153, %155 : vector<8x32xf32>
    %c0_67 = arith.constant 0 : index
    %c0_68 = arith.constant 0 : index
    %157 = vector.load %arg15[%c0_67, %c0_68] : memref<8x32xf32, #tpu.memory_space<vmem>>, vector<8x32xf32>
    tpu.vector_store %arg15[%c0_67, %c0_68], %156 {strides = array<i32>} : memref<8x32xf32, #tpu.memory_space<vmem>>, vector<8x32xf32>,
    return
  }
  func.func @transform_0(%arg0: i32) -> (i32, i32) {
    %c0_i32 = arith.constant 0 : i32
    %c0_i32_0 = arith.constant 0 : i32
    return %arg0, %c0_i32 : i32, i32
  }
  func.func @transform_1(%arg0: i32) -> (i32, i32) {
    %c0_i32 = arith.constant 0 : i32
    %c0_i32_0 = arith.constant 0 : i32
    return %arg0, %c0_i32 : i32, i32
  }
  func.func @transform_2(%arg0: i32) -> (i32, i32) {
    %c0_i32 = arith.constant 0 : i32
    %c0_i32_0 = arith.constant 0 : i32
    return %arg0, %c0_i32 : i32, i32
  }
  func.func @transform_3(%arg0: i32) -> (i32, i32) {
    %c0_i32 = arith.constant 0 : i32
    %c0_i32_0 = arith.constant 0 : i32
    %c0_i32_1 = arith.constant 0 : i32
    return %c0_i32, %c0_i32_0 : i32, i32
  }
  func.func @transform_4(%arg0: i32) -> (i32, i32) {
    %c0_i32 = arith.constant 0 : i32
    %c0_i32_0 = arith.constant 0 : i32
    %c0_i32_1 = arith.constant 0 : i32
    return %c0_i32, %c0_i32_0 : i32, i32
  }
  func.func @transform_5(%arg0: i32) -> (i32, i32) {
    %c0_i32 = arith.constant 0 : i32
    %c0_i32_0 = arith.constant 0 : i32
    %c0_i32_1 = arith.constant 0 : i32
    return %c0_i32, %c0_i32_0 : i32, i32
  }
  func.func @transform_6(%arg0: i32) -> (i32, i32) {
    %c0_i32 = arith.constant 0 : i32
    %c0_i32_0 = arith.constant 0 : i32
    %c0_i32_1 = arith.constant 0 : i32
    return %c0_i32, %c0_i32_0 : i32, i32
  }
  func.func @transform_7(%arg0: i32) -> (i32, i32) {
    %c0_i32 = arith.constant 0 : i32
    %c0_i32_0 = arith.constant 0 : i32
    %c0_i32_1 = arith.constant 0 : i32
    return %c0_i32, %c0_i32_0 : i32, i32
  }
  func.func @transform_8(%arg0: i32) -> (i32, i32) {
    %c0_i32 = arith.constant 0 : i32
    %c0_i32_0 = arith.constant 0 : i32
    %c0_i32_1 = arith.constant 0 : i32
    return %c0_i32, %c0_i32_0 : i32, i32
  }
  func.func @transform_9(%arg0: i32) -> (i32, i32) {
    %c0_i32 = arith.constant 0 : i32
    %c0_i32_0 = arith.constant 0 : i32
    %c0_i32_1 = arith.constant 0 : i32
    return %c0_i32, %c0_i32_0 : i32, i32
  }
  func.func @transform_10(%arg0: i32) -> (i32, i32) {
    %c0_i32 = arith.constant 0 : i32
    %c0_i32_0 = arith.constant 0 : i32
    %c0_i32_1 = arith.constant 0 : i32
    return %c0_i32, %c0_i32_0 : i32, i32
  }
  func.func @transform_11(%arg0: i32) -> (i32, i32) {
    %c0_i32 = arith.constant 0 : i32
    %c0_i32_0 = arith.constant 0 : i32
    %c0_i32_1 = arith.constant 0 : i32
    return %c0_i32, %c0_i32_0 : i32, i32
  }
  func.func @transform_12(%arg0: i32) -> (i32, i32) {
    %c0_i32 = arith.constant 0 : i32
    %c0_i32_0 = arith.constant 0 : i32
    %c0_i32_1 = arith.constant 0 : i32
    return %c0_i32, %c0_i32_0 : i32, i32
  }
  func.func @transform_13(%arg0: i32) -> (i32, i32) {
    %c0_i32 = arith.constant 0 : i32
    %c0_i32_0 = arith.constant 0 : i32
    %c0_i32_1 = arith.constant 0 : i32
    return %c0_i32, %c0_i32_0 : i32, i32
  }
  func.func @transform_14(%arg0: i32) -> (i32, i32) {
    %c0_i32 = arith.constant 0 : i32
    %c0_i32_0 = arith.constant 0 : i32
    return %arg0, %c0_i32 : i32, i32
  }
}

</mosaic_0001>

<llo_original>
// kernel: tpu_custom_call.1
$region0: #{tpu_custom_call.1}
  #allocation0 [shape = 'u32[]', space=smem, size = 0x4, offset = 0x4, fixed_abs, tag = 'smem constant byte address 0x4 - core index']
  #allocation1 [shape = 'u32[72,128]{1,0:T(1,128)}', space=vmem, size = 0x9000, scoped, tag = 'internal scratch']
  %s0 = inlined_call_operand.hbm [shape: f32[16,32], index: 0, kind: input, shape index: {}]
  %s1 = inlined_call_operand.vmem [shape: s32[16,1], index: 1, kind: input, shape index: {}]
  %s2 = inlined_call_operand.hbm [shape: f32[16,1280], index: 2, kind: input, shape index: {}]
  %s3 = inlined_call_operand.hbm [shape: bf16[128,256], index: 3, kind: input, shape index: {}]
  %s4 = inlined_call_operand.hbm [shape: bf16[256,256], index: 4, kind: input, shape index: {}]
  %s5 = inlined_call_operand.hbm [shape: bf16[256,256], index: 5, kind: input, shape index: {}]
  %s6 = inlined_call_operand.hbm [shape: bf16[1280,512], index: 6, kind: input, shape index: {}]
  %s7 = inlined_call_operand.hbm [shape: bf16[512,256], index: 7, kind: input, shape index: {}]
  %s8 = inlined_call_operand.hbm [shape: bf16[32,1024], index: 8, kind: input, shape index: {}]
  %s9 = inlined_call_operand.hbm [shape: bf16[256,1024], index: 9, kind: input, shape index: {}]
  %s10 = inlined_call_operand.hbm [shape: bf16[256,1024], index: 10, kind: input, shape index: {}]
  %s11 = inlined_call_operand.hbm [shape: bf16[1024,1024], index: 11, kind: input, shape index: {}]
  %s12 = inlined_call_operand.vmem [shape: bf16[1024,32], index: 12, kind: input, shape index: {}]
  %s13 = inlined_call_operand.hbm [shape: f32[16,1024], index: 13, kind: input, shape index: {}]
  %s14 = inlined_call_operand.hbm [shape: f32[16,32], index: 14, kind: output, shape index: {}]
  %s15 = sld [smem:[#allocation0]]
  $region137: #{tpu_custom_call.1} parent=0
    _
  %s17 = ssub.s32 1, %s15
  %s18 = scalar_select 0, %s17, %s15
  $region1: #{tpu_custom_call.1} parent=0
    #allocation2 [shape = 'u8[8192]{0}', space=vmem, size = 0x2000, scoped, tag = 'input window, operand 0']
    #allocation3 [shape = 's32[2]{0}', space=sflag, size = 0x8, scoped, tag = 'scoped memory for tpu_custom_call.1']
    #allocation4 [shape = 's32[2]{0}', space=sflag, size = 0x8, scoped, tag = 'scoped memory for tpu_custom_call.1']
    #allocation5 [shape = 'u8[81920]{0}', space=vmem, size = 0x14000, scoped, tag = 'input window, operand 2']
    #allocation6 [shape = 's32[2]{0}', space=sflag, size = 0x8, scoped, tag = 'scoped memory for tpu_custom_call.1']
    #allocation7 [shape = 'u8[65536]{0}', space=vmem, size = 0x10000, scoped, tag = 'input window, operand 3, single buffered']
    #allocation8 [shape = 'u8[131072]{0}', space=vmem, size = 0x20000, scoped, tag = 'input window, operand 4, single buffered']
    #allocation9 [shape = 's32[1]{0}', space=sflag, size = 0x4, scoped, tag = 'scoped memory for tpu_custom_call.1']
    #allocation10 [shape = 'u8[131072]{0}', space=vmem, size = 0x20000, scoped, tag = 'input window, operand 5, single buffered']
    #allocation11 [shape = 'u8[1310720]{0}', space=vmem, size = 0x140000, scoped, tag = 'input window, operand 6, single buffered']
    #allocation12 [shape = 's32[1]{0}', space=sflag, size = 0x4, scoped, tag = 'scoped memory for tpu_custom_call.1']
    #allocation13 [shape = 'u8[262144]{0}', space=vmem, size = 0x40000, scoped, tag = 'input window, operand 7, single buffered']
    #allocation14 [shape = 'u8[65536]{0}', space=vmem, size = 0x10000, scoped, tag = 'input window, operand 8, single buffered']
    #allocation15 [shape = 's32[1]{0}', space=sflag, size = 0x4, scoped, tag = 'scoped memory for tpu_custom_call.1']
    #allocation16 [shape = 'u8[524288]{0}', space=vmem, size = 0x80000, scoped, tag = 'input window, operand 9, single buffered']
    #allocation17 [shape = 'u8[524288]{0}', space=vmem, size = 0x80000, scoped, tag = 'input window, operand 10, single buffered']
    #allocation18 [shape = 's32[1]{0}', space=sflag, size = 0x4, scoped, tag = 'scoped memory for tpu_custom_call.1']
    #allocation19 [shape = 'u8[2097152]{0}', space=vmem, size = 0x200000, scoped, tag = 'input window, operand 11, single buffered']
    #allocation20 [shape = 'u8[65536]{0}', space=vmem, size = 0x10000, scoped, tag = 'input window, operand 13, single buffered']
    #allocation21 [shape = 's32[1]{0}', space=sflag, size = 0x4, scoped, tag = 'scoped memory for tpu_custom_call.1']
    #allocation22 [shape = 'u8[8192]{0}', space=vmem, size = 0x2000, scoped, tag = 'output window, operand 0']
    %19 = vsyncpa [#allocation3], 0
    %s20 = scalar_lea.sflag [#allocation3], 1
    %21 = vsyncpa %s20, 0
    %22 = vsyncpa [#allocation6], 0
    %s23 = scalar_lea.sflag [#allocation6], 1
    %24 = vsyncpa %s23, 0
    %25 = vsyncpa [#allocation9], 0
    %26 = vsyncpa [#allocation12], 0
    %27 = vsyncpa [#allocation15], 0
    %28 = vsyncpa [#allocation18], 0
    %29 = vsyncpa [#allocation21], 0
    %30 = vsyncpa [#allocation4], 0
    %s31 = scalar_lea.sflag [#allocation4], 1
    %32 = vsyncpa %s31, 0
    loop: start=0, step=1, limit=4
    $region2: #{tpu_custom_call.1} parent=1 // loop_pre_header
      _
    $region3: #{tpu_custom_call.1} parent=1 // loop_header
      %s34 = sphi 0, %s38
      %p35 = scmp.ge.s32.totalorder %s34, 4
      %s44 = sphi 0, %s46
      %s47 = sphi 0, %s44
      %s48 = sphi 0, %s47
      %s64 = sphi 0, %s48
      %s70 = sphi 0, %s72
      %s73 = sphi 0, %s70
      %s74 = sphi 0, %s73
      %s90 = sphi 0, %s74
      %s96 = sphi 0, %s98
      %s99 = sphi 0, %s96
      %s100 = sphi 0, %s99
      %s116 = sphi 0, %s100
      %s120 = sphi 0, %s120
      %s122 = sphi 0, %s120
      %s123 = sphi 0, %s122
      %s137 = sphi 0, %s123
      %s141 = sphi 0, %s141
      %s143 = sphi 0, %s141
      %s144 = sphi 0, %s143
      %s158 = sphi 0, %s144
      %s162 = sphi 0, %s162
      %s164 = sphi 0, %s162
      %s165 = sphi 0, %s164
      %s179 = sphi 0, %s165
      %s183 = sphi 0, %s183
      %s185 = sphi 0, %s183
      %s186 = sphi 0, %s185
      %s200 = sphi 0, %s186
      %s204 = sphi 0, %s204
      %s206 = sphi 0, %s204
      %s207 = sphi 0, %s206
      %s221 = sphi 0, %s207
      %s225 = sphi 0, %s225
      %s227 = sphi 0, %s225
      %s228 = sphi 0, %s227
      %s242 = sphi 0, %s228
      %s246 = sphi 0, %s246
      %s248 = sphi 0, %s246
      %s249 = sphi 0, %s248
      %s263 = sphi 0, %s249
      %s267 = sphi 0, %s267
      %s269 = sphi 0, %s267
      %s270 = sphi 0, %s269
      %s284 = sphi 0, %s270
      %s288 = sphi 0, %s288
      %s290 = sphi 0, %s288
      %s291 = sphi 0, %s290
      %s305 = sphi 0, %s291
      %s309 = sphi 0, %s309
      %s311 = sphi 0, %s309
      %s312 = sphi 0, %s311
      %s326 = sphi 0, %s312
      %s330 = sphi 0, %s330
      %s332 = sphi 0, %s330
      %s333 = sphi 0, %s332
      %s347 = sphi 0, %s333
      %s353 = sphi 0, %s355
      %s356 = sphi 0, %s353
      %s357 = sphi 0, %s356
      %s373 = sphi 0, %s357
    $region4: #{tpu_custom_call.1} parent=1 // loop_header_branch
      %37 = sbr.rel (%p35) target = $region8
    $region5: #{tpu_custom_call.1} parent=1 // loop_body
      %s39 = ssub.s32 %s34, 1
      %s40 = ssub.s32 %s34, 2
      %s41 = sadd.s32 %s34, 1
      %s42 = ssub.s32 %s34, %s41
      %p43 = scmp.eq.s32.totalorder %s42, 0
      %s45 = sadd.s32 %s44, 1
      %s46 = scalar_select %p43, %s44, %s45
      %p49 = pneg %p43
      %p50 = scmp.eq.s32.totalorder %s34, 1
      %p51 = por %p49, %p50
      %p52 = scmp.ne.s32.totalorder %s44, %s47
      %p53 = scmp.eq.s32.totalorder %s34, 0
      %p54 = por %p52, %p53
      %p55 = scmp.ne.s32.totalorder %s44, %s47
      %p56 = scmp.eq.s32.totalorder %s39, 1
      %p57 = por %p55, %p56
      %p58 = scmp.ne.s32.totalorder %s47, %s48
      %p59 = scmp.eq.s32.totalorder %s39, 0
      %p60 = por %p58, %p59
      %p61 = scmp.ne.s32.totalorder %s47, %s48
      %p62 = scmp.eq.s32.totalorder %s40, 1
      %p63 = por %p61, %p62
      %p65 = scmp.ne.s32.totalorder %s48, %s64
      %p66 = scmp.eq.s32.totalorder %s40, 0
      %p67 = por %p65, %p66
      %s68 = ssub.s32 %s34, %s41
      %p69 = scmp.eq.s32.totalorder %s68, 0
      %s71 = sadd.s32 %s70, 1
      %s72 = scalar_select %p69, %s70, %s71
      %p75 = pneg %p69
      %p76 = scmp.eq.s32.totalorder %s34, 1
      %p77 = por %p75, %p76
      %p78 = scmp.ne.s32.totalorder %s70, %s73
      %p79 = scmp.eq.s32.totalorder %s34, 0
      %p80 = por %p78, %p79
      %p81 = scmp.ne.s32.totalorder %s70, %s73
      %p82 = scmp.eq.s32.totalorder %s39, 1
      %p83 = por %p81, %p82
      %p84 = scmp.ne.s32.totalorder %s73, %s74
      %p85 = scmp.eq.s32.totalorder %s39, 0
      %p86 = por %p84, %p85
      %p87 = scmp.ne.s32.totalorder %s73, %s74
      %p88 = scmp.eq.s32.totalorder %s40, 1
      %p89 = por %p87, %p88
      %p91 = scmp.ne.s32.totalorder %s74, %s90
      %p92 = scmp.eq.s32.totalorder %s40, 0
      %p93 = por %p91, %p92
      %s94 = ssub.s32 %s34, %s41
      %p95 = scmp.eq.s32.totalorder %s94, 0
      %s97 = sadd.s32 %s96, 1
      %s98 = scalar_select %p95, %s96, %s97
      %p101 = pneg %p95
      %p102 = scmp.eq.s32.totalorder %s34, 1
      %p103 = por %p101, %p102
      %p104 = scmp.ne.s32.totalorder %s96, %s99
      %p105 = scmp.eq.s32.totalorder %s34, 0
      %p106 = por %p104, %p105
      %p107 = scmp.ne.s32.totalorder %s96, %s99
      %p108 = scmp.eq.s32.totalorder %s39, 1
      %p109 = por %p107, %p108
      %p110 = scmp.ne.s32.totalorder %s99, %s100
      %p111 = scmp.eq.s32.totalorder %s39, 0
      %p112 = por %p110, %p111
      %p113 = scmp.ne.s32.totalorder %s99, %s100
      %p114 = scmp.eq.s32.totalorder %s40, 1
      %p115 = por %p113, %p114
      %p117 = scmp.ne.s32.totalorder %s100, %s116
      %p118 = scmp.eq.s32.totalorder %s40, 0
      %p119 = por %p117, %p118
      %s121 = sadd.s32 %s120, 1
      %p124 = scmp.eq.s32.totalorder %s34, 1
      %p125 = scmp.ne.s32.totalorder %s120, %s122
      %p126 = scmp.eq.s32.totalorder %s34, 0
      %p127 = por %p125, %p126
      %p128 = scmp.ne.s32.totalorder %s120, %s122
      %p129 = scmp.eq.s32.totalorder %s39, 1
      %p130 = por %p128, %p129
      %p131 = scmp.ne.s32.totalorder %s122, %s123
      %p132 = scmp.eq.s32.totalorder %s39, 0
      %p133 = por %p131, %p132
      %p134 = scmp.ne.s32.totalorder %s122, %s123
      %p135 = scmp.eq.s32.totalorder %s40, 1
      %p136 = por %p134, %p135
      %p138 = scmp.ne.s32.totalorder %s123, %s137
      %p139 = scmp.eq.s32.totalorder %s40, 0
      %p140 = por %p138, %p139
      %s142 = sadd.s32 %s141, 1
      %p145 = scmp.eq.s32.totalorder %s34, 1
      %p146 = scmp.ne.s32.totalorder %s141, %s143
      %p147 = scmp.eq.s32.totalorder %s34, 0
      %p148 = por %p146, %p147
      %p149 = scmp.ne.s32.totalorder %s141, %s143
      %p150 = scmp.eq.s32.totalorder %s39, 1
      %p151 = por %p149, %p150
      %p152 = scmp.ne.s32.totalorder %s143, %s144
      %p153 = scmp.eq.s32.totalorder %s39, 0
      %p154 = por %p152, %p153
      %p155 = scmp.ne.s32.totalorder %s143, %s144
      %p156 = scmp.eq.s32.totalorder %s40, 1
      %p157 = por %p155, %p156
      %p159 = scmp.ne.s32.totalorder %s144, %s158
      %p160 = scmp.eq.s32.totalorder %s40, 0
      %p161 = por %p159, %p160
      %s163 = sadd.s32 %s162, 1
      %p166 = scmp.eq.s32.totalorder %s34, 1
      %p167 = scmp.ne.s32.totalorder %s162, %s164
      %p168 = scmp.eq.s32.totalorder %s34, 0
      %p169 = por %p167, %p168
      %p170 = scmp.ne.s32.totalorder %s162, %s164
      %p171 = scmp.eq.s32.totalorder %s39, 1
      %p172 = por %p170, %p171
      %p173 = scmp.ne.s32.totalorder %s164, %s165
      %p174 = scmp.eq.s32.totalorder %s39, 0
      %p175 = por %p173, %p174
      %p176 = scmp.ne.s32.totalorder %s164, %s165
      %p177 = scmp.eq.s32.totalorder %s40, 1
      %p178 = por %p176, %p177
      %p180 = scmp.ne.s32.totalorder %s165, %s179
      %p181 = scmp.eq.s32.totalorder %s40, 0
      %p182 = por %p180, %p181
      %s184 = sadd.s32 %s183, 1
      %p187 = scmp.eq.s32.totalorder %s34, 1
      %p188 = scmp.ne.s32.totalorder %s183, %s185
      %p189 = scmp.eq.s32.totalorder %s34, 0
      %p190 = por %p188, %p189
      %p191 = scmp.ne.s32.totalorder %s183, %s185
      %p192 = scmp.eq.s32.totalorder %s39, 1
      %p193 = por %p191, %p192
      %p194 = scmp.ne.s32.totalorder %s185, %s186
      %p195 = scmp.eq.s32.totalorder %s39, 0
      %p196 = por %p194, %p195
      %p197 = scmp.ne.s32.totalorder %s185, %s186
      %p198 = scmp.eq.s32.totalorder %s40, 1
      %p199 = por %p197, %p198
      %p201 = scmp.ne.s32.totalorder %s186, %s200
      %p202 = scmp.eq.s32.totalorder %s40, 0
      %p203 = por %p201, %p202
      %s205 = sadd.s32 %s204, 1
      %p208 = scmp.eq.s32.totalorder %s34, 1
      %p209 = scmp.ne.s32.totalorder %s204, %s206
      %p210 = scmp.eq.s32.totalorder %s34, 0
      %p211 = por %p209, %p210
      %p212 = scmp.ne.s32.totalorder %s204, %s206
      %p213 = scmp.eq.s32.totalorder %s39, 1
      %p214 = por %p212, %p213
      %p215 = scmp.ne.s32.totalorder %s206, %s207
      %p216 = scmp.eq.s32.totalorder %s39, 0
      %p217 = por %p215, %p216
      %p218 = scmp.ne.s32.totalorder %s206, %s207
      %p219 = scmp.eq.s32.totalorder %s40, 1
      %p220 = por %p218, %p219
      %p222 = scmp.ne.s32.totalorder %s207, %s221
      %p223 = scmp.eq.s32.totalorder %s40, 0
      %p224 = por %p222, %p223
      %s226 = sadd.s32 %s225, 1
      %p229 = scmp.eq.s32.totalorder %s34, 1
      %p230 = scmp.ne.s32.totalorder %s225, %s227
      %p231 = scmp.eq.s32.totalorder %s34, 0
      %p232 = por %p230, %p231
      %p233 = scmp.ne.s32.totalorder %s225, %s227
      %p234 = scmp.eq.s32.totalorder %s39, 1
      %p235 = por %p233, %p234
      %p236 = scmp.ne.s32.totalorder %s227, %s228
      %p237 = scmp.eq.s32.totalorder %s39, 0
      %p238 = por %p236, %p237
      %p239 = scmp.ne.s32.totalorder %s227, %s228
      %p240 = scmp.eq.s32.totalorder %s40, 1
      %p241 = por %p239, %p240
      %p243 = scmp.ne.s32.totalorder %s228, %s242
      %p244 = scmp.eq.s32.totalorder %s40, 0
      %p245 = por %p243, %p244
      %s247 = sadd.s32 %s246, 1
      %p250 = scmp.eq.s32.totalorder %s34, 1
      %p251 = scmp.ne.s32.totalorder %s246, %s248
      %p252 = scmp.eq.s32.totalorder %s34, 0
      %p253 = por %p251, %p252
      %p254 = scmp.ne.s32.totalorder %s246, %s248
      %p255 = scmp.eq.s32.totalorder %s39, 1
      %p256 = por %p254, %p255
      %p257 = scmp.ne.s32.totalorder %s248, %s249
      %p258 = scmp.eq.s32.totalorder %s39, 0
      %p259 = por %p257, %p258
      %p260 = scmp.ne.s32.totalorder %s248, %s249
      %p261 = scmp.eq.s32.totalorder %s40, 1
      %p262 = por %p260, %p261
      %p264 = scmp.ne.s32.totalorder %s249, %s263
      %p265 = scmp.eq.s32.totalorder %s40, 0
      %p266 = por %p264, %p265
      %s268 = sadd.s32 %s267, 1
      %p271 = scmp.eq.s32.totalorder %s34, 1
      %p272 = scmp.ne.s32.totalorder %s267, %s269
      %p273 = scmp.eq.s32.totalorder %s34, 0
      %p274 = por %p272, %p273
      %p275 = scmp.ne.s32.totalorder %s267, %s269
      %p276 = scmp.eq.s32.totalorder %s39, 1
      %p277 = por %p275, %p276
      %p278 = scmp.ne.s32.totalorder %s269, %s270
      %p279 = scmp.eq.s32.totalorder %s39, 0
      %p280 = por %p278, %p279
      %p281 = scmp.ne.s32.totalorder %s269, %s270
      %p282 = scmp.eq.s32.totalorder %s40, 1
      %p283 = por %p281, %p282
      %p285 = scmp.ne.s32.totalorder %s270, %s284
      %p286 = scmp.eq.s32.totalorder %s40, 0
      %p287 = por %p285, %p286
      %s289 = sadd.s32 %s288, 1
      %p292 = scmp.eq.s32.totalorder %s34, 1
      %p293 = scmp.ne.s32.totalorder %s288, %s290
      %p294 = scmp.eq.s32.totalorder %s34, 0
      %p295 = por %p293, %p294
      %p296 = scmp.ne.s32.totalorder %s288, %s290
      %p297 = scmp.eq.s32.totalorder %s39, 1
      %p298 = por %p296, %p297
      %p299 = scmp.ne.s32.totalorder %s290, %s291
      %p300 = scmp.eq.s32.totalorder %s39, 0
      %p301 = por %p299, %p300
      %p302 = scmp.ne.s32.totalorder %s290, %s291
      %p303 = scmp.eq.s32.totalorder %s40, 1
      %p304 = por %p302, %p303
      %p306 = scmp.ne.s32.totalorder %s291, %s305
      %p307 = scmp.eq.s32.totalorder %s40, 0
      %p308 = por %p306, %p307
      %s310 = sadd.s32 %s309, 1
      %p313 = scmp.eq.s32.totalorder %s34, 1
      %p314 = scmp.ne.s32.totalorder %s309, %s311
      %p315 = scmp.eq.s32.totalorder %s34, 0
      %p316 = por %p314, %p315
      %p317 = scmp.ne.s32.totalorder %s309, %s311
      %p318 = scmp.eq.s32.totalorder %s39, 1
      %p319 = por %p317, %p318
      %p320 = scmp.ne.s32.totalorder %s311, %s312
      %p321 = scmp.eq.s32.totalorder %s39, 0
      %p322 = por %p320, %p321
      %p323 = scmp.ne.s32.totalorder %s311, %s312
      %p324 = scmp.eq.s32.totalorder %s40, 1
      %p325 = por %p323, %p324
      %p327 = scmp.ne.s32.totalorder %s312, %s326
      %p328 = scmp.eq.s32.totalorder %s40, 0
      %p329 = por %p327, %p328
      %s331 = sadd.s32 %s330, 1
      %p334 = scmp.eq.s32.totalorder %s34, 1
      %p335 = scmp.ne.s32.totalorder %s330, %s332
      %p336 = scmp.eq.s32.totalorder %s34, 0
      %p337 = por %p335, %p336
      %p338 = scmp.ne.s32.totalorder %s330, %s332
      %p339 = scmp.eq.s32.totalorder %s39, 1
      %p340 = por %p338, %p339
      %p341 = scmp.ne.s32.totalorder %s332, %s333
      %p342 = scmp.eq.s32.totalorder %s39, 0
      %p343 = por %p341, %p342
      %p344 = scmp.ne.s32.totalorder %s332, %s333
      %p345 = scmp.eq.s32.totalorder %s40, 1
      %p346 = por %p344, %p345
      %p348 = scmp.ne.s32.totalorder %s333, %s347
      %p349 = scmp.eq.s32.totalorder %s40, 0
      %p350 = por %p348, %p349
      %s351 = ssub.s32 %s34, %s41
      %p352 = scmp.eq.s32.totalorder %s351, 0
      %s354 = sadd.s32 %s353, 1
      %s355 = scalar_select %p352, %s353, %s354
      %p358 = pneg %p352
      %p359 = scmp.eq.s32.totalorder %s34, 1
      %p360 = por %p358, %p359
      %p361 = scmp.ne.s32.totalorder %s353, %s356
      %p362 = scmp.eq.s32.totalorder %s34, 0
      %p363 = por %p361, %p362
      %p364 = scmp.ne.s32.totalorder %s353, %s356
      %p365 = scmp.eq.s32.totalorder %s39, 1
      %p366 = por %p364, %p365
      %p367 = scmp.ne.s32.totalorder %s356, %s357
      %p368 = scmp.eq.s32.totalorder %s39, 0
      %p369 = por %p367, %p368
      %p370 = scmp.ne.s32.totalorder %s356, %s357
      %p371 = scmp.eq.s32.totalorder %s40, 1
      %p372 = por %p370, %p371
      %p374 = scmp.ne.s32.totalorder %s357, %s373
      %p375 = scmp.eq.s32.totalorder %s40, 0
      %p376 = por %p374, %p375
      %p377 = scmp.le.s32.totalorder 1, %s34
      %p378 = scmp.lt.s32.totalorder %s34, 3
      %p379 = pnand %p377, %p378
      %p380 = pneg %p379
      // Predicated region
      $region9: #{tpu_custom_call.1} parent=5 // pred_check
        _
      $region10: #{tpu_custom_call.1} parent=5 // pred_check_branch
        %382 = sbr.rel (%p379) target = $region12
      $region11: #{tpu_custom_call.1} parent=5 // pred_region
        %s383 = ssub.s32 %s34, 1
        // Predicated region
        $region13: #{tpu_custom_call.1} parent=11 // pred_check
          %p384 = pneg %p133
        $region14: #{tpu_custom_call.1} parent=11 // pred_check_branch
          %386 = sbr.rel (%p384) target = $region16
        $region15: #{tpu_custom_call.1} parent=11 // pred_region
          %388 = vsyncadd [#allocation6], 0
          %s389 = sshll.u32 %s3, 4
          %s390 = int_to_ptr.hbm [resolvable:$true] %s389
          %s391 = sshll.u32 [#allocation7], 4
          %s392 = int_to_ptr.vmem [resolvable:$true] %s391
          %397 = dma.hbm_to_vmem [thread:$0]  %s390, 2048, %s392, [#allocation6], 128, 128, 8
        $region16: #{tpu_custom_call.1} parent=11 // pred_fallthru
          _
        // Predicated region
        $region17: #{tpu_custom_call.1} parent=11 // pred_check
          %p398 = pneg %p154
        $region18: #{tpu_custom_call.1} parent=11 // pred_check_branch
          %400 = sbr.rel (%p398) target = $region20
        $region19: #{tpu_custom_call.1} parent=11 // pred_region
          %402 = vsyncadd [#allocation9], 0
          %s403 = sshll.u32 %s4, 4
          %s404 = int_to_ptr.hbm [resolvable:$true] %s403
          %s405 = sshll.u32 [#allocation8], 4
          %s406 = int_to_ptr.vmem [resolvable:$true] %s405
          %411 = dma.hbm_to_vmem [thread:$0]  %s404, 4096, %s406, [#allocation9], 128, 128, 8
        $region20: #{tpu_custom_call.1} parent=11 // pred_fallthru
          _
        // Predicated region
        $region21: #{tpu_custom_call.1} parent=11 // pred_check
          %p412 = pneg %p175
        $region22: #{tpu_custom_call.1} parent=11 // pred_check_branch
          %414 = sbr.rel (%p412) target = $region24
        $region23: #{tpu_custom_call.1} parent=11 // pred_region
          %416 = vsyncadd [#allocation9], 0
          %s417 = sshll.u32 %s5, 4
          %s418 = int_to_ptr.hbm [resolvable:$true] %s417
          %s419 = sshll.u32 [#allocation10], 4
          %s420 = int_to_ptr.vmem [resolvable:$true] %s419
          %425 = dma.hbm_to_vmem [thread:$0]  %s418, 4096, %s420, [#allocation9], 128, 128, 8
        $region24: #{tpu_custom_call.1} parent=11 // pred_fallthru
          _
        // Predicated region
        $region25: #{tpu_custom_call.1} parent=11 // pred_check
          %p426 = pneg %p196
        $region26: #{tpu_custom_call.1} parent=11 // pred_check_branch
          %428 = sbr.rel (%p426) target = $region28
        $region27: #{tpu_custom_call.1} parent=11 // pred_region
          %430 = vsyncadd [#allocation12], 0
          %s431 = sshll.u32 %s6, 4
          %s432 = int_to_ptr.hbm [resolvable:$true] %s431
          %s433 = sshll.u32 [#allocation11], 4
          %s434 = int_to_ptr.vmem [resolvable:$true] %s433
          %439 = dma.hbm_to_vmem [thread:$0]  %s432, 40960, %s434, [#allocation12], 256, 256, 16
        $region28: #{tpu_custom_call.1} parent=11 // pred_fallthru
          _
        // Predicated region
        $region29: #{tpu_custom_call.1} parent=11 // pred_check
          %p440 = pneg %p217
        $region30: #{tpu_custom_call.1} parent=11 // pred_check_branch
          %442 = sbr.rel (%p440) target = $region32
        $region31: #{tpu_custom_call.1} parent=11 // pred_region
          %444 = vsyncadd [#allocation12], 0
          %s445 = sshll.u32 %s7, 4
          %s446 = int_to_ptr.hbm [resolvable:$true] %s445
          %s447 = sshll.u32 [#allocation13], 4
          %s448 = int_to_ptr.vmem [resolvable:$true] %s447
          %453 = dma.hbm_to_vmem [thread:$0]  %s446, 8192, %s448, [#allocation12], 128, 128, 8
        $region32: #{tpu_custom_call.1} parent=11 // pred_fallthru
          _
        // Predicated region
        $region33: #{tpu_custom_call.1} parent=11 // pred_check
          %p454 = pneg %p238
        $region34: #{tpu_custom_call.1} parent=11 // pred_check_branch
          %456 = sbr.rel (%p454) target = $region36
        $region35: #{tpu_custom_call.1} parent=11 // pred_region
          %458 = vsyncadd [#allocation15], 0
          %s459 = sshll.u32 %s8, 4
          %s460 = int_to_ptr.hbm [resolvable:$true] %s459
          %s461 = sshll.u32 [#allocation14], 4
          %s462 = int_to_ptr.vmem [resolvable:$true] %s461
          %467 = dma.hbm_to_vmem [thread:$0]  %s460, 2048, %s462, [#allocation15], 512, 512, 32
        $region36: #{tpu_custom_call.1} parent=11 // pred_fallthru
          _
        // Predicated region
        $region37: #{tpu_custom_call.1} parent=11 // pred_check
          %p468 = pneg %p259
        $region38: #{tpu_custom_call.1} parent=11 // pred_check_branch
          %470 = sbr.rel (%p468) target = $region40
        $region39: #{tpu_custom_call.1} parent=11 // pred_region
          %472 = vsyncadd [#allocation15], 0
          %s473 = sshll.u32 %s9, 4
          %s474 = int_to_ptr.hbm [resolvable:$true] %s473
          %s475 = sshll.u32 [#allocation16], 4
          %s476 = int_to_ptr.vmem [resolvable:$true] %s475
          %481 = dma.hbm_to_vmem [thread:$0]  %s474, 16384, %s476, [#allocation15], 512, 512, 32
        $region40: #{tpu_custom_call.1} parent=11 // pred_fallthru
          _
        // Predicated region
        $region41: #{tpu_custom_call.1} parent=11 // pred_check
          %p482 = pneg %p280
        $region42: #{tpu_custom_call.1} parent=11 // pred_check_branch
          %484 = sbr.rel (%p482) target = $region44
        $region43: #{tpu_custom_call.1} parent=11 // pred_region
          %486 = vsyncadd [#allocation18], 0
          %s487 = sshll.u32 %s10, 4
          %s488 = int_to_ptr.hbm [resolvable:$true] %s487
          %s489 = sshll.u32 [#allocation17], 4
          %s490 = int_to_ptr.vmem [resolvable:$true] %s489
          %495 = dma.hbm_to_vmem [thread:$0]  %s488, 16384, %s490, [#allocation18], 512, 512, 32
        $region44: #{tpu_custom_call.1} parent=11 // pred_fallthru
          _
        // Predicated region
        $region45: #{tpu_custom_call.1} parent=11 // pred_check
          %p496 = pneg %p301
        $region46: #{tpu_custom_call.1} parent=11 // pred_check_branch
          %498 = sbr.rel (%p496) target = $region48
        $region47: #{tpu_custom_call.1} parent=11 // pred_region
          %500 = vsyncadd [#allocation18], 0
          %s501 = sshll.u32 %s11, 4
          %s502 = int_to_ptr.hbm [resolvable:$true] %s501
          %s503 = sshll.u32 [#allocation19], 4
          %s504 = int_to_ptr.vmem [resolvable:$true] %s503
          %509 = dma.hbm_to_vmem [thread:$0]  %s502, 65536, %s504, [#allocation18], 512, 512, 32
        $region48: #{tpu_custom_call.1} parent=11 // pred_fallthru
          _
        // Predicated region
        $region49: #{tpu_custom_call.1} parent=11 // pred_check
          %p510 = pneg %p322
        $region50: #{tpu_custom_call.1} parent=11 // pred_check_branch
          %512 = sbr.rel (%p510) target = $region52
        $region51: #{tpu_custom_call.1} parent=11 // pred_region
          _
        $region52: #{tpu_custom_call.1} parent=11 // pred_fallthru
          _
        // Predicated region
        $region53: #{tpu_custom_call.1} parent=11 // pred_check
          %p513 = pneg %p343
        $region54: #{tpu_custom_call.1} parent=11 // pred_check_branch
          %515 = sbr.rel (%p513) target = $region56
        $region55: #{tpu_custom_call.1} parent=11 // pred_region
          %517 = vsyncadd [#allocation21], 0
          %s518 = sshll.u32 %s13, 4
          %s519 = int_to_ptr.hbm [resolvable:$true] %s518
          %s520 = sshll.u32 [#allocation20], 4
          %s521 = int_to_ptr.vmem [resolvable:$true] %s520
          %526 = dma.hbm_to_vmem [thread:$0]  %s519, 2048, %s521, [#allocation21], 1024, 1024, 64
        $region56: #{tpu_custom_call.1} parent=11 // pred_fallthru
          _
      $region12: #{tpu_custom_call.1} parent=5 // pred_fallthru
        _
      %p527 = scmp.lt.s32.totalorder %s34, 2
      // Predicated region
      $region57: #{tpu_custom_call.1} parent=5 // pred_check
        %p528 = pneg %p527
      $region58: #{tpu_custom_call.1} parent=5 // pred_check_branch
        %530 = sbr.rel (%p528) target = $region60
      $region59: #{tpu_custom_call.1} parent=5 // pred_region
        // Predicated region
        $region61: #{tpu_custom_call.1} parent=59 // pred_check
          %p531 = pneg %p54
        $region62: #{tpu_custom_call.1} parent=59 // pred_check_branch
          %533 = sbr.rel (%p531) target = $region64
        $region63: #{tpu_custom_call.1} parent=59 // pred_region
          %s534 = sand.u32 %s44, 1
          %s535 = scalar_lea.sflag [#allocation3], %s534
          %s536 = sand.u32 %s44, 1
          %s537 = smul.addr %s536, 8
          %s538 = scalar_lea.vmem [#allocation2], %s537
          %540 = vsyncadd %s535, 0
          %s541 = smul.addr %s34, 8
          %s542 = scalar_lea.hbm %s0, %s541
          %s544 = sshll.u32 %s542, 4
          %s545 = int_to_ptr.hbm [resolvable:$true] %s544
          %s546 = sshll.u32 %s538, 4
          %s547 = int_to_ptr.vmem [resolvable:$true] %s546
          %549 = dma.hbm_to_vmem [thread:$0]  %s545, 128, %s547, %s535
        $region64: #{tpu_custom_call.1} parent=59 // pred_fallthru
          _
        // Predicated region
        $region65: #{tpu_custom_call.1} parent=59 // pred_check
          %p550 = pneg %p80
        $region66: #{tpu_custom_call.1} parent=59 // pred_check_branch
          %552 = sbr.rel (%p550) target = $region68
        $region67: #{tpu_custom_call.1} parent=59 // pred_region
          %p553 = scmp.lt.s32.totalorder %s34, 1
          %s554 = scalar_select %p553, %s34, 1
          %s555 = smul.addr %s554, 8
          %s556 = scalar_lea.vmem %s1, %s555
        $region68: #{tpu_custom_call.1} parent=59 // pred_fallthru
          _
        // Predicated region
        $region69: #{tpu_custom_call.1} parent=59 // pred_check
          %p557 = pneg %p106
        $region70: #{tpu_custom_call.1} parent=59 // pred_check_branch
          %559 = sbr.rel (%p557) target = $region72
        $region71: #{tpu_custom_call.1} parent=59 // pred_region
          %s560 = sand.u32 %s34, 1
          %s561 = scalar_lea.sflag [#allocation6], %s560
          %s562 = sand.u32 %s96, 1
          %s563 = smul.addr %s562, 80
          %s564 = scalar_lea.vmem [#allocation5], %s563
          %566 = vsyncadd %s561, 0
          %s567 = smul.addr %s34, 10
          %s568 = smul.addr %s567, 8
          %s569 = scalar_lea.hbm %s2, %s568
          %s571 = sshll.u32 %s569, 4
          %s572 = int_to_ptr.hbm [resolvable:$true] %s571
          %s573 = sshll.u32 %s564, 4
          %s574 = int_to_ptr.vmem [resolvable:$true] %s573
          %576 = dma.hbm_to_vmem [thread:$0]  %s572, 1280, %s574, %s561
        $region72: #{tpu_custom_call.1} parent=59 // pred_fallthru
          _
      $region60: #{tpu_custom_call.1} parent=5 // pred_fallthru
        _
      %p577 = scmp.le.s32.totalorder 1, %s34
      %p578 = scmp.lt.s32.totalorder %s34, 3
      %p579 = pnand %p577, %p578
      %p580 = pneg %p579
      // Predicated region
      $region73: #{tpu_custom_call.1} parent=5 // pred_check
        _
      $region74: #{tpu_custom_call.1} parent=5 // pred_check_branch
        %582 = sbr.rel (%p579) target = $region76
      $region75: #{tpu_custom_call.1} parent=5 // pred_region
        %s583 = ssub.s32 %s34, 1
        %s584 = sand.u32 %s47, 1
        %s585 = scalar_lea.sflag [#allocation3], %s584
        %s586 = sand.u32 %s47, 1
        %s587 = smul.addr %s586, 8
        %s588 = scalar_lea.vmem [#allocation2], %s587
        // Predicated region
        $region77: #{tpu_custom_call.1} parent=75 // pred_check
          %p589 = pneg %p60
        $region78: #{tpu_custom_call.1} parent=75 // pred_check_branch
          %591 = sbr.rel (%p589) target = $region80
        $region79: #{tpu_custom_call.1} parent=75 // pred_region
          %593 = dma.done %s585, 128
        $region80: #{tpu_custom_call.1} parent=75 // pred_fallthru
          _
        %s594 = sand.u32 %s39, 1
        %s595 = scalar_lea.sflag [#allocation6], %s594
        %s596 = sand.u32 %s99, 1
        %s597 = smul.addr %s596, 80
        %s598 = scalar_lea.vmem [#allocation5], %s597
        // Predicated region
        $region81: #{tpu_custom_call.1} parent=75 // pred_check
          %p599 = pneg %p112
        $region82: #{tpu_custom_call.1} parent=75 // pred_check_branch
          %601 = sbr.rel (%p599) target = $region84
        $region83: #{tpu_custom_call.1} parent=75 // pred_region
          %603 = dma.done %s595, 1280
        $region84: #{tpu_custom_call.1} parent=75 // pred_fallthru
          _
        // Predicated region
        $region85: #{tpu_custom_call.1} parent=75 // pred_check
          %p604 = pneg %p133
        $region86: #{tpu_custom_call.1} parent=75 // pred_check_branch
          %606 = sbr.rel (%p604) target = $region88
        $region87: #{tpu_custom_call.1} parent=75 // pred_region
          %608 = dma.done [#allocation6], 2048
        $region88: #{tpu_custom_call.1} parent=75 // pred_fallthru
          _
        // Predicated region
        $region89: #{tpu_custom_call.1} parent=75 // pred_check
          %p609 = pneg %p154
        $region90: #{tpu_custom_call.1} parent=75 // pred_check_branch
          %611 = sbr.rel (%p609) target = $region92
        $region91: #{tpu_custom_call.1} parent=75 // pred_region
          %613 = dma.done [#allocation9], 4096
        $region92: #{tpu_custom_call.1} parent=75 // pred_fallthru
          _
        // Predicated region
        $region93: #{tpu_custom_call.1} parent=75 // pred_check
          %p614 = pneg %p175
        $region94: #{tpu_custom_call.1} parent=75 // pred_check_branch
          %616 = sbr.rel (%p614) target = $region96
        $region95: #{tpu_custom_call.1} parent=75 // pred_region
          %618 = dma.done [#allocation9], 4096
        $region96: #{tpu_custom_call.1} parent=75 // pred_fallthru
          _
        // Predicated region
        $region97: #{tpu_custom_call.1} parent=75 // pred_check
          %p619 = pneg %p196
        $region98: #{tpu_custom_call.1} parent=75 // pred_check_branch
          %621 = sbr.rel (%p619) target = $region100
        $region99: #{tpu_custom_call.1} parent=75 // pred_region
          %623 = dma.done [#allocation12], 40960
        $region100: #{tpu_custom_call.1} parent=75 // pred_fallthru
          _
        // Predicated region
        $region101: #{tpu_custom_call.1} parent=75 // pred_check
          %p624 = pneg %p217
        $region102: #{tpu_custom_call.1} parent=75 // pred_check_branch
          %626 = sbr.rel (%p624) target = $region104
        $region103: #{tpu_custom_call.1} parent=75 // pred_region
          %628 = dma.done [#allocation12], 8192
        $region104: #{tpu_custom_call.1} parent=75 // pred_fallthru
          _
        // Predicated region
        $region105: #{tpu_custom_call.1} parent=75 // pred_check
          %p629 = pneg %p238
        $region106: #{tpu_custom_call.1} parent=75 // pred_check_branch
          %631 = sbr.rel (%p629) target = $region108
        $region107: #{tpu_custom_call.1} parent=75 // pred_region
          %633 = dma.done [#allocation15], 2048
        $region108: #{tpu_custom_call.1} parent=75 // pred_fallthru
          _
        // Predicated region
        $region109: #{tpu_custom_call.1} parent=75 // pred_check
          %p634 = pneg %p259
        $region110: #{tpu_custom_call.1} parent=75 // pred_check_branch
          %636 = sbr.rel (%p634) target = $region112
        $region111: #{tpu_custom_call.1} parent=75 // pred_region
          %638 = dma.done [#allocation15], 16384
        $region112: #{tpu_custom_call.1} parent=75 // pred_fallthru
          _
        // Predicated region
        $region113: #{tpu_custom_call.1} parent=75 // pred_check
          %p639 = pneg %p280
        $region114: #{tpu_custom_call.1} parent=75 // pred_check_branch
          %641 = sbr.rel (%p639) target = $region116
        $region115: #{tpu_custom_call.1} parent=75 // pred_region
          %643 = dma.done [#allocation18], 16384
        $region116: #{tpu_custom_call.1} parent=75 // pred_fallthru
          _
        // Predicated region
        $region117: #{tpu_custom_call.1} parent=75 // pred_check
          %p644 = pneg %p301
        $region118: #{tpu_custom_call.1} parent=75 // pred_check_branch
          %646 = sbr.rel (%p644) target = $region120
        $region119: #{tpu_custom_call.1} parent=75 // pred_region
          %648 = dma.done [#allocation18], 65536
        $region120: #{tpu_custom_call.1} parent=75 // pred_fallthru
          _
        // Predicated region
        $region121: #{tpu_custom_call.1} parent=75 // pred_check
          %p649 = pneg %p343
        $region122: #{tpu_custom_call.1} parent=75 // pred_check_branch
          %651 = sbr.rel (%p649) target = $region124
        $region123: #{tpu_custom_call.1} parent=75 // pred_region
          %653 = dma.done [#allocation21], 2048
        $region124: #{tpu_custom_call.1} parent=75 // pred_fallthru
          _
        %s654 = sand.u32 %s47, 1
        %s655 = scalar_lea.sflag [#allocation3], %s654
        %s656 = sand.u32 %s47, 1
        %s657 = smul.addr %s656, 8
        %s658 = scalar_lea.vmem [#allocation2], %s657
        %p659 = pneg %p60
        %p660 = pneg %p57
        %p661 = scmp.lt.s32.totalorder %s39, 1
        %s662 = scalar_select %p661, %s39, 1
        %s663 = smul.addr %s662, 8
        %s664 = scalar_lea.vmem %s1, %s663
        %p665 = pneg %p86
        %p666 = pneg %p83
        %s667 = sand.u32 %s39, 1
        %s668 = scalar_lea.sflag [#allocation6], %s667
        %s669 = sand.u32 %s99, 1
        %s670 = smul.addr %s669, 80
        %s671 = scalar_lea.vmem [#allocation5], %s670
        %p672 = pneg %p112
        %p673 = pneg %p109
        %p674 = pneg %p133
        %p675 = pneg %p130
        %p676 = pneg %p154
        %p677 = pneg %p151
        %p678 = pneg %p175
        %p679 = pneg %p172
        %p680 = pneg %p196
        %p681 = pneg %p193
        %p682 = pneg %p217
        %p683 = pneg %p214
        %p684 = pneg %p238
        %p685 = pneg %p235
        %p686 = pneg %p259
        %p687 = pneg %p256
        %p688 = pneg %p280
        %p689 = pneg %p277
        %p690 = pneg %p301
        %p691 = pneg %p298
        %p692 = pneg %p322
        %p693 = pneg %p319
        %p694 = pneg %p343
        %p695 = pneg %p340
        %p696 = pneg %p369
        %p697 = pneg %p366
        %s698 = sand.u32 %s356, 1
        %s699 = scalar_lea.sflag [#allocation4], %s698
        %s700 = sand.u32 %s356, 1
        %s701 = smul.addr %s700, 8
        %s702 = scalar_lea.vmem [#allocation22], %s701
        %p703 = scmp.lt.s32.totalorder %s39, 1
        %s704 = scalar_select %p703, %s39, 1
        %s705 = smul.addr %s704, 8
        %s706 = scalar_lea.vmem %s1, %s705
        %v708 = vld [vmem:[%s706] sm:$0xff]
        %v709 = vlaneseq
        %v710 = vand.u32 %v709, 127
        %711 = vset.pattern.permute.xlu0 0
        %712 = vperm.xlu0 %711, %v708
        %v713 = vpop.permute.xlu0 %712
        %vm714 = vcmp.eq.s32.totalorder %v713, %v710
        %v715 = vsel %vm714, 1, 0
        %v716 = vcvt.s32.f32 %v715
        %v717 = vpack.c.bf16 %v716, %v716
        %v718 = vld [vmem:[#allocation7] sm:$0xff]
        %v719 = vld [vmem:[#allocation7 + $0x8] sm:$0xff]
        %v720 = vld [vmem:[#allocation7 + $0x10] sm:$0xff]
        %v721 = vld [vmem:[#allocation7 + $0x18] sm:$0xff]
        %v722 = vld [vmem:[#allocation7 + $0x20] sm:$0xff]
        %v723 = vld [vmem:[#allocation7 + $0x28] sm:$0xff]
        %v724 = vld [vmem:[#allocation7 + $0x30] sm:$0xff]
        %v725 = vld [vmem:[#allocation7 + $0x38] sm:$0xff]
        %v726 = vld [vmem:[#allocation7 + $0x40] sm:$0xff]
        %v727 = vld [vmem:[#allocation7 + $0x48] sm:$0xff]
        %v728 = vld [vmem:[#allocation7 + $0x50] sm:$0xff]
        %v729 = vld [vmem:[#allocation7 + $0x58] sm:$0xff]
        %v730 = vld [vmem:[#allocation7 + $0x60] sm:$0xff]
        %v731 = vld [vmem:[#allocation7 + $0x68] sm:$0xff]
        %v732 = vld [vmem:[#allocation7 + $0x70] sm:$0xff]
        %v733 = vld [vmem:[#allocation7 + $0x78] sm:$0xff]
        %v750 = vunpack.c.l.b16 %v718
        %v751 = vunpack.c.h.b16 %v718
        %v752 = vunpack.c.l.b16 %v719
        %v753 = vunpack.c.h.b16 %v719
        %v754 = vunpack.c.l.b16 %v720
        %v755 = vunpack.c.h.b16 %v720
        %v756 = vunpack.c.l.b16 %v721
        %v757 = vunpack.c.h.b16 %v721
        %v758 = vunpack.c.l.b16 %v722
        %v759 = vunpack.c.h.b16 %v722
        %v760 = vunpack.c.l.b16 %v723
        %v761 = vunpack.c.h.b16 %v723
        %v762 = vunpack.c.l.b16 %v724
        %v763 = vunpack.c.h.b16 %v724
        %v764 = vunpack.c.l.b16 %v725
        %v765 = vunpack.c.h.b16 %v725
        %v766 = vunpack.c.l.b16 %v726
        %v767 = vunpack.c.h.b16 %v726
        %v768 = vunpack.c.l.b16 %v727
        %v769 = vunpack.c.h.b16 %v727
        %v770 = vunpack.c.l.b16 %v728
        %v771 = vunpack.c.h.b16 %v728
        %v772 = vunpack.c.l.b16 %v729
        %v773 = vunpack.c.h.b16 %v729
        %v774 = vunpack.c.l.b16 %v730
        %v775 = vunpack.c.h.b16 %v730
        %v776 = vunpack.c.l.b16 %v731
        %v777 = vunpack.c.h.b16 %v731
        %v778 = vunpack.c.l.b16 %v732
        %v779 = vunpack.c.h.b16 %v732
        %v780 = vunpack.c.l.b16 %v733
        %v781 = vunpack.c.h.b16 %v733
        %v782 = vpack.c.b16 %v752, %v750
        %v783 = vpack.c.b16 %v753, %v751
        %v784 = vpack.c.b16 %v756, %v754
        %v785 = vpack.c.b16 %v757, %v755
        %v786 = vpack.c.b16 %v760, %v758
        %v787 = vpack.c.b16 %v761, %v759
        %v788 = vpack.c.b16 %v764, %v762
        %v789 = vpack.c.b16 %v765, %v763
        %v790 = vpack.c.b16 %v768, %v766
        %v791 = vpack.c.b16 %v769, %v767
        %v792 = vpack.c.b16 %v772, %v770
        %v793 = vpack.c.b16 %v773, %v771
        %v794 = vpack.c.b16 %v776, %v774
        %v795 = vpack.c.b16 %v777, %v775
        %v796 = vpack.c.b16 %v780, %v778
        %v797 = vpack.c.b16 %v781, %v779
        %814 = vmatpush.bf16.msra.mxu0 %v796
        %815 = vmatpush.bf16.msra.mxu0 %v794
        %816 = vmatpush.bf16.msra.mxu0 %v792
        %817 = vmatpush.bf16.msra.mxu0 %v790
        %818 = vmatpush.bf16.msra.mxu0 %v788
        %819 = vmatpush.bf16.msra.mxu0 %v786
        %820 = vmatpush.bf16.msra.mxu0 %v784
        %821 = vmatpush.bf16.msra.mxu0 %v782
        %822 = vmatmul.bf16.gmra.mxu0 %v717
        %v823 = vpop.f32.mrf.mxu0
        %v824 = vadd.f32 0.0, %v823
        %v825 = vpop.f32.mrf.mxu0
        %826 = vdwg.mxu0
        %827 = vmatpush.bf16.msra.mxu0 %v797
        %828 = vmatpush.bf16.msra.mxu0 %v795
        %829 = vmatpush.bf16.msra.mxu0 %v793
        %830 = vmatpush.bf16.msra.mxu0 %v791
        %831 = vmatpush.bf16.msra.mxu0 %v789
        %832 = vmatpush.bf16.msra.mxu0 %v787
        %833 = vmatpush.bf16.msra.mxu0 %v785
        %834 = vmatpush.bf16.msra.mxu0 %v783
        %835 = vmatmul.bf16.gmra.mxu0 %v717
        %v836 = vpop.f32.mrf.mxu0
        %v837 = vadd.f32 0.0, %v836
        %v838 = vpop.f32.mrf.mxu0
        %839 = vdwg.mxu0
        %v840 = vpack.c.bf16 %v824, %v824
        %v841 = vpack.c.bf16 %v837, %v837
        %v842 = vld [vmem:[#allocation8] sm:$0xff]
        %v843 = vld [vmem:[#allocation8 + $0x8] sm:$0xff]
        %v844 = vld [vmem:[#allocation8 + $0x10] sm:$0xff]
        %v845 = vld [vmem:[#allocation8 + $0x18] sm:$0xff]
        %v846 = vld [vmem:[#allocation8 + $0x20] sm:$0xff]
        %v847 = vld [vmem:[#allocation8 + $0x28] sm:$0xff]
        %v848 = vld [vmem:[#allocation8 + $0x30] sm:$0xff]
        %v849 = vld [vmem:[#allocation8 + $0x38] sm:$0xff]
        %v850 = vld [vmem:[#allocation8 + $0x40] sm:$0xff]
        %v851 = vld [vmem:[#allocation8 + $0x48] sm:$0xff]
        %v852 = vld [vmem:[#allocation8 + $0x50] sm:$0xff]
        %v853 = vld [vmem:[#allocation8 + $0x58] sm:$0xff]
        %v854 = vld [vmem:[#allocation8 + $0x60] sm:$0xff]
        %v855 = vld [vmem:[#allocation8 + $0x68] sm:$0xff]
        %v856 = vld [vmem:[#allocation8 + $0x70] sm:$0xff]
        %v857 = vld [vmem:[#allocation8 + $0x78] sm:$0xff]
        %v858 = vld [vmem:[#allocation8 + $0x80] sm:$0xff]
        %v859 = vld [vmem:[#allocation8 + $0x88] sm:$0xff]
        %v860 = vld [vmem:[#allocation8 + $0x90] sm:$0xff]
        %v861 = vld [vmem:[#allocation8 + $0x98] sm:$0xff]
        %v862 = vld [vmem:[#allocation8 + $0xa0] sm:$0xff]
        %v863 = vld [vmem:[#allocation8 + $0xa8] sm:$0xff]
        %v864 = vld [vmem:[#allocation8 + $0xb0] sm:$0xff]
        %v865 = vld [vmem:[#allocation8 + $0xb8] sm:$0xff]
        %v866 = vld [vmem:[#allocation8 + $0xc0] sm:$0xff]
        %v867 = vld [vmem:[#allocation8 + $0xc8] sm:$0xff]
        %v868 = vld [vmem:[#allocation8 + $0xd0] sm:$0xff]
        %v869 = vld [vmem:[#allocation8 + $0xd8] sm:$0xff]
        %v870 = vld [vmem:[#allocation8 + $0xe0] sm:$0xff]
        %v871 = vld [vmem:[#allocation8 + $0xe8] sm:$0xff]
        %v872 = vld [vmem:[#allocation8 + $0xf0] sm:$0xff]
        %v873 = vld [vmem:[#allocation8 + $0xf8] sm:$0xff]
        %v874 = vld [vmem:[#allocation20] ss:$8 sm:$0x3]
        %v876 = vperm.slane %v874, 0
        %v877 = vperm.slane %v874, 1
        %v912 = vunpack.c.l.b16 %v842
        %v913 = vunpack.c.h.b16 %v842
        %v914 = vunpack.c.l.b16 %v843
        %v915 = vunpack.c.h.b16 %v843
        %v916 = vunpack.c.l.b16 %v844
        %v917 = vunpack.c.h.b16 %v844
        %v918 = vunpack.c.l.b16 %v845
        %v919 = vunpack.c.h.b16 %v845
        %v920 = vunpack.c.l.b16 %v846
        %v921 = vunpack.c.h.b16 %v846
        %v922 = vunpack.c.l.b16 %v847
        %v923 = vunpack.c.h.b16 %v847
        %v924 = vunpack.c.l.b16 %v848
        %v925 = vunpack.c.h.b16 %v848
        %v926 = vunpack.c.l.b16 %v849
        %v927 = vunpack.c.h.b16 %v849
        %v928 = vunpack.c.l.b16 %v850
        %v929 = vunpack.c.h.b16 %v850
        %v930 = vunpack.c.l.b16 %v851
        %v931 = vunpack.c.h.b16 %v851
        %v932 = vunpack.c.l.b16 %v852
        %v933 = vunpack.c.h.b16 %v852
        %v934 = vunpack.c.l.b16 %v853
        %v935 = vunpack.c.h.b16 %v853
        %v936 = vunpack.c.l.b16 %v854
        %v937 = vunpack.c.h.b16 %v854
        %v938 = vunpack.c.l.b16 %v855
        %v939 = vunpack.c.h.b16 %v855
        %v940 = vunpack.c.l.b16 %v856
        %v941 = vunpack.c.h.b16 %v856
        %v942 = vunpack.c.l.b16 %v857
        %v943 = vunpack.c.h.b16 %v857
        %v944 = vunpack.c.l.b16 %v858
        %v945 = vunpack.c.h.b16 %v858
        %v946 = vunpack.c.l.b16 %v859
        %v947 = vunpack.c.h.b16 %v859
        %v948 = vunpack.c.l.b16 %v860
        %v949 = vunpack.c.h.b16 %v860
        %v950 = vunpack.c.l.b16 %v861
        %v951 = vunpack.c.h.b16 %v861
        %v952 = vunpack.c.l.b16 %v862
        %v953 = vunpack.c.h.b16 %v862
        %v954 = vunpack.c.l.b16 %v863
        %v955 = vunpack.c.h.b16 %v863
        %v956 = vunpack.c.l.b16 %v864
        %v957 = vunpack.c.h.b16 %v864
        %v958 = vunpack.c.l.b16 %v865
        %v959 = vunpack.c.h.b16 %v865
        %v960 = vunpack.c.l.b16 %v866
        %v961 = vunpack.c.h.b16 %v866
        %v962 = vunpack.c.l.b16 %v867
        %v963 = vunpack.c.h.b16 %v867
        %v964 = vunpack.c.l.b16 %v868
        %v965 = vunpack.c.h.b16 %v868
        %v966 = vunpack.c.l.b16 %v869
        %v967 = vunpack.c.h.b16 %v869
        %v968 = vunpack.c.l.b16 %v870
        %v969 = vunpack.c.h.b16 %v870
        %v970 = vunpack.c.l.b16 %v871
        %v971 = vunpack.c.h.b16 %v871
        %v972 = vunpack.c.l.b16 %v872
        %v973 = vunpack.c.h.b16 %v872
        %v974 = vunpack.c.l.b16 %v873
        %v975 = vunpack.c.h.b16 %v873
        %v976 = vpack.c.b16 %v914, %v912
        %v977 = vpack.c.b16 %v915, %v913
        %v978 = vpack.c.b16 %v918, %v916
        %v979 = vpack.c.b16 %v919, %v917
        %v980 = vpack.c.b16 %v922, %v920
        %v981 = vpack.c.b16 %v923, %v921
        %v982 = vpack.c.b16 %v926, %v924
        %v983 = vpack.c.b16 %v927, %v925
        %v984 = vpack.c.b16 %v930, %v928
        %v985 = vpack.c.b16 %v931, %v929
        %v986 = vpack.c.b16 %v934, %v932
        %v987 = vpack.c.b16 %v935, %v933
        %v988 = vpack.c.b16 %v938, %v936
        %v989 = vpack.c.b16 %v939, %v937
        %v990 = vpack.c.b16 %v942, %v940
        %v991 = vpack.c.b16 %v943, %v941
        %v992 = vpack.c.b16 %v946, %v944
        %v993 = vpack.c.b16 %v947, %v945
        %v994 = vpack.c.b16 %v950, %v948
        %v995 = vpack.c.b16 %v951, %v949
        %v996 = vpack.c.b16 %v954, %v952
        %v997 = vpack.c.b16 %v955, %v953
        %v998 = vpack.c.b16 %v958, %v956
        %v999 = vpack.c.b16 %v959, %v957
        %v1000 = vpack.c.b16 %v962, %v960
        %v1001 = vpack.c.b16 %v963, %v961
        %v1002 = vpack.c.b16 %v966, %v964
        %v1003 = vpack.c.b16 %v967, %v965
        %v1004 = vpack.c.b16 %v970, %v968
        %v1005 = vpack.c.b16 %v971, %v969
        %v1006 = vpack.c.b16 %v974, %v972
        %v1007 = vpack.c.b16 %v975, %v973
        %1040 = vmatpush.bf16.msra.mxu0 %v990
        %1041 = vmatpush.bf16.msra.mxu0 %v988
        %1042 = vmatpush.bf16.msra.mxu0 %v986
        %1043 = vmatpush.bf16.msra.mxu0 %v984
        %1044 = vmatpush.bf16.msra.mxu0 %v982
        %1045 = vmatpush.bf16.msra.mxu0 %v980
        %1046 = vmatpush.bf16.msra.mxu0 %v978
        %1047 = vmatpush.bf16.msra.mxu0 %v976
        %1048 = vmatmul.bf16.gmra.mxu0 %v840
        %v1049 = vpop.f32.mrf.mxu0
        %v1050 = vadd.f32 %v876, %v1049
        %v1051 = vpop.f32.mrf.mxu0
        %1052 = vdwg.mxu0
        %1053 = vmatpush.bf16.msra.mxu0 %v1006
        %1054 = vmatpush.bf16.msra.mxu0 %v1004
        %1055 = vmatpush.bf16.msra.mxu0 %v1002
        %1056 = vmatpush.bf16.msra.mxu0 %v1000
        %1057 = vmatpush.bf16.msra.mxu0 %v998
        %1058 = vmatpush.bf16.msra.mxu0 %v996
        %1059 = vmatpush.bf16.msra.mxu0 %v994
        %1060 = vmatpush.bf16.msra.mxu0 %v992
        %1061 = vmatmul.bf16.gmra.mxu0 %v841
        %v1062 = vpop.f32.mrf.mxu0
        %v1063 = vadd.f32 %v1050, %v1062
        %v1064 = vpop.f32.mrf.mxu0
        %1065 = vdwg.mxu0
        %1066 = vmatpush.bf16.msra.mxu0 %v991
        %1067 = vmatpush.bf16.msra.mxu0 %v989
        %1068 = vmatpush.bf16.msra.mxu0 %v987
        %1069 = vmatpush.bf16.msra.mxu0 %v985
        %1070 = vmatpush.bf16.msra.mxu0 %v983
        %1071 = vmatpush.bf16.msra.mxu0 %v981
        %1072 = vmatpush.bf16.msra.mxu0 %v979
        %1073 = vmatpush.bf16.msra.mxu0 %v977
        %1074 = vmatmul.bf16.gmra.mxu0 %v840
        %v1075 = vpop.f32.mrf.mxu0
        %v1076 = vadd.f32 %v877, %v1075
        %v1077 = vpop.f32.mrf.mxu0
        %1078 = vdwg.mxu0
        %1079 = vmatpush.bf16.msra.mxu0 %v1007
        %1080 = vmatpush.bf16.msra.mxu0 %v1005
        %1081 = vmatpush.bf16.msra.mxu0 %v1003
        %1082 = vmatpush.bf16.msra.mxu0 %v1001
        %1083 = vmatpush.bf16.msra.mxu0 %v999
        %1084 = vmatpush.bf16.msra.mxu0 %v997
        %1085 = vmatpush.bf16.msra.mxu0 %v995
        %1086 = vmatpush.bf16.msra.mxu0 %v993
        %1087 = vmatmul.bf16.gmra.mxu0 %v841
        %v1088 = vpop.f32.mrf.mxu0
        %v1089 = vadd.f32 %v1076, %v1088
        %v1090 = vpop.f32.mrf.mxu0
        %1091 = vdwg.mxu0
        %v1092 = vxor.u32 %v1063, 2147483648
        %v1093 = vxor.u32 %v1089, 2147483648
        %v1094 = vmul.f32 %v1092, 1.442695
        %v1095 = vpow.pop %v1094
        %v1096 = vmul.f32 %v1093, 1.442695
        %v1097 = vpow.pop %v1096
        %v1098 = vadd.f32 %v1095, 1.0
        %v1099 = vadd.f32 %v1097, 1.0
        %v1100 = vrcp.pop %v1098
        %v1101 = vmul.f32 %v1098, %v1100
        %v1102 = vsub.f32 1.0, %v1101
        %v1103 = vmul.f32 %v1100, %v1102
        %v1104 = vadd.f32 %v1100, %v1103
        %vm1105 = vweird.f32 %v1098
        %vm1106 = vweird.f32 %v1100
        %vm1107 = vmor %vm1105, %vm1106
        %v1108 = vsel %vm1107, %v1100, %v1104
        %v1109 = vand.u32 2147483647, %v1098
        %vm1110 = vcmp.eq.f32.partialorder %v1109, 8.507059e+37
        %v1111 = vand.u32 %v1098, 2147483648
        %v1112 = vor.u32 1.1754944e-38, %v1111
        %v1113 = vsel %vm1110, %v1112, %v1108
        %v1114 = vmul.f32 1.0, %v1113
        %v1115 = vrcp.pop %v1099
        %v1116 = vmul.f32 %v1099, %v1115
        %v1117 = vsub.f32 1.0, %v1116
        %v1118 = vmul.f32 %v1115, %v1117
        %v1119 = vadd.f32 %v1115, %v1118
        %vm1120 = vweird.f32 %v1099
        %vm1121 = vweird.f32 %v1115
        %vm1122 = vmor %vm1120, %vm1121
        %v1123 = vsel %vm1122, %v1115, %v1119
        %v1124 = vand.u32 2147483647, %v1099
        %vm1125 = vcmp.eq.f32.partialorder %v1124, 8.507059e+37
        %v1126 = vand.u32 %v1099, 2147483648
        %v1127 = vor.u32 1.1754944e-38, %v1126
        %v1128 = vsel %vm1125, %v1127, %v1123
        %v1129 = vmul.f32 1.0, %v1128
        %v1130 = vmul.f32 %v1063, %v1114
        %v1131 = vmul.f32 %v1089, %v1129
        %v1132 = vpack.c.bf16 %v1130, %v1130
        %v1133 = vpack.c.bf16 %v1131, %v1131
        %v1134 = vld [vmem:[#allocation10] sm:$0xff]
        %v1135 = vld [vmem:[#allocation10 + $0x8] sm:$0xff]
        %v1136 = vld [vmem:[#allocation10 + $0x10] sm:$0xff]
        %v1137 = vld [vmem:[#allocation10 + $0x18] sm:$0xff]
        %v1138 = vld [vmem:[#allocation10 + $0x20] sm:$0xff]
        %v1139 = vld [vmem:[#allocation10 + $0x28] sm:$0xff]
        %v1140 = vld [vmem:[#allocation10 + $0x30] sm:$0xff]
        %v1141 = vld [vmem:[#allocation10 + $0x38] sm:$0xff]
        %v1142 = vld [vmem:[#allocation10 + $0x40] sm:$0xff]
        %v1143 = vld [vmem:[#allocation10 + $0x48] sm:$0xff]
        %v1144 = vld [vmem:[#allocation10 + $0x50] sm:$0xff]
        %v1145 = vld [vmem:[#allocation10 + $0x58] sm:$0xff]
        %v1146 = vld [vmem:[#allocation10 + $0x60] sm:$0xff]
        %v1147 = vld [vmem:[#allocation10 + $0x68] sm:$0xff]
        %v1148 = vld [vmem:[#allocation10 + $0x70] sm:$0xff]
        %v1149 = vld [vmem:[#allocation10 + $0x78] sm:$0xff]
        %v1150 = vld [vmem:[#allocation10 + $0x80] sm:$0xff]
        %v1151 = vld [vmem:[#allocation10 + $0x88] sm:$0xff]
        %v1152 = vld [vmem:[#allocation10 + $0x90] sm:$0xff]
        %v1153 = vld [vmem:[#allocation10 + $0x98] sm:$0xff]
        %v1154 = vld [vmem:[#allocation10 + $0xa0] sm:$0xff]
        %v1155 = vld [vmem:[#allocation10 + $0xa8] sm:$0xff]
        %v1156 = vld [vmem:[#allocation10 + $0xb0] sm:$0xff]
        %v1157 = vld [vmem:[#allocation10 + $0xb8] sm:$0xff]
        %v1158 = vld [vmem:[#allocation10 + $0xc0] sm:$0xff]
        %v1159 = vld [vmem:[#allocation10 + $0xc8] sm:$0xff]
        %v1160 = vld [vmem:[#allocation10 + $0xd0] sm:$0xff]
        %v1161 = vld [vmem:[#allocation10 + $0xd8] sm:$0xff]
        %v1162 = vld [vmem:[#allocation10 + $0xe0] sm:$0xff]
        %v1163 = vld [vmem:[#allocation10 + $0xe8] sm:$0xff]
        %v1164 = vld [vmem:[#allocation10 + $0xf0] sm:$0xff]
        %v1165 = vld [vmem:[#allocation10 + $0xf8] sm:$0xff]
        %s1166 = scalar_lea.vmem [#allocation20], 1
        %v1167 = vld [vmem:[%s1166] ss:$8 sm:$0x3]
        %v1169 = vperm.slane %v1167, 0
        %v1170 = vperm.slane %v1167, 1
        %v1205 = vunpack.c.l.b16 %v1134
        %v1206 = vunpack.c.h.b16 %v1134
        %v1207 = vunpack.c.l.b16 %v1135
        %v1208 = vunpack.c.h.b16 %v1135
        %v1209 = vunpack.c.l.b16 %v1136
        %v1210 = vunpack.c.h.b16 %v1136
        %v1211 = vunpack.c.l.b16 %v1137
        %v1212 = vunpack.c.h.b16 %v1137
        %v1213 = vunpack.c.l.b16 %v1138
        %v1214 = vunpack.c.h.b16 %v1138
        %v1215 = vunpack.c.l.b16 %v1139
        %v1216 = vunpack.c.h.b16 %v1139
        %v1217 = vunpack.c.l.b16 %v1140
        %v1218 = vunpack.c.h.b16 %v1140
        %v1219 = vunpack.c.l.b16 %v1141
        %v1220 = vunpack.c.h.b16 %v1141
        %v1221 = vunpack.c.l.b16 %v1142
        %v1222 = vunpack.c.h.b16 %v1142
        %v1223 = vunpack.c.l.b16 %v1143
        %v1224 = vunpack.c.h.b16 %v1143
        %v1225 = vunpack.c.l.b16 %v1144
        %v1226 = vunpack.c.h.b16 %v1144
        %v1227 = vunpack.c.l.b16 %v1145
        %v1228 = vunpack.c.h.b16 %v1145
        %v1229 = vunpack.c.l.b16 %v1146
        %v1230 = vunpack.c.h.b16 %v1146
        %v1231 = vunpack.c.l.b16 %v1147
        %v1232 = vunpack.c.h.b16 %v1147
        %v1233 = vunpack.c.l.b16 %v1148
        %v1234 = vunpack.c.h.b16 %v1148
        %v1235 = vunpack.c.l.b16 %v1149
        %v1236 = vunpack.c.h.b16 %v1149
        %v1237 = vunpack.c.l.b16 %v1150
        %v1238 = vunpack.c.h.b16 %v1150
        %v1239 = vunpack.c.l.b16 %v1151
        %v1240 = vunpack.c.h.b16 %v1151
        %v1241 = vunpack.c.l.b16 %v1152
        %v1242 = vunpack.c.h.b16 %v1152
        %v1243 = vunpack.c.l.b16 %v1153
        %v1244 = vunpack.c.h.b16 %v1153
        %v1245 = vunpack.c.l.b16 %v1154
        %v1246 = vunpack.c.h.b16 %v1154
        %v1247 = vunpack.c.l.b16 %v1155
        %v1248 = vunpack.c.h.b16 %v1155
        %v1249 = vunpack.c.l.b16 %v1156
        %v1250 = vunpack.c.h.b16 %v1156
        %v1251 = vunpack.c.l.b16 %v1157
        %v1252 = vunpack.c.h.b16 %v1157
        %v1253 = vunpack.c.l.b16 %v1158
        %v1254 = vunpack.c.h.b16 %v1158
        %v1255 = vunpack.c.l.b16 %v1159
        %v1256 = vunpack.c.h.b16 %v1159
        %v1257 = vunpack.c.l.b16 %v1160
        %v1258 = vunpack.c.h.b16 %v1160
        %v1259 = vunpack.c.l.b16 %v1161
        %v1260 = vunpack.c.h.b16 %v1161
        %v1261 = vunpack.c.l.b16 %v1162
        %v1262 = vunpack.c.h.b16 %v1162
        %v1263 = vunpack.c.l.b16 %v1163
        %v1264 = vunpack.c.h.b16 %v1163
        %v1265 = vunpack.c.l.b16 %v1164
        %v1266 = vunpack.c.h.b16 %v1164
        %v1267 = vunpack.c.l.b16 %v1165
        %v1268 = vunpack.c.h.b16 %v1165
        %v1269 = vpack.c.b16 %v1207, %v1205
        %v1270 = vpack.c.b16 %v1208, %v1206
        %v1271 = vpack.c.b16 %v1211, %v1209
        %v1272 = vpack.c.b16 %v1212, %v1210
        %v1273 = vpack.c.b16 %v1215, %v1213
        %v1274 = vpack.c.b16 %v1216, %v1214
        %v1275 = vpack.c.b16 %v1219, %v1217
        %v1276 = vpack.c.b16 %v1220, %v1218
        %v1277 = vpack.c.b16 %v1223, %v1221
        %v1278 = vpack.c.b16 %v1224, %v1222
        %v1279 = vpack.c.b16 %v1227, %v1225
        %v1280 = vpack.c.b16 %v1228, %v1226
        %v1281 = vpack.c.b16 %v1231, %v1229
        %v1282 = vpack.c.b16 %v1232, %v1230
        %v1283 = vpack.c.b16 %v1235, %v1233
        %v1284 = vpack.c.b16 %v1236, %v1234
        %v1285 = vpack.c.b16 %v1239, %v1237
        %v1286 = vpack.c.b16 %v1240, %v1238
        %v1287 = vpack.c.b16 %v1243, %v1241
        %v1288 = vpack.c.b16 %v1244, %v1242
        %v1289 = vpack.c.b16 %v1247, %v1245
        %v1290 = vpack.c.b16 %v1248, %v1246
        %v1291 = vpack.c.b16 %v1251, %v1249
        %v1292 = vpack.c.b16 %v1252, %v1250
        %v1293 = vpack.c.b16 %v1255, %v1253
        %v1294 = vpack.c.b16 %v1256, %v1254
        %v1295 = vpack.c.b16 %v1259, %v1257
        %v1296 = vpack.c.b16 %v1260, %v1258
        %v1297 = vpack.c.b16 %v1263, %v1261
        %v1298 = vpack.c.b16 %v1264, %v1262
        %v1299 = vpack.c.b16 %v1267, %v1265
        %v1300 = vpack.c.b16 %v1268, %v1266
        %1333 = vmatpush.bf16.msra.mxu0 %v1283
        %1334 = vmatpush.bf16.msra.mxu0 %v1281
        %1335 = vmatpush.bf16.msra.mxu0 %v1279
        %1336 = vmatpush.bf16.msra.mxu0 %v1277
        %1337 = vmatpush.bf16.msra.mxu0 %v1275
        %1338 = vmatpush.bf16.msra.mxu0 %v1273
        %1339 = vmatpush.bf16.msra.mxu0 %v1271
        %1340 = vmatpush.bf16.msra.mxu0 %v1269
        %1341 = vmatmul.bf16.gmra.mxu0 %v1132
        %v1342 = vpop.f32.mrf.mxu0
        %v1343 = vadd.f32 %v1169, %v1342
        %v1344 = vpop.f32.mrf.mxu0
        %1345 = vdwg.mxu0
        %1346 = vmatpush.bf16.msra.mxu0 %v1299
        %1347 = vmatpush.bf16.msra.mxu0 %v1297
        %1348 = vmatpush.bf16.msra.mxu0 %v1295
        %1349 = vmatpush.bf16.msra.mxu0 %v1293
        %1350 = vmatpush.bf16.msra.mxu0 %v1291
        %1351 = vmatpush.bf16.msra.mxu0 %v1289
        %1352 = vmatpush.bf16.msra.mxu0 %v1287
        %1353 = vmatpush.bf16.msra.mxu0 %v1285
        %1354 = vmatmul.bf16.gmra.mxu0 %v1133
        %v1355 = vpop.f32.mrf.mxu0
        %v1356 = vadd.f32 %v1343, %v1355
        %v1357 = vpop.f32.mrf.mxu0
        %1358 = vdwg.mxu0
        %1359 = vmatpush.bf16.msra.mxu0 %v1284
        %1360 = vmatpush.bf16.msra.mxu0 %v1282
        %1361 = vmatpush.bf16.msra.mxu0 %v1280
        %1362 = vmatpush.bf16.msra.mxu0 %v1278
        %1363 = vmatpush.bf16.msra.mxu0 %v1276
        %1364 = vmatpush.bf16.msra.mxu0 %v1274
        %1365 = vmatpush.bf16.msra.mxu0 %v1272
        %1366 = vmatpush.bf16.msra.mxu0 %v1270
        %1367 = vmatmul.bf16.gmra.mxu0 %v1132
        %v1368 = vpop.f32.mrf.mxu0
        %v1369 = vadd.f32 %v1170, %v1368
        %v1370 = vpop.f32.mrf.mxu0
        %1371 = vdwg.mxu0
        %1372 = vmatpush.bf16.msra.mxu0 %v1300
        %1373 = vmatpush.bf16.msra.mxu0 %v1298
        %1374 = vmatpush.bf16.msra.mxu0 %v1296
        %1375 = vmatpush.bf16.msra.mxu0 %v1294
        %1376 = vmatpush.bf16.msra.mxu0 %v1292
        %1377 = vmatpush.bf16.msra.mxu0 %v1290
        %1378 = vmatpush.bf16.msra.mxu0 %v1288
        %1379 = vmatpush.bf16.msra.mxu0 %v1286
        %1380 = vmatmul.bf16.gmra.mxu0 %v1133
        %v1381 = vpop.f32.mrf.mxu0
        %v1382 = vadd.f32 %v1369, %v1381
        %v1383 = vpop.f32.mrf.mxu0
        %1384 = vdwg.mxu0
        %v1385 = vld [vmem:[%s598] sm:$0xff]
        %v1386 = vld [vmem:[%s598 + $0x8] sm:$0xff]
        %v1387 = vld [vmem:[%s598 + $0x10] sm:$0xff]
        %v1388 = vld [vmem:[%s598 + $0x18] sm:$0xff]
        %v1389 = vld [vmem:[%s598 + $0x20] sm:$0xff]
        %v1390 = vld [vmem:[%s598 + $0x28] sm:$0xff]
        %v1391 = vld [vmem:[%s598 + $0x30] sm:$0xff]
        %v1392 = vld [vmem:[%s598 + $0x38] sm:$0xff]
        %v1393 = vld [vmem:[%s598 + $0x40] sm:$0xff]
        %v1394 = vld [vmem:[%s598 + $0x48] sm:$0xff]
        %v1395 = vpack.c.bf16 %v1385, %v1385
        %v1396 = vpack.c.bf16 %v1386, %v1386
        %v1397 = vpack.c.bf16 %v1387, %v1387
        %v1398 = vpack.c.bf16 %v1388, %v1388
        %v1399 = vpack.c.bf16 %v1389, %v1389
        %v1400 = vpack.c.bf16 %v1390, %v1390
        %v1401 = vpack.c.bf16 %v1391, %v1391
        %v1402 = vpack.c.bf16 %v1392, %v1392
        %v1403 = vpack.c.bf16 %v1393, %v1393
        %v1404 = vpack.c.bf16 %v1394, %v1394
        %v1405 = vld [vmem:[#allocation11] sm:$0xff]
        %v1406 = vld [vmem:[#allocation11 + $0x8] sm:$0xff]
        %v1407 = vld [vmem:[#allocation11 + $0x10] sm:$0xff]
        %v1408 = vld [vmem:[#allocation11 + $0x18] sm:$0xff]
        %v1409 = vld [vmem:[#allocation11 + $0x20] sm:$0xff]
        %v1410 = vld [vmem:[#allocation11 + $0x28] sm:$0xff]
        %v1411 = vld [vmem:[#allocation11 + $0x30] sm:$0xff]
        %v1412 = vld [vmem:[#allocation11 + $0x38] sm:$0xff]
        %v1413 = vld [vmem:[#allocation11 + $0x40] sm:$0xff]
        %v1414 = vld [vmem:[#allocation11 + $0x48] sm:$0xff]
        %v1415 = vld [vmem:[#allocation11 + $0x50] sm:$0xff]
        %v1416 = vld [vmem:[#allocation11 + $0x58] sm:$0xff]
        %v1417 = vld [vmem:[#allocation11 + $0x60] sm:$0xff]
        %v1418 = vld [vmem:[#allocation11 + $0x68] sm:$0xff]
        %v1419 = vld [vmem:[#allocation11 + $0x70] sm:$0xff]
        %v1420 = vld [vmem:[#allocation11 + $0x78] sm:$0xff]
        %v1421 = vld [vmem:[#allocation11 + $0x80] sm:$0xff]
        %v1422 = vld [vmem:[#allocation11 + $0x88] sm:$0xff]
        %v1423 = vld [vmem:[#allocation11 + $0x90] sm:$0xff]
        %v1424 = vld [vmem:[#allocation11 + $0x98] sm:$0xff]
        %v1425 = vld [vmem:[#allocation11 + $0xa0] sm:$0xff]
        %v1426 = vld [vmem:[#allocation11 + $0xa8] sm:$0xff]
        %v1427 = vld [vmem:[#allocation11 + $0xb0] sm:$0xff]
        %v1428 = vld [vmem:[#allocation11 + $0xb8] sm:$0xff]
        %v1429 = vld [vmem:[#allocation11 + $0xc0] sm:$0xff]
        %v1430 = vld [vmem:[#allocation11 + $0xc8] sm:$0xff]
        %v1431 = vld [vmem:[#allocation11 + $0xd0] sm:$0xff]
        %v1432 = vld [vmem:[#allocation11 + $0xd8] sm:$0xff]
        %v1433 = vld [vmem:[#allocation11 + $0xe0] sm:$0xff]
        %v1434 = vld [vmem:[#allocation11 + $0xe8] sm:$0xff]
        %v1435 = vld [vmem:[#allocation11 + $0xf0] sm:$0xff]
        %v1436 = vld [vmem:[#allocation11 + $0xf8] sm:$0xff]
        %v1437 = vld [vmem:[#allocation11 + $0x100] sm:$0xff]
        %v1438 = vld [vmem:[#allocation11 + $0x108] sm:$0xff]
        %v1439 = vld [vmem:[#allocation11 + $0x110] sm:$0xff]
        %v1440 = vld [vmem:[#allocation11 + $0x118] sm:$0xff]
        %v1441 = vld [vmem:[#allocation11 + $0x120] sm:$0xff]
        %v1442 = vld [vmem:[#allocation11 + $0x128] sm:$0xff]
        %v1443 = vld [vmem:[#allocation11 + $0x130] sm:$0xff]
        %v1444 = vld [vmem:[#allocation11 + $0x138] sm:$0xff]
        %v1445 = vld [vmem:[#allocation11 + $0x140] sm:$0xff]
        %v1446 = vld [vmem:[#allocation11 + $0x148] sm:$0xff]
        %v1447 = vld [vmem:[#allocation11 + $0x150] sm:$0xff]
        %v1448 = vld [vmem:[#allocation11 + $0x158] sm:$0xff]
        %v1449 = vld [vmem:[#allocation11 + $0x160] sm:$0xff]
        %v1450 = vld [vmem:[#allocation11 + $0x168] sm:$0xff]
        %v1451 = vld [vmem:[#allocation11 + $0x170] sm:$0xff]
        %v1452 = vld [vmem:[#allocation11 + $0x178] sm:$0xff]
        %v1453 = vld [vmem:[#allocation11 + $0x180] sm:$0xff]
        %v1454 = vld [vmem:[#allocation11 + $0x188] sm:$0xff]
        %v1455 = vld [vmem:[#allocation11 + $0x190] sm:$0xff]
        %v1456 = vld [vmem:[#allocation11 + $0x198] sm:$0xff]
        %v1457 = vld [vmem:[#allocation11 + $0x1a0] sm:$0xff]
        %v1458 = vld [vmem:[#allocation11 + $0x1a8] sm:$0xff]
        %v1459 = vld [vmem:[#allocation11 + $0x1b0] sm:$0xff]
        %v1460 = vld [vmem:[#allocation11 + $0x1b8] sm:$0xff]
        %v1461 = vld [vmem:[#allocation11 + $0x1c0] sm:$0xff]
        %v1462 = vld [vmem:[#allocation11 + $0x1c8] sm:$0xff]
        %v1463 = vld [vmem:[#allocation11 + $0x1d0] sm:$0xff]
        %v1464 = vld [vmem:[#allocation11 + $0x1d8] sm:$0xff]
        %v1465 = vld [vmem:[#allocation11 + $0x1e0] sm:$0xff]
        %v1466 = vld [vmem:[#allocation11 + $0x1e8] sm:$0xff]
        %v1467 = vld [vmem:[#allocation11 + $0x1f0] sm:$0xff]
        %v1468 = vld [vmem:[#allocation11 + $0x1f8] sm:$0xff]
        %v1469 = vld [vmem:[#allocation11 + $0x200] sm:$0xff]
        %v1470 = vld [vmem:[#allocation11 + $0x208] sm:$0xff]
        %v1471 = vld [vmem:[#allocation11 + $0x210] sm:$0xff]
        %v1472 = vld [vmem:[#allocation11 + $0x218] sm:$0xff]
        %v1473 = vld [vmem:[#allocation11 + $0x220] sm:$0xff]
        %v1474 = vld [vmem:[#allocation11 + $0x228] sm:$0xff]
        %v1475 = vld [vmem:[#allocation11 + $0x230] sm:$0xff]
        %v1476 = vld [vmem:[#allocation11 + $0x238] sm:$0xff]
        %v1477 = vld [vmem:[#allocation11 + $0x240] sm:$0xff]
        %v1478 = vld [vmem:[#allocation11 + $0x248] sm:$0xff]
        %v1479 = vld [vmem:[#allocation11 + $0x250] sm:$0xff]
        %v1480 = vld [vmem:[#allocation11 + $0x258] sm:$0xff]
        %v1481 = vld [vmem:[#allocation11 + $0x260] sm:$0xff]
        %v1482 = vld [vmem:[#allocation11 + $0x268] sm:$0xff]
        %v1483 = vld [vmem:[#allocation11 + $0x270] sm:$0xff]
        %v1484 = vld [vmem:[#allocation11 + $0x278] sm:$0xff]
        %v1485 = vld [vmem:[#allocation11 + $0x280] sm:$0xff]
        %v1486 = vld [vmem:[#allocation11 + $0x288] sm:$0xff]
        %v1487 = vld [vmem:[#allocation11 + $0x290] sm:$0xff]
        %v1488 = vld [vmem:[#allocation11 + $0x298] sm:$0xff]
        %v1489 = vld [vmem:[#allocation11 + $0x2a0] sm:$0xff]
        %v1490 = vld [vmem:[#allocation11 + $0x2a8] sm:$0xff]
        %v1491 = vld [vmem:[#allocation11 + $0x2b0] sm:$0xff]
        %v1492 = vld [vmem:[#allocation11 + $0x2b8] sm:$0xff]
        %v1493 = vld [vmem:[#allocation11 + $0x2c0] sm:$0xff]
        %v1494 = vld [vmem:[#allocation11 + $0x2c8] sm:$0xff]
        %v1495 = vld [vmem:[#allocation11 + $0x2d0] sm:$0xff]
        %v1496 = vld [vmem:[#allocation11 + $0x2d8] sm:$0xff]
        %v1497 = vld [vmem:[#allocation11 + $0x2e0] sm:$0xff]
        %v1498 = vld [vmem:[#allocation11 + $0x2e8] sm:$0xff]
        %v1499 = vld [vmem:[#allocation11 + $0x2f0] sm:$0xff]
        %v1500 = vld [vmem:[#allocation11 + $0x2f8] sm:$0xff]
        %v1501 = vld [vmem:[#allocation11 + $0x300] sm:$0xff]
        %v1502 = vld [vmem:[#allocation11 + $0x308] sm:$0xff]
        %v1503 = vld [vmem:[#allocation11 + $0x310] sm:$0xff]
        %v1504 = vld [vmem:[#allocation11 + $0x318] sm:$0xff]
        %v1505 = vld [vmem:[#allocation11 + $0x320] sm:$0xff]
        %v1506 = vld [vmem:[#allocation11 + $0x328] sm:$0xff]
        %v1507 = vld [vmem:[#allocation11 + $0x330] sm:$0xff]
        %v1508 = vld [vmem:[#allocation11 + $0x338] sm:$0xff]
        %v1509 = vld [vmem:[#allocation11 + $0x340] sm:$0xff]
        %v1510 = vld [vmem:[#allocation11 + $0x348] sm:$0xff]
        %v1511 = vld [vmem:[#allocation11 + $0x350] sm:$0xff]
        %v1512 = vld [vmem:[#allocation11 + $0x358] sm:$0xff]
        %v1513 = vld [vmem:[#allocation11 + $0x360] sm:$0xff]
        %v1514 = vld [vmem:[#allocation11 + $0x368] sm:$0xff]
        %v1515 = vld [vmem:[#allocation11 + $0x370] sm:$0xff]
        %v1516 = vld [vmem:[#allocation11 + $0x378] sm:$0xff]
        %v1517 = vld [vmem:[#allocation11 + $0x380] sm:$0xff]
        %v1518 = vld [vmem:[#allocation11 + $0x388] sm:$0xff]
        %v1519 = vld [vmem:[#allocation11 + $0x390] sm:$0xff]
        %v1520 = vld [vmem:[#allocation11 + $0x398] sm:$0xff]
        %v1521 = vld [vmem:[#allocation11 + $0x3a0] sm:$0xff]
        %v1522 = vld [vmem:[#allocation11 + $0x3a8] sm:$0xff]
        %v1523 = vld [vmem:[#allocation11 + $0x3b0] sm:$0xff]
        %v1524 = vld [vmem:[#allocation11 + $0x3b8] sm:$0xff]
        %v1525 = vld [vmem:[#allocation11 + $0x3c0] sm:$0xff]
        %v1526 = vld [vmem:[#allocation11 + $0x3c8] sm:$0xff]
        %v1527 = vld [vmem:[#allocation11 + $0x3d0] sm:$0xff]
        %v1528 = vld [vmem:[#allocation11 + $0x3d8] sm:$0xff]
        %v1529 = vld [vmem:[#allocation11 + $0x3e0] sm:$0xff]
        %v1530 = vld [vmem:[#allocation11 + $0x3e8] sm:$0xff]
        %v1531 = vld [vmem:[#allocation11 + $0x3f0] sm:$0xff]
        %v1532 = vld [vmem:[#allocation11 + $0x3f8] sm:$0xff]
        %v1533 = vld [vmem:[#allocation11 + $0x400] sm:$0xff]
        %v1534 = vld [vmem:[#allocation11 + $0x408] sm:$0xff]
        %v1535 = vld [vmem:[#allocation11 + $0x410] sm:$0xff]
        %v1536 = vld [vmem:[#allocation11 + $0x418] sm:$0xff]
        %v1537 = vld [vmem:[#allocation11 + $0x420] sm:$0xff]
        %v1538 = vld [vmem:[#allocation11 + $0x428] sm:$0xff]
        %v1539 = vld [vmem:[#allocation11 + $0x430] sm:$0xff]
        %v1540 = vld [vmem:[#allocation11 + $0x438] sm:$0xff]
        %v1541 = vld [vmem:[#allocation11 + $0x440] sm:$0xff]
        %v1542 = vld [vmem:[#allocation11 + $0x448] sm:$0xff]
        %v1543 = vld [vmem:[#allocation11 + $0x450] sm:$0xff]
        %v1544 = vld [vmem:[#allocation11 + $0x458] sm:$0xff]
        %v1545 = vld [vmem:[#allocation11 + $0x460] sm:$0xff]
        %v1546 = vld [vmem:[#allocation11 + $0x468] sm:$0xff]
        %v1547 = vld [vmem:[#allocation11 + $0x470] sm:$0xff]
        %v1548 = vld [vmem:[#allocation11 + $0x478] sm:$0xff]
        %v1549 = vld [vmem:[#allocation11 + $0x480] sm:$0xff]
        %v1550 = vld [vmem:[#allocation11 + $0x488] sm:$0xff]
        %v1551 = vld [vmem:[#allocation11 + $0x490] sm:$0xff]
        %v1552 = vld [vmem:[#allocation11 + $0x498] sm:$0xff]
        %v1553 = vld [vmem:[#allocation11 + $0x4a0] sm:$0xff]
        %v1554 = vld [vmem:[#allocation11 + $0x4a8] sm:$0xff]
        %v1555 = vld [vmem:[#allocation11 + $0x4b0] sm:$0xff]
        %v1556 = vld [vmem:[#allocation11 + $0x4b8] sm:$0xff]
        %v1557 = vld [vmem:[#allocation11 + $0x4c0] sm:$0xff]
        %v1558 = vld [vmem:[#allocation11 + $0x4c8] sm:$0xff]
        %v1559 = vld [vmem:[#allocation11 + $0x4d0] sm:$0xff]
        %v1560 = vld [vmem:[#allocation11 + $0x4d8] sm:$0xff]
        %v1561 = vld [vmem:[#allocation11 + $0x4e0] sm:$0xff]
        %v1562 = vld [vmem:[#allocation11 + $0x4e8] sm:$0xff]
        %v1563 = vld [vmem:[#allocation11 + $0x4f0] sm:$0xff]
        %v1564 = vld [vmem:[#allocation11 + $0x4f8] sm:$0xff]
        %v1565 = vld [vmem:[#allocation11 + $0x500] sm:$0xff]
        %v1566 = vld [vmem:[#allocation11 + $0x508] sm:$0xff]
        %v1567 = vld [vmem:[#allocation11 + $0x510] sm:$0xff]
        %v1568 = vld [vmem:[#allocation11 + $0x518] sm:$0xff]
        %v1569 = vld [vmem:[#allocation11 + $0x520] sm:$0xff]
        %v1570 = vld [vmem:[#allocation11 + $0x528] sm:$0xff]
        %v1571 = vld [vmem:[#allocation11 + $0x530] sm:$0xff]
        %v1572 = vld [vmem:[#allocation11 + $0x538] sm:$0xff]
        %v1573 = vld [vmem:[#allocation11 + $0x540] sm:$0xff]
        %v1574 = vld [vmem:[#allocation11 + $0x548] sm:$0xff]
        %v1575 = vld [vmem:[#allocation11 + $0x550] sm:$0xff]
        %v1576 = vld [vmem:[#allocation11 + $0x558] sm:$0xff]
        %v1577 = vld [vmem:[#allocation11 + $0x560] sm:$0xff]
        %v1578 = vld [vmem:[#allocation11 + $0x568] sm:$0xff]
        %v1579 = vld [vmem:[#allocation11 + $0x570] sm:$0xff]
        %v1580 = vld [vmem:[#allocation11 + $0x578] sm:$0xff]
        %v1581 = vld [vmem:[#allocation11 + $0x580] sm:$0xff]
        %v1582 = vld [vmem:[#allocation11 + $0x588] sm:$0xff]
        %v1583 = vld [vmem:[#allocation11 + $0x590] sm:$0xff]
        %v1584 = vld [vmem:[#allocation11 + $0x598] sm:$0xff]
        %v1585 = vld [vmem:[#allocation11 + $0x5a0] sm:$0xff]
        %v1586 = vld [vmem:[#allocation11 + $0x5a8] sm:$0xff]
        %v1587 = vld [vmem:[#allocation11 + $0x5b0] sm:$0xff]
        %v1588 = vld [vmem:[#allocation11 + $0x5b8] sm:$0xff]
        %v1589 = vld [vmem:[#allocation11 + $0x5c0] sm:$0xff]
        %v1590 = vld [vmem:[#allocation11 + $0x5c8] sm:$0xff]
        %v1591 = vld [vmem:[#allocation11 + $0x5d0] sm:$0xff]
        %v1592 = vld [vmem:[#allocation11 + $0x5d8] sm:$0xff]
        %v1593 = vld [vmem:[#allocation11 + $0x5e0] sm:$0xff]
        %v1594 = vld [vmem:[#allocation11 + $0x5e8] sm:$0xff]
        %v1595 = vld [vmem:[#allocation11 + $0x5f0] sm:$0xff]
        %v1596 = vld [vmem:[#allocation11 + $0x5f8] sm:$0xff]
        %v1597 = vld [vmem:[#allocation11 + $0x600] sm:$0xff]
        %v1598 = vld [vmem:[#allocation11 + $0x608] sm:$0xff]
        %v1599 = vld [vmem:[#allocation11 + $0x610] sm:$0xff]
        %v1600 = vld [vmem:[#allocation11 + $0x618] sm:$0xff]
        %v1601 = vld [vmem:[#allocation11 + $0x620] sm:$0xff]
        %v1602 = vld [vmem:[#allocation11 + $0x628] sm:$0xff]
        %v1603 = vld [vmem:[#allocation11 + $0x630] sm:$0xff]
        %v1604 = vld [vmem:[#allocation11 + $0x638] sm:$0xff]
        %v1605 = vld [vmem:[#allocation11 + $0x640] sm:$0xff]
        %v1606 = vld [vmem:[#allocation11 + $0x648] sm:$0xff]
        %v1607 = vld [vmem:[#allocation11 + $0x650] sm:$0xff]
        %v1608 = vld [vmem:[#allocation11 + $0x658] sm:$0xff]
        %v1609 = vld [vmem:[#allocation11 + $0x660] sm:$0xff]
        %v1610 = vld [vmem:[#allocation11 + $0x668] sm:$0xff]
        %v1611 = vld [vmem:[#allocation11 + $0x670] sm:$0xff]
        %v1612 = vld [vmem:[#allocation11 + $0x678] sm:$0xff]
        %v1613 = vld [vmem:[#allocation11 + $0x680] sm:$0xff]
        %v1614 = vld [vmem:[#allocation11 + $0x688] sm:$0xff]
        %v1615 = vld [vmem:[#allocation11 + $0x690] sm:$0xff]
        %v1616 = vld [vmem:[#allocation11 + $0x698] sm:$0xff]
        %v1617 = vld [vmem:[#allocation11 + $0x6a0] sm:$0xff]
        %v1618 = vld [vmem:[#allocation11 + $0x6a8] sm:$0xff]
        %v1619 = vld [vmem:[#allocation11 + $0x6b0] sm:$0xff]
        %v1620 = vld [vmem:[#allocation11 + $0x6b8] sm:$0xff]
        %v1621 = vld [vmem:[#allocation11 + $0x6c0] sm:$0xff]
        %v1622 = vld [vmem:[#allocation11 + $0x6c8] sm:$0xff]
        %v1623 = vld [vmem:[#allocation11 + $0x6d0] sm:$0xff]
        %v1624 = vld [vmem:[#allocation11 + $0x6d8] sm:$0xff]
        %v1625 = vld [vmem:[#allocation11 + $0x6e0] sm:$0xff]
        %v1626 = vld [vmem:[#allocation11 + $0x6e8] sm:$0xff]
        %v1627 = vld [vmem:[#allocation11 + $0x6f0] sm:$0xff]
        %v1628 = vld [vmem:[#allocation11 + $0x6f8] sm:$0xff]
        %v1629 = vld [vmem:[#allocation11 + $0x700] sm:$0xff]
        %v1630 = vld [vmem:[#allocation11 + $0x708] sm:$0xff]
        %v1631 = vld [vmem:[#allocation11 + $0x710] sm:$0xff]
        %v1632 = vld [vmem:[#allocation11 + $0x718] sm:$0xff]
        %v1633 = vld [vmem:[#allocation11 + $0x720] sm:$0xff]
        %v1634 = vld [vmem:[#allocation11 + $0x728] sm:$0xff]
        %v1635 = vld [vmem:[#allocation11 + $0x730] sm:$0xff]
        %v1636 = vld [vmem:[#allocation11 + $0x738] sm:$0xff]
        %v1637 = vld [vmem:[#allocation11 + $0x740] sm:$0xff]
        %v1638 = vld [vmem:[#allocation11 + $0x748] sm:$0xff]
        %v1639 = vld [vmem:[#allocation11 + $0x750] sm:$0xff]
        %v1640 = vld [vmem:[#allocation11 + $0x758] sm:$0xff]
        %v1641 = vld [vmem:[#allocation11 + $0x760] sm:$0xff]
        %v1642 = vld [vmem:[#allocation11 + $0x768] sm:$0xff]
        %v1643 = vld [vmem:[#allocation11 + $0x770] sm:$0xff]
        %v1644 = vld [vmem:[#allocation11 + $0x778] sm:$0xff]
        %v1645 = vld [vmem:[#allocation11 + $0x780] sm:$0xff]
        %v1646 = vld [vmem:[#allocation11 + $0x788] sm:$0xff]
        %v1647 = vld [vmem:[#allocation11 + $0x790] sm:$0xff]
        %v1648 = vld [vmem:[#allocation11 + $0x798] sm:$0xff]
        %v1649 = vld [vmem:[#allocation11 + $0x7a0] sm:$0xff]
        %v1650 = vld [vmem:[#allocation11 + $0x7a8] sm:$0xff]
        %v1651 = vld [vmem:[#allocation11 + $0x7b0] sm:$0xff]
        %v1652 = vld [vmem:[#allocation11 + $0x7b8] sm:$0xff]
        %v1653 = vld [vmem:[#allocation11 + $0x7c0] sm:$0xff]
        %v1654 = vld [vmem:[#allocation11 + $0x7c8] sm:$0xff]
        %v1655 = vld [vmem:[#allocation11 + $0x7d0] sm:$0xff]
        %v1656 = vld [vmem:[#allocation11 + $0x7d8] sm:$0xff]
        %v1657 = vld [vmem:[#allocation11 + $0x7e0] sm:$0xff]
        %v1658 = vld [vmem:[#allocation11 + $0x7e8] sm:$0xff]
        %v1659 = vld [vmem:[#allocation11 + $0x7f0] sm:$0xff]
        %v1660 = vld [vmem:[#allocation11 + $0x7f8] sm:$0xff]
        %v1661 = vld [vmem:[#allocation11 + $0x800] sm:$0xff]
        %v1662 = vld [vmem:[#allocation11 + $0x808] sm:$0xff]
        %v1663 = vld [vmem:[#allocation11 + $0x810] sm:$0xff]
        %v1664 = vld [vmem:[#allocation11 + $0x818] sm:$0xff]
        %v1665 = vld [vmem:[#allocation11 + $0x820] sm:$0xff]
        %v1666 = vld [vmem:[#allocation11 + $0x828] sm:$0xff]
        %v1667 = vld [vmem:[#allocation11 + $0x830] sm:$0xff]
        %v1668 = vld [vmem:[#allocation11 + $0x838] sm:$0xff]
        %v1669 = vld [vmem:[#allocation11 + $0x840] sm:$0xff]
        %v1670 = vld [vmem:[#allocation11 + $0x848] sm:$0xff]
        %v1671 = vld [vmem:[#allocation11 + $0x850] sm:$0xff]
        %v1672 = vld [vmem:[#allocation11 + $0x858] sm:$0xff]
        %v1673 = vld [vmem:[#allocation11 + $0x860] sm:$0xff]
        %v1674 = vld [vmem:[#allocation11 + $0x868] sm:$0xff]
        %v1675 = vld [vmem:[#allocation11 + $0x870] sm:$0xff]
        %v1676 = vld [vmem:[#allocation11 + $0x878] sm:$0xff]
        %v1677 = vld [vmem:[#allocation11 + $0x880] sm:$0xff]
        %v1678 = vld [vmem:[#allocation11 + $0x888] sm:$0xff]
        %v1679 = vld [vmem:[#allocation11 + $0x890] sm:$0xff]
        %v1680 = vld [vmem:[#allocation11 + $0x898] sm:$0xff]
        %v1681 = vld [vmem:[#allocation11 + $0x8a0] sm:$0xff]
        %v1682 = vld [vmem:[#allocation11 + $0x8a8] sm:$0xff]
        %v1683 = vld [vmem:[#allocation11 + $0x8b0] sm:$0xff]
        %v1684 = vld [vmem:[#allocation11 + $0x8b8] sm:$0xff]
        %v1685 = vld [vmem:[#allocation11 + $0x8c0] sm:$0xff]
        %v1686 = vld [vmem:[#allocation11 + $0x8c8] sm:$0xff]
        %v1687 = vld [vmem:[#allocation11 + $0x8d0] sm:$0xff]
        %v1688 = vld [vmem:[#allocation11 + $0x8d8] sm:$0xff]
        %v1689 = vld [vmem:[#allocation11 + $0x8e0] sm:$0xff]
        %v1690 = vld [vmem:[#allocation11 + $0x8e8] sm:$0xff]
        %v1691 = vld [vmem:[#allocation11 + $0x8f0] sm:$0xff]
        %v1692 = vld [vmem:[#allocation11 + $0x8f8] sm:$0xff]
        %v1693 = vld [vmem:[#allocation11 + $0x900] sm:$0xff]
        %v1694 = vld [vmem:[#allocation11 + $0x908] sm:$0xff]
        %v1695 = vld [vmem:[#allocation11 + $0x910] sm:$0xff]
        %v1696 = vld [vmem:[#allocation11 + $0x918] sm:$0xff]
        %v1697 = vld [vmem:[#allocation11 + $0x920] sm:$0xff]
        %v1698 = vld [vmem:[#allocation11 + $0x928] sm:$0xff]
        %v1699 = vld [vmem:[#allocation11 + $0x930] sm:$0xff]
        %v1700 = vld [vmem:[#allocation11 + $0x938] sm:$0xff]
        %v1701 = vld [vmem:[#allocation11 + $0x940] sm:$0xff]
        %v1702 = vld [vmem:[#allocation11 + $0x948] sm:$0xff]
        %v1703 = vld [vmem:[#allocation11 + $0x950] sm:$0xff]
        %v1704 = vld [vmem:[#allocation11 + $0x958] sm:$0xff]
        %v1705 = vld [vmem:[#allocation11 + $0x960] sm:$0xff]
        %v1706 = vld [vmem:[#allocation11 + $0x968] sm:$0xff]
        %v1707 = vld [vmem:[#allocation11 + $0x970] sm:$0xff]
        %v1708 = vld [vmem:[#allocation11 + $0x978] sm:$0xff]
        %v1709 = vld [vmem:[#allocation11 + $0x980] sm:$0xff]
        %v1710 = vld [vmem:[#allocation11 + $0x988] sm:$0xff]
        %v1711 = vld [vmem:[#allocation11 + $0x990] sm:$0xff]
        %v1712 = vld [vmem:[#allocation11 + $0x998] sm:$0xff]
        %v1713 = vld [vmem:[#allocation11 + $0x9a0] sm:$0xff]
        %v1714 = vld [vmem:[#allocation11 + $0x9a8] sm:$0xff]
        %v1715 = vld [vmem:[#allocation11 + $0x9b0] sm:$0xff]
        %v1716 = vld [vmem:[#allocation11 + $0x9b8] sm:$0xff]
        %v1717 = vld [vmem:[#allocation11 + $0x9c0] sm:$0xff]
        %v1718 = vld [vmem:[#allocation11 + $0x9c8] sm:$0xff]
        %v1719 = vld [vmem:[#allocation11 + $0x9d0] sm:$0xff]
        %v1720 = vld [vmem:[#allocation11 + $0x9d8] sm:$0xff]
        %v1721 = vld [vmem:[#allocation11 + $0x9e0] sm:$0xff]
        %v1722 = vld [vmem:[#allocation11 + $0x9e8] sm:$0xff]
        %v1723 = vld [vmem:[#allocation11 + $0x9f0] sm:$0xff]
        %v1724 = vld [vmem:[#allocation11 + $0x9f8] sm:$0xff]
        %s1725 = scalar_lea.vmem [#allocation20], 2
        %v1726 = vld [vmem:[%s1725] ss:$8 sm:$0xf]
        %v1728 = vperm.slane %v1726, 0
        %v1729 = vperm.slane %v1726, 1
        %v1730 = vperm.slane %v1726, 2
        %v1731 = vperm.slane %v1726, 3
        %v2056 = vunpack.c.l.b16 %v1405
        %v2057 = vunpack.c.h.b16 %v1405
        %v2058 = vunpack.c.l.b16 %v1406
        %v2059 = vunpack.c.h.b16 %v1406
        %v2060 = vunpack.c.l.b16 %v1407
        %v2061 = vunpack.c.h.b16 %v1407
        %v2062 = vunpack.c.l.b16 %v1408
        %v2063 = vunpack.c.h.b16 %v1408
        %v2064 = vunpack.c.l.b16 %v1409
        %v2065 = vunpack.c.h.b16 %v1409
        %v2066 = vunpack.c.l.b16 %v1410
        %v2067 = vunpack.c.h.b16 %v1410
        %v2068 = vunpack.c.l.b16 %v1411
        %v2069 = vunpack.c.h.b16 %v1411
        %v2070 = vunpack.c.l.b16 %v1412
        %v2071 = vunpack.c.h.b16 %v1412
        %v2072 = vunpack.c.l.b16 %v1413
        %v2073 = vunpack.c.h.b16 %v1413
        %v2074 = vunpack.c.l.b16 %v1414
        %v2075 = vunpack.c.h.b16 %v1414
        %v2076 = vunpack.c.l.b16 %v1415
        %v2077 = vunpack.c.h.b16 %v1415
        %v2078 = vunpack.c.l.b16 %v1416
        %v2079 = vunpack.c.h.b16 %v1416
        %v2080 = vunpack.c.l.b16 %v1417
        %v2081 = vunpack.c.h.b16 %v1417
        %v2082 = vunpack.c.l.b16 %v1418
        %v2083 = vunpack.c.h.b16 %v1418
        %v2084 = vunpack.c.l.b16 %v1419
        %v2085 = vunpack.c.h.b16 %v1419
        %v2086 = vunpack.c.l.b16 %v1420
        %v2087 = vunpack.c.h.b16 %v1420
        %v2088 = vunpack.c.l.b16 %v1421
        %v2089 = vunpack.c.h.b16 %v1421
        %v2090 = vunpack.c.l.b16 %v1422
        %v2091 = vunpack.c.h.b16 %v1422
        %v2092 = vunpack.c.l.b16 %v1423
        %v2093 = vunpack.c.h.b16 %v1423
        %v2094 = vunpack.c.l.b16 %v1424
        %v2095 = vunpack.c.h.b16 %v1424
        %v2096 = vunpack.c.l.b16 %v1425
        %v2097 = vunpack.c.h.b16 %v1425
        %v2098 = vunpack.c.l.b16 %v1426
        %v2099 = vunpack.c.h.b16 %v1426
        %v2100 = vunpack.c.l.b16 %v1427
        %v2101 = vunpack.c.h.b16 %v1427
        %v2102 = vunpack.c.l.b16 %v1428
        %v2103 = vunpack.c.h.b16 %v1428
        %v2104 = vunpack.c.l.b16 %v1429
        %v2105 = vunpack.c.h.b16 %v1429
        %v2106 = vunpack.c.l.b16 %v1430
        %v2107 = vunpack.c.h.b16 %v1430
        %v2108 = vunpack.c.l.b16 %v1431
        %v2109 = vunpack.c.h.b16 %v1431
        %v2110 = vunpack.c.l.b16 %v1432
        %v2111 = vunpack.c.h.b16 %v1432
        %v2112 = vunpack.c.l.b16 %v1433
        %v2113 = vunpack.c.h.b16 %v1433
        %v2114 = vunpack.c.l.b16 %v1434
        %v2115 = vunpack.c.h.b16 %v1434
        %v2116 = vunpack.c.l.b16 %v1435
        %v2117 = vunpack.c.h.b16 %v1435
        %v2118 = vunpack.c.l.b16 %v1436
        %v2119 = vunpack.c.h.b16 %v1436
        %v2120 = vunpack.c.l.b16 %v1437
        %v2121 = vunpack.c.h.b16 %v1437
        %v2122 = vunpack.c.l.b16 %v1438
        %v2123 = vunpack.c.h.b16 %v1438
        %v2124 = vunpack.c.l.b16 %v1439
        %v2125 = vunpack.c.h.b16 %v1439
        %v2126 = vunpack.c.l.b16 %v1440
        %v2127 = vunpack.c.h.b16 %v1440
        %v2128 = vunpack.c.l.b16 %v1441
        %v2129 = vunpack.c.h.b16 %v1441
        %v2130 = vunpack.c.l.b16 %v1442
        %v2131 = vunpack.c.h.b16 %v1442
        %v2132 = vunpack.c.l.b16 %v1443
        %v2133 = vunpack.c.h.b16 %v1443
        %v2134 = vunpack.c.l.b16 %v1444
        %v2135 = vunpack.c.h.b16 %v1444
        %v2136 = vunpack.c.l.b16 %v1445
        %v2137 = vunpack.c.h.b16 %v1445
        %v2138 = vunpack.c.l.b16 %v1446
        %v2139 = vunpack.c.h.b16 %v1446
        %v2140 = vunpack.c.l.b16 %v1447
        %v2141 = vunpack.c.h.b16 %v1447
        %v2142 = vunpack.c.l.b16 %v1448
        %v2143 = vunpack.c.h.b16 %v1448
        %v2144 = vunpack.c.l.b16 %v1449
        %v2145 = vunpack.c.h.b16 %v1449
        %v2146 = vunpack.c.l.b16 %v1450
        %v2147 = vunpack.c.h.b16 %v1450
        %v2148 = vunpack.c.l.b16 %v1451
        %v2149 = vunpack.c.h.b16 %v1451
        %v2150 = vunpack.c.l.b16 %v1452
        %v2151 = vunpack.c.h.b16 %v1452
        %v2152 = vunpack.c.l.b16 %v1453
        %v2153 = vunpack.c.h.b16 %v1453
        %v2154 = vunpack.c.l.b16 %v1454
        %v2155 = vunpack.c.h.b16 %v1454
        %v2156 = vunpack.c.l.b16 %v1455
        %v2157 = vunpack.c.h.b16 %v1455
        %v2158 = vunpack.c.l.b16 %v1456
        %v2159 = vunpack.c.h.b16 %v1456
        %v2160 = vunpack.c.l.b16 %v1457
        %v2161 = vunpack.c.h.b16 %v1457
        %v2162 = vunpack.c.l.b16 %v1458
        %v2163 = vunpack.c.h.b16 %v1458
        %v2164 = vunpack.c.l.b16 %v1459
        %v2165 = vunpack.c.h.b16 %v1459
        %v2166 = vunpack.c.l.b16 %v1460
        %v2167 = vunpack.c.h.b16 %v1460
        %v2168 = vunpack.c.l.b16 %v1461
        %v2169 = vunpack.c.h.b16 %v1461
        %v2170 = vunpack.c.l.b16 %v1462
        %v2171 = vunpack.c.h.b16 %v1462
        %v2172 = vunpack.c.l.b16 %v1463
        %v2173 = vunpack.c.h.b16 %v1463
        %v2174 = vunpack.c.l.b16 %v1464
        %v2175 = vunpack.c.h.b16 %v1464
        %v2176 = vunpack.c.l.b16 %v1465
        %v2177 = vunpack.c.h.b16 %v1465
        %v2178 = vunpack.c.l.b16 %v1466
        %v2179 = vunpack.c.h.b16 %v1466
        %v2180 = vunpack.c.l.b16 %v1467
        %v2181 = vunpack.c.h.b16 %v1467
        %v2182 = vunpack.c.l.b16 %v1468
        %v2183 = vunpack.c.h.b16 %v1468
        %v2184 = vunpack.c.l.b16 %v1469
        %v2185 = vunpack.c.h.b16 %v1469
        %v2186 = vunpack.c.l.b16 %v1470
        %v2187 = vunpack.c.h.b16 %v1470
        %v2188 = vunpack.c.l.b16 %v1471
        %v2189 = vunpack.c.h.b16 %v1471
        %v2190 = vunpack.c.l.b16 %v1472
        %v2191 = vunpack.c.h.b16 %v1472
        %v2192 = vunpack.c.l.b16 %v1473
        %v2193 = vunpack.c.h.b16 %v1473
        %v2194 = vunpack.c.l.b16 %v1474
        %v2195 = vunpack.c.h.b16 %v1474
        %v2196 = vunpack.c.l.b16 %v1475
        %v2197 = vunpack.c.h.b16 %v1475
        %v2198 = vunpack.c.l.b16 %v1476
        %v2199 = vunpack.c.h.b16 %v1476
        %v2200 = vunpack.c.l.b16 %v1477
        %v2201 = vunpack.c.h.b16 %v1477
        %v2202 = vunpack.c.l.b16 %v1478
        %v2203 = vunpack.c.h.b16 %v1478
        %v2204 = vunpack.c.l.b16 %v1479
        %v2205 = vunpack.c.h.b16 %v1479
        %v2206 = vunpack.c.l.b16 %v1480
        %v2207 = vunpack.c.h.b16 %v1480
        %v2208 = vunpack.c.l.b16 %v1481
        %v2209 = vunpack.c.h.b16 %v1481
        %v2210 = vunpack.c.l.b16 %v1482
        %v2211 = vunpack.c.h.b16 %v1482
        %v2212 = vunpack.c.l.b16 %v1483
        %v2213 = vunpack.c.h.b16 %v1483
        %v2214 = vunpack.c.l.b16 %v1484
        %v2215 = vunpack.c.h.b16 %v1484
        %v2216 = vunpack.c.l.b16 %v1485
        %v2217 = vunpack.c.h.b16 %v1485
        %v2218 = vunpack.c.l.b16 %v1486
        %v2219 = vunpack.c.h.b16 %v1486
        %v2220 = vunpack.c.l.b16 %v1487
        %v2221 = vunpack.c.h.b16 %v1487
        %v2222 = vunpack.c.l.b16 %v1488
        %v2223 = vunpack.c.h.b16 %v1488
        %v2224 = vunpack.c.l.b16 %v1489
        %v2225 = vunpack.c.h.b16 %v1489
        %v2226 = vunpack.c.l.b16 %v1490
        %v2227 = vunpack.c.h.b16 %v1490
        %v2228 = vunpack.c.l.b16 %v1491
        %v2229 = vunpack.c.h.b16 %v1491
        %v2230 = vunpack.c.l.b16 %v1492
        %v2231 = vunpack.c.h.b16 %v1492
        %v2232 = vunpack.c.l.b16 %v1493
        %v2233 = vunpack.c.h.b16 %v1493
        %v2234 = vunpack.c.l.b16 %v1494
        %v2235 = vunpack.c.h.b16 %v1494
        %v2236 = vunpack.c.l.b16 %v1495
        %v2237 = vunpack.c.h.b16 %v1495
        %v2238 = vunpack.c.l.b16 %v1496
        %v2239 = vunpack.c.h.b16 %v1496
        %v2240 = vunpack.c.l.b16 %v1497
        %v2241 = vunpack.c.h.b16 %v1497
        %v2242 = vunpack.c.l.b16 %v1498
        %v2243 = vunpack.c.h.b16 %v1498
        %v2244 = vunpack.c.l.b16 %v1499
        %v2245 = vunpack.c.h.b16 %v1499
        %v2246 = vunpack.c.l.b16 %v1500
        %v2247 = vunpack.c.h.b16 %v1500
        %v2248 = vunpack.c.l.b16 %v1501
        %v2249 = vunpack.c.h.b16 %v1501
        %v2250 = vunpack.c.l.b16 %v1502
        %v2251 = vunpack.c.h.b16 %v1502
        %v2252 = vunpack.c.l.b16 %v1503
        %v2253 = vunpack.c.h.b16 %v1503
        %v2254 = vunpack.c.l.b16 %v1504
        %v2255 = vunpack.c.h.b16 %v1504
        %v2256 = vunpack.c.l.b16 %v1505
        %v2257 = vunpack.c.h.b16 %v1505
        %v2258 = vunpack.c.l.b16 %v1506
        %v2259 = vunpack.c.h.b16 %v1506
        %v2260 = vunpack.c.l.b16 %v1507
        %v2261 = vunpack.c.h.b16 %v1507
        %v2262 = vunpack.c.l.b16 %v1508
        %v2263 = vunpack.c.h.b16 %v1508
        %v2264 = vunpack.c.l.b16 %v1509
        %v2265 = vunpack.c.h.b16 %v1509
        %v2266 = vunpack.c.l.b16 %v1510
        %v2267 = vunpack.c.h.b16 %v1510
        %v2268 = vunpack.c.l.b16 %v1511
        %v2269 = vunpack.c.h.b16 %v1511
        %v2270 = vunpack.c.l.b16 %v1512
        %v2271 = vunpack.c.h.b16 %v1512
        %v2272 = vunpack.c.l.b16 %v1513
        %v2273 = vunpack.c.h.b16 %v1513
        %v2274 = vunpack.c.l.b16 %v1514
        %v2275 = vunpack.c.h.b16 %v1514
        %v2276 = vunpack.c.l.b16 %v1515
        %v2277 = vunpack.c.h.b16 %v1515
        %v2278 = vunpack.c.l.b16 %v1516
        %v2279 = vunpack.c.h.b16 %v1516
        %v2280 = vunpack.c.l.b16 %v1517
        %v2281 = vunpack.c.h.b16 %v1517
        %v2282 = vunpack.c.l.b16 %v1518
        %v2283 = vunpack.c.h.b16 %v1518
        %v2284 = vunpack.c.l.b16 %v1519
        %v2285 = vunpack.c.h.b16 %v1519
        %v2286 = vunpack.c.l.b16 %v1520
        %v2287 = vunpack.c.h.b16 %v1520
        %v2288 = vunpack.c.l.b16 %v1521
        %v2289 = vunpack.c.h.b16 %v1521
        %v2290 = vunpack.c.l.b16 %v1522
        %v2291 = vunpack.c.h.b16 %v1522
        %v2292 = vunpack.c.l.b16 %v1523
        %v2293 = vunpack.c.h.b16 %v1523
        %v2294 = vunpack.c.l.b16 %v1524
        %v2295 = vunpack.c.h.b16 %v1524
        %v2296 = vunpack.c.l.b16 %v1525
        %v2297 = vunpack.c.h.b16 %v1525
        %v2298 = vunpack.c.l.b16 %v1526
        %v2299 = vunpack.c.h.b16 %v1526
        %v2300 = vunpack.c.l.b16 %v1527
        %v2301 = vunpack.c.h.b16 %v1527
        %v2302 = vunpack.c.l.b16 %v1528
        %v2303 = vunpack.c.h.b16 %v1528
        %v2304 = vunpack.c.l.b16 %v1529
        %v2305 = vunpack.c.h.b16 %v1529
        %v2306 = vunpack.c.l.b16 %v1530
        %v2307 = vunpack.c.h.b16 %v1530
        %v2308 = vunpack.c.l.b16 %v1531
        %v2309 = vunpack.c.h.b16 %v1531
        %v2310 = vunpack.c.l.b16 %v1532
        %v2311 = vunpack.c.h.b16 %v1532
        %v2312 = vunpack.c.l.b16 %v1533
        %v2313 = vunpack.c.h.b16 %v1533
        %v2314 = vunpack.c.l.b16 %v1534
        %v2315 = vunpack.c.h.b16 %v1534
        %v2316 = vunpack.c.l.b16 %v1535
        %v2317 = vunpack.c.h.b16 %v1535
        %v2318 = vunpack.c.l.b16 %v1536
        %v2319 = vunpack.c.h.b16 %v1536
        %v2320 = vunpack.c.l.b16 %v1537
        %v2321 = vunpack.c.h.b16 %v1537
        %v2322 = vunpack.c.l.b16 %v1538
        %v2323 = vunpack.c.h.b16 %v1538
        %v2324 = vunpack.c.l.b16 %v1539
        %v2325 = vunpack.c.h.b16 %v1539
        %v2326 = vunpack.c.l.b16 %v1540
        %v2327 = vunpack.c.h.b16 %v1540
        %v2328 = vunpack.c.l.b16 %v1541
        %v2329 = vunpack.c.h.b16 %v1541
        %v2330 = vunpack.c.l.b16 %v1542
        %v2331 = vunpack.c.h.b16 %v1542
        %v2332 = vunpack.c.l.b16 %v1543
        %v2333 = vunpack.c.h.b16 %v1543
        %v2334 = vunpack.c.l.b16 %v1544
        %v2335 = vunpack.c.h.b16 %v1544
        %v2336 = vunpack.c.l.b16 %v1545
        %v2337 = vunpack.c.h.b16 %v1545
        %v2338 = vunpack.c.l.b16 %v1546
        %v2339 = vunpack.c.h.b16 %v1546
        %v2340 = vunpack.c.l.b16 %v1547
        %v2341 = vunpack.c.h.b16 %v1547
        %v2342 = vunpack.c.l.b16 %v1548
        %v2343 = vunpack.c.h.b16 %v1548
        %v2344 = vunpack.c.l.b16 %v1549
        %v2345 = vunpack.c.h.b16 %v1549
        %v2346 = vunpack.c.l.b16 %v1550
        %v2347 = vunpack.c.h.b16 %v1550
        %v2348 = vunpack.c.l.b16 %v1551
        %v2349 = vunpack.c.h.b16 %v1551
        %v2350 = vunpack.c.l.b16 %v1552
        %v2351 = vunpack.c.h.b16 %v1552
        %v2352 = vunpack.c.l.b16 %v1553
        %v2353 = vunpack.c.h.b16 %v1553
        %v2354 = vunpack.c.l.b16 %v1554
        %v2355 = vunpack.c.h.b16 %v1554
        %v2356 = vunpack.c.l.b16 %v1555
        %v2357 = vunpack.c.h.b16 %v1555
        %v2358 = vunpack.c.l.b16 %v1556
        %v2359 = vunpack.c.h.b16 %v1556
        %v2360 = vunpack.c.l.b16 %v1557
        %v2361 = vunpack.c.h.b16 %v1557
        %v2362 = vunpack.c.l.b16 %v1558
        %v2363 = vunpack.c.h.b16 %v1558
        %v2364 = vunpack.c.l.b16 %v1559
        %v2365 = vunpack.c.h.b16 %v1559
        %v2366 = vunpack.c.l.b16 %v1560
        %v2367 = vunpack.c.h.b16 %v1560
        %v2368 = vunpack.c.l.b16 %v1561
        %v2369 = vunpack.c.h.b16 %v1561
        %v2370 = vunpack.c.l.b16 %v1562
        %v2371 = vunpack.c.h.b16 %v1562
        %v2372 = vunpack.c.l.b16 %v1563
        %v2373 = vunpack.c.h.b16 %v1563
        %v2374 = vunpack.c.l.b16 %v1564
        %v2375 = vunpack.c.h.b16 %v1564
        %v2376 = vunpack.c.l.b16 %v1565
        %v2377 = vunpack.c.h.b16 %v1565
        %v2378 = vunpack.c.l.b16 %v1566
        %v2379 = vunpack.c.h.b16 %v1566
        %v2380 = vunpack.c.l.b16 %v1567
        %v2381 = vunpack.c.h.b16 %v1567
        %v2382 = vunpack.c.l.b16 %v1568
        %v2383 = vunpack.c.h.b16 %v1568
        %v2384 = vunpack.c.l.b16 %v1569
        %v2385 = vunpack.c.h.b16 %v1569
        %v2386 = vunpack.c.l.b16 %v1570
        %v2387 = vunpack.c.h.b16 %v1570
        %v2388 = vunpack.c.l.b16 %v1571
        %v2389 = vunpack.c.h.b16 %v1571
        %v2390 = vunpack.c.l.b16 %v1572
        %v2391 = vunpack.c.h.b16 %v1572
        %v2392 = vunpack.c.l.b16 %v1573
        %v2393 = vunpack.c.h.b16 %v1573
        %v2394 = vunpack.c.l.b16 %v1574
        %v2395 = vunpack.c.h.b16 %v1574
        %v2396 = vunpack.c.l.b16 %v1575
        %v2397 = vunpack.c.h.b16 %v1575
        %v2398 = vunpack.c.l.b16 %v1576
        %v2399 = vunpack.c.h.b16 %v1576
        %v2400 = vunpack.c.l.b16 %v1577
        %v2401 = vunpack.c.h.b16 %v1577
        %v2402 = vunpack.c.l.b16 %v1578
        %v2403 = vunpack.c.h.b16 %v1578
        %v2404 = vunpack.c.l.b16 %v1579
        %v2405 = vunpack.c.h.b16 %v1579
        %v2406 = vunpack.c.l.b16 %v1580
        %v2407 = vunpack.c.h.b16 %v1580
        %v2408 = vunpack.c.l.b16 %v1581
        %v2409 = vunpack.c.h.b16 %v1581
        %v2410 = vunpack.c.l.b16 %v1582
        %v2411 = vunpack.c.h.b16 %v1582
        %v2412 = vunpack.c.l.b16 %v1583
        %v2413 = vunpack.c.h.b16 %v1583
        %v2414 = vunpack.c.l.b16 %v1584
        %v2415 = vunpack.c.h.b16 %v1584
        %v2416 = vunpack.c.l.b16 %v1585
        %v2417 = vunpack.c.h.b16 %v1585
        %v2418 = vunpack.c.l.b16 %v1586
        %v2419 = vunpack.c.h.b16 %v1586
        %v2420 = vunpack.c.l.b16 %v1587
        %v2421 = vunpack.c.h.b16 %v1587
        %v2422 = vunpack.c.l.b16 %v1588
        %v2423 = vunpack.c.h.b16 %v1588
        %v2424 = vunpack.c.l.b16 %v1589
        %v2425 = vunpack.c.h.b16 %v1589
        %v2426 = vunpack.c.l.b16 %v1590
        %v2427 = vunpack.c.h.b16 %v1590
        %v2428 = vunpack.c.l.b16 %v1591
        %v2429 = vunpack.c.h.b16 %v1591
        %v2430 = vunpack.c.l.b16 %v1592
        %v2431 = vunpack.c.h.b16 %v1592
        %v2432 = vunpack.c.l.b16 %v1593
        %v2433 = vunpack.c.h.b16 %v1593
        %v2434 = vunpack.c.l.b16 %v1594
        %v2435 = vunpack.c.h.b16 %v1594
        %v2436 = vunpack.c.l.b16 %v1595
        %v2437 = vunpack.c.h.b16 %v1595
        %v2438 = vunpack.c.l.b16 %v1596
        %v2439 = vunpack.c.h.b16 %v1596
        %v2440 = vunpack.c.l.b16 %v1597
        %v2441 = vunpack.c.h.b16 %v1597
        %v2442 = vunpack.c.l.b16 %v1598
        %v2443 = vunpack.c.h.b16 %v1598
        %v2444 = vunpack.c.l.b16 %v1599
        %v2445 = vunpack.c.h.b16 %v1599
        %v2446 = vunpack.c.l.b16 %v1600
        %v2447 = vunpack.c.h.b16 %v1600
        %v2448 = vunpack.c.l.b16 %v1601
        %v2449 = vunpack.c.h.b16 %v1601
        %v2450 = vunpack.c.l.b16 %v1602
        %v2451 = vunpack.c.h.b16 %v1602
        %v2452 = vunpack.c.l.b16 %v1603
        %v2453 = vunpack.c.h.b16 %v1603
        %v2454 = vunpack.c.l.b16 %v1604
        %v2455 = vunpack.c.h.b16 %v1604
        %v2456 = vunpack.c.l.b16 %v1605
        %v2457 = vunpack.c.h.b16 %v1605
        %v2458 = vunpack.c.l.b16 %v1606
        %v2459 = vunpack.c.h.b16 %v1606
        %v2460 = vunpack.c.l.b16 %v1607
        %v2461 = vunpack.c.h.b16 %v1607
        %v2462 = vunpack.c.l.b16 %v1608
        %v2463 = vunpack.c.h.b16 %v1608
        %v2464 = vunpack.c.l.b16 %v1609
        %v2465 = vunpack.c.h.b16 %v1609
        %v2466 = vunpack.c.l.b16 %v1610
        %v2467 = vunpack.c.h.b16 %v1610
        %v2468 = vunpack.c.l.b16 %v1611
        %v2469 = vunpack.c.h.b16 %v1611
        %v2470 = vunpack.c.l.b16 %v1612
        %v2471 = vunpack.c.h.b16 %v1612
        %v2472 = vunpack.c.l.b16 %v1613
        %v2473 = vunpack.c.h.b16 %v1613
        %v2474 = vunpack.c.l.b16 %v1614
        %v2475 = vunpack.c.h.b16 %v1614
        %v2476 = vunpack.c.l.b16 %v1615
        %v2477 = vunpack.c.h.b16 %v1615
        %v2478 = vunpack.c.l.b16 %v1616
        %v2479 = vunpack.c.h.b16 %v1616
        %v2480 = vunpack.c.l.b16 %v1617
        %v2481 = vunpack.c.h.b16 %v1617
        %v2482 = vunpack.c.l.b16 %v1618
        %v2483 = vunpack.c.h.b16 %v1618
        %v2484 = vunpack.c.l.b16 %v1619
        %v2485 = vunpack.c.h.b16 %v1619
        %v2486 = vunpack.c.l.b16 %v1620
        %v2487 = vunpack.c.h.b16 %v1620
        %v2488 = vunpack.c.l.b16 %v1621
        %v2489 = vunpack.c.h.b16 %v1621
        %v2490 = vunpack.c.l.b16 %v1622
        %v2491 = vunpack.c.h.b16 %v1622
        %v2492 = vunpack.c.l.b16 %v1623
        %v2493 = vunpack.c.h.b16 %v1623
        %v2494 = vunpack.c.l.b16 %v1624
        %v2495 = vunpack.c.h.b16 %v1624
        %v2496 = vunpack.c.l.b16 %v1625
        %v2497 = vunpack.c.h.b16 %v1625
        %v2498 = vunpack.c.l.b16 %v1626
        %v2499 = vunpack.c.h.b16 %v1626
        %v2500 = vunpack.c.l.b16 %v1627
        %v2501 = vunpack.c.h.b16 %v1627
        %v2502 = vunpack.c.l.b16 %v1628
        %v2503 = vunpack.c.h.b16 %v1628
        %v2504 = vunpack.c.l.b16 %v1629
        %v2505 = vunpack.c.h.b16 %v1629
        %v2506 = vunpack.c.l.b16 %v1630
        %v2507 = vunpack.c.h.b16 %v1630
        %v2508 = vunpack.c.l.b16 %v1631
        %v2509 = vunpack.c.h.b16 %v1631
        %v2510 = vunpack.c.l.b16 %v1632
        %v2511 = vunpack.c.h.b16 %v1632
        %v2512 = vunpack.c.l.b16 %v1633
        %v2513 = vunpack.c.h.b16 %v1633
        %v2514 = vunpack.c.l.b16 %v1634
        %v2515 = vunpack.c.h.b16 %v1634
        %v2516 = vunpack.c.l.b16 %v1635
        %v2517 = vunpack.c.h.b16 %v1635
        %v2518 = vunpack.c.l.b16 %v1636
        %v2519 = vunpack.c.h.b16 %v1636
        %v2520 = vunpack.c.l.b16 %v1637
        %v2521 = vunpack.c.h.b16 %v1637
        %v2522 = vunpack.c.l.b16 %v1638
        %v2523 = vunpack.c.h.b16 %v1638
        %v2524 = vunpack.c.l.b16 %v1639
        %v2525 = vunpack.c.h.b16 %v1639
        %v2526 = vunpack.c.l.b16 %v1640
        %v2527 = vunpack.c.h.b16 %v1640
        %v2528 = vunpack.c.l.b16 %v1641
        %v2529 = vunpack.c.h.b16 %v1641
        %v2530 = vunpack.c.l.b16 %v1642
        %v2531 = vunpack.c.h.b16 %v1642
        %v2532 = vunpack.c.l.b16 %v1643
        %v2533 = vunpack.c.h.b16 %v1643
        %v2534 = vunpack.c.l.b16 %v1644
        %v2535 = vunpack.c.h.b16 %v1644
        %v2536 = vunpack.c.l.b16 %v1645
        %v2537 = vunpack.c.h.b16 %v1645
        %v2538 = vunpack.c.l.b16 %v1646
        %v2539 = vunpack.c.h.b16 %v1646
        %v2540 = vunpack.c.l.b16 %v1647
        %v2541 = vunpack.c.h.b16 %v1647
        %v2542 = vunpack.c.l.b16 %v1648
        %v2543 = vunpack.c.h.b16 %v1648
        %v2544 = vunpack.c.l.b16 %v1649
        %v2545 = vunpack.c.h.b16 %v1649
        %v2546 = vunpack.c.l.b16 %v1650
        %v2547 = vunpack.c.h.b16 %v1650
        %v2548 = vunpack.c.l.b16 %v1651
        %v2549 = vunpack.c.h.b16 %v1651
        %v2550 = vunpack.c.l.b16 %v1652
        %v2551 = vunpack.c.h.b16 %v1652
        %v2552 = vunpack.c.l.b16 %v1653
        %v2553 = vunpack.c.h.b16 %v1653
        %v2554 = vunpack.c.l.b16 %v1654
        %v2555 = vunpack.c.h.b16 %v1654
        %v2556 = vunpack.c.l.b16 %v1655
        %v2557 = vunpack.c.h.b16 %v1655
        %v2558 = vunpack.c.l.b16 %v1656
        %v2559 = vunpack.c.h.b16 %v1656
        %v2560 = vunpack.c.l.b16 %v1657
        %v2561 = vunpack.c.h.b16 %v1657
        %v2562 = vunpack.c.l.b16 %v1658
        %v2563 = vunpack.c.h.b16 %v1658
        %v2564 = vunpack.c.l.b16 %v1659
        %v2565 = vunpack.c.h.b16 %v1659
        %v2566 = vunpack.c.l.b16 %v1660
        %v2567 = vunpack.c.h.b16 %v1660
        %v2568 = vunpack.c.l.b16 %v1661
        %v2569 = vunpack.c.h.b16 %v1661
        %v2570 = vunpack.c.l.b16 %v1662
        %v2571 = vunpack.c.h.b16 %v1662
        %v2572 = vunpack.c.l.b16 %v1663
        %v2573 = vunpack.c.h.b16 %v1663
        %v2574 = vunpack.c.l.b16 %v1664
        %v2575 = vunpack.c.h.b16 %v1664
        %v2576 = vunpack.c.l.b16 %v1665
        %v2577 = vunpack.c.h.b16 %v1665
        %v2578 = vunpack.c.l.b16 %v1666
        %v2579 = vunpack.c.h.b16 %v1666
        %v2580 = vunpack.c.l.b16 %v1667
        %v2581 = vunpack.c.h.b16 %v1667
        %v2582 = vunpack.c.l.b16 %v1668
        %v2583 = vunpack.c.h.b16 %v1668
        %v2584 = vunpack.c.l.b16 %v1669
        %v2585 = vunpack.c.h.b16 %v1669
        %v2586 = vunpack.c.l.b16 %v1670
        %v2587 = vunpack.c.h.b16 %v1670
        %v2588 = vunpack.c.l.b16 %v1671
        %v2589 = vunpack.c.h.b16 %v1671
        %v2590 = vunpack.c.l.b16 %v1672
        %v2591 = vunpack.c.h.b16 %v1672
        %v2592 = vunpack.c.l.b16 %v1673
        %v2593 = vunpack.c.h.b16 %v1673
        %v2594 = vunpack.c.l.b16 %v1674
        %v2595 = vunpack.c.h.b16 %v1674
        %v2596 = vunpack.c.l.b16 %v1675
        %v2597 = vunpack.c.h.b16 %v1675
        %v2598 = vunpack.c.l.b16 %v1676
        %v2599 = vunpack.c.h.b16 %v1676
        %v2600 = vunpack.c.l.b16 %v1677
        %v2601 = vunpack.c.h.b16 %v1677
        %v2602 = vunpack.c.l.b16 %v1678
        %v2603 = vunpack.c.h.b16 %v1678
        %v2604 = vunpack.c.l.b16 %v1679
        %v2605 = vunpack.c.h.b16 %v1679
        %v2606 = vunpack.c.l.b16 %v1680
        %v2607 = vunpack.c.h.b16 %v1680
        %v2608 = vunpack.c.l.b16 %v1681
        %v2609 = vunpack.c.h.b16 %v1681
        %v2610 = vunpack.c.l.b16 %v1682
        %v2611 = vunpack.c.h.b16 %v1682
        %v2612 = vunpack.c.l.b16 %v1683
        %v2613 = vunpack.c.h.b16 %v1683
        %v2614 = vunpack.c.l.b16 %v1684
        %v2615 = vunpack.c.h.b16 %v1684
        %v2616 = vunpack.c.l.b16 %v1685
        %v2617 = vunpack.c.h.b16 %v1685
        %v2618 = vunpack.c.l.b16 %v1686
        %v2619 = vunpack.c.h.b16 %v1686
        %v2620 = vunpack.c.l.b16 %v1687
        %v2621 = vunpack.c.h.b16 %v1687
        %v2622 = vunpack.c.l.b16 %v1688
        %v2623 = vunpack.c.h.b16 %v1688
        %v2624 = vunpack.c.l.b16 %v1689
        %v2625 = vunpack.c.h.b16 %v1689
        %v2626 = vunpack.c.l.b16 %v1690
        %v2627 = vunpack.c.h.b16 %v1690
        %v2628 = vunpack.c.l.b16 %v1691
        %v2629 = vunpack.c.h.b16 %v1691
        %v2630 = vunpack.c.l.b16 %v1692
        %v2631 = vunpack.c.h.b16 %v1692
        %v2632 = vunpack.c.l.b16 %v1693
        %v2633 = vunpack.c.h.b16 %v1693
        %v2634 = vunpack.c.l.b16 %v1694
        %v2635 = vunpack.c.h.b16 %v1694
        %v2636 = vunpack.c.l.b16 %v1695
        %v2637 = vunpack.c.h.b16 %v1695
        %v2638 = vunpack.c.l.b16 %v1696
        %v2639 = vunpack.c.h.b16 %v1696
        %v2640 = vunpack.c.l.b16 %v1697
        %v2641 = vunpack.c.h.b16 %v1697
        %v2642 = vunpack.c.l.b16 %v1698
        %v2643 = vunpack.c.h.b16 %v1698
        %v2644 = vunpack.c.l.b16 %v1699
        %v2645 = vunpack.c.h.b16 %v1699
        %v2646 = vunpack.c.l.b16 %v1700
        %v2647 = vunpack.c.h.b16 %v1700
        %v2648 = vunpack.c.l.b16 %v1701
        %v2649 = vunpack.c.h.b16 %v1701
        %v2650 = vunpack.c.l.b16 %v1702
        %v2651 = vunpack.c.h.b16 %v1702
        %v2652 = vunpack.c.l.b16 %v1703
        %v2653 = vunpack.c.h.b16 %v1703
        %v2654 = vunpack.c.l.b16 %v1704
        %v2655 = vunpack.c.h.b16 %v1704
        %v2656 = vunpack.c.l.b16 %v1705
        %v2657 = vunpack.c.h.b16 %v1705
        %v2658 = vunpack.c.l.b16 %v1706
        %v2659 = vunpack.c.h.b16 %v1706
        %v2660 = vunpack.c.l.b16 %v1707
        %v2661 = vunpack.c.h.b16 %v1707
        %v2662 = vunpack.c.l.b16 %v1708
        %v2663 = vunpack.c.h.b16 %v1708
        %v2664 = vunpack.c.l.b16 %v1709
        %v2665 = vunpack.c.h.b16 %v1709
        %v2666 = vunpack.c.l.b16 %v1710
        %v2667 = vunpack.c.h.b16 %v1710
        %v2668 = vunpack.c.l.b16 %v1711
        %v2669 = vunpack.c.h.b16 %v1711
        %v2670 = vunpack.c.l.b16 %v1712
        %v2671 = vunpack.c.h.b16 %v1712
        %v2672 = vunpack.c.l.b16 %v1713
        %v2673 = vunpack.c.h.b16 %v1713
        %v2674 = vunpack.c.l.b16 %v1714
        %v2675 = vunpack.c.h.b16 %v1714
        %v2676 = vunpack.c.l.b16 %v1715
        %v2677 = vunpack.c.h.b16 %v1715
        %v2678 = vunpack.c.l.b16 %v1716
        %v2679 = vunpack.c.h.b16 %v1716
        %v2680 = vunpack.c.l.b16 %v1717
        %v2681 = vunpack.c.h.b16 %v1717
        %v2682 = vunpack.c.l.b16 %v1718
        %v2683 = vunpack.c.h.b16 %v1718
        %v2684 = vunpack.c.l.b16 %v1719
        %v2685 = vunpack.c.h.b16 %v1719
        %v2686 = vunpack.c.l.b16 %v1720
        %v2687 = vunpack.c.h.b16 %v1720
        %v2688 = vunpack.c.l.b16 %v1721
        %v2689 = vunpack.c.h.b16 %v1721
        %v2690 = vunpack.c.l.b16 %v1722
        %v2691 = vunpack.c.h.b16 %v1722
        %v2692 = vunpack.c.l.b16 %v1723
        %v2693 = vunpack.c.h.b16 %v1723
        %v2694 = vunpack.c.l.b16 %v1724
        %v2695 = vunpack.c.h.b16 %v1724
        %v2696 = vpack.c.b16 %v2060, %v2056
        %v2697 = vpack.c.b16 %v2061, %v2057
        %v2698 = vpack.c.b16 %v2062, %v2058
        %v2699 = vpack.c.b16 %v2063, %v2059
        %v2700 = vpack.c.b16 %v2068, %v2064
        %v2701 = vpack.c.b16 %v2069, %v2065
        %v2702 = vpack.c.b16 %v2070, %v2066
        %v2703 = vpack.c.b16 %v2071, %v2067
        %v2704 = vpack.c.b16 %v2076, %v2072
        %v2705 = vpack.c.b16 %v2077, %v2073
        %v2706 = vpack.c.b16 %v2078, %v2074
        %v2707 = vpack.c.b16 %v2079, %v2075
        %v2708 = vpack.c.b16 %v2084, %v2080
        %v2709 = vpack.c.b16 %v2085, %v2081
        %v2710 = vpack.c.b16 %v2086, %v2082
        %v2711 = vpack.c.b16 %v2087, %v2083
        %v2712 = vpack.c.b16 %v2092, %v2088
        %v2713 = vpack.c.b16 %v2093, %v2089
        %v2714 = vpack.c.b16 %v2094, %v2090
        %v2715 = vpack.c.b16 %v2095, %v2091
        %v2716 = vpack.c.b16 %v2100, %v2096
        %v2717 = vpack.c.b16 %v2101, %v2097
        %v2718 = vpack.c.b16 %v2102, %v2098
        %v2719 = vpack.c.b16 %v2103, %v2099
        %v2720 = vpack.c.b16 %v2108, %v2104
        %v2721 = vpack.c.b16 %v2109, %v2105
        %v2722 = vpack.c.b16 %v2110, %v2106
        %v2723 = vpack.c.b16 %v2111, %v2107
        %v2724 = vpack.c.b16 %v2116, %v2112
        %v2725 = vpack.c.b16 %v2117, %v2113
        %v2726 = vpack.c.b16 %v2118, %v2114
        %v2727 = vpack.c.b16 %v2119, %v2115
        %v2728 = vpack.c.b16 %v2124, %v2120
        %v2729 = vpack.c.b16 %v2125, %v2121
        %v2730 = vpack.c.b16 %v2126, %v2122
        %v2731 = vpack.c.b16 %v2127, %v2123
        %v2732 = vpack.c.b16 %v2132, %v2128
        %v2733 = vpack.c.b16 %v2133, %v2129
        %v2734 = vpack.c.b16 %v2134, %v2130
        %v2735 = vpack.c.b16 %v2135, %v2131
        %v2736 = vpack.c.b16 %v2140, %v2136
        %v2737 = vpack.c.b16 %v2141, %v2137
        %v2738 = vpack.c.b16 %v2142, %v2138
        %v2739 = vpack.c.b16 %v2143, %v2139
        %v2740 = vpack.c.b16 %v2148, %v2144
        %v2741 = vpack.c.b16 %v2149, %v2145
        %v2742 = vpack.c.b16 %v2150, %v2146
        %v2743 = vpack.c.b16 %v2151, %v2147
        %v2744 = vpack.c.b16 %v2156, %v2152
        %v2745 = vpack.c.b16 %v2157, %v2153
        %v2746 = vpack.c.b16 %v2158, %v2154
        %v2747 = vpack.c.b16 %v2159, %v2155
        %v2748 = vpack.c.b16 %v2164, %v2160
        %v2749 = vpack.c.b16 %v2165, %v2161
        %v2750 = vpack.c.b16 %v2166, %v2162
        %v2751 = vpack.c.b16 %v2167, %v2163
        %v2752 = vpack.c.b16 %v2172, %v2168
        %v2753 = vpack.c.b16 %v2173, %v2169
        %v2754 = vpack.c.b16 %v2174, %v2170
        %v2755 = vpack.c.b16 %v2175, %v2171
        %v2756 = vpack.c.b16 %v2180, %v2176
        %v2757 = vpack.c.b16 %v2181, %v2177
        %v2758 = vpack.c.b16 %v2182, %v2178
        %v2759 = vpack.c.b16 %v2183, %v2179
        %v2760 = vpack.c.b16 %v2188, %v2184
        %v2761 = vpack.c.b16 %v2189, %v2185
        %v2762 = vpack.c.b16 %v2190, %v2186
        %v2763 = vpack.c.b16 %v2191, %v2187
        %v2764 = vpack.c.b16 %v2196, %v2192
        %v2765 = vpack.c.b16 %v2197, %v2193
        %v2766 = vpack.c.b16 %v2198, %v2194
        %v2767 = vpack.c.b16 %v2199, %v2195
        %v2768 = vpack.c.b16 %v2204, %v2200
        %v2769 = vpack.c.b16 %v2205, %v2201
        %v2770 = vpack.c.b16 %v2206, %v2202
        %v2771 = vpack.c.b16 %v2207, %v2203
        %v2772 = vpack.c.b16 %v2212, %v2208
        %v2773 = vpack.c.b16 %v2213, %v2209
        %v2774 = vpack.c.b16 %v2214, %v2210
        %v2775 = vpack.c.b16 %v2215, %v2211
        %v2776 = vpack.c.b16 %v2220, %v2216
        %v2777 = vpack.c.b16 %v2221, %v2217
        %v2778 = vpack.c.b16 %v2222, %v2218
        %v2779 = vpack.c.b16 %v2223, %v2219
        %v2780 = vpack.c.b16 %v2228, %v2224
        %v2781 = vpack.c.b16 %v2229, %v2225
        %v2782 = vpack.c.b16 %v2230, %v2226
        %v2783 = vpack.c.b16 %v2231, %v2227
        %v2784 = vpack.c.b16 %v2236, %v2232
        %v2785 = vpack.c.b16 %v2237, %v2233
        %v2786 = vpack.c.b16 %v2238, %v2234
        %v2787 = vpack.c.b16 %v2239, %v2235
        %v2788 = vpack.c.b16 %v2244, %v2240
        %v2789 = vpack.c.b16 %v2245, %v2241
        %v2790 = vpack.c.b16 %v2246, %v2242
        %v2791 = vpack.c.b16 %v2247, %v2243
        %v2792 = vpack.c.b16 %v2252, %v2248
        %v2793 = vpack.c.b16 %v2253, %v2249
        %v2794 = vpack.c.b16 %v2254, %v2250
        %v2795 = vpack.c.b16 %v2255, %v2251
        %v2796 = vpack.c.b16 %v2260, %v2256
        %v2797 = vpack.c.b16 %v2261, %v2257
        %v2798 = vpack.c.b16 %v2262, %v2258
        %v2799 = vpack.c.b16 %v2263, %v2259
        %v2800 = vpack.c.b16 %v2268, %v2264
        %v2801 = vpack.c.b16 %v2269, %v2265
        %v2802 = vpack.c.b16 %v2270, %v2266
        %v2803 = vpack.c.b16 %v2271, %v2267
        %v2804 = vpack.c.b16 %v2276, %v2272
        %v2805 = vpack.c.b16 %v2277, %v2273
        %v2806 = vpack.c.b16 %v2278, %v2274
        %v2807 = vpack.c.b16 %v2279, %v2275
        %v2808 = vpack.c.b16 %v2284, %v2280
        %v2809 = vpack.c.b16 %v2285, %v2281
        %v2810 = vpack.c.b16 %v2286, %v2282
        %v2811 = vpack.c.b16 %v2287, %v2283
        %v2812 = vpack.c.b16 %v2292, %v2288
        %v2813 = vpack.c.b16 %v2293, %v2289
        %v2814 = vpack.c.b16 %v2294, %v2290
        %v2815 = vpack.c.b16 %v2295, %v2291
        %v2816 = vpack.c.b16 %v2300, %v2296
        %v2817 = vpack.c.b16 %v2301, %v2297
        %v2818 = vpack.c.b16 %v2302, %v2298
        %v2819 = vpack.c.b16 %v2303, %v2299
        %v2820 = vpack.c.b16 %v2308, %v2304
        %v2821 = vpack.c.b16 %v2309, %v2305
        %v2822 = vpack.c.b16 %v2310, %v2306
        %v2823 = vpack.c.b16 %v2311, %v2307
        %v2824 = vpack.c.b16 %v2316, %v2312
        %v2825 = vpack.c.b16 %v2317, %v2313
        %v2826 = vpack.c.b16 %v2318, %v2314
        %v2827 = vpack.c.b16 %v2319, %v2315
        %v2828 = vpack.c.b16 %v2324, %v2320
        %v2829 = vpack.c.b16 %v2325, %v2321
        %v2830 = vpack.c.b16 %v2326, %v2322
        %v2831 = vpack.c.b16 %v2327, %v2323
        %v2832 = vpack.c.b16 %v2332, %v2328
        %v2833 = vpack.c.b16 %v2333, %v2329
        %v2834 = vpack.c.b16 %v2334, %v2330
        %v2835 = vpack.c.b16 %v2335, %v2331
        %v2836 = vpack.c.b16 %v2340, %v2336
        %v2837 = vpack.c.b16 %v2341, %v2337
        %v2838 = vpack.c.b16 %v2342, %v2338
        %v2839 = vpack.c.b16 %v2343, %v2339
        %v2840 = vpack.c.b16 %v2348, %v2344
        %v2841 = vpack.c.b16 %v2349, %v2345
        %v2842 = vpack.c.b16 %v2350, %v2346
        %v2843 = vpack.c.b16 %v2351, %v2347
        %v2844 = vpack.c.b16 %v2356, %v2352
        %v2845 = vpack.c.b16 %v2357, %v2353
        %v2846 = vpack.c.b16 %v2358, %v2354
        %v2847 = vpack.c.b16 %v2359, %v2355
        %v2848 = vpack.c.b16 %v2364, %v2360
        %v2849 = vpack.c.b16 %v2365, %v2361
        %v2850 = vpack.c.b16 %v2366, %v2362
        %v2851 = vpack.c.b16 %v2367, %v2363
        %v2852 = vpack.c.b16 %v2372, %v2368
        %v2853 = vpack.c.b16 %v2373, %v2369
        %v2854 = vpack.c.b16 %v2374, %v2370
        %v2855 = vpack.c.b16 %v2375, %v2371
        %v2856 = vpack.c.b16 %v2380, %v2376
        %v2857 = vpack.c.b16 %v2381, %v2377
        %v2858 = vpack.c.b16 %v2382, %v2378
        %v2859 = vpack.c.b16 %v2383, %v2379
        %v2860 = vpack.c.b16 %v2388, %v2384
        %v2861 = vpack.c.b16 %v2389, %v2385
        %v2862 = vpack.c.b16 %v2390, %v2386
        %v2863 = vpack.c.b16 %v2391, %v2387
        %v2864 = vpack.c.b16 %v2396, %v2392
        %v2865 = vpack.c.b16 %v2397, %v2393
        %v2866 = vpack.c.b16 %v2398, %v2394
        %v2867 = vpack.c.b16 %v2399, %v2395
        %v2868 = vpack.c.b16 %v2404, %v2400
        %v2869 = vpack.c.b16 %v2405, %v2401
        %v2870 = vpack.c.b16 %v2406, %v2402
        %v2871 = vpack.c.b16 %v2407, %v2403
        %v2872 = vpack.c.b16 %v2412, %v2408
        %v2873 = vpack.c.b16 %v2413, %v2409
        %v2874 = vpack.c.b16 %v2414, %v2410
        %v2875 = vpack.c.b16 %v2415, %v2411
        %v2876 = vpack.c.b16 %v2420, %v2416
        %v2877 = vpack.c.b16 %v2421, %v2417
        %v2878 = vpack.c.b16 %v2422, %v2418
        %v2879 = vpack.c.b16 %v2423, %v2419
        %v2880 = vpack.c.b16 %v2428, %v2424
        %v2881 = vpack.c.b16 %v2429, %v2425
        %v2882 = vpack.c.b16 %v2430, %v2426
        %v2883 = vpack.c.b16 %v2431, %v2427
        %v2884 = vpack.c.b16 %v2436, %v2432
        %v2885 = vpack.c.b16 %v2437, %v2433
        %v2886 = vpack.c.b16 %v2438, %v2434
        %v2887 = vpack.c.b16 %v2439, %v2435
        %v2888 = vpack.c.b16 %v2444, %v2440
        %v2889 = vpack.c.b16 %v2445, %v2441
        %v2890 = vpack.c.b16 %v2446, %v2442
        %v2891 = vpack.c.b16 %v2447, %v2443
        %v2892 = vpack.c.b16 %v2452, %v2448
        %v2893 = vpack.c.b16 %v2453, %v2449
        %v2894 = vpack.c.b16 %v2454, %v2450
        %v2895 = vpack.c.b16 %v2455, %v2451
        %v2896 = vpack.c.b16 %v2460, %v2456
        %v2897 = vpack.c.b16 %v2461, %v2457
        %v2898 = vpack.c.b16 %v2462, %v2458
        %v2899 = vpack.c.b16 %v2463, %v2459
        %v2900 = vpack.c.b16 %v2468, %v2464
        %v2901 = vpack.c.b16 %v2469, %v2465
        %v2902 = vpack.c.b16 %v2470, %v2466
        %v2903 = vpack.c.b16 %v2471, %v2467
        %v2904 = vpack.c.b16 %v2476, %v2472
        %v2905 = vpack.c.b16 %v2477, %v2473
        %v2906 = vpack.c.b16 %v2478, %v2474
        %v2907 = vpack.c.b16 %v2479, %v2475
        %v2908 = vpack.c.b16 %v2484, %v2480
        %v2909 = vpack.c.b16 %v2485, %v2481
        %v2910 = vpack.c.b16 %v2486, %v2482
        %v2911 = vpack.c.b16 %v2487, %v2483
        %v2912 = vpack.c.b16 %v2492, %v2488
        %v2913 = vpack.c.b16 %v2493, %v2489
        %v2914 = vpack.c.b16 %v2494, %v2490
        %v2915 = vpack.c.b16 %v2495, %v2491
        %v2916 = vpack.c.b16 %v2500, %v2496
        %v2917 = vpack.c.b16 %v2501, %v2497
        %v2918 = vpack.c.b16 %v2502, %v2498
        %v2919 = vpack.c.b16 %v2503, %v2499
        %v2920 = vpack.c.b16 %v2508, %v2504
        %v2921 = vpack.c.b16 %v2509, %v2505
        %v2922 = vpack.c.b16 %v2510, %v2506
        %v2923 = vpack.c.b16 %v2511, %v2507
        %v2924 = vpack.c.b16 %v2516, %v2512
        %v2925 = vpack.c.b16 %v2517, %v2513
        %v2926 = vpack.c.b16 %v2518, %v2514
        %v2927 = vpack.c.b16 %v2519, %v2515
        %v2928 = vpack.c.b16 %v2524, %v2520
        %v2929 = vpack.c.b16 %v2525, %v2521
        %v2930 = vpack.c.b16 %v2526, %v2522
        %v2931 = vpack.c.b16 %v2527, %v2523
        %v2932 = vpack.c.b16 %v2532, %v2528
        %v2933 = vpack.c.b16 %v2533, %v2529
        %v2934 = vpack.c.b16 %v2534, %v2530
        %v2935 = vpack.c.b16 %v2535, %v2531
        %v2936 = vpack.c.b16 %v2540, %v2536
        %v2937 = vpack.c.b16 %v2541, %v2537
        %v2938 = vpack.c.b16 %v2542, %v2538
        %v2939 = vpack.c.b16 %v2543, %v2539
        %v2940 = vpack.c.b16 %v2548, %v2544
        %v2941 = vpack.c.b16 %v2549, %v2545
        %v2942 = vpack.c.b16 %v2550, %v2546
        %v2943 = vpack.c.b16 %v2551, %v2547
        %v2944 = vpack.c.b16 %v2556, %v2552
        %v2945 = vpack.c.b16 %v2557, %v2553
        %v2946 = vpack.c.b16 %v2558, %v2554
        %v2947 = vpack.c.b16 %v2559, %v2555
        %v2948 = vpack.c.b16 %v2564, %v2560
        %v2949 = vpack.c.b16 %v2565, %v2561
        %v2950 = vpack.c.b16 %v2566, %v2562
        %v2951 = vpack.c.b16 %v2567, %v2563
        %v2952 = vpack.c.b16 %v2572, %v2568
        %v2953 = vpack.c.b16 %v2573, %v2569
        %v2954 = vpack.c.b16 %v2574, %v2570
        %v2955 = vpack.c.b16 %v2575, %v2571
        %v2956 = vpack.c.b16 %v2580, %v2576
        %v2957 = vpack.c.b16 %v2581, %v2577
        %v2958 = vpack.c.b16 %v2582, %v2578
        %v2959 = vpack.c.b16 %v2583, %v2579
        %v2960 = vpack.c.b16 %v2588, %v2584
        %v2961 = vpack.c.b16 %v2589, %v2585
        %v2962 = vpack.c.b16 %v2590, %v2586
        %v2963 = vpack.c.b16 %v2591, %v2587
        %v2964 = vpack.c.b16 %v2596, %v2592
        %v2965 = vpack.c.b16 %v2597, %v2593
        %v2966 = vpack.c.b16 %v2598, %v2594
        %v2967 = vpack.c.b16 %v2599, %v2595
        %v2968 = vpack.c.b16 %v2604, %v2600
        %v2969 = vpack.c.b16 %v2605, %v2601
        %v2970 = vpack.c.b16 %v2606, %v2602
        %v2971 = vpack.c.b16 %v2607, %v2603
        %v2972 = vpack.c.b16 %v2612, %v2608
        %v2973 = vpack.c.b16 %v2613, %v2609
        %v2974 = vpack.c.b16 %v2614, %v2610
        %v2975 = vpack.c.b16 %v2615, %v2611
        %v2976 = vpack.c.b16 %v2620, %v2616
        %v2977 = vpack.c.b16 %v2621, %v2617
        %v2978 = vpack.c.b16 %v2622, %v2618
        %v2979 = vpack.c.b16 %v2623, %v2619
        %v2980 = vpack.c.b16 %v2628, %v2624
        %v2981 = vpack.c.b16 %v2629, %v2625
        %v2982 = vpack.c.b16 %v2630, %v2626
        %v2983 = vpack.c.b16 %v2631, %v2627
        %v2984 = vpack.c.b16 %v2636, %v2632
        %v2985 = vpack.c.b16 %v2637, %v2633
        %v2986 = vpack.c.b16 %v2638, %v2634
        %v2987 = vpack.c.b16 %v2639, %v2635
        %v2988 = vpack.c.b16 %v2644, %v2640
        %v2989 = vpack.c.b16 %v2645, %v2641
        %v2990 = vpack.c.b16 %v2646, %v2642
        %v2991 = vpack.c.b16 %v2647, %v2643
        %v2992 = vpack.c.b16 %v2652, %v2648
        %v2993 = vpack.c.b16 %v2653, %v2649
        %v2994 = vpack.c.b16 %v2654, %v2650
        %v2995 = vpack.c.b16 %v2655, %v2651
        %v2996 = vpack.c.b16 %v2660, %v2656
        %v2997 = vpack.c.b16 %v2661, %v2657
        %v2998 = vpack.c.b16 %v2662, %v2658
        %v2999 = vpack.c.b16 %v2663, %v2659
        %v3000 = vpack.c.b16 %v2668, %v2664
        %v3001 = vpack.c.b16 %v2669, %v2665
        %v3002 = vpack.c.b16 %v2670, %v2666
        %v3003 = vpack.c.b16 %v2671, %v2667
        %v3004 = vpack.c.b16 %v2676, %v2672
        %v3005 = vpack.c.b16 %v2677, %v2673
        %v3006 = vpack.c.b16 %v2678, %v2674
        %v3007 = vpack.c.b16 %v2679, %v2675
        %v3008 = vpack.c.b16 %v2684, %v2680
        %v3009 = vpack.c.b16 %v2685, %v2681
        %v3010 = vpack.c.b16 %v2686, %v2682
        %v3011 = vpack.c.b16 %v2687, %v2683
        %v3012 = vpack.c.b16 %v2692, %v2688
        %v3013 = vpack.c.b16 %v2693, %v2689
        %v3014 = vpack.c.b16 %v2694, %v2690
        %v3015 = vpack.c.b16 %v2695, %v2691
        %3336 = vmatpush.bf16.msra.mxu0 %v2724
        %3337 = vmatpush.bf16.msra.mxu0 %v2720
        %3338 = vmatpush.bf16.msra.mxu0 %v2716
        %3339 = vmatpush.bf16.msra.mxu0 %v2712
        %3340 = vmatpush.bf16.msra.mxu0 %v2708
        %3341 = vmatpush.bf16.msra.mxu0 %v2704
        %3342 = vmatpush.bf16.msra.mxu0 %v2700
        %3343 = vmatpush.bf16.msra.mxu0 %v2696
        %3344 = vmatmul.bf16.gmra.mxu0 %v1395
        %v3345 = vpop.f32.mrf.mxu0
        %v3346 = vadd.f32 %v1728, %v3345
        %v3347 = vpop.f32.mrf.mxu0
        %3348 = vdwg.mxu0
        %3349 = vmatpush.bf16.msra.mxu0 %v2756
        %3350 = vmatpush.bf16.msra.mxu0 %v2752
        %3351 = vmatpush.bf16.msra.mxu0 %v2748
        %3352 = vmatpush.bf16.msra.mxu0 %v2744
        %3353 = vmatpush.bf16.msra.mxu0 %v2740
        %3354 = vmatpush.bf16.msra.mxu0 %v2736
        %3355 = vmatpush.bf16.msra.mxu0 %v2732
        %3356 = vmatpush.bf16.msra.mxu0 %v2728
        %3357 = vmatmul.bf16.gmra.mxu0 %v1396
        %v3358 = vpop.f32.mrf.mxu0
        %v3359 = vadd.f32 %v3346, %v3358
        %v3360 = vpop.f32.mrf.mxu0
        %3361 = vdwg.mxu0
        %3362 = vmatpush.bf16.msra.mxu0 %v2788
        %3363 = vmatpush.bf16.msra.mxu0 %v2784
        %3364 = vmatpush.bf16.msra.mxu0 %v2780
        %3365 = vmatpush.bf16.msra.mxu0 %v2776
        %3366 = vmatpush.bf16.msra.mxu0 %v2772
        %3367 = vmatpush.bf16.msra.mxu0 %v2768
        %3368 = vmatpush.bf16.msra.mxu0 %v2764
        %3369 = vmatpush.bf16.msra.mxu0 %v2760
        %3370 = vmatmul.bf16.gmra.mxu0 %v1397
        %v3371 = vpop.f32.mrf.mxu0
        %v3372 = vadd.f32 %v3359, %v3371
        %v3373 = vpop.f32.mrf.mxu0
        %3374 = vdwg.mxu0
        %3375 = vmatpush.bf16.msra.mxu0 %v2820
        %3376 = vmatpush.bf16.msra.mxu0 %v2816
        %3377 = vmatpush.bf16.msra.mxu0 %v2812
        %3378 = vmatpush.bf16.msra.mxu0 %v2808
        %3379 = vmatpush.bf16.msra.mxu0 %v2804
        %3380 = vmatpush.bf16.msra.mxu0 %v2800
        %3381 = vmatpush.bf16.msra.mxu0 %v2796
        %3382 = vmatpush.bf16.msra.mxu0 %v2792
        %3383 = vmatmul.bf16.gmra.mxu0 %v1398
        %v3384 = vpop.f32.mrf.mxu0
        %v3385 = vadd.f32 %v3372, %v3384
        %v3386 = vpop.f32.mrf.mxu0
        %3387 = vdwg.mxu0
        %3388 = vmatpush.bf16.msra.mxu0 %v2852
        %3389 = vmatpush.bf16.msra.mxu0 %v2848
        %3390 = vmatpush.bf16.msra.mxu0 %v2844
        %3391 = vmatpush.bf16.msra.mxu0 %v2840
        %3392 = vmatpush.bf16.msra.mxu0 %v2836
        %3393 = vmatpush.bf16.msra.mxu0 %v2832
        %3394 = vmatpush.bf16.msra.mxu0 %v2828
        %3395 = vmatpush.bf16.msra.mxu0 %v2824
        %3396 = vmatmul.bf16.gmra.mxu0 %v1399
        %v3397 = vpop.f32.mrf.mxu0
        %v3398 = vadd.f32 %v3385, %v3397
        %v3399 = vpop.f32.mrf.mxu0
        %3400 = vdwg.mxu0
        %3401 = vmatpush.bf16.msra.mxu0 %v2884
        %3402 = vmatpush.bf16.msra.mxu0 %v2880
        %3403 = vmatpush.bf16.msra.mxu0 %v2876
        %3404 = vmatpush.bf16.msra.mxu0 %v2872
        %3405 = vmatpush.bf16.msra.mxu0 %v2868
        %3406 = vmatpush.bf16.msra.mxu0 %v2864
        %3407 = vmatpush.bf16.msra.mxu0 %v2860
        %3408 = vmatpush.bf16.msra.mxu0 %v2856
        %3409 = vmatmul.bf16.gmra.mxu0 %v1400
        %v3410 = vpop.f32.mrf.mxu0
        %v3411 = vadd.f32 %v3398, %v3410
        %v3412 = vpop.f32.mrf.mxu0
        %3413 = vdwg.mxu0
        %3414 = vmatpush.bf16.msra.mxu0 %v2916
        %3415 = vmatpush.bf16.msra.mxu0 %v2912
        %3416 = vmatpush.bf16.msra.mxu0 %v2908
        %3417 = vmatpush.bf16.msra.mxu0 %v2904
        %3418 = vmatpush.bf16.msra.mxu0 %v2900
        %3419 = vmatpush.bf16.msra.mxu0 %v2896
        %3420 = vmatpush.bf16.msra.mxu0 %v2892
        %3421 = vmatpush.bf16.msra.mxu0 %v2888
        %3422 = vmatmul.bf16.gmra.mxu0 %v1401
        %v3423 = vpop.f32.mrf.mxu0
        %v3424 = vadd.f32 %v3411, %v3423
        %v3425 = vpop.f32.mrf.mxu0
        %3426 = vdwg.mxu0
        %3427 = vmatpush.bf16.msra.mxu0 %v2948
        %3428 = vmatpush.bf16.msra.mxu0 %v2944
        %3429 = vmatpush.bf16.msra.mxu0 %v2940
        %3430 = vmatpush.bf16.msra.mxu0 %v2936
        %3431 = vmatpush.bf16.msra.mxu0 %v2932
        %3432 = vmatpush.bf16.msra.mxu0 %v2928
        %3433 = vmatpush.bf16.msra.mxu0 %v2924
        %3434 = vmatpush.bf16.msra.mxu0 %v2920
        %3435 = vmatmul.bf16.gmra.mxu0 %v1402
        %v3436 = vpop.f32.mrf.mxu0
        %v3437 = vadd.f32 %v3424, %v3436
        %v3438 = vpop.f32.mrf.mxu0
        %3439 = vdwg.mxu0
        %3440 = vmatpush.bf16.msra.mxu0 %v2980
        %3441 = vmatpush.bf16.msra.mxu0 %v2976
        %3442 = vmatpush.bf16.msra.mxu0 %v2972
        %3443 = vmatpush.bf16.msra.mxu0 %v2968
        %3444 = vmatpush.bf16.msra.mxu0 %v2964
        %3445 = vmatpush.bf16.msra.mxu0 %v2960
        %3446 = vmatpush.bf16.msra.mxu0 %v2956
        %3447 = vmatpush.bf16.msra.mxu0 %v2952
        %3448 = vmatmul.bf16.gmra.mxu0 %v1403
        %v3449 = vpop.f32.mrf.mxu0
        %v3450 = vadd.f32 %v3437, %v3449
        %v3451 = vpop.f32.mrf.mxu0
        %3452 = vdwg.mxu0
        %3453 = vmatpush.bf16.msra.mxu0 %v3012
        %3454 = vmatpush.bf16.msra.mxu0 %v3008
        %3455 = vmatpush.bf16.msra.mxu0 %v3004
        %3456 = vmatpush.bf16.msra.mxu0 %v3000
        %3457 = vmatpush.bf16.msra.mxu0 %v2996
        %3458 = vmatpush.bf16.msra.mxu0 %v2992
        %3459 = vmatpush.bf16.msra.mxu0 %v2988
        %3460 = vmatpush.bf16.msra.mxu0 %v2984
        %3461 = vmatmul.bf16.gmra.mxu0 %v1404
        %v3462 = vpop.f32.mrf.mxu0
        %v3463 = vadd.f32 %v3450, %v3462
        %v3464 = vpop.f32.mrf.mxu0
        %3465 = vdwg.mxu0
        %3466 = vmatpush.bf16.msra.mxu0 %v2725
        %3467 = vmatpush.bf16.msra.mxu0 %v2721
        %3468 = vmatpush.bf16.msra.mxu0 %v2717
        %3469 = vmatpush.bf16.msra.mxu0 %v2713
        %3470 = vmatpush.bf16.msra.mxu0 %v2709
        %3471 = vmatpush.bf16.msra.mxu0 %v2705
        %3472 = vmatpush.bf16.msra.mxu0 %v2701
        %3473 = vmatpush.bf16.msra.mxu0 %v2697
        %3474 = vmatmul.bf16.gmra.mxu0 %v1395
        %v3475 = vpop.f32.mrf.mxu0
        %v3476 = vadd.f32 %v1729, %v3475
        %v3477 = vpop.f32.mrf.mxu0
        %3478 = vdwg.mxu0
        %3479 = vmatpush.bf16.msra.mxu0 %v2757
        %3480 = vmatpush.bf16.msra.mxu0 %v2753
        %3481 = vmatpush.bf16.msra.mxu0 %v2749
        %3482 = vmatpush.bf16.msra.mxu0 %v2745
        %3483 = vmatpush.bf16.msra.mxu0 %v2741
        %3484 = vmatpush.bf16.msra.mxu0 %v2737
        %3485 = vmatpush.bf16.msra.mxu0 %v2733
        %3486 = vmatpush.bf16.msra.mxu0 %v2729
        %3487 = vmatmul.bf16.gmra.mxu0 %v1396
        %v3488 = vpop.f32.mrf.mxu0
        %v3489 = vadd.f32 %v3476, %v3488
        %v3490 = vpop.f32.mrf.mxu0
        %3491 = vdwg.mxu0
        %3492 = vmatpush.bf16.msra.mxu0 %v2789
        %3493 = vmatpush.bf16.msra.mxu0 %v2785
        %3494 = vmatpush.bf16.msra.mxu0 %v2781
        %3495 = vmatpush.bf16.msra.mxu0 %v2777
        %3496 = vmatpush.bf16.msra.mxu0 %v2773
        %3497 = vmatpush.bf16.msra.mxu0 %v2769
        %3498 = vmatpush.bf16.msra.mxu0 %v2765
        %3499 = vmatpush.bf16.msra.mxu0 %v2761
        %3500 = vmatmul.bf16.gmra.mxu0 %v1397
        %v3501 = vpop.f32.mrf.mxu0
        %v3502 = vadd.f32 %v3489, %v3501
        %v3503 = vpop.f32.mrf.mxu0
        %3504 = vdwg.mxu0
        %3505 = vmatpush.bf16.msra.mxu0 %v2821
        %3506 = vmatpush.bf16.msra.mxu0 %v2817
        %3507 = vmatpush.bf16.msra.mxu0 %v2813
        %3508 = vmatpush.bf16.msra.mxu0 %v2809
        %3509 = vmatpush.bf16.msra.mxu0 %v2805
        %3510 = vmatpush.bf16.msra.mxu0 %v2801
        %3511 = vmatpush.bf16.msra.mxu0 %v2797
        %3512 = vmatpush.bf16.msra.mxu0 %v2793
        %3513 = vmatmul.bf16.gmra.mxu0 %v1398
        %v3514 = vpop.f32.mrf.mxu0
        %v3515 = vadd.f32 %v3502, %v3514
        %v3516 = vpop.f32.mrf.mxu0
        %3517 = vdwg.mxu0
        %3518 = vmatpush.bf16.msra.mxu0 %v2853
        %3519 = vmatpush.bf16.msra.mxu0 %v2849
        %3520 = vmatpush.bf16.msra.mxu0 %v2845
        %3521 = vmatpush.bf16.msra.mxu0 %v2841
        %3522 = vmatpush.bf16.msra.mxu0 %v2837
        %3523 = vmatpush.bf16.msra.mxu0 %v2833
        %3524 = vmatpush.bf16.msra.mxu0 %v2829
        %3525 = vmatpush.bf16.msra.mxu0 %v2825
        %3526 = vmatmul.bf16.gmra.mxu0 %v1399
        %v3527 = vpop.f32.mrf.mxu0
        %v3528 = vadd.f32 %v3515, %v3527
        %v3529 = vpop.f32.mrf.mxu0
        %3530 = vdwg.mxu0
        %3531 = vmatpush.bf16.msra.mxu0 %v2885
        %3532 = vmatpush.bf16.msra.mxu0 %v2881
        %3533 = vmatpush.bf16.msra.mxu0 %v2877
        %3534 = vmatpush.bf16.msra.mxu0 %v2873
        %3535 = vmatpush.bf16.msra.mxu0 %v2869
        %3536 = vmatpush.bf16.msra.mxu0 %v2865
        %3537 = vmatpush.bf16.msra.mxu0 %v2861
        %3538 = vmatpush.bf16.msra.mxu0 %v2857
        %3539 = vmatmul.bf16.gmra.mxu0 %v1400
        %v3540 = vpop.f32.mrf.mxu0
        %v3541 = vadd.f32 %v3528, %v3540
        %v3542 = vpop.f32.mrf.mxu0
        %3543 = vdwg.mxu0
        %3544 = vmatpush.bf16.msra.mxu0 %v2917
        %3545 = vmatpush.bf16.msra.mxu0 %v2913
        %3546 = vmatpush.bf16.msra.mxu0 %v2909
        %3547 = vmatpush.bf16.msra.mxu0 %v2905
        %3548 = vmatpush.bf16.msra.mxu0 %v2901
        %3549 = vmatpush.bf16.msra.mxu0 %v2897
        %3550 = vmatpush.bf16.msra.mxu0 %v2893
        %3551 = vmatpush.bf16.msra.mxu0 %v2889
        %3552 = vmatmul.bf16.gmra.mxu0 %v1401
        %v3553 = vpop.f32.mrf.mxu0
        %v3554 = vadd.f32 %v3541, %v3553
        %v3555 = vpop.f32.mrf.mxu0
        %3556 = vdwg.mxu0
        %3557 = vmatpush.bf16.msra.mxu0 %v2949
        %3558 = vmatpush.bf16.msra.mxu0 %v2945
        %3559 = vmatpush.bf16.msra.mxu0 %v2941
        %3560 = vmatpush.bf16.msra.mxu0 %v2937
        %3561 = vmatpush.bf16.msra.mxu0 %v2933
        %3562 = vmatpush.bf16.msra.mxu0 %v2929
        %3563 = vmatpush.bf16.msra.mxu0 %v2925
        %3564 = vmatpush.bf16.msra.mxu0 %v2921
        %3565 = vmatmul.bf16.gmra.mxu0 %v1402
        %v3566 = vpop.f32.mrf.mxu0
        %v3567 = vadd.f32 %v3554, %v3566
        %v3568 = vpop.f32.mrf.mxu0
        %3569 = vdwg.mxu0
        %3570 = vmatpush.bf16.msra.mxu0 %v2981
        %3571 = vmatpush.bf16.msra.mxu0 %v2977
        %3572 = vmatpush.bf16.msra.mxu0 %v2973
        %3573 = vmatpush.bf16.msra.mxu0 %v2969
        %3574 = vmatpush.bf16.msra.mxu0 %v2965
        %3575 = vmatpush.bf16.msra.mxu0 %v2961
        %3576 = vmatpush.bf16.msra.mxu0 %v2957
        %3577 = vmatpush.bf16.msra.mxu0 %v2953
        %3578 = vmatmul.bf16.gmra.mxu0 %v1403
        %v3579 = vpop.f32.mrf.mxu0
        %v3580 = vadd.f32 %v3567, %v3579
        %v3581 = vpop.f32.mrf.mxu0
        %3582 = vdwg.mxu0
        %3583 = vmatpush.bf16.msra.mxu0 %v3013
        %3584 = vmatpush.bf16.msra.mxu0 %v3009
        %3585 = vmatpush.bf16.msra.mxu0 %v3005
        %3586 = vmatpush.bf16.msra.mxu0 %v3001
        %3587 = vmatpush.bf16.msra.mxu0 %v2997
        %3588 = vmatpush.bf16.msra.mxu0 %v2993
        %3589 = vmatpush.bf16.msra.mxu0 %v2989
        %3590 = vmatpush.bf16.msra.mxu0 %v2985
        %3591 = vmatmul.bf16.gmra.mxu0 %v1404
        %v3592 = vpop.f32.mrf.mxu0
        %v3593 = vadd.f32 %v3580, %v3592
        %v3594 = vpop.f32.mrf.mxu0
        %3595 = vdwg.mxu0
        %3596 = vmatpush.bf16.msra.mxu0 %v2726
        %3597 = vmatpush.bf16.msra.mxu0 %v2722
        %3598 = vmatpush.bf16.msra.mxu0 %v2718
        %3599 = vmatpush.bf16.msra.mxu0 %v2714
        %3600 = vmatpush.bf16.msra.mxu0 %v2710
        %3601 = vmatpush.bf16.msra.mxu0 %v2706
        %3602 = vmatpush.bf16.msra.mxu0 %v2702
        %3603 = vmatpush.bf16.msra.mxu0 %v2698
        %3604 = vmatmul.bf16.gmra.mxu0 %v1395
        %v3605 = vpop.f32.mrf.mxu0
        %v3606 = vadd.f32 %v1730, %v3605
        %v3607 = vpop.f32.mrf.mxu0
        %3608 = vdwg.mxu0
        %3609 = vmatpush.bf16.msra.mxu0 %v2758
        %3610 = vmatpush.bf16.msra.mxu0 %v2754
        %3611 = vmatpush.bf16.msra.mxu0 %v2750
        %3612 = vmatpush.bf16.msra.mxu0 %v2746
        %3613 = vmatpush.bf16.msra.mxu0 %v2742
        %3614 = vmatpush.bf16.msra.mxu0 %v2738
        %3615 = vmatpush.bf16.msra.mxu0 %v2734
        %3616 = vmatpush.bf16.msra.mxu0 %v2730
        %3617 = vmatmul.bf16.gmra.mxu0 %v1396
        %v3618 = vpop.f32.mrf.mxu0
        %v3619 = vadd.f32 %v3606, %v3618
        %v3620 = vpop.f32.mrf.mxu0
        %3621 = vdwg.mxu0
        %3622 = vmatpush.bf16.msra.mxu0 %v2790
        %3623 = vmatpush.bf16.msra.mxu0 %v2786
        %3624 = vmatpush.bf16.msra.mxu0 %v2782
        %3625 = vmatpush.bf16.msra.mxu0 %v2778
        %3626 = vmatpush.bf16.msra.mxu0 %v2774
        %3627 = vmatpush.bf16.msra.mxu0 %v2770
        %3628 = vmatpush.bf16.msra.mxu0 %v2766
        %3629 = vmatpush.bf16.msra.mxu0 %v2762
        %3630 = vmatmul.bf16.gmra.mxu0 %v1397
        %v3631 = vpop.f32.mrf.mxu0
        %v3632 = vadd.f32 %v3619, %v3631
        %v3633 = vpop.f32.mrf.mxu0
        %3634 = vdwg.mxu0
        %3635 = vmatpush.bf16.msra.mxu0 %v2822
        %3636 = vmatpush.bf16.msra.mxu0 %v2818
        %3637 = vmatpush.bf16.msra.mxu0 %v2814
        %3638 = vmatpush.bf16.msra.mxu0 %v2810
        %3639 = vmatpush.bf16.msra.mxu0 %v2806
        %3640 = vmatpush.bf16.msra.mxu0 %v2802
        %3641 = vmatpush.bf16.msra.mxu0 %v2798
        %3642 = vmatpush.bf16.msra.mxu0 %v2794
        %3643 = vmatmul.bf16.gmra.mxu0 %v1398
        %v3644 = vpop.f32.mrf.mxu0
        %v3645 = vadd.f32 %v3632, %v3644
        %v3646 = vpop.f32.mrf.mxu0
        %3647 = vdwg.mxu0
        %3648 = vmatpush.bf16.msra.mxu0 %v2854
        %3649 = vmatpush.bf16.msra.mxu0 %v2850
        %3650 = vmatpush.bf16.msra.mxu0 %v2846
        %3651 = vmatpush.bf16.msra.mxu0 %v2842
        %3652 = vmatpush.bf16.msra.mxu0 %v2838
        %3653 = vmatpush.bf16.msra.mxu0 %v2834
        %3654 = vmatpush.bf16.msra.mxu0 %v2830
        %3655 = vmatpush.bf16.msra.mxu0 %v2826
        %3656 = vmatmul.bf16.gmra.mxu0 %v1399
        %v3657 = vpop.f32.mrf.mxu0
        %v3658 = vadd.f32 %v3645, %v3657
        %v3659 = vpop.f32.mrf.mxu0
        %3660 = vdwg.mxu0
        %3661 = vmatpush.bf16.msra.mxu0 %v2886
        %3662 = vmatpush.bf16.msra.mxu0 %v2882
        %3663 = vmatpush.bf16.msra.mxu0 %v2878
        %3664 = vmatpush.bf16.msra.mxu0 %v2874
        %3665 = vmatpush.bf16.msra.mxu0 %v2870
        %3666 = vmatpush.bf16.msra.mxu0 %v2866
        %3667 = vmatpush.bf16.msra.mxu0 %v2862
        %3668 = vmatpush.bf16.msra.mxu0 %v2858
        %3669 = vmatmul.bf16.gmra.mxu0 %v1400
        %v3670 = vpop.f32.mrf.mxu0
        %v3671 = vadd.f32 %v3658, %v3670
        %v3672 = vpop.f32.mrf.mxu0
        %3673 = vdwg.mxu0
        %3674 = vmatpush.bf16.msra.mxu0 %v2918
        %3675 = vmatpush.bf16.msra.mxu0 %v2914
        %3676 = vmatpush.bf16.msra.mxu0 %v2910
        %3677 = vmatpush.bf16.msra.mxu0 %v2906
        %3678 = vmatpush.bf16.msra.mxu0 %v2902
        %3679 = vmatpush.bf16.msra.mxu0 %v2898
        %3680 = vmatpush.bf16.msra.mxu0 %v2894
        %3681 = vmatpush.bf16.msra.mxu0 %v2890
        %3682 = vmatmul.bf16.gmra.mxu0 %v1401
        %v3683 = vpop.f32.mrf.mxu0
        %v3684 = vadd.f32 %v3671, %v3683
        %v3685 = vpop.f32.mrf.mxu0
        %3686 = vdwg.mxu0
        %3687 = vmatpush.bf16.msra.mxu0 %v2950
        %3688 = vmatpush.bf16.msra.mxu0 %v2946
        %3689 = vmatpush.bf16.msra.mxu0 %v2942
        %3690 = vmatpush.bf16.msra.mxu0 %v2938
        %3691 = vmatpush.bf16.msra.mxu0 %v2934
        %3692 = vmatpush.bf16.msra.mxu0 %v2930
        %3693 = vmatpush.bf16.msra.mxu0 %v2926
        %3694 = vmatpush.bf16.msra.mxu0 %v2922
        %3695 = vmatmul.bf16.gmra.mxu0 %v1402
        %v3696 = vpop.f32.mrf.mxu0
        %v3697 = vadd.f32 %v3684, %v3696
        %v3698 = vpop.f32.mrf.mxu0
        %3699 = vdwg.mxu0
        %3700 = vmatpush.bf16.msra.mxu0 %v2982
        %3701 = vmatpush.bf16.msra.mxu0 %v2978
        %3702 = vmatpush.bf16.msra.mxu0 %v2974
        %3703 = vmatpush.bf16.msra.mxu0 %v2970
        %3704 = vmatpush.bf16.msra.mxu0 %v2966
        %3705 = vmatpush.bf16.msra.mxu0 %v2962
        %3706 = vmatpush.bf16.msra.mxu0 %v2958
        %3707 = vmatpush.bf16.msra.mxu0 %v2954
        %3708 = vmatmul.bf16.gmra.mxu0 %v1403
        %v3709 = vpop.f32.mrf.mxu0
        %v3710 = vadd.f32 %v3697, %v3709
        %v3711 = vpop.f32.mrf.mxu0
        %3712 = vdwg.mxu0
        %3713 = vmatpush.bf16.msra.mxu0 %v3014
        %3714 = vmatpush.bf16.msra.mxu0 %v3010
        %3715 = vmatpush.bf16.msra.mxu0 %v3006
        %3716 = vmatpush.bf16.msra.mxu0 %v3002
        %3717 = vmatpush.bf16.msra.mxu0 %v2998
        %3718 = vmatpush.bf16.msra.mxu0 %v2994
        %3719 = vmatpush.bf16.msra.mxu0 %v2990
        %3720 = vmatpush.bf16.msra.mxu0 %v2986
        %3721 = vmatmul.bf16.gmra.mxu0 %v1404
        %v3722 = vpop.f32.mrf.mxu0
        %v3723 = vadd.f32 %v3710, %v3722
        %v3724 = vpop.f32.mrf.mxu0
        %3725 = vdwg.mxu0
        %3726 = vmatpush.bf16.msra.mxu0 %v2727
        %3727 = vmatpush.bf16.msra.mxu0 %v2723
        %3728 = vmatpush.bf16.msra.mxu0 %v2719
        %3729 = vmatpush.bf16.msra.mxu0 %v2715
        %3730 = vmatpush.bf16.msra.mxu0 %v2711
        %3731 = vmatpush.bf16.msra.mxu0 %v2707
        %3732 = vmatpush.bf16.msra.mxu0 %v2703
        %3733 = vmatpush.bf16.msra.mxu0 %v2699
        %3734 = vmatmul.bf16.gmra.mxu0 %v1395
        %v3735 = vpop.f32.mrf.mxu0
        %v3736 = vadd.f32 %v1731, %v3735
        %v3737 = vpop.f32.mrf.mxu0
        %3738 = vdwg.mxu0
        %3739 = vmatpush.bf16.msra.mxu0 %v2759
        %3740 = vmatpush.bf16.msra.mxu0 %v2755
        %3741 = vmatpush.bf16.msra.mxu0 %v2751
        %3742 = vmatpush.bf16.msra.mxu0 %v2747
        %3743 = vmatpush.bf16.msra.mxu0 %v2743
        %3744 = vmatpush.bf16.msra.mxu0 %v2739
        %3745 = vmatpush.bf16.msra.mxu0 %v2735
        %3746 = vmatpush.bf16.msra.mxu0 %v2731
        %3747 = vmatmul.bf16.gmra.mxu0 %v1396
        %v3748 = vpop.f32.mrf.mxu0
        %v3749 = vadd.f32 %v3736, %v3748
        %v3750 = vpop.f32.mrf.mxu0
        %3751 = vdwg.mxu0
        %3752 = vmatpush.bf16.msra.mxu0 %v2791
        %3753 = vmatpush.bf16.msra.mxu0 %v2787
        %3754 = vmatpush.bf16.msra.mxu0 %v2783
        %3755 = vmatpush.bf16.msra.mxu0 %v2779
        %3756 = vmatpush.bf16.msra.mxu0 %v2775
        %3757 = vmatpush.bf16.msra.mxu0 %v2771
        %3758 = vmatpush.bf16.msra.mxu0 %v2767
        %3759 = vmatpush.bf16.msra.mxu0 %v2763
        %3760 = vmatmul.bf16.gmra.mxu0 %v1397
        %v3761 = vpop.f32.mrf.mxu0
        %v3762 = vadd.f32 %v3749, %v3761
        %v3763 = vpop.f32.mrf.mxu0
        %3764 = vdwg.mxu0
        %3765 = vmatpush.bf16.msra.mxu0 %v2823
        %3766 = vmatpush.bf16.msra.mxu0 %v2819
        %3767 = vmatpush.bf16.msra.mxu0 %v2815
        %3768 = vmatpush.bf16.msra.mxu0 %v2811
        %3769 = vmatpush.bf16.msra.mxu0 %v2807
        %3770 = vmatpush.bf16.msra.mxu0 %v2803
        %3771 = vmatpush.bf16.msra.mxu0 %v2799
        %3772 = vmatpush.bf16.msra.mxu0 %v2795
        %3773 = vmatmul.bf16.gmra.mxu0 %v1398
        %v3774 = vpop.f32.mrf.mxu0
        %v3775 = vadd.f32 %v3762, %v3774
        %v3776 = vpop.f32.mrf.mxu0
        %3777 = vdwg.mxu0
        %3778 = vmatpush.bf16.msra.mxu0 %v2855
        %3779 = vmatpush.bf16.msra.mxu0 %v2851
        %3780 = vmatpush.bf16.msra.mxu0 %v2847
        %3781 = vmatpush.bf16.msra.mxu0 %v2843
        %3782 = vmatpush.bf16.msra.mxu0 %v2839
        %3783 = vmatpush.bf16.msra.mxu0 %v2835
        %3784 = vmatpush.bf16.msra.mxu0 %v2831
        %3785 = vmatpush.bf16.msra.mxu0 %v2827
        %3786 = vmatmul.bf16.gmra.mxu0 %v1399
        %v3787 = vpop.f32.mrf.mxu0
        %v3788 = vadd.f32 %v3775, %v3787
        %v3789 = vpop.f32.mrf.mxu0
        %3790 = vdwg.mxu0
        %3791 = vmatpush.bf16.msra.mxu0 %v2887
        %3792 = vmatpush.bf16.msra.mxu0 %v2883
        %3793 = vmatpush.bf16.msra.mxu0 %v2879
        %3794 = vmatpush.bf16.msra.mxu0 %v2875
        %3795 = vmatpush.bf16.msra.mxu0 %v2871
        %3796 = vmatpush.bf16.msra.mxu0 %v2867
        %3797 = vmatpush.bf16.msra.mxu0 %v2863
        %3798 = vmatpush.bf16.msra.mxu0 %v2859
        %3799 = vmatmul.bf16.gmra.mxu0 %v1400
        %v3800 = vpop.f32.mrf.mxu0
        %v3801 = vadd.f32 %v3788, %v3800
        %v3802 = vpop.f32.mrf.mxu0
        %3803 = vdwg.mxu0
        %3804 = vmatpush.bf16.msra.mxu0 %v2919
        %3805 = vmatpush.bf16.msra.mxu0 %v2915
        %3806 = vmatpush.bf16.msra.mxu0 %v2911
        %3807 = vmatpush.bf16.msra.mxu0 %v2907
        %3808 = vmatpush.bf16.msra.mxu0 %v2903
        %3809 = vmatpush.bf16.msra.mxu0 %v2899
        %3810 = vmatpush.bf16.msra.mxu0 %v2895
        %3811 = vmatpush.bf16.msra.mxu0 %v2891
        %3812 = vmatmul.bf16.gmra.mxu0 %v1401
        %v3813 = vpop.f32.mrf.mxu0
        %v3814 = vadd.f32 %v3801, %v3813
        %v3815 = vpop.f32.mrf.mxu0
        %3816 = vdwg.mxu0
        %3817 = vmatpush.bf16.msra.mxu0 %v2951
        %3818 = vmatpush.bf16.msra.mxu0 %v2947
        %3819 = vmatpush.bf16.msra.mxu0 %v2943
        %3820 = vmatpush.bf16.msra.mxu0 %v2939
        %3821 = vmatpush.bf16.msra.mxu0 %v2935
        %3822 = vmatpush.bf16.msra.mxu0 %v2931
        %3823 = vmatpush.bf16.msra.mxu0 %v2927
        %3824 = vmatpush.bf16.msra.mxu0 %v2923
        %3825 = vmatmul.bf16.gmra.mxu0 %v1402
        %v3826 = vpop.f32.mrf.mxu0
        %v3827 = vadd.f32 %v3814, %v3826
        %v3828 = vpop.f32.mrf.mxu0
        %3829 = vdwg.mxu0
        %3830 = vmatpush.bf16.msra.mxu0 %v2983
        %3831 = vmatpush.bf16.msra.mxu0 %v2979
        %3832 = vmatpush.bf16.msra.mxu0 %v2975
        %3833 = vmatpush.bf16.msra.mxu0 %v2971
        %3834 = vmatpush.bf16.msra.mxu0 %v2967
        %3835 = vmatpush.bf16.msra.mxu0 %v2963
        %3836 = vmatpush.bf16.msra.mxu0 %v2959
        %3837 = vmatpush.bf16.msra.mxu0 %v2955
        %3838 = vmatmul.bf16.gmra.mxu0 %v1403
        %v3839 = vpop.f32.mrf.mxu0
        %v3840 = vadd.f32 %v3827, %v3839
        %v3841 = vpop.f32.mrf.mxu0
        %3842 = vdwg.mxu0
        %3843 = vmatpush.bf16.msra.mxu0 %v3015
        %3844 = vmatpush.bf16.msra.mxu0 %v3011
        %3845 = vmatpush.bf16.msra.mxu0 %v3007
        %3846 = vmatpush.bf16.msra.mxu0 %v3003
        %3847 = vmatpush.bf16.msra.mxu0 %v2999
        %3848 = vmatpush.bf16.msra.mxu0 %v2995
        %3849 = vmatpush.bf16.msra.mxu0 %v2991
        %3850 = vmatpush.bf16.msra.mxu0 %v2987
        %3851 = vmatmul.bf16.gmra.mxu0 %v1404
        %v3852 = vpop.f32.mrf.mxu0
        %v3853 = vadd.f32 %v3840, %v3852
        %v3854 = vpop.f32.mrf.mxu0
        %3855 = vdwg.mxu0
        %s3856 = scalar_lea.vmem [#allocation20], 3
        %v3857 = vld [vmem:[%s3856] ss:$8 sm:$0xf]
        %s3858 = scalar_lea.vmem [#allocation20], 4
        %v3859 = vld [vmem:[%s3858] ss:$8 sm:$0xf]
        %v3860 = vadd.f32 %v3463, %v3593
        %v3861 = vadd.f32 %v3860, %v3723
        %v3862 = vadd.f32 %v3861, %v3853
        %3863 = vadd.xlane.f32.xlu0 %v3862
        %v3864 = vpop.xlane.xlu0 %3863
        %v3865 = vrcp.pop 512.0
        %v3866 = vmul.f32 512.0, %v3865
        %v3867 = vsub.f32 1.0, %v3866
        %v3868 = vmul.f32 %v3865, %v3867
        %v3869 = vadd.f32 %v3865, %v3868
        %vm3870 = vweird.f32 %v3865
        %v3871 = vsel %vm3870, %v3865, %v3869
        %v3872 = vmul.f32 %v3864, %v3871
        %v3873 = vmul.f32 %v3463, %v3463
        %v3874 = vmul.f32 %v3593, %v3593
        %v3875 = vmul.f32 %v3723, %v3723
        %v3876 = vmul.f32 %v3853, %v3853
        %v3877 = vadd.f32 %v3873, %v3874
        %v3878 = vadd.f32 %v3877, %v3875
        %v3879 = vadd.f32 %v3878, %v3876
        %3880 = vadd.xlane.f32.xlu0 %v3879
        %v3881 = vpop.xlane.xlu0 %3880
        %v3882 = vmul.f32 %v3881, %v3871
        %v3883 = vmul.f32 %v3872, %v3872
        %v3884 = vsub.f32 %v3882, %v3883
        %v3885 = vsub.f32 %v3463, %v3872
        %v3886 = vsub.f32 %v3593, %v3872
        %v3887 = vsub.f32 %v3723, %v3872
        %v3888 = vsub.f32 %v3853, %v3872
        %v3889 = vadd.f32 %v3884, 1e-05
        %v3890 = vrsqrt.pop %v3889
        %v3891 = vmul.f32 %v3890, %v3889
        %v3892 = vmul.f32 %v3891, %v3890
        %v3893 = vmul.f32 0.5, %v3892
        %v3894 = vsub.f32 1.5, %v3893
        %v3895 = vmul.f32 %v3890, %v3894
        %vm3896 = vweird.f32 %v3889
        %vm3897 = vweird.f32 %v3890
        %vm3898 = vmor %vm3896, %vm3897
        %v3899 = vsel %vm3898, %v3890, %v3895
        %v3900 = vmul.f32 %v3885, %v3899
        %v3901 = vmul.f32 %v3886, %v3899
        %v3902 = vmul.f32 %v3887, %v3899
        %v3903 = vmul.f32 %v3888, %v3899
        %v3905 = vperm.slane %v3857, 0
        %v3906 = vperm.slane %v3857, 1
        %v3907 = vperm.slane %v3857, 2
        %v3908 = vperm.slane %v3857, 3
        %v3913 = vmul.f32 %v3900, %v3905
        %v3914 = vmul.f32 %v3901, %v3906
        %v3915 = vmul.f32 %v3902, %v3907
        %v3916 = vmul.f32 %v3903, %v3908
        %v3918 = vperm.slane %v3859, 0
        %v3919 = vperm.slane %v3859, 1
        %v3920 = vperm.slane %v3859, 2
        %v3921 = vperm.slane %v3859, 3
        %v3926 = vadd.f32 %v3913, %v3918
        %v3927 = vadd.f32 %v3914, %v3919
        %v3928 = vadd.f32 %v3915, %v3920
        %v3929 = vadd.f32 %v3916, %v3921
        %v3930 = vxor.u32 %v3926, 2147483648
        %v3931 = vxor.u32 %v3927, 2147483648
        %v3932 = vxor.u32 %v3928, 2147483648
        %v3933 = vxor.u32 %v3929, 2147483648
        %v3934 = vmul.f32 %v3930, 1.442695
        %v3935 = vpow.pop %v3934
        %v3936 = vmul.f32 %v3931, 1.442695
        %v3937 = vpow.pop %v3936
        %v3938 = vmul.f32 %v3932, 1.442695
        %v3939 = vpow.pop %v3938
        %v3940 = vmul.f32 %v3933, 1.442695
        %v3941 = vpow.pop %v3940
        %v3942 = vadd.f32 %v3935, 1.0
        %v3943 = vadd.f32 %v3937, 1.0
        %v3944 = vadd.f32 %v3939, 1.0
        %v3945 = vadd.f32 %v3941, 1.0
        %v3946 = vrcp.pop %v3942
        %v3947 = vmul.f32 %v3942, %v3946
        %v3948 = vsub.f32 1.0, %v3947
        %v3949 = vmul.f32 %v3946, %v3948
        %v3950 = vadd.f32 %v3946, %v3949
        %vm3951 = vweird.f32 %v3942
        %vm3952 = vweird.f32 %v3946
        %vm3953 = vmor %vm3951, %vm3952
        %v3954 = vsel %vm3953, %v3946, %v3950
        %v3955 = vand.u32 2147483647, %v3942
        %vm3956 = vcmp.eq.f32.partialorder %v3955, 8.507059e+37
        %v3957 = vand.u32 %v3942, 2147483648
        %v3958 = vor.u32 1.1754944e-38, %v3957
        %v3959 = vsel %vm3956, %v3958, %v3954
        %v3960 = vmul.f32 1.0, %v3959
        %v3961 = vrcp.pop %v3943
        %v3962 = vmul.f32 %v3943, %v3961
        %v3963 = vsub.f32 1.0, %v3962
        %v3964 = vmul.f32 %v3961, %v3963
        %v3965 = vadd.f32 %v3961, %v3964
        %vm3966 = vweird.f32 %v3943
        %vm3967 = vweird.f32 %v3961
        %vm3968 = vmor %vm3966, %vm3967
        %v3969 = vsel %vm3968, %v3961, %v3965
        %v3970 = vand.u32 2147483647, %v3943
        %vm3971 = vcmp.eq.f32.partialorder %v3970, 8.507059e+37
        %v3972 = vand.u32 %v3943, 2147483648
        %v3973 = vor.u32 1.1754944e-38, %v3972
        %v3974 = vsel %vm3971, %v3973, %v3969
        %v3975 = vmul.f32 1.0, %v3974
        %v3976 = vrcp.pop %v3944
        %v3977 = vmul.f32 %v3944, %v3976
        %v3978 = vsub.f32 1.0, %v3977
        %v3979 = vmul.f32 %v3976, %v3978
        %v3980 = vadd.f32 %v3976, %v3979
        %vm3981 = vweird.f32 %v3944
        %vm3982 = vweird.f32 %v3976
        %vm3983 = vmor %vm3981, %vm3982
        %v3984 = vsel %vm3983, %v3976, %v3980
        %v3985 = vand.u32 2147483647, %v3944
        %vm3986 = vcmp.eq.f32.partialorder %v3985, 8.507059e+37
        %v3987 = vand.u32 %v3944, 2147483648
        %v3988 = vor.u32 1.1754944e-38, %v3987
        %v3989 = vsel %vm3986, %v3988, %v3984
        %v3990 = vmul.f32 1.0, %v3989
        %v3991 = vrcp.pop %v3945
        %v3992 = vmul.f32 %v3945, %v3991
        %v3993 = vsub.f32 1.0, %v3992
        %v3994 = vmul.f32 %v3991, %v3993
        %v3995 = vadd.f32 %v3991, %v3994
        %vm3996 = vweird.f32 %v3945
        %vm3997 = vweird.f32 %v3991
        %vm3998 = vmor %vm3996, %vm3997
        %v3999 = vsel %vm3998, %v3991, %v3995
        %v4000 = vand.u32 2147483647, %v3945
        %vm4001 = vcmp.eq.f32.partialorder %v4000, 8.507059e+37
        %v4002 = vand.u32 %v3945, 2147483648
        %v4003 = vor.u32 1.1754944e-38, %v4002
        %v4004 = vsel %vm4001, %v4003, %v3999
        %v4005 = vmul.f32 1.0, %v4004
        %v4006 = vmul.f32 %v3926, %v3960
        %v4007 = vmul.f32 %v3927, %v3975
        %v4008 = vmul.f32 %v3928, %v3990
        %v4009 = vmul.f32 %v3929, %v4005
        %v4010 = vpack.c.bf16 %v4006, %v4006
        %v4011 = vpack.c.bf16 %v4007, %v4007
        %v4012 = vpack.c.bf16 %v4008, %v4008
        %v4013 = vpack.c.bf16 %v4009, %v4009
        %v4014 = vld [vmem:[#allocation13] sm:$0xff]
        %v4015 = vld [vmem:[#allocation13 + $0x8] sm:$0xff]
        %v4016 = vld [vmem:[#allocation13 + $0x10] sm:$0xff]
        %v4017 = vld [vmem:[#allocation13 + $0x18] sm:$0xff]
        %v4018 = vld [vmem:[#allocation13 + $0x20] sm:$0xff]
        %v4019 = vld [vmem:[#allocation13 + $0x28] sm:$0xff]
        %v4020 = vld [vmem:[#allocation13 + $0x30] sm:$0xff]
        %v4021 = vld [vmem:[#allocation13 + $0x38] sm:$0xff]
        %v4022 = vld [vmem:[#allocation13 + $0x40] sm:$0xff]
        %v4023 = vld [vmem:[#allocation13 + $0x48] sm:$0xff]
        %v4024 = vld [vmem:[#allocation13 + $0x50] sm:$0xff]
        %v4025 = vld [vmem:[#allocation13 + $0x58] sm:$0xff]
        %v4026 = vld [vmem:[#allocation13 + $0x60] sm:$0xff]
        %v4027 = vld [vmem:[#allocation13 + $0x68] sm:$0xff]
        %v4028 = vld [vmem:[#allocation13 + $0x70] sm:$0xff]
        %v4029 = vld [vmem:[#allocation13 + $0x78] sm:$0xff]
        %v4030 = vld [vmem:[#allocation13 + $0x80] sm:$0xff]
        %v4031 = vld [vmem:[#allocation13 + $0x88] sm:$0xff]
        %v4032 = vld [vmem:[#allocation13 + $0x90] sm:$0xff]
        %v4033 = vld [vmem:[#allocation13 + $0x98] sm:$0xff]
        %v4034 = vld [vmem:[#allocation13 + $0xa0] sm:$0xff]
        %v4035 = vld [vmem:[#allocation13 + $0xa8] sm:$0xff]
        %v4036 = vld [vmem:[#allocation13 + $0xb0] sm:$0xff]
        %v4037 = vld [vmem:[#allocation13 + $0xb8] sm:$0xff]
        %v4038 = vld [vmem:[#allocation13 + $0xc0] sm:$0xff]
        %v4039 = vld [vmem:[#allocation13 + $0xc8] sm:$0xff]
        %v4040 = vld [vmem:[#allocation13 + $0xd0] sm:$0xff]
        %v4041 = vld [vmem:[#allocation13 + $0xd8] sm:$0xff]
        %v4042 = vld [vmem:[#allocation13 + $0xe0] sm:$0xff]
        %v4043 = vld [vmem:[#allocation13 + $0xe8] sm:$0xff]
        %v4044 = vld [vmem:[#allocation13 + $0xf0] sm:$0xff]
        %v4045 = vld [vmem:[#allocation13 + $0xf8] sm:$0xff]
        %v4046 = vld [vmem:[#allocation13 + $0x100] sm:$0xff]
        %v4047 = vld [vmem:[#allocation13 + $0x108] sm:$0xff]
        %v4048 = vld [vmem:[#allocation13 + $0x110] sm:$0xff]
        %v4049 = vld [vmem:[#allocation13 + $0x118] sm:$0xff]
        %v4050 = vld [vmem:[#allocation13 + $0x120] sm:$0xff]
        %v4051 = vld [vmem:[#allocation13 + $0x128] sm:$0xff]
        %v4052 = vld [vmem:[#allocation13 + $0x130] sm:$0xff]
        %v4053 = vld [vmem:[#allocation13 + $0x138] sm:$0xff]
        %v4054 = vld [vmem:[#allocation13 + $0x140] sm:$0xff]
        %v4055 = vld [vmem:[#allocation13 + $0x148] sm:$0xff]
        %v4056 = vld [vmem:[#allocation13 + $0x150] sm:$0xff]
        %v4057 = vld [vmem:[#allocation13 + $0x158] sm:$0xff]
        %v4058 = vld [vmem:[#allocation13 + $0x160] sm:$0xff]
        %v4059 = vld [vmem:[#allocation13 + $0x168] sm:$0xff]
        %v4060 = vld [vmem:[#allocation13 + $0x170] sm:$0xff]
        %v4061 = vld [vmem:[#allocation13 + $0x178] sm:$0xff]
        %v4062 = vld [vmem:[#allocation13 + $0x180] sm:$0xff]
        %v4063 = vld [vmem:[#allocation13 + $0x188] sm:$0xff]
        %v4064 = vld [vmem:[#allocation13 + $0x190] sm:$0xff]
        %v4065 = vld [vmem:[#allocation13 + $0x198] sm:$0xff]
        %v4066 = vld [vmem:[#allocation13 + $0x1a0] sm:$0xff]
        %v4067 = vld [vmem:[#allocation13 + $0x1a8] sm:$0xff]
        %v4068 = vld [vmem:[#allocation13 + $0x1b0] sm:$0xff]
        %v4069 = vld [vmem:[#allocation13 + $0x1b8] sm:$0xff]
        %v4070 = vld [vmem:[#allocation13 + $0x1c0] sm:$0xff]
        %v4071 = vld [vmem:[#allocation13 + $0x1c8] sm:$0xff]
        %v4072 = vld [vmem:[#allocation13 + $0x1d0] sm:$0xff]
        %v4073 = vld [vmem:[#allocation13 + $0x1d8] sm:$0xff]
        %v4074 = vld [vmem:[#allocation13 + $0x1e0] sm:$0xff]
        %v4075 = vld [vmem:[#allocation13 + $0x1e8] sm:$0xff]
        %v4076 = vld [vmem:[#allocation13 + $0x1f0] sm:$0xff]
        %v4077 = vld [vmem:[#allocation13 + $0x1f8] sm:$0xff]
        %s4078 = scalar_lea.vmem [#allocation20], 5
        %v4079 = vld [vmem:[%s4078] ss:$8 sm:$0x3]
        %v4081 = vperm.slane %v4079, 0
        %v4082 = vperm.slane %v4079, 1
        %v4149 = vunpack.c.l.b16 %v4014
        %v4150 = vunpack.c.h.b16 %v4014
        %v4151 = vunpack.c.l.b16 %v4015
        %v4152 = vunpack.c.h.b16 %v4015
        %v4153 = vunpack.c.l.b16 %v4016
        %v4154 = vunpack.c.h.b16 %v4016
        %v4155 = vunpack.c.l.b16 %v4017
        %v4156 = vunpack.c.h.b16 %v4017
        %v4157 = vunpack.c.l.b16 %v4018
        %v4158 = vunpack.c.h.b16 %v4018
        %v4159 = vunpack.c.l.b16 %v4019
        %v4160 = vunpack.c.h.b16 %v4019
        %v4161 = vunpack.c.l.b16 %v4020
        %v4162 = vunpack.c.h.b16 %v4020
        %v4163 = vunpack.c.l.b16 %v4021
        %v4164 = vunpack.c.h.b16 %v4021
        %v4165 = vunpack.c.l.b16 %v4022
        %v4166 = vunpack.c.h.b16 %v4022
        %v4167 = vunpack.c.l.b16 %v4023
        %v4168 = vunpack.c.h.b16 %v4023
        %v4169 = vunpack.c.l.b16 %v4024
        %v4170 = vunpack.c.h.b16 %v4024
        %v4171 = vunpack.c.l.b16 %v4025
        %v4172 = vunpack.c.h.b16 %v4025
        %v4173 = vunpack.c.l.b16 %v4026
        %v4174 = vunpack.c.h.b16 %v4026
        %v4175 = vunpack.c.l.b16 %v4027
        %v4176 = vunpack.c.h.b16 %v4027
        %v4177 = vunpack.c.l.b16 %v4028
        %v4178 = vunpack.c.h.b16 %v4028
        %v4179 = vunpack.c.l.b16 %v4029
        %v4180 = vunpack.c.h.b16 %v4029
        %v4181 = vunpack.c.l.b16 %v4030
        %v4182 = vunpack.c.h.b16 %v4030
        %v4183 = vunpack.c.l.b16 %v4031
        %v4184 = vunpack.c.h.b16 %v4031
        %v4185 = vunpack.c.l.b16 %v4032
        %v4186 = vunpack.c.h.b16 %v4032
        %v4187 = vunpack.c.l.b16 %v4033
        %v4188 = vunpack.c.h.b16 %v4033
        %v4189 = vunpack.c.l.b16 %v4034
        %v4190 = vunpack.c.h.b16 %v4034
        %v4191 = vunpack.c.l.b16 %v4035
        %v4192 = vunpack.c.h.b16 %v4035
        %v4193 = vunpack.c.l.b16 %v4036
        %v4194 = vunpack.c.h.b16 %v4036
        %v4195 = vunpack.c.l.b16 %v4037
        %v4196 = vunpack.c.h.b16 %v4037
        %v4197 = vunpack.c.l.b16 %v4038
        %v4198 = vunpack.c.h.b16 %v4038
        %v4199 = vunpack.c.l.b16 %v4039
        %v4200 = vunpack.c.h.b16 %v4039
        %v4201 = vunpack.c.l.b16 %v4040
        %v4202 = vunpack.c.h.b16 %v4040
        %v4203 = vunpack.c.l.b16 %v4041
        %v4204 = vunpack.c.h.b16 %v4041
        %v4205 = vunpack.c.l.b16 %v4042
        %v4206 = vunpack.c.h.b16 %v4042
        %v4207 = vunpack.c.l.b16 %v4043
        %v4208 = vunpack.c.h.b16 %v4043
        %v4209 = vunpack.c.l.b16 %v4044
        %v4210 = vunpack.c.h.b16 %v4044
        %v4211 = vunpack.c.l.b16 %v4045
        %v4212 = vunpack.c.h.b16 %v4045
        %v4213 = vunpack.c.l.b16 %v4046
        %v4214 = vunpack.c.h.b16 %v4046
        %v4215 = vunpack.c.l.b16 %v4047
        %v4216 = vunpack.c.h.b16 %v4047
        %v4217 = vunpack.c.l.b16 %v4048
        %v4218 = vunpack.c.h.b16 %v4048
        %v4219 = vunpack.c.l.b16 %v4049
        %v4220 = vunpack.c.h.b16 %v4049
        %v4221 = vunpack.c.l.b16 %v4050
        %v4222 = vunpack.c.h.b16 %v4050
        %v4223 = vunpack.c.l.b16 %v4051
        %v4224 = vunpack.c.h.b16 %v4051
        %v4225 = vunpack.c.l.b16 %v4052
        %v4226 = vunpack.c.h.b16 %v4052
        %v4227 = vunpack.c.l.b16 %v4053
        %v4228 = vunpack.c.h.b16 %v4053
        %v4229 = vunpack.c.l.b16 %v4054
        %v4230 = vunpack.c.h.b16 %v4054
        %v4231 = vunpack.c.l.b16 %v4055
        %v4232 = vunpack.c.h.b16 %v4055
        %v4233 = vunpack.c.l.b16 %v4056
        %v4234 = vunpack.c.h.b16 %v4056
        %v4235 = vunpack.c.l.b16 %v4057
        %v4236 = vunpack.c.h.b16 %v4057
        %v4237 = vunpack.c.l.b16 %v4058
        %v4238 = vunpack.c.h.b16 %v4058
        %v4239 = vunpack.c.l.b16 %v4059
        %v4240 = vunpack.c.h.b16 %v4059
        %v4241 = vunpack.c.l.b16 %v4060
        %v4242 = vunpack.c.h.b16 %v4060
        %v4243 = vunpack.c.l.b16 %v4061
        %v4244 = vunpack.c.h.b16 %v4061
        %v4245 = vunpack.c.l.b16 %v4062
        %v4246 = vunpack.c.h.b16 %v4062
        %v4247 = vunpack.c.l.b16 %v4063
        %v4248 = vunpack.c.h.b16 %v4063
        %v4249 = vunpack.c.l.b16 %v4064
        %v4250 = vunpack.c.h.b16 %v4064
        %v4251 = vunpack.c.l.b16 %v4065
        %v4252 = vunpack.c.h.b16 %v4065
        %v4253 = vunpack.c.l.b16 %v4066
        %v4254 = vunpack.c.h.b16 %v4066
        %v4255 = vunpack.c.l.b16 %v4067
        %v4256 = vunpack.c.h.b16 %v4067
        %v4257 = vunpack.c.l.b16 %v4068
        %v4258 = vunpack.c.h.b16 %v4068
        %v4259 = vunpack.c.l.b16 %v4069
        %v4260 = vunpack.c.h.b16 %v4069
        %v4261 = vunpack.c.l.b16 %v4070
        %v4262 = vunpack.c.h.b16 %v4070
        %v4263 = vunpack.c.l.b16 %v4071
        %v4264 = vunpack.c.h.b16 %v4071
        %v4265 = vunpack.c.l.b16 %v4072
        %v4266 = vunpack.c.h.b16 %v4072
        %v4267 = vunpack.c.l.b16 %v4073
        %v4268 = vunpack.c.h.b16 %v4073
        %v4269 = vunpack.c.l.b16 %v4074
        %v4270 = vunpack.c.h.b16 %v4074
        %v4271 = vunpack.c.l.b16 %v4075
        %v4272 = vunpack.c.h.b16 %v4075
        %v4273 = vunpack.c.l.b16 %v4076
        %v4274 = vunpack.c.h.b16 %v4076
        %v4275 = vunpack.c.l.b16 %v4077
        %v4276 = vunpack.c.h.b16 %v4077
        %v4277 = vpack.c.b16 %v4151, %v4149
        %v4278 = vpack.c.b16 %v4152, %v4150
        %v4279 = vpack.c.b16 %v4155, %v4153
        %v4280 = vpack.c.b16 %v4156, %v4154
        %v4281 = vpack.c.b16 %v4159, %v4157
        %v4282 = vpack.c.b16 %v4160, %v4158
        %v4283 = vpack.c.b16 %v4163, %v4161
        %v4284 = vpack.c.b16 %v4164, %v4162
        %v4285 = vpack.c.b16 %v4167, %v4165
        %v4286 = vpack.c.b16 %v4168, %v4166
        %v4287 = vpack.c.b16 %v4171, %v4169
        %v4288 = vpack.c.b16 %v4172, %v4170
        %v4289 = vpack.c.b16 %v4175, %v4173
        %v4290 = vpack.c.b16 %v4176, %v4174
        %v4291 = vpack.c.b16 %v4179, %v4177
        %v4292 = vpack.c.b16 %v4180, %v4178
        %v4293 = vpack.c.b16 %v4183, %v4181
        %v4294 = vpack.c.b16 %v4184, %v4182
        %v4295 = vpack.c.b16 %v4187, %v4185
        %v4296 = vpack.c.b16 %v4188, %v4186
        %v4297 = vpack.c.b16 %v4191, %v4189
        %v4298 = vpack.c.b16 %v4192, %v4190
        %v4299 = vpack.c.b16 %v4195, %v4193
        %v4300 = vpack.c.b16 %v4196, %v4194
        %v4301 = vpack.c.b16 %v4199, %v4197
        %v4302 = vpack.c.b16 %v4200, %v4198
        %v4303 = vpack.c.b16 %v4203, %v4201
        %v4304 = vpack.c.b16 %v4204, %v4202
        %v4305 = vpack.c.b16 %v4207, %v4205
        %v4306 = vpack.c.b16 %v4208, %v4206
        %v4307 = vpack.c.b16 %v4211, %v4209
        %v4308 = vpack.c.b16 %v4212, %v4210
        %v4309 = vpack.c.b16 %v4215, %v4213
        %v4310 = vpack.c.b16 %v4216, %v4214
        %v4311 = vpack.c.b16 %v4219, %v4217
        %v4312 = vpack.c.b16 %v4220, %v4218
        %v4313 = vpack.c.b16 %v4223, %v4221
        %v4314 = vpack.c.b16 %v4224, %v4222
        %v4315 = vpack.c.b16 %v4227, %v4225
        %v4316 = vpack.c.b16 %v4228, %v4226
        %v4317 = vpack.c.b16 %v4231, %v4229
        %v4318 = vpack.c.b16 %v4232, %v4230
        %v4319 = vpack.c.b16 %v4235, %v4233
        %v4320 = vpack.c.b16 %v4236, %v4234
        %v4321 = vpack.c.b16 %v4239, %v4237
        %v4322 = vpack.c.b16 %v4240, %v4238
        %v4323 = vpack.c.b16 %v4243, %v4241
        %v4324 = vpack.c.b16 %v4244, %v4242
        %v4325 = vpack.c.b16 %v4247, %v4245
        %v4326 = vpack.c.b16 %v4248, %v4246
        %v4327 = vpack.c.b16 %v4251, %v4249
        %v4328 = vpack.c.b16 %v4252, %v4250
        %v4329 = vpack.c.b16 %v4255, %v4253
        %v4330 = vpack.c.b16 %v4256, %v4254
        %v4331 = vpack.c.b16 %v4259, %v4257
        %v4332 = vpack.c.b16 %v4260, %v4258
        %v4333 = vpack.c.b16 %v4263, %v4261
        %v4334 = vpack.c.b16 %v4264, %v4262
        %v4335 = vpack.c.b16 %v4267, %v4265
        %v4336 = vpack.c.b16 %v4268, %v4266
        %v4337 = vpack.c.b16 %v4271, %v4269
        %v4338 = vpack.c.b16 %v4272, %v4270
        %v4339 = vpack.c.b16 %v4275, %v4273
        %v4340 = vpack.c.b16 %v4276, %v4274
        %4405 = vmatpush.bf16.msra.mxu0 %v4291
        %4406 = vmatpush.bf16.msra.mxu0 %v4289
        %4407 = vmatpush.bf16.msra.mxu0 %v4287
        %4408 = vmatpush.bf16.msra.mxu0 %v4285
        %4409 = vmatpush.bf16.msra.mxu0 %v4283
        %4410 = vmatpush.bf16.msra.mxu0 %v4281
        %4411 = vmatpush.bf16.msra.mxu0 %v4279
        %4412 = vmatpush.bf16.msra.mxu0 %v4277
        %4413 = vmatmul.bf16.gmra.mxu0 %v4010
        %v4414 = vpop.f32.mrf.mxu0
        %v4415 = vadd.f32 %v4081, %v4414
        %v4416 = vpop.f32.mrf.mxu0
        %4417 = vdwg.mxu0
        %4418 = vmatpush.bf16.msra.mxu0 %v4307
        %4419 = vmatpush.bf16.msra.mxu0 %v4305
        %4420 = vmatpush.bf16.msra.mxu0 %v4303
        %4421 = vmatpush.bf16.msra.mxu0 %v4301
        %4422 = vmatpush.bf16.msra.mxu0 %v4299
        %4423 = vmatpush.bf16.msra.mxu0 %v4297
        %4424 = vmatpush.bf16.msra.mxu0 %v4295
        %4425 = vmatpush.bf16.msra.mxu0 %v4293
        %4426 = vmatmul.bf16.gmra.mxu0 %v4011
        %v4427 = vpop.f32.mrf.mxu0
        %v4428 = vadd.f32 %v4415, %v4427
        %v4429 = vpop.f32.mrf.mxu0
        %4430 = vdwg.mxu0
        %4431 = vmatpush.bf16.msra.mxu0 %v4323
        %4432 = vmatpush.bf16.msra.mxu0 %v4321
        %4433 = vmatpush.bf16.msra.mxu0 %v4319
        %4434 = vmatpush.bf16.msra.mxu0 %v4317
        %4435 = vmatpush.bf16.msra.mxu0 %v4315
        %4436 = vmatpush.bf16.msra.mxu0 %v4313
        %4437 = vmatpush.bf16.msra.mxu0 %v4311
        %4438 = vmatpush.bf16.msra.mxu0 %v4309
        %4439 = vmatmul.bf16.gmra.mxu0 %v4012
        %v4440 = vpop.f32.mrf.mxu0
        %v4441 = vadd.f32 %v4428, %v4440
        %v4442 = vpop.f32.mrf.mxu0
        %4443 = vdwg.mxu0
        %4444 = vmatpush.bf16.msra.mxu0 %v4339
        %4445 = vmatpush.bf16.msra.mxu0 %v4337
        %4446 = vmatpush.bf16.msra.mxu0 %v4335
        %4447 = vmatpush.bf16.msra.mxu0 %v4333
        %4448 = vmatpush.bf16.msra.mxu0 %v4331
        %4449 = vmatpush.bf16.msra.mxu0 %v4329
        %4450 = vmatpush.bf16.msra.mxu0 %v4327
        %4451 = vmatpush.bf16.msra.mxu0 %v4325
        %4452 = vmatmul.bf16.gmra.mxu0 %v4013
        %v4453 = vpop.f32.mrf.mxu0
        %v4454 = vadd.f32 %v4441, %v4453
        %v4455 = vpop.f32.mrf.mxu0
        %4456 = vdwg.mxu0
        %4457 = vmatpush.bf16.msra.mxu0 %v4292
        %4458 = vmatpush.bf16.msra.mxu0 %v4290
        %4459 = vmatpush.bf16.msra.mxu0 %v4288
        %4460 = vmatpush.bf16.msra.mxu0 %v4286
        %4461 = vmatpush.bf16.msra.mxu0 %v4284
        %4462 = vmatpush.bf16.msra.mxu0 %v4282
        %4463 = vmatpush.bf16.msra.mxu0 %v4280
        %4464 = vmatpush.bf16.msra.mxu0 %v4278
        %4465 = vmatmul.bf16.gmra.mxu0 %v4010
        %v4466 = vpop.f32.mrf.mxu0
        %v4467 = vadd.f32 %v4082, %v4466
        %v4468 = vpop.f32.mrf.mxu0
        %4469 = vdwg.mxu0
        %4470 = vmatpush.bf16.msra.mxu0 %v4308
        %4471 = vmatpush.bf16.msra.mxu0 %v4306
        %4472 = vmatpush.bf16.msra.mxu0 %v4304
        %4473 = vmatpush.bf16.msra.mxu0 %v4302
        %4474 = vmatpush.bf16.msra.mxu0 %v4300
        %4475 = vmatpush.bf16.msra.mxu0 %v4298
        %4476 = vmatpush.bf16.msra.mxu0 %v4296
        %4477 = vmatpush.bf16.msra.mxu0 %v4294
        %4478 = vmatmul.bf16.gmra.mxu0 %v4011
        %v4479 = vpop.f32.mrf.mxu0
        %v4480 = vadd.f32 %v4467, %v4479
        %v4481 = vpop.f32.mrf.mxu0
        %4482 = vdwg.mxu0
        %4483 = vmatpush.bf16.msra.mxu0 %v4324
        %4484 = vmatpush.bf16.msra.mxu0 %v4322
        %4485 = vmatpush.bf16.msra.mxu0 %v4320
        %4486 = vmatpush.bf16.msra.mxu0 %v4318
        %4487 = vmatpush.bf16.msra.mxu0 %v4316
        %4488 = vmatpush.bf16.msra.mxu0 %v4314
        %4489 = vmatpush.bf16.msra.mxu0 %v4312
        %4490 = vmatpush.bf16.msra.mxu0 %v4310
        %4491 = vmatmul.bf16.gmra.mxu0 %v4012
        %v4492 = vpop.f32.mrf.mxu0
        %v4493 = vadd.f32 %v4480, %v4492
        %v4494 = vpop.f32.mrf.mxu0
        %4495 = vdwg.mxu0
        %4496 = vmatpush.bf16.msra.mxu0 %v4340
        %4497 = vmatpush.bf16.msra.mxu0 %v4338
        %4498 = vmatpush.bf16.msra.mxu0 %v4336
        %4499 = vmatpush.bf16.msra.mxu0 %v4334
        %4500 = vmatpush.bf16.msra.mxu0 %v4332
        %4501 = vmatpush.bf16.msra.mxu0 %v4330
        %4502 = vmatpush.bf16.msra.mxu0 %v4328
        %4503 = vmatpush.bf16.msra.mxu0 %v4326
        %4504 = vmatmul.bf16.gmra.mxu0 %v4013
        %v4505 = vpop.f32.mrf.mxu0
        %v4506 = vadd.f32 %v4493, %v4505
        %v4507 = vpop.f32.mrf.mxu0
        %4508 = vdwg.mxu0
        %v4509 = vld [vmem:[%s588] sm:$0xff]
        %v4510 = vpack.c.bf16 %v4509, %v4509
        %v4511 = vld [vmem:[#allocation14] sm:$0xff]
        %v4512 = vld [vmem:[#allocation14 + $0x8] sm:$0xff]
        %v4513 = vld [vmem:[#allocation14 + $0x10] sm:$0xff]
        %v4514 = vld [vmem:[#allocation14 + $0x18] sm:$0xff]
        %v4515 = vld [vmem:[#allocation14 + $0x20] sm:$0xff]
        %v4516 = vld [vmem:[#allocation14 + $0x28] sm:$0xff]
        %v4517 = vld [vmem:[#allocation14 + $0x30] sm:$0xff]
        %v4518 = vld [vmem:[#allocation14 + $0x38] sm:$0xff]
        %v4519 = vld [vmem:[#allocation14 + $0x40] sm:$0xff]
        %v4520 = vld [vmem:[#allocation14 + $0x48] sm:$0xff]
        %v4521 = vld [vmem:[#allocation14 + $0x50] sm:$0xff]
        %v4522 = vld [vmem:[#allocation14 + $0x58] sm:$0xff]
        %v4523 = vld [vmem:[#allocation14 + $0x60] sm:$0xff]
        %v4524 = vld [vmem:[#allocation14 + $0x68] sm:$0xff]
        %v4525 = vld [vmem:[#allocation14 + $0x70] sm:$0xff]
        %v4526 = vld [vmem:[#allocation14 + $0x78] sm:$0xff]
        %v4527 = vpack.c.bf16 %v1356, %v1356
        %v4528 = vpack.c.bf16 %v1382, %v1382
        %v4529 = vld [vmem:[#allocation16] sm:$0xff]
        %v4530 = vld [vmem:[#allocation16 + $0x8] sm:$0xff]
        %v4531 = vld [vmem:[#allocation16 + $0x10] sm:$0xff]
        %v4532 = vld [vmem:[#allocation16 + $0x18] sm:$0xff]
        %v4533 = vld [vmem:[#allocation16 + $0x20] sm:$0xff]
        %v4534 = vld [vmem:[#allocation16 + $0x28] sm:$0xff]
        %v4535 = vld [vmem:[#allocation16 + $0x30] sm:$0xff]
        %v4536 = vld [vmem:[#allocation16 + $0x38] sm:$0xff]
        %v4537 = vld [vmem:[#allocation16 + $0x40] sm:$0xff]
        %v4538 = vld [vmem:[#allocation16 + $0x48] sm:$0xff]
        %v4539 = vld [vmem:[#allocation16 + $0x50] sm:$0xff]
        %v4540 = vld [vmem:[#allocation16 + $0x58] sm:$0xff]
        %v4541 = vld [vmem:[#allocation16 + $0x60] sm:$0xff]
        %v4542 = vld [vmem:[#allocation16 + $0x68] sm:$0xff]
        %v4543 = vld [vmem:[#allocation16 + $0x70] sm:$0xff]
        %v4544 = vld [vmem:[#allocation16 + $0x78] sm:$0xff]
        %v4545 = vld [vmem:[#allocation16 + $0x80] sm:$0xff]
        %v4546 = vld [vmem:[#allocation16 + $0x88] sm:$0xff]
        %v4547 = vld [vmem:[#allocation16 + $0x90] sm:$0xff]
        %v4548 = vld [vmem:[#allocation16 + $0x98] sm:$0xff]
        %v4549 = vld [vmem:[#allocation16 + $0xa0] sm:$0xff]
        %v4550 = vld [vmem:[#allocation16 + $0xa8] sm:$0xff]
        %v4551 = vld [vmem:[#allocation16 + $0xb0] sm:$0xff]
        %v4552 = vld [vmem:[#allocation16 + $0xb8] sm:$0xff]
        %v4553 = vld [vmem:[#allocation16 + $0xc0] sm:$0xff]
        %v4554 = vld [vmem:[#allocation16 + $0xc8] sm:$0xff]
        %v4555 = vld [vmem:[#allocation16 + $0xd0] sm:$0xff]
        %v4556 = vld [vmem:[#allocation16 + $0xd8] sm:$0xff]
        %v4557 = vld [vmem:[#allocation16 + $0xe0] sm:$0xff]
        %v4558 = vld [vmem:[#allocation16 + $0xe8] sm:$0xff]
        %v4559 = vld [vmem:[#allocation16 + $0xf0] sm:$0xff]
        %v4560 = vld [vmem:[#allocation16 + $0xf8] sm:$0xff]
        %v4561 = vld [vmem:[#allocation16 + $0x100] sm:$0xff]
        %v4562 = vld [vmem:[#allocation16 + $0x108] sm:$0xff]
        %v4563 = vld [vmem:[#allocation16 + $0x110] sm:$0xff]
        %v4564 = vld [vmem:[#allocation16 + $0x118] sm:$0xff]
        %v4565 = vld [vmem:[#allocation16 + $0x120] sm:$0xff]
        %v4566 = vld [vmem:[#allocation16 + $0x128] sm:$0xff]
        %v4567 = vld [vmem:[#allocation16 + $0x130] sm:$0xff]
        %v4568 = vld [vmem:[#allocation16 + $0x138] sm:$0xff]
        %v4569 = vld [vmem:[#allocation16 + $0x140] sm:$0xff]
        %v4570 = vld [vmem:[#allocation16 + $0x148] sm:$0xff]
        %v4571 = vld [vmem:[#allocation16 + $0x150] sm:$0xff]
        %v4572 = vld [vmem:[#allocation16 + $0x158] sm:$0xff]
        %v4573 = vld [vmem:[#allocation16 + $0x160] sm:$0xff]
        %v4574 = vld [vmem:[#allocation16 + $0x168] sm:$0xff]
        %v4575 = vld [vmem:[#allocation16 + $0x170] sm:$0xff]
        %v4576 = vld [vmem:[#allocation16 + $0x178] sm:$0xff]
        %v4577 = vld [vmem:[#allocation16 + $0x180] sm:$0xff]
        %v4578 = vld [vmem:[#allocation16 + $0x188] sm:$0xff]
        %v4579 = vld [vmem:[#allocation16 + $0x190] sm:$0xff]
        %v4580 = vld [vmem:[#allocation16 + $0x198] sm:$0xff]
        %v4581 = vld [vmem:[#allocation16 + $0x1a0] sm:$0xff]
        %v4582 = vld [vmem:[#allocation16 + $0x1a8] sm:$0xff]
        %v4583 = vld [vmem:[#allocation16 + $0x1b0] sm:$0xff]
        %v4584 = vld [vmem:[#allocation16 + $0x1b8] sm:$0xff]
        %v4585 = vld [vmem:[#allocation16 + $0x1c0] sm:$0xff]
        %v4586 = vld [vmem:[#allocation16 + $0x1c8] sm:$0xff]
        %v4587 = vld [vmem:[#allocation16 + $0x1d0] sm:$0xff]
        %v4588 = vld [vmem:[#allocation16 + $0x1d8] sm:$0xff]
        %v4589 = vld [vmem:[#allocation16 + $0x1e0] sm:$0xff]
        %v4590 = vld [vmem:[#allocation16 + $0x1e8] sm:$0xff]
        %v4591 = vld [vmem:[#allocation16 + $0x1f0] sm:$0xff]
        %v4592 = vld [vmem:[#allocation16 + $0x1f8] sm:$0xff]
        %v4593 = vld [vmem:[#allocation16 + $0x200] sm:$0xff]
        %v4594 = vld [vmem:[#allocation16 + $0x208] sm:$0xff]
        %v4595 = vld [vmem:[#allocation16 + $0x210] sm:$0xff]
        %v4596 = vld [vmem:[#allocation16 + $0x218] sm:$0xff]
        %v4597 = vld [vmem:[#allocation16 + $0x220] sm:$0xff]
        %v4598 = vld [vmem:[#allocation16 + $0x228] sm:$0xff]
        %v4599 = vld [vmem:[#allocation16 + $0x230] sm:$0xff]
        %v4600 = vld [vmem:[#allocation16 + $0x238] sm:$0xff]
        %v4601 = vld [vmem:[#allocation16 + $0x240] sm:$0xff]
        %v4602 = vld [vmem:[#allocation16 + $0x248] sm:$0xff]
        %v4603 = vld [vmem:[#allocation16 + $0x250] sm:$0xff]
        %v4604 = vld [vmem:[#allocation16 + $0x258] sm:$0xff]
        %v4605 = vld [vmem:[#allocation16 + $0x260] sm:$0xff]
        %v4606 = vld [vmem:[#allocation16 + $0x268] sm:$0xff]
        %v4607 = vld [vmem:[#allocation16 + $0x270] sm:$0xff]
        %v4608 = vld [vmem:[#allocation16 + $0x278] sm:$0xff]
        %v4609 = vld [vmem:[#allocation16 + $0x280] sm:$0xff]
        %v4610 = vld [vmem:[#allocation16 + $0x288] sm:$0xff]
        %v4611 = vld [vmem:[#allocation16 + $0x290] sm:$0xff]
        %v4612 = vld [vmem:[#allocation16 + $0x298] sm:$0xff]
        %v4613 = vld [vmem:[#allocation16 + $0x2a0] sm:$0xff]
        %v4614 = vld [vmem:[#allocation16 + $0x2a8] sm:$0xff]
        %v4615 = vld [vmem:[#allocation16 + $0x2b0] sm:$0xff]
        %v4616 = vld [vmem:[#allocation16 + $0x2b8] sm:$0xff]
        %v4617 = vld [vmem:[#allocation16 + $0x2c0] sm:$0xff]
        %v4618 = vld [vmem:[#allocation16 + $0x2c8] sm:$0xff]
        %v4619 = vld [vmem:[#allocation16 + $0x2d0] sm:$0xff]
        %v4620 = vld [vmem:[#allocation16 + $0x2d8] sm:$0xff]
        %v4621 = vld [vmem:[#allocation16 + $0x2e0] sm:$0xff]
        %v4622 = vld [vmem:[#allocation16 + $0x2e8] sm:$0xff]
        %v4623 = vld [vmem:[#allocation16 + $0x2f0] sm:$0xff]
        %v4624 = vld [vmem:[#allocation16 + $0x2f8] sm:$0xff]
        %v4625 = vld [vmem:[#allocation16 + $0x300] sm:$0xff]
        %v4626 = vld [vmem:[#allocation16 + $0x308] sm:$0xff]
        %v4627 = vld [vmem:[#allocation16 + $0x310] sm:$0xff]
        %v4628 = vld [vmem:[#allocation16 + $0x318] sm:$0xff]
        %v4629 = vld [vmem:[#allocation16 + $0x320] sm:$0xff]
        %v4630 = vld [vmem:[#allocation16 + $0x328] sm:$0xff]
        %v4631 = vld [vmem:[#allocation16 + $0x330] sm:$0xff]
        %v4632 = vld [vmem:[#allocation16 + $0x338] sm:$0xff]
        %v4633 = vld [vmem:[#allocation16 + $0x340] sm:$0xff]
        %v4634 = vld [vmem:[#allocation16 + $0x348] sm:$0xff]
        %v4635 = vld [vmem:[#allocation16 + $0x350] sm:$0xff]
        %v4636 = vld [vmem:[#allocation16 + $0x358] sm:$0xff]
        %v4637 = vld [vmem:[#allocation16 + $0x360] sm:$0xff]
        %v4638 = vld [vmem:[#allocation16 + $0x368] sm:$0xff]
        %v4639 = vld [vmem:[#allocation16 + $0x370] sm:$0xff]
        %v4640 = vld [vmem:[#allocation16 + $0x378] sm:$0xff]
        %v4641 = vld [vmem:[#allocation16 + $0x380] sm:$0xff]
        %v4642 = vld [vmem:[#allocation16 + $0x388] sm:$0xff]
        %v4643 = vld [vmem:[#allocation16 + $0x390] sm:$0xff]
        %v4644 = vld [vmem:[#allocation16 + $0x398] sm:$0xff]
        %v4645 = vld [vmem:[#allocation16 + $0x3a0] sm:$0xff]
        %v4646 = vld [vmem:[#allocation16 + $0x3a8] sm:$0xff]
        %v4647 = vld [vmem:[#allocation16 + $0x3b0] sm:$0xff]
        %v4648 = vld [vmem:[#allocation16 + $0x3b8] sm:$0xff]
        %v4649 = vld [vmem:[#allocation16 + $0x3c0] sm:$0xff]
        %v4650 = vld [vmem:[#allocation16 + $0x3c8] sm:$0xff]
        %v4651 = vld [vmem:[#allocation16 + $0x3d0] sm:$0xff]
        %v4652 = vld [vmem:[#allocation16 + $0x3d8] sm:$0xff]
        %v4653 = vld [vmem:[#allocation16 + $0x3e0] sm:$0xff]
        %v4654 = vld [vmem:[#allocation16 + $0x3e8] sm:$0xff]
        %v4655 = vld [vmem:[#allocation16 + $0x3f0] sm:$0xff]
        %v4656 = vld [vmem:[#allocation16 + $0x3f8] sm:$0xff]
        %v4785 = vunpack.c.l.b16 %v4529
        %v4786 = vunpack.c.h.b16 %v4529
        %v4787 = vunpack.c.l.b16 %v4530
        %v4788 = vunpack.c.h.b16 %v4530
        %v4789 = vunpack.c.l.b16 %v4531
        %v4790 = vunpack.c.h.b16 %v4531
        %v4791 = vunpack.c.l.b16 %v4532
        %v4792 = vunpack.c.h.b16 %v4532
        %v4793 = vunpack.c.l.b16 %v4533
        %v4794 = vunpack.c.h.b16 %v4533
        %v4795 = vunpack.c.l.b16 %v4534
        %v4796 = vunpack.c.h.b16 %v4534
        %v4797 = vunpack.c.l.b16 %v4535
        %v4798 = vunpack.c.h.b16 %v4535
        %v4799 = vunpack.c.l.b16 %v4536
        %v4800 = vunpack.c.h.b16 %v4536
        %v4801 = vunpack.c.l.b16 %v4537
        %v4802 = vunpack.c.h.b16 %v4537
        %v4803 = vunpack.c.l.b16 %v4538
        %v4804 = vunpack.c.h.b16 %v4538
        %v4805 = vunpack.c.l.b16 %v4539
        %v4806 = vunpack.c.h.b16 %v4539
        %v4807 = vunpack.c.l.b16 %v4540
        %v4808 = vunpack.c.h.b16 %v4540
        %v4809 = vunpack.c.l.b16 %v4541
        %v4810 = vunpack.c.h.b16 %v4541
        %v4811 = vunpack.c.l.b16 %v4542
        %v4812 = vunpack.c.h.b16 %v4542
        %v4813 = vunpack.c.l.b16 %v4543
        %v4814 = vunpack.c.h.b16 %v4543
        %v4815 = vunpack.c.l.b16 %v4544
        %v4816 = vunpack.c.h.b16 %v4544
        %v4817 = vunpack.c.l.b16 %v4545
        %v4818 = vunpack.c.h.b16 %v4545
        %v4819 = vunpack.c.l.b16 %v4546
        %v4820 = vunpack.c.h.b16 %v4546
        %v4821 = vunpack.c.l.b16 %v4547
        %v4822 = vunpack.c.h.b16 %v4547
        %v4823 = vunpack.c.l.b16 %v4548
        %v4824 = vunpack.c.h.b16 %v4548
        %v4825 = vunpack.c.l.b16 %v4549
        %v4826 = vunpack.c.h.b16 %v4549
        %v4827 = vunpack.c.l.b16 %v4550
        %v4828 = vunpack.c.h.b16 %v4550
        %v4829 = vunpack.c.l.b16 %v4551
        %v4830 = vunpack.c.h.b16 %v4551
        %v4831 = vunpack.c.l.b16 %v4552
        %v4832 = vunpack.c.h.b16 %v4552
        %v4833 = vunpack.c.l.b16 %v4553
        %v4834 = vunpack.c.h.b16 %v4553
        %v4835 = vunpack.c.l.b16 %v4554
        %v4836 = vunpack.c.h.b16 %v4554
        %v4837 = vunpack.c.l.b16 %v4555
        %v4838 = vunpack.c.h.b16 %v4555
        %v4839 = vunpack.c.l.b16 %v4556
        %v4840 = vunpack.c.h.b16 %v4556
        %v4841 = vunpack.c.l.b16 %v4557
        %v4842 = vunpack.c.h.b16 %v4557
        %v4843 = vunpack.c.l.b16 %v4558
        %v4844 = vunpack.c.h.b16 %v4558
        %v4845 = vunpack.c.l.b16 %v4559
        %v4846 = vunpack.c.h.b16 %v4559
        %v4847 = vunpack.c.l.b16 %v4560
        %v4848 = vunpack.c.h.b16 %v4560
        %v4849 = vunpack.c.l.b16 %v4561
        %v4850 = vunpack.c.h.b16 %v4561
        %v4851 = vunpack.c.l.b16 %v4562
        %v4852 = vunpack.c.h.b16 %v4562
        %v4853 = vunpack.c.l.b16 %v4563
        %v4854 = vunpack.c.h.b16 %v4563
        %v4855 = vunpack.c.l.b16 %v4564
        %v4856 = vunpack.c.h.b16 %v4564
        %v4857 = vunpack.c.l.b16 %v4565
        %v4858 = vunpack.c.h.b16 %v4565
        %v4859 = vunpack.c.l.b16 %v4566
        %v4860 = vunpack.c.h.b16 %v4566
        %v4861 = vunpack.c.l.b16 %v4567
        %v4862 = vunpack.c.h.b16 %v4567
        %v4863 = vunpack.c.l.b16 %v4568
        %v4864 = vunpack.c.h.b16 %v4568
        %v4865 = vunpack.c.l.b16 %v4569
        %v4866 = vunpack.c.h.b16 %v4569
        %v4867 = vunpack.c.l.b16 %v4570
        %v4868 = vunpack.c.h.b16 %v4570
        %v4869 = vunpack.c.l.b16 %v4571
        %v4870 = vunpack.c.h.b16 %v4571
        %v4871 = vunpack.c.l.b16 %v4572
        %v4872 = vunpack.c.h.b16 %v4572
        %v4873 = vunpack.c.l.b16 %v4573
        %v4874 = vunpack.c.h.b16 %v4573
        %v4875 = vunpack.c.l.b16 %v4574
        %v4876 = vunpack.c.h.b16 %v4574
        %v4877 = vunpack.c.l.b16 %v4575
        %v4878 = vunpack.c.h.b16 %v4575
        %v4879 = vunpack.c.l.b16 %v4576
        %v4880 = vunpack.c.h.b16 %v4576
        %v4881 = vunpack.c.l.b16 %v4577
        %v4882 = vunpack.c.h.b16 %v4577
        %v4883 = vunpack.c.l.b16 %v4578
        %v4884 = vunpack.c.h.b16 %v4578
        %v4885 = vunpack.c.l.b16 %v4579
        %v4886 = vunpack.c.h.b16 %v4579
        %v4887 = vunpack.c.l.b16 %v4580
        %v4888 = vunpack.c.h.b16 %v4580
        %v4889 = vunpack.c.l.b16 %v4581
        %v4890 = vunpack.c.h.b16 %v4581
        %v4891 = vunpack.c.l.b16 %v4582
        %v4892 = vunpack.c.h.b16 %v4582
        %v4893 = vunpack.c.l.b16 %v4583
        %v4894 = vunpack.c.h.b16 %v4583
        %v4895 = vunpack.c.l.b16 %v4584
        %v4896 = vunpack.c.h.b16 %v4584
        %v4897 = vunpack.c.l.b16 %v4585
        %v4898 = vunpack.c.h.b16 %v4585
        %v4899 = vunpack.c.l.b16 %v4586
        %v4900 = vunpack.c.h.b16 %v4586
        %v4901 = vunpack.c.l.b16 %v4587
        %v4902 = vunpack.c.h.b16 %v4587
        %v4903 = vunpack.c.l.b16 %v4588
        %v4904 = vunpack.c.h.b16 %v4588
        %v4905 = vunpack.c.l.b16 %v4589
        %v4906 = vunpack.c.h.b16 %v4589
        %v4907 = vunpack.c.l.b16 %v4590
        %v4908 = vunpack.c.h.b16 %v4590
        %v4909 = vunpack.c.l.b16 %v4591
        %v4910 = vunpack.c.h.b16 %v4591
        %v4911 = vunpack.c.l.b16 %v4592
        %v4912 = vunpack.c.h.b16 %v4592
        %v4913 = vunpack.c.l.b16 %v4593
        %v4914 = vunpack.c.h.b16 %v4593
        %v4915 = vunpack.c.l.b16 %v4594
        %v4916 = vunpack.c.h.b16 %v4594
        %v4917 = vunpack.c.l.b16 %v4595
        %v4918 = vunpack.c.h.b16 %v4595
        %v4919 = vunpack.c.l.b16 %v4596
        %v4920 = vunpack.c.h.b16 %v4596
        %v4921 = vunpack.c.l.b16 %v4597
        %v4922 = vunpack.c.h.b16 %v4597
        %v4923 = vunpack.c.l.b16 %v4598
        %v4924 = vunpack.c.h.b16 %v4598
        %v4925 = vunpack.c.l.b16 %v4599
        %v4926 = vunpack.c.h.b16 %v4599
        %v4927 = vunpack.c.l.b16 %v4600
        %v4928 = vunpack.c.h.b16 %v4600
        %v4929 = vunpack.c.l.b16 %v4601
        %v4930 = vunpack.c.h.b16 %v4601
        %v4931 = vunpack.c.l.b16 %v4602
        %v4932 = vunpack.c.h.b16 %v4602
        %v4933 = vunpack.c.l.b16 %v4603
        %v4934 = vunpack.c.h.b16 %v4603
        %v4935 = vunpack.c.l.b16 %v4604
        %v4936 = vunpack.c.h.b16 %v4604
        %v4937 = vunpack.c.l.b16 %v4605
        %v4938 = vunpack.c.h.b16 %v4605
        %v4939 = vunpack.c.l.b16 %v4606
        %v4940 = vunpack.c.h.b16 %v4606
        %v4941 = vunpack.c.l.b16 %v4607
        %v4942 = vunpack.c.h.b16 %v4607
        %v4943 = vunpack.c.l.b16 %v4608
        %v4944 = vunpack.c.h.b16 %v4608
        %v4945 = vunpack.c.l.b16 %v4609
        %v4946 = vunpack.c.h.b16 %v4609
        %v4947 = vunpack.c.l.b16 %v4610
        %v4948 = vunpack.c.h.b16 %v4610
        %v4949 = vunpack.c.l.b16 %v4611
        %v4950 = vunpack.c.h.b16 %v4611
        %v4951 = vunpack.c.l.b16 %v4612
        %v4952 = vunpack.c.h.b16 %v4612
        %v4953 = vunpack.c.l.b16 %v4613
        %v4954 = vunpack.c.h.b16 %v4613
        %v4955 = vunpack.c.l.b16 %v4614
        %v4956 = vunpack.c.h.b16 %v4614
        %v4957 = vunpack.c.l.b16 %v4615
        %v4958 = vunpack.c.h.b16 %v4615
        %v4959 = vunpack.c.l.b16 %v4616
        %v4960 = vunpack.c.h.b16 %v4616
        %v4961 = vunpack.c.l.b16 %v4617
        %v4962 = vunpack.c.h.b16 %v4617
        %v4963 = vunpack.c.l.b16 %v4618
        %v4964 = vunpack.c.h.b16 %v4618
        %v4965 = vunpack.c.l.b16 %v4619
        %v4966 = vunpack.c.h.b16 %v4619
        %v4967 = vunpack.c.l.b16 %v4620
        %v4968 = vunpack.c.h.b16 %v4620
        %v4969 = vunpack.c.l.b16 %v4621
        %v4970 = vunpack.c.h.b16 %v4621
        %v4971 = vunpack.c.l.b16 %v4622
        %v4972 = vunpack.c.h.b16 %v4622
        %v4973 = vunpack.c.l.b16 %v4623
        %v4974 = vunpack.c.h.b16 %v4623
        %v4975 = vunpack.c.l.b16 %v4624
        %v4976 = vunpack.c.h.b16 %v4624
        %v4977 = vunpack.c.l.b16 %v4625
        %v4978 = vunpack.c.h.b16 %v4625
        %v4979 = vunpack.c.l.b16 %v4626
        %v4980 = vunpack.c.h.b16 %v4626
        %v4981 = vunpack.c.l.b16 %v4627
        %v4982 = vunpack.c.h.b16 %v4627
        %v4983 = vunpack.c.l.b16 %v4628
        %v4984 = vunpack.c.h.b16 %v4628
        %v4985 = vunpack.c.l.b16 %v4629
        %v4986 = vunpack.c.h.b16 %v4629
        %v4987 = vunpack.c.l.b16 %v4630
        %v4988 = vunpack.c.h.b16 %v4630
        %v4989 = vunpack.c.l.b16 %v4631
        %v4990 = vunpack.c.h.b16 %v4631
        %v4991 = vunpack.c.l.b16 %v4632
        %v4992 = vunpack.c.h.b16 %v4632
        %v4993 = vunpack.c.l.b16 %v4633
        %v4994 = vunpack.c.h.b16 %v4633
        %v4995 = vunpack.c.l.b16 %v4634
        %v4996 = vunpack.c.h.b16 %v4634
        %v4997 = vunpack.c.l.b16 %v4635
        %v4998 = vunpack.c.h.b16 %v4635
        %v4999 = vunpack.c.l.b16 %v4636
        %v5000 = vunpack.c.h.b16 %v4636
        %v5001 = vunpack.c.l.b16 %v4637
        %v5002 = vunpack.c.h.b16 %v4637
        %v5003 = vunpack.c.l.b16 %v4638
        %v5004 = vunpack.c.h.b16 %v4638
        %v5005 = vunpack.c.l.b16 %v4639
        %v5006 = vunpack.c.h.b16 %v4639
        %v5007 = vunpack.c.l.b16 %v4640
        %v5008 = vunpack.c.h.b16 %v4640
        %v5009 = vunpack.c.l.b16 %v4641
        %v5010 = vunpack.c.h.b16 %v4641
        %v5011 = vunpack.c.l.b16 %v4642
        %v5012 = vunpack.c.h.b16 %v4642
        %v5013 = vunpack.c.l.b16 %v4643
        %v5014 = vunpack.c.h.b16 %v4643
        %v5015 = vunpack.c.l.b16 %v4644
        %v5016 = vunpack.c.h.b16 %v4644
        %v5017 = vunpack.c.l.b16 %v4645
        %v5018 = vunpack.c.h.b16 %v4645
        %v5019 = vunpack.c.l.b16 %v4646
        %v5020 = vunpack.c.h.b16 %v4646
        %v5021 = vunpack.c.l.b16 %v4647
        %v5022 = vunpack.c.h.b16 %v4647
        %v5023 = vunpack.c.l.b16 %v4648
        %v5024 = vunpack.c.h.b16 %v4648
        %v5025 = vunpack.c.l.b16 %v4649
        %v5026 = vunpack.c.h.b16 %v4649
        %v5027 = vunpack.c.l.b16 %v4650
        %v5028 = vunpack.c.h.b16 %v4650
        %v5029 = vunpack.c.l.b16 %v4651
        %v5030 = vunpack.c.h.b16 %v4651
        %v5031 = vunpack.c.l.b16 %v4652
        %v5032 = vunpack.c.h.b16 %v4652
        %v5033 = vunpack.c.l.b16 %v4653
        %v5034 = vunpack.c.h.b16 %v4653
        %v5035 = vunpack.c.l.b16 %v4654
        %v5036 = vunpack.c.h.b16 %v4654
        %v5037 = vunpack.c.l.b16 %v4655
        %v5038 = vunpack.c.h.b16 %v4655
        %v5039 = vunpack.c.l.b16 %v4656
        %v5040 = vunpack.c.h.b16 %v4656
        %v5041 = vpack.c.b16 %v4793, %v4785
        %v5042 = vpack.c.b16 %v4794, %v4786
        %v5043 = vpack.c.b16 %v4795, %v4787
        %v5044 = vpack.c.b16 %v4796, %v4788
        %v5045 = vpack.c.b16 %v4797, %v4789
        %v5046 = vpack.c.b16 %v4798, %v4790
        %v5047 = vpack.c.b16 %v4799, %v4791
        %v5048 = vpack.c.b16 %v4800, %v4792
        %v5049 = vpack.c.b16 %v4809, %v4801
        %v5050 = vpack.c.b16 %v4810, %v4802
        %v5051 = vpack.c.b16 %v4811, %v4803
        %v5052 = vpack.c.b16 %v4812, %v4804
        %v5053 = vpack.c.b16 %v4813, %v4805
        %v5054 = vpack.c.b16 %v4814, %v4806
        %v5055 = vpack.c.b16 %v4815, %v4807
        %v5056 = vpack.c.b16 %v4816, %v4808
        %v5057 = vpack.c.b16 %v4825, %v4817
        %v5058 = vpack.c.b16 %v4826, %v4818
        %v5059 = vpack.c.b16 %v4827, %v4819
        %v5060 = vpack.c.b16 %v4828, %v4820
        %v5061 = vpack.c.b16 %v4829, %v4821
        %v5062 = vpack.c.b16 %v4830, %v4822
        %v5063 = vpack.c.b16 %v4831, %v4823
        %v5064 = vpack.c.b16 %v4832, %v4824
        %v5065 = vpack.c.b16 %v4841, %v4833
        %v5066 = vpack.c.b16 %v4842, %v4834
        %v5067 = vpack.c.b16 %v4843, %v4835
        %v5068 = vpack.c.b16 %v4844, %v4836
        %v5069 = vpack.c.b16 %v4845, %v4837
        %v5070 = vpack.c.b16 %v4846, %v4838
        %v5071 = vpack.c.b16 %v4847, %v4839
        %v5072 = vpack.c.b16 %v4848, %v4840
        %v5073 = vpack.c.b16 %v4857, %v4849
        %v5074 = vpack.c.b16 %v4858, %v4850
        %v5075 = vpack.c.b16 %v4859, %v4851
        %v5076 = vpack.c.b16 %v4860, %v4852
        %v5077 = vpack.c.b16 %v4861, %v4853
        %v5078 = vpack.c.b16 %v4862, %v4854
        %v5079 = vpack.c.b16 %v4863, %v4855
        %v5080 = vpack.c.b16 %v4864, %v4856
        %v5081 = vpack.c.b16 %v4873, %v4865
        %v5082 = vpack.c.b16 %v4874, %v4866
        %v5083 = vpack.c.b16 %v4875, %v4867
        %v5084 = vpack.c.b16 %v4876, %v4868
        %v5085 = vpack.c.b16 %v4877, %v4869
        %v5086 = vpack.c.b16 %v4878, %v4870
        %v5087 = vpack.c.b16 %v4879, %v4871
        %v5088 = vpack.c.b16 %v4880, %v4872
        %v5089 = vpack.c.b16 %v4889, %v4881
        %v5090 = vpack.c.b16 %v4890, %v4882
        %v5091 = vpack.c.b16 %v4891, %v4883
        %v5092 = vpack.c.b16 %v4892, %v4884
        %v5093 = vpack.c.b16 %v4893, %v4885
        %v5094 = vpack.c.b16 %v4894, %v4886
        %v5095 = vpack.c.b16 %v4895, %v4887
        %v5096 = vpack.c.b16 %v4896, %v4888
        %v5097 = vpack.c.b16 %v4905, %v4897
        %v5098 = vpack.c.b16 %v4906, %v4898
        %v5099 = vpack.c.b16 %v4907, %v4899
        %v5100 = vpack.c.b16 %v4908, %v4900
        %v5101 = vpack.c.b16 %v4909, %v4901
        %v5102 = vpack.c.b16 %v4910, %v4902
        %v5103 = vpack.c.b16 %v4911, %v4903
        %v5104 = vpack.c.b16 %v4912, %v4904
        %v5105 = vpack.c.b16 %v4921, %v4913
        %v5106 = vpack.c.b16 %v4922, %v4914
        %v5107 = vpack.c.b16 %v4923, %v4915
        %v5108 = vpack.c.b16 %v4924, %v4916
        %v5109 = vpack.c.b16 %v4925, %v4917
        %v5110 = vpack.c.b16 %v4926, %v4918
        %v5111 = vpack.c.b16 %v4927, %v4919
        %v5112 = vpack.c.b16 %v4928, %v4920
        %v5113 = vpack.c.b16 %v4937, %v4929
        %v5114 = vpack.c.b16 %v4938, %v4930
        %v5115 = vpack.c.b16 %v4939, %v4931
        %v5116 = vpack.c.b16 %v4940, %v4932
        %v5117 = vpack.c.b16 %v4941, %v4933
        %v5118 = vpack.c.b16 %v4942, %v4934
        %v5119 = vpack.c.b16 %v4943, %v4935
        %v5120 = vpack.c.b16 %v4944, %v4936
        %v5121 = vpack.c.b16 %v4953, %v4945
        %v5122 = vpack.c.b16 %v4954, %v4946
        %v5123 = vpack.c.b16 %v4955, %v4947
        %v5124 = vpack.c.b16 %v4956, %v4948
        %v5125 = vpack.c.b16 %v4957, %v4949
        %v5126 = vpack.c.b16 %v4958, %v4950
        %v5127 = vpack.c.b16 %v4959, %v4951
        %v5128 = vpack.c.b16 %v4960, %v4952
        %v5129 = vpack.c.b16 %v4969, %v4961
        %v5130 = vpack.c.b16 %v4970, %v4962
        %v5131 = vpack.c.b16 %v4971, %v4963
        %v5132 = vpack.c.b16 %v4972, %v4964
        %v5133 = vpack.c.b16 %v4973, %v4965
        %v5134 = vpack.c.b16 %v4974, %v4966
        %v5135 = vpack.c.b16 %v4975, %v4967
        %v5136 = vpack.c.b16 %v4976, %v4968
        %v5137 = vpack.c.b16 %v4985, %v4977
        %v5138 = vpack.c.b16 %v4986, %v4978
        %v5139 = vpack.c.b16 %v4987, %v4979
        %v5140 = vpack.c.b16 %v4988, %v4980
        %v5141 = vpack.c.b16 %v4989, %v4981
        %v5142 = vpack.c.b16 %v4990, %v4982
        %v5143 = vpack.c.b16 %v4991, %v4983
        %v5144 = vpack.c.b16 %v4992, %v4984
        %v5145 = vpack.c.b16 %v5001, %v4993
        %v5146 = vpack.c.b16 %v5002, %v4994
        %v5147 = vpack.c.b16 %v5003, %v4995
        %v5148 = vpack.c.b16 %v5004, %v4996
        %v5149 = vpack.c.b16 %v5005, %v4997
        %v5150 = vpack.c.b16 %v5006, %v4998
        %v5151 = vpack.c.b16 %v5007, %v4999
        %v5152 = vpack.c.b16 %v5008, %v5000
        %v5153 = vpack.c.b16 %v5017, %v5009
        %v5154 = vpack.c.b16 %v5018, %v5010
        %v5155 = vpack.c.b16 %v5019, %v5011
        %v5156 = vpack.c.b16 %v5020, %v5012
        %v5157 = vpack.c.b16 %v5021, %v5013
        %v5158 = vpack.c.b16 %v5022, %v5014
        %v5159 = vpack.c.b16 %v5023, %v5015
        %v5160 = vpack.c.b16 %v5024, %v5016
        %v5161 = vpack.c.b16 %v5033, %v5025
        %v5162 = vpack.c.b16 %v5034, %v5026
        %v5163 = vpack.c.b16 %v5035, %v5027
        %v5164 = vpack.c.b16 %v5036, %v5028
        %v5165 = vpack.c.b16 %v5037, %v5029
        %v5166 = vpack.c.b16 %v5038, %v5030
        %v5167 = vpack.c.b16 %v5039, %v5031
        %v5168 = vpack.c.b16 %v5040, %v5032
        %5297 = vmatpush.bf16.msra.mxu0 %v5097
        %5298 = vmatpush.bf16.msra.mxu0 %v5089
        %5299 = vmatpush.bf16.msra.mxu0 %v5081
        %5300 = vmatpush.bf16.msra.mxu0 %v5073
        %5301 = vmatpush.bf16.msra.mxu0 %v5065
        %5302 = vmatpush.bf16.msra.mxu0 %v5057
        %5303 = vmatpush.bf16.msra.mxu0 %v5049
        %5304 = vmatpush.bf16.msra.mxu0 %v5041
        %5305 = vmatmul.bf16.gmra.mxu0 %v4527
        %v5306 = vpop.f32.mrf.mxu0
        %v5307 = vadd.f32 0.0, %v5306
        %v5308 = vpop.f32.mrf.mxu0
        %5309 = vdwg.mxu0
        %5310 = vmatpush.bf16.msra.mxu0 %v5161
        %5311 = vmatpush.bf16.msra.mxu0 %v5153
        %5312 = vmatpush.bf16.msra.mxu0 %v5145
        %5313 = vmatpush.bf16.msra.mxu0 %v5137
        %5314 = vmatpush.bf16.msra.mxu0 %v5129
        %5315 = vmatpush.bf16.msra.mxu0 %v5121
        %5316 = vmatpush.bf16.msra.mxu0 %v5113
        %5317 = vmatpush.bf16.msra.mxu0 %v5105
        %5318 = vmatmul.bf16.gmra.mxu0 %v4528
        %v5319 = vpop.f32.mrf.mxu0
        %v5320 = vadd.f32 %v5307, %v5319
        %v5321 = vpop.f32.mrf.mxu0
        %5322 = vdwg.mxu0
        %5323 = vmatpush.bf16.msra.mxu0 %v5098
        %5324 = vmatpush.bf16.msra.mxu0 %v5090
        %5325 = vmatpush.bf16.msra.mxu0 %v5082
        %5326 = vmatpush.bf16.msra.mxu0 %v5074
        %5327 = vmatpush.bf16.msra.mxu0 %v5066
        %5328 = vmatpush.bf16.msra.mxu0 %v5058
        %5329 = vmatpush.bf16.msra.mxu0 %v5050
        %5330 = vmatpush.bf16.msra.mxu0 %v5042
        %5331 = vmatmul.bf16.gmra.mxu0 %v4527
        %v5332 = vpop.f32.mrf.mxu0
        %v5333 = vadd.f32 0.0, %v5332
        %v5334 = vpop.f32.mrf.mxu0
        %5335 = vdwg.mxu0
        %5336 = vmatpush.bf16.msra.mxu0 %v5162
        %5337 = vmatpush.bf16.msra.mxu0 %v5154
        %5338 = vmatpush.bf16.msra.mxu0 %v5146
        %5339 = vmatpush.bf16.msra.mxu0 %v5138
        %5340 = vmatpush.bf16.msra.mxu0 %v5130
        %5341 = vmatpush.bf16.msra.mxu0 %v5122
        %5342 = vmatpush.bf16.msra.mxu0 %v5114
        %5343 = vmatpush.bf16.msra.mxu0 %v5106
        %5344 = vmatmul.bf16.gmra.mxu0 %v4528
        %v5345 = vpop.f32.mrf.mxu0
        %v5346 = vadd.f32 %v5333, %v5345
        %v5347 = vpop.f32.mrf.mxu0
        %5348 = vdwg.mxu0
        %5349 = vmatpush.bf16.msra.mxu0 %v5099
        %5350 = vmatpush.bf16.msra.mxu0 %v5091
        %5351 = vmatpush.bf16.msra.mxu0 %v5083
        %5352 = vmatpush.bf16.msra.mxu0 %v5075
        %5353 = vmatpush.bf16.msra.mxu0 %v5067
        %5354 = vmatpush.bf16.msra.mxu0 %v5059
        %5355 = vmatpush.bf16.msra.mxu0 %v5051
        %5356 = vmatpush.bf16.msra.mxu0 %v5043
        %5357 = vmatmul.bf16.gmra.mxu0 %v4527
        %v5358 = vpop.f32.mrf.mxu0
        %v5359 = vadd.f32 0.0, %v5358
        %v5360 = vpop.f32.mrf.mxu0
        %5361 = vdwg.mxu0
        %5362 = vmatpush.bf16.msra.mxu0 %v5163
        %5363 = vmatpush.bf16.msra.mxu0 %v5155
        %5364 = vmatpush.bf16.msra.mxu0 %v5147
        %5365 = vmatpush.bf16.msra.mxu0 %v5139
        %5366 = vmatpush.bf16.msra.mxu0 %v5131
        %5367 = vmatpush.bf16.msra.mxu0 %v5123
        %5368 = vmatpush.bf16.msra.mxu0 %v5115
        %5369 = vmatpush.bf16.msra.mxu0 %v5107
        %5370 = vmatmul.bf16.gmra.mxu0 %v4528
        %v5371 = vpop.f32.mrf.mxu0
        %v5372 = vadd.f32 %v5359, %v5371
        %v5373 = vpop.f32.mrf.mxu0
        %5374 = vdwg.mxu0
        %5375 = vmatpush.bf16.msra.mxu0 %v5100
        %5376 = vmatpush.bf16.msra.mxu0 %v5092
        %5377 = vmatpush.bf16.msra.mxu0 %v5084
        %5378 = vmatpush.bf16.msra.mxu0 %v5076
        %5379 = vmatpush.bf16.msra.mxu0 %v5068
        %5380 = vmatpush.bf16.msra.mxu0 %v5060
        %5381 = vmatpush.bf16.msra.mxu0 %v5052
        %5382 = vmatpush.bf16.msra.mxu0 %v5044
        %5383 = vmatmul.bf16.gmra.mxu0 %v4527
        %v5384 = vpop.f32.mrf.mxu0
        %v5385 = vadd.f32 0.0, %v5384
        %v5386 = vpop.f32.mrf.mxu0
        %5387 = vdwg.mxu0
        %5388 = vmatpush.bf16.msra.mxu0 %v5164
        %5389 = vmatpush.bf16.msra.mxu0 %v5156
        %5390 = vmatpush.bf16.msra.mxu0 %v5148
        %5391 = vmatpush.bf16.msra.mxu0 %v5140
        %5392 = vmatpush.bf16.msra.mxu0 %v5132
        %5393 = vmatpush.bf16.msra.mxu0 %v5124
        %5394 = vmatpush.bf16.msra.mxu0 %v5116
        %5395 = vmatpush.bf16.msra.mxu0 %v5108
        %5396 = vmatmul.bf16.gmra.mxu0 %v4528
        %v5397 = vpop.f32.mrf.mxu0
        %v5398 = vadd.f32 %v5385, %v5397
        %v5399 = vpop.f32.mrf.mxu0
        %5400 = vdwg.mxu0
        %5401 = vmatpush.bf16.msra.mxu0 %v5101
        %5402 = vmatpush.bf16.msra.mxu0 %v5093
        %5403 = vmatpush.bf16.msra.mxu0 %v5085
        %5404 = vmatpush.bf16.msra.mxu0 %v5077
        %5405 = vmatpush.bf16.msra.mxu0 %v5069
        %5406 = vmatpush.bf16.msra.mxu0 %v5061
        %5407 = vmatpush.bf16.msra.mxu0 %v5053
        %5408 = vmatpush.bf16.msra.mxu0 %v5045
        %5409 = vmatmul.bf16.gmra.mxu0 %v4527
        %v5410 = vpop.f32.mrf.mxu0
        %v5411 = vadd.f32 0.0, %v5410
        %v5412 = vpop.f32.mrf.mxu0
        %5413 = vdwg.mxu0
        %5414 = vmatpush.bf16.msra.mxu0 %v5165
        %5415 = vmatpush.bf16.msra.mxu0 %v5157
        %5416 = vmatpush.bf16.msra.mxu0 %v5149
        %5417 = vmatpush.bf16.msra.mxu0 %v5141
        %5418 = vmatpush.bf16.msra.mxu0 %v5133
        %5419 = vmatpush.bf16.msra.mxu0 %v5125
        %5420 = vmatpush.bf16.msra.mxu0 %v5117
        %5421 = vmatpush.bf16.msra.mxu0 %v5109
        %5422 = vmatmul.bf16.gmra.mxu0 %v4528
        %v5423 = vpop.f32.mrf.mxu0
        %v5424 = vadd.f32 %v5411, %v5423
        %v5425 = vpop.f32.mrf.mxu0
        %5426 = vdwg.mxu0
        %5427 = vmatpush.bf16.msra.mxu0 %v5102
        %5428 = vmatpush.bf16.msra.mxu0 %v5094
        %5429 = vmatpush.bf16.msra.mxu0 %v5086
        %5430 = vmatpush.bf16.msra.mxu0 %v5078
        %5431 = vmatpush.bf16.msra.mxu0 %v5070
        %5432 = vmatpush.bf16.msra.mxu0 %v5062
        %5433 = vmatpush.bf16.msra.mxu0 %v5054
        %5434 = vmatpush.bf16.msra.mxu0 %v5046
        %5435 = vmatmul.bf16.gmra.mxu0 %v4527
        %v5436 = vpop.f32.mrf.mxu0
        %v5437 = vadd.f32 0.0, %v5436
        %v5438 = vpop.f32.mrf.mxu0
        %5439 = vdwg.mxu0
        %5440 = vmatpush.bf16.msra.mxu0 %v5166
        %5441 = vmatpush.bf16.msra.mxu0 %v5158
        %5442 = vmatpush.bf16.msra.mxu0 %v5150
        %5443 = vmatpush.bf16.msra.mxu0 %v5142
        %5444 = vmatpush.bf16.msra.mxu0 %v5134
        %5445 = vmatpush.bf16.msra.mxu0 %v5126
        %5446 = vmatpush.bf16.msra.mxu0 %v5118
        %5447 = vmatpush.bf16.msra.mxu0 %v5110
        %5448 = vmatmul.bf16.gmra.mxu0 %v4528
        %v5449 = vpop.f32.mrf.mxu0
        %v5450 = vadd.f32 %v5437, %v5449
        %v5451 = vpop.f32.mrf.mxu0
        %5452 = vdwg.mxu0
        %5453 = vmatpush.bf16.msra.mxu0 %v5103
        %5454 = vmatpush.bf16.msra.mxu0 %v5095
        %5455 = vmatpush.bf16.msra.mxu0 %v5087
        %5456 = vmatpush.bf16.msra.mxu0 %v5079
        %5457 = vmatpush.bf16.msra.mxu0 %v5071
        %5458 = vmatpush.bf16.msra.mxu0 %v5063
        %5459 = vmatpush.bf16.msra.mxu0 %v5055
        %5460 = vmatpush.bf16.msra.mxu0 %v5047
        %5461 = vmatmul.bf16.gmra.mxu0 %v4527
        %v5462 = vpop.f32.mrf.mxu0
        %v5463 = vadd.f32 0.0, %v5462
        %v5464 = vpop.f32.mrf.mxu0
        %5465 = vdwg.mxu0
        %5466 = vmatpush.bf16.msra.mxu0 %v5167
        %5467 = vmatpush.bf16.msra.mxu0 %v5159
        %5468 = vmatpush.bf16.msra.mxu0 %v5151
        %5469 = vmatpush.bf16.msra.mxu0 %v5143
        %5470 = vmatpush.bf16.msra.mxu0 %v5135
        %5471 = vmatpush.bf16.msra.mxu0 %v5127
        %5472 = vmatpush.bf16.msra.mxu0 %v5119
        %5473 = vmatpush.bf16.msra.mxu0 %v5111
        %5474 = vmatmul.bf16.gmra.mxu0 %v4528
        %v5475 = vpop.f32.mrf.mxu0
        %v5476 = vadd.f32 %v5463, %v5475
        %v5477 = vpop.f32.mrf.mxu0
        %5478 = vdwg.mxu0
        %5479 = vmatpush.bf16.msra.mxu0 %v5104
        %5480 = vmatpush.bf16.msra.mxu0 %v5096
        %5481 = vmatpush.bf16.msra.mxu0 %v5088
        %5482 = vmatpush.bf16.msra.mxu0 %v5080
        %5483 = vmatpush.bf16.msra.mxu0 %v5072
        %5484 = vmatpush.bf16.msra.mxu0 %v5064
        %5485 = vmatpush.bf16.msra.mxu0 %v5056
        %5486 = vmatpush.bf16.msra.mxu0 %v5048
        %5487 = vmatmul.bf16.gmra.mxu0 %v4527
        %v5488 = vpop.f32.mrf.mxu0
        %v5489 = vadd.f32 0.0, %v5488
        %v5490 = vpop.f32.mrf.mxu0
        %5491 = vdwg.mxu0
        %5492 = vmatpush.bf16.msra.mxu0 %v5168
        %5493 = vmatpush.bf16.msra.mxu0 %v5160
        %5494 = vmatpush.bf16.msra.mxu0 %v5152
        %5495 = vmatpush.bf16.msra.mxu0 %v5144
        %5496 = vmatpush.bf16.msra.mxu0 %v5136
        %5497 = vmatpush.bf16.msra.mxu0 %v5128
        %5498 = vmatpush.bf16.msra.mxu0 %v5120
        %5499 = vmatpush.bf16.msra.mxu0 %v5112
        %5500 = vmatmul.bf16.gmra.mxu0 %v4528
        %v5501 = vpop.f32.mrf.mxu0
        %v5502 = vadd.f32 %v5489, %v5501
        %v5503 = vpop.f32.mrf.mxu0
        %5504 = vdwg.mxu0
        %v5521 = vunpack.c.l.b16 %v4511
        %v5522 = vunpack.c.h.b16 %v4511
        %v5523 = vunpack.c.l.b16 %v4512
        %v5524 = vunpack.c.h.b16 %v4512
        %v5525 = vunpack.c.l.b16 %v4513
        %v5526 = vunpack.c.h.b16 %v4513
        %v5527 = vunpack.c.l.b16 %v4514
        %v5528 = vunpack.c.h.b16 %v4514
        %v5529 = vunpack.c.l.b16 %v4515
        %v5530 = vunpack.c.h.b16 %v4515
        %v5531 = vunpack.c.l.b16 %v4516
        %v5532 = vunpack.c.h.b16 %v4516
        %v5533 = vunpack.c.l.b16 %v4517
        %v5534 = vunpack.c.h.b16 %v4517
        %v5535 = vunpack.c.l.b16 %v4518
        %v5536 = vunpack.c.h.b16 %v4518
        %v5537 = vunpack.c.l.b16 %v4519
        %v5538 = vunpack.c.h.b16 %v4519
        %v5539 = vunpack.c.l.b16 %v4520
        %v5540 = vunpack.c.h.b16 %v4520
        %v5541 = vunpack.c.l.b16 %v4521
        %v5542 = vunpack.c.h.b16 %v4521
        %v5543 = vunpack.c.l.b16 %v4522
        %v5544 = vunpack.c.h.b16 %v4522
        %v5545 = vunpack.c.l.b16 %v4523
        %v5546 = vunpack.c.h.b16 %v4523
        %v5547 = vunpack.c.l.b16 %v4524
        %v5548 = vunpack.c.h.b16 %v4524
        %v5549 = vunpack.c.l.b16 %v4525
        %v5550 = vunpack.c.h.b16 %v4525
        %v5551 = vunpack.c.l.b16 %v4526
        %v5552 = vunpack.c.h.b16 %v4526
        %v5553 = vpack.c.b16 %v5529, %v5521
        %v5554 = vpack.c.b16 %v5530, %v5522
        %v5555 = vpack.c.b16 %v5531, %v5523
        %v5556 = vpack.c.b16 %v5532, %v5524
        %v5557 = vpack.c.b16 %v5533, %v5525
        %v5558 = vpack.c.b16 %v5534, %v5526
        %v5559 = vpack.c.b16 %v5535, %v5527
        %v5560 = vpack.c.b16 %v5536, %v5528
        %v5561 = vpack.c.b16 %v5545, %v5537
        %v5562 = vpack.c.b16 %v5546, %v5538
        %v5563 = vpack.c.b16 %v5547, %v5539
        %v5564 = vpack.c.b16 %v5548, %v5540
        %v5565 = vpack.c.b16 %v5549, %v5541
        %v5566 = vpack.c.b16 %v5550, %v5542
        %v5567 = vpack.c.b16 %v5551, %v5543
        %v5568 = vpack.c.b16 %v5552, %v5544
        %vm5585 = vcmask 261120
        %v5587 = vsel %vm5585, %v4510, 0
        %5589 = vmatpush.bf16.msra.mxu0 0
        %5590 = vmatpush.bf16.msra.mxu0 0
        %5591 = vmatpush.bf16.msra.mxu0 0
        %5592 = vmatpush.bf16.msra.mxu0 0
        %5593 = vmatpush.bf16.msra.mxu0 0
        %5594 = vmatpush.bf16.msra.mxu0 0
        %5595 = vmatpush.bf16.msra.mxu0 %v5561
        %5596 = vmatpush.bf16.msra.mxu0 %v5553
        %5597 = vmatmul.bf16.gmra.mxu0 %v5587
        %v5598 = vpop.f32.mrf.mxu0
        %v5599 = vadd.f32 %v5320, %v5598
        %v5600 = vpop.f32.mrf.mxu0
        %5601 = vdwg.mxu0
        %5602 = vmatpush.bf16.msra.mxu0 0
        %5603 = vmatpush.bf16.msra.mxu0 0
        %5604 = vmatpush.bf16.msra.mxu0 0
        %5605 = vmatpush.bf16.msra.mxu0 0
        %5606 = vmatpush.bf16.msra.mxu0 0
        %5607 = vmatpush.bf16.msra.mxu0 0
        %5608 = vmatpush.bf16.msra.mxu0 %v5562
        %5609 = vmatpush.bf16.msra.mxu0 %v5554
        %5610 = vmatmul.bf16.gmra.mxu0 %v5587
        %v5611 = vpop.f32.mrf.mxu0
        %v5612 = vadd.f32 %v5346, %v5611
        %v5613 = vpop.f32.mrf.mxu0
        %5614 = vdwg.mxu0
        %5615 = vmatpush.bf16.msra.mxu0 0
        %5616 = vmatpush.bf16.msra.mxu0 0
        %5617 = vmatpush.bf16.msra.mxu0 0
        %5618 = vmatpush.bf16.msra.mxu0 0
        %5619 = vmatpush.bf16.msra.mxu0 0
        %5620 = vmatpush.bf16.msra.mxu0 0
        %5621 = vmatpush.bf16.msra.mxu0 %v5563
        %5622 = vmatpush.bf16.msra.mxu0 %v5555
        %5623 = vmatmul.bf16.gmra.mxu0 %v5587
        %v5624 = vpop.f32.mrf.mxu0
        %v5625 = vadd.f32 %v5372, %v5624
        %v5626 = vpop.f32.mrf.mxu0
        %5627 = vdwg.mxu0
        %5628 = vmatpush.bf16.msra.mxu0 0
        %5629 = vmatpush.bf16.msra.mxu0 0
        %5630 = vmatpush.bf16.msra.mxu0 0
        %5631 = vmatpush.bf16.msra.mxu0 0
        %5632 = vmatpush.bf16.msra.mxu0 0
        %5633 = vmatpush.bf16.msra.mxu0 0
        %5634 = vmatpush.bf16.msra.mxu0 %v5564
        %5635 = vmatpush.bf16.msra.mxu0 %v5556
        %5636 = vmatmul.bf16.gmra.mxu0 %v5587
        %v5637 = vpop.f32.mrf.mxu0
        %v5638 = vadd.f32 %v5398, %v5637
        %v5639 = vpop.f32.mrf.mxu0
        %5640 = vdwg.mxu0
        %5641 = vmatpush.bf16.msra.mxu0 0
        %5642 = vmatpush.bf16.msra.mxu0 0
        %5643 = vmatpush.bf16.msra.mxu0 0
        %5644 = vmatpush.bf16.msra.mxu0 0
        %5645 = vmatpush.bf16.msra.mxu0 0
        %5646 = vmatpush.bf16.msra.mxu0 0
        %5647 = vmatpush.bf16.msra.mxu0 %v5565
        %5648 = vmatpush.bf16.msra.mxu0 %v5557
        %5649 = vmatmul.bf16.gmra.mxu0 %v5587
        %v5650 = vpop.f32.mrf.mxu0
        %v5651 = vadd.f32 %v5424, %v5650
        %v5652 = vpop.f32.mrf.mxu0
        %5653 = vdwg.mxu0
        %5654 = vmatpush.bf16.msra.mxu0 0
        %5655 = vmatpush.bf16.msra.mxu0 0
        %5656 = vmatpush.bf16.msra.mxu0 0
        %5657 = vmatpush.bf16.msra.mxu0 0
        %5658 = vmatpush.bf16.msra.mxu0 0
        %5659 = vmatpush.bf16.msra.mxu0 0
        %5660 = vmatpush.bf16.msra.mxu0 %v5566
        %5661 = vmatpush.bf16.msra.mxu0 %v5558
        %5662 = vmatmul.bf16.gmra.mxu0 %v5587
        %v5663 = vpop.f32.mrf.mxu0
        %v5664 = vadd.f32 %v5450, %v5663
        %v5665 = vpop.f32.mrf.mxu0
        %5666 = vdwg.mxu0
        %5667 = vmatpush.bf16.msra.mxu0 0
        %5668 = vmatpush.bf16.msra.mxu0 0
        %5669 = vmatpush.bf16.msra.mxu0 0
        %5670 = vmatpush.bf16.msra.mxu0 0
        %5671 = vmatpush.bf16.msra.mxu0 0
        %5672 = vmatpush.bf16.msra.mxu0 0
        %5673 = vmatpush.bf16.msra.mxu0 %v5567
        %5674 = vmatpush.bf16.msra.mxu0 %v5559
        %5675 = vmatmul.bf16.gmra.mxu0 %v5587
        %v5676 = vpop.f32.mrf.mxu0
        %v5677 = vadd.f32 %v5476, %v5676
        %v5678 = vpop.f32.mrf.mxu0
        %5679 = vdwg.mxu0
        %5680 = vmatpush.bf16.msra.mxu0 0
        %5681 = vmatpush.bf16.msra.mxu0 0
        %5682 = vmatpush.bf16.msra.mxu0 0
        %5683 = vmatpush.bf16.msra.mxu0 0
        %5684 = vmatpush.bf16.msra.mxu0 0
        %5685 = vmatpush.bf16.msra.mxu0 0
        %5686 = vmatpush.bf16.msra.mxu0 %v5568
        %5687 = vmatpush.bf16.msra.mxu0 %v5560
        %5688 = vmatmul.bf16.gmra.mxu0 %v5587
        %v5689 = vpop.f32.mrf.mxu0
        %v5690 = vadd.f32 %v5502, %v5689
        %v5691 = vpop.f32.mrf.mxu0
        %5692 = vdwg.mxu0
        %v5693 = vpack.c.bf16 %v4454, %v4454
        %v5694 = vpack.c.bf16 %v4506, %v4506
        %v5695 = vld [vmem:[#allocation17] sm:$0xff]
        %v5696 = vld [vmem:[#allocation17 + $0x8] sm:$0xff]
        %v5697 = vld [vmem:[#allocation17 + $0x10] sm:$0xff]
        %v5698 = vld [vmem:[#allocation17 + $0x18] sm:$0xff]
        %v5699 = vld [vmem:[#allocation17 + $0x20] sm:$0xff]
        %v5700 = vld [vmem:[#allocation17 + $0x28] sm:$0xff]
        %v5701 = vld [vmem:[#allocation17 + $0x30] sm:$0xff]
        %v5702 = vld [vmem:[#allocation17 + $0x38] sm:$0xff]
        %v5703 = vld [vmem:[#allocation17 + $0x40] sm:$0xff]
        %v5704 = vld [vmem:[#allocation17 + $0x48] sm:$0xff]
        %v5705 = vld [vmem:[#allocation17 + $0x50] sm:$0xff]
        %v5706 = vld [vmem:[#allocation17 + $0x58] sm:$0xff]
        %v5707 = vld [vmem:[#allocation17 + $0x60] sm:$0xff]
        %v5708 = vld [vmem:[#allocation17 + $0x68] sm:$0xff]
        %v5709 = vld [vmem:[#allocation17 + $0x70] sm:$0xff]
        %v5710 = vld [vmem:[#allocation17 + $0x78] sm:$0xff]
        %v5711 = vld [vmem:[#allocation17 + $0x80] sm:$0xff]
        %v5712 = vld [vmem:[#allocation17 + $0x88] sm:$0xff]
        %v5713 = vld [vmem:[#allocation17 + $0x90] sm:$0xff]
        %v5714 = vld [vmem:[#allocation17 + $0x98] sm:$0xff]
        %v5715 = vld [vmem:[#allocation17 + $0xa0] sm:$0xff]
        %v5716 = vld [vmem:[#allocation17 + $0xa8] sm:$0xff]
        %v5717 = vld [vmem:[#allocation17 + $0xb0] sm:$0xff]
        %v5718 = vld [vmem:[#allocation17 + $0xb8] sm:$0xff]
        %v5719 = vld [vmem:[#allocation17 + $0xc0] sm:$0xff]
        %v5720 = vld [vmem:[#allocation17 + $0xc8] sm:$0xff]
        %v5721 = vld [vmem:[#allocation17 + $0xd0] sm:$0xff]
        %v5722 = vld [vmem:[#allocation17 + $0xd8] sm:$0xff]
        %v5723 = vld [vmem:[#allocation17 + $0xe0] sm:$0xff]
        %v5724 = vld [vmem:[#allocation17 + $0xe8] sm:$0xff]
        %v5725 = vld [vmem:[#allocation17 + $0xf0] sm:$0xff]
        %v5726 = vld [vmem:[#allocation17 + $0xf8] sm:$0xff]
        %v5727 = vld [vmem:[#allocation17 + $0x100] sm:$0xff]
        %v5728 = vld [vmem:[#allocation17 + $0x108] sm:$0xff]
        %v5729 = vld [vmem:[#allocation17 + $0x110] sm:$0xff]
        %v5730 = vld [vmem:[#allocation17 + $0x118] sm:$0xff]
        %v5731 = vld [vmem:[#allocation17 + $0x120] sm:$0xff]
        %v5732 = vld [vmem:[#allocation17 + $0x128] sm:$0xff]
        %v5733 = vld [vmem:[#allocation17 + $0x130] sm:$0xff]
        %v5734 = vld [vmem:[#allocation17 + $0x138] sm:$0xff]
        %v5735 = vld [vmem:[#allocation17 + $0x140] sm:$0xff]
        %v5736 = vld [vmem:[#allocation17 + $0x148] sm:$0xff]
        %v5737 = vld [vmem:[#allocation17 + $0x150] sm:$0xff]
        %v5738 = vld [vmem:[#allocation17 + $0x158] sm:$0xff]
        %v5739 = vld [vmem:[#allocation17 + $0x160] sm:$0xff]
        %v5740 = vld [vmem:[#allocation17 + $0x168] sm:$0xff]
        %v5741 = vld [vmem:[#allocation17 + $0x170] sm:$0xff]
        %v5742 = vld [vmem:[#allocation17 + $0x178] sm:$0xff]
        %v5743 = vld [vmem:[#allocation17 + $0x180] sm:$0xff]
        %v5744 = vld [vmem:[#allocation17 + $0x188] sm:$0xff]
        %v5745 = vld [vmem:[#allocation17 + $0x190] sm:$0xff]
        %v5746 = vld [vmem:[#allocation17 + $0x198] sm:$0xff]
        %v5747 = vld [vmem:[#allocation17 + $0x1a0] sm:$0xff]
        %v5748 = vld [vmem:[#allocation17 + $0x1a8] sm:$0xff]
        %v5749 = vld [vmem:[#allocation17 + $0x1b0] sm:$0xff]
        %v5750 = vld [vmem:[#allocation17 + $0x1b8] sm:$0xff]
        %v5751 = vld [vmem:[#allocation17 + $0x1c0] sm:$0xff]
        %v5752 = vld [vmem:[#allocation17 + $0x1c8] sm:$0xff]
        %v5753 = vld [vmem:[#allocation17 + $0x1d0] sm:$0xff]
        %v5754 = vld [vmem:[#allocation17 + $0x1d8] sm:$0xff]
        %v5755 = vld [vmem:[#allocation17 + $0x1e0] sm:$0xff]
        %v5756 = vld [vmem:[#allocation17 + $0x1e8] sm:$0xff]
        %v5757 = vld [vmem:[#allocation17 + $0x1f0] sm:$0xff]
        %v5758 = vld [vmem:[#allocation17 + $0x1f8] sm:$0xff]
        %v5759 = vld [vmem:[#allocation17 + $0x200] sm:$0xff]
        %v5760 = vld [vmem:[#allocation17 + $0x208] sm:$0xff]
        %v5761 = vld [vmem:[#allocation17 + $0x210] sm:$0xff]
        %v5762 = vld [vmem:[#allocation17 + $0x218] sm:$0xff]
        %v5763 = vld [vmem:[#allocation17 + $0x220] sm:$0xff]
        %v5764 = vld [vmem:[#allocation17 + $0x228] sm:$0xff]
        %v5765 = vld [vmem:[#allocation17 + $0x230] sm:$0xff]
        %v5766 = vld [vmem:[#allocation17 + $0x238] sm:$0xff]
        %v5767 = vld [vmem:[#allocation17 + $0x240] sm:$0xff]
        %v5768 = vld [vmem:[#allocation17 + $0x248] sm:$0xff]
        %v5769 = vld [vmem:[#allocation17 + $0x250] sm:$0xff]
        %v5770 = vld [vmem:[#allocation17 + $0x258] sm:$0xff]
        %v5771 = vld [vmem:[#allocation17 + $0x260] sm:$0xff]
        %v5772 = vld [vmem:[#allocation17 + $0x268] sm:$0xff]
        %v5773 = vld [vmem:[#allocation17 + $0x270] sm:$0xff]
        %v5774 = vld [vmem:[#allocation17 + $0x278] sm:$0xff]
        %v5775 = vld [vmem:[#allocation17 + $0x280] sm:$0xff]
        %v5776 = vld [vmem:[#allocation17 + $0x288] sm:$0xff]
        %v5777 = vld [vmem:[#allocation17 + $0x290] sm:$0xff]
        %v5778 = vld [vmem:[#allocation17 + $0x298] sm:$0xff]
        %v5779 = vld [vmem:[#allocation17 + $0x2a0] sm:$0xff]
        %v5780 = vld [vmem:[#allocation17 + $0x2a8] sm:$0xff]
        %v5781 = vld [vmem:[#allocation17 + $0x2b0] sm:$0xff]
        %v5782 = vld [vmem:[#allocation17 + $0x2b8] sm:$0xff]
        %v5783 = vld [vmem:[#allocation17 + $0x2c0] sm:$0xff]
        %v5784 = vld [vmem:[#allocation17 + $0x2c8] sm:$0xff]
        %v5785 = vld [vmem:[#allocation17 + $0x2d0] sm:$0xff]
        %v5786 = vld [vmem:[#allocation17 + $0x2d8] sm:$0xff]
        %v5787 = vld [vmem:[#allocation17 + $0x2e0] sm:$0xff]
        %v5788 = vld [vmem:[#allocation17 + $0x2e8] sm:$0xff]
        %v5789 = vld [vmem:[#allocation17 + $0x2f0] sm:$0xff]
        %v5790 = vld [vmem:[#allocation17 + $0x2f8] sm:$0xff]
        %v5791 = vld [vmem:[#allocation17 + $0x300] sm:$0xff]
        %v5792 = vld [vmem:[#allocation17 + $0x308] sm:$0xff]
        %v5793 = vld [vmem:[#allocation17 + $0x310] sm:$0xff]
        %v5794 = vld [vmem:[#allocation17 + $0x318] sm:$0xff]
        %v5795 = vld [vmem:[#allocation17 + $0x320] sm:$0xff]
        %v5796 = vld [vmem:[#allocation17 + $0x328] sm:$0xff]
        %v5797 = vld [vmem:[#allocation17 + $0x330] sm:$0xff]
        %v5798 = vld [vmem:[#allocation17 + $0x338] sm:$0xff]
        %v5799 = vld [vmem:[#allocation17 + $0x340] sm:$0xff]
        %v5800 = vld [vmem:[#allocation17 + $0x348] sm:$0xff]
        %v5801 = vld [vmem:[#allocation17 + $0x350] sm:$0xff]
        %v5802 = vld [vmem:[#allocation17 + $0x358] sm:$0xff]
        %v5803 = vld [vmem:[#allocation17 + $0x360] sm:$0xff]
        %v5804 = vld [vmem:[#allocation17 + $0x368] sm:$0xff]
        %v5805 = vld [vmem:[#allocation17 + $0x370] sm:$0xff]
        %v5806 = vld [vmem:[#allocation17 + $0x378] sm:$0xff]
        %v5807 = vld [vmem:[#allocation17 + $0x380] sm:$0xff]
        %v5808 = vld [vmem:[#allocation17 + $0x388] sm:$0xff]
        %v5809 = vld [vmem:[#allocation17 + $0x390] sm:$0xff]
        %v5810 = vld [vmem:[#allocation17 + $0x398] sm:$0xff]
        %v5811 = vld [vmem:[#allocation17 + $0x3a0] sm:$0xff]
        %v5812 = vld [vmem:[#allocation17 + $0x3a8] sm:$0xff]
        %v5813 = vld [vmem:[#allocation17 + $0x3b0] sm:$0xff]
        %v5814 = vld [vmem:[#allocation17 + $0x3b8] sm:$0xff]
        %v5815 = vld [vmem:[#allocation17 + $0x3c0] sm:$0xff]
        %v5816 = vld [vmem:[#allocation17 + $0x3c8] sm:$0xff]
        %v5817 = vld [vmem:[#allocation17 + $0x3d0] sm:$0xff]
        %v5818 = vld [vmem:[#allocation17 + $0x3d8] sm:$0xff]
        %v5819 = vld [vmem:[#allocation17 + $0x3e0] sm:$0xff]
        %v5820 = vld [vmem:[#allocation17 + $0x3e8] sm:$0xff]
        %v5821 = vld [vmem:[#allocation17 + $0x3f0] sm:$0xff]
        %v5822 = vld [vmem:[#allocation17 + $0x3f8] sm:$0xff]
        %v5951 = vunpack.c.l.b16 %v5695
        %v5952 = vunpack.c.h.b16 %v5695
        %v5953 = vunpack.c.l.b16 %v5696
        %v5954 = vunpack.c.h.b16 %v5696
        %v5955 = vunpack.c.l.b16 %v5697
        %v5956 = vunpack.c.h.b16 %v5697
        %v5957 = vunpack.c.l.b16 %v5698
        %v5958 = vunpack.c.h.b16 %v5698
        %v5959 = vunpack.c.l.b16 %v5699
        %v5960 = vunpack.c.h.b16 %v5699
        %v5961 = vunpack.c.l.b16 %v5700
        %v5962 = vunpack.c.h.b16 %v5700
        %v5963 = vunpack.c.l.b16 %v5701
        %v5964 = vunpack.c.h.b16 %v5701
        %v5965 = vunpack.c.l.b16 %v5702
        %v5966 = vunpack.c.h.b16 %v5702
        %v5967 = vunpack.c.l.b16 %v5703
        %v5968 = vunpack.c.h.b16 %v5703
        %v5969 = vunpack.c.l.b16 %v5704
        %v5970 = vunpack.c.h.b16 %v5704
        %v5971 = vunpack.c.l.b16 %v5705
        %v5972 = vunpack.c.h.b16 %v5705
        %v5973 = vunpack.c.l.b16 %v5706
        %v5974 = vunpack.c.h.b16 %v5706
        %v5975 = vunpack.c.l.b16 %v5707
        %v5976 = vunpack.c.h.b16 %v5707
        %v5977 = vunpack.c.l.b16 %v5708
        %v5978 = vunpack.c.h.b16 %v5708
        %v5979 = vunpack.c.l.b16 %v5709
        %v5980 = vunpack.c.h.b16 %v5709
        %v5981 = vunpack.c.l.b16 %v5710
        %v5982 = vunpack.c.h.b16 %v5710
        %v5983 = vunpack.c.l.b16 %v5711
        %v5984 = vunpack.c.h.b16 %v5711
        %v5985 = vunpack.c.l.b16 %v5712
        %v5986 = vunpack.c.h.b16 %v5712
        %v5987 = vunpack.c.l.b16 %v5713
        %v5988 = vunpack.c.h.b16 %v5713
        %v5989 = vunpack.c.l.b16 %v5714
        %v5990 = vunpack.c.h.b16 %v5714
        %v5991 = vunpack.c.l.b16 %v5715
        %v5992 = vunpack.c.h.b16 %v5715
        %v5993 = vunpack.c.l.b16 %v5716
        %v5994 = vunpack.c.h.b16 %v5716
        %v5995 = vunpack.c.l.b16 %v5717
        %v5996 = vunpack.c.h.b16 %v5717
        %v5997 = vunpack.c.l.b16 %v5718
        %v5998 = vunpack.c.h.b16 %v5718
        %v5999 = vunpack.c.l.b16 %v5719
        %v6000 = vunpack.c.h.b16 %v5719
        %v6001 = vunpack.c.l.b16 %v5720
        %v6002 = vunpack.c.h.b16 %v5720
        %v6003 = vunpack.c.l.b16 %v5721
        %v6004 = vunpack.c.h.b16 %v5721
        %v6005 = vunpack.c.l.b16 %v5722
        %v6006 = vunpack.c.h.b16 %v5722
        %v6007 = vunpack.c.l.b16 %v5723
        %v6008 = vunpack.c.h.b16 %v5723
        %v6009 = vunpack.c.l.b16 %v5724
        %v6010 = vunpack.c.h.b16 %v5724
        %v6011 = vunpack.c.l.b16 %v5725
        %v6012 = vunpack.c.h.b16 %v5725
        %v6013 = vunpack.c.l.b16 %v5726
        %v6014 = vunpack.c.h.b16 %v5726
        %v6015 = vunpack.c.l.b16 %v5727
        %v6016 = vunpack.c.h.b16 %v5727
        %v6017 = vunpack.c.l.b16 %v5728
        %v6018 = vunpack.c.h.b16 %v5728
        %v6019 = vunpack.c.l.b16 %v5729
        %v6020 = vunpack.c.h.b16 %v5729
        %v6021 = vunpack.c.l.b16 %v5730
        %v6022 = vunpack.c.h.b16 %v5730
        %v6023 = vunpack.c.l.b16 %v5731
        %v6024 = vunpack.c.h.b16 %v5731
        %v6025 = vunpack.c.l.b16 %v5732
        %v6026 = vunpack.c.h.b16 %v5732
        %v6027 = vunpack.c.l.b16 %v5733
        %v6028 = vunpack.c.h.b16 %v5733
        %v6029 = vunpack.c.l.b16 %v5734
        %v6030 = vunpack.c.h.b16 %v5734
        %v6031 = vunpack.c.l.b16 %v5735
        %v6032 = vunpack.c.h.b16 %v5735
        %v6033 = vunpack.c.l.b16 %v5736
        %v6034 = vunpack.c.h.b16 %v5736
        %v6035 = vunpack.c.l.b16 %v5737
        %v6036 = vunpack.c.h.b16 %v5737
        %v6037 = vunpack.c.l.b16 %v5738
        %v6038 = vunpack.c.h.b16 %v5738
        %v6039 = vunpack.c.l.b16 %v5739
        %v6040 = vunpack.c.h.b16 %v5739
        %v6041 = vunpack.c.l.b16 %v5740
        %v6042 = vunpack.c.h.b16 %v5740
        %v6043 = vunpack.c.l.b16 %v5741
        %v6044 = vunpack.c.h.b16 %v5741
        %v6045 = vunpack.c.l.b16 %v5742
        %v6046 = vunpack.c.h.b16 %v5742
        %v6047 = vunpack.c.l.b16 %v5743
        %v6048 = vunpack.c.h.b16 %v5743
        %v6049 = vunpack.c.l.b16 %v5744
        %v6050 = vunpack.c.h.b16 %v5744
        %v6051 = vunpack.c.l.b16 %v5745
        %v6052 = vunpack.c.h.b16 %v5745
        %v6053 = vunpack.c.l.b16 %v5746
        %v6054 = vunpack.c.h.b16 %v5746
        %v6055 = vunpack.c.l.b16 %v5747
        %v6056 = vunpack.c.h.b16 %v5747
        %v6057 = vunpack.c.l.b16 %v5748
        %v6058 = vunpack.c.h.b16 %v5748
        %v6059 = vunpack.c.l.b16 %v5749
        %v6060 = vunpack.c.h.b16 %v5749
        %v6061 = vunpack.c.l.b16 %v5750
        %v6062 = vunpack.c.h.b16 %v5750
        %v6063 = vunpack.c.l.b16 %v5751
        %v6064 = vunpack.c.h.b16 %v5751
        %v6065 = vunpack.c.l.b16 %v5752
        %v6066 = vunpack.c.h.b16 %v5752
        %v6067 = vunpack.c.l.b16 %v5753
        %v6068 = vunpack.c.h.b16 %v5753
        %v6069 = vunpack.c.l.b16 %v5754
        %v6070 = vunpack.c.h.b16 %v5754
        %v6071 = vunpack.c.l.b16 %v5755
        %v6072 = vunpack.c.h.b16 %v5755
        %v6073 = vunpack.c.l.b16 %v5756
        %v6074 = vunpack.c.h.b16 %v5756
        %v6075 = vunpack.c.l.b16 %v5757
        %v6076 = vunpack.c.h.b16 %v5757
        %v6077 = vunpack.c.l.b16 %v5758
        %v6078 = vunpack.c.h.b16 %v5758
        %v6079 = vunpack.c.l.b16 %v5759
        %v6080 = vunpack.c.h.b16 %v5759
        %v6081 = vunpack.c.l.b16 %v5760
        %v6082 = vunpack.c.h.b16 %v5760
        %v6083 = vunpack.c.l.b16 %v5761
        %v6084 = vunpack.c.h.b16 %v5761
        %v6085 = vunpack.c.l.b16 %v5762
        %v6086 = vunpack.c.h.b16 %v5762
        %v6087 = vunpack.c.l.b16 %v5763
        %v6088 = vunpack.c.h.b16 %v5763
        %v6089 = vunpack.c.l.b16 %v5764
        %v6090 = vunpack.c.h.b16 %v5764
        %v6091 = vunpack.c.l.b16 %v5765
        %v6092 = vunpack.c.h.b16 %v5765
        %v6093 = vunpack.c.l.b16 %v5766
        %v6094 = vunpack.c.h.b16 %v5766
        %v6095 = vunpack.c.l.b16 %v5767
        %v6096 = vunpack.c.h.b16 %v5767
        %v6097 = vunpack.c.l.b16 %v5768
        %v6098 = vunpack.c.h.b16 %v5768
        %v6099 = vunpack.c.l.b16 %v5769
        %v6100 = vunpack.c.h.b16 %v5769
        %v6101 = vunpack.c.l.b16 %v5770
        %v6102 = vunpack.c.h.b16 %v5770
        %v6103 = vunpack.c.l.b16 %v5771
        %v6104 = vunpack.c.h.b16 %v5771
        %v6105 = vunpack.c.l.b16 %v5772
        %v6106 = vunpack.c.h.b16 %v5772
        %v6107 = vunpack.c.l.b16 %v5773
        %v6108 = vunpack.c.h.b16 %v5773
        %v6109 = vunpack.c.l.b16 %v5774
        %v6110 = vunpack.c.h.b16 %v5774
        %v6111 = vunpack.c.l.b16 %v5775
        %v6112 = vunpack.c.h.b16 %v5775
        %v6113 = vunpack.c.l.b16 %v5776
        %v6114 = vunpack.c.h.b16 %v5776
        %v6115 = vunpack.c.l.b16 %v5777
        %v6116 = vunpack.c.h.b16 %v5777
        %v6117 = vunpack.c.l.b16 %v5778
        %v6118 = vunpack.c.h.b16 %v5778
        %v6119 = vunpack.c.l.b16 %v5779
        %v6120 = vunpack.c.h.b16 %v5779
        %v6121 = vunpack.c.l.b16 %v5780
        %v6122 = vunpack.c.h.b16 %v5780
        %v6123 = vunpack.c.l.b16 %v5781
        %v6124 = vunpack.c.h.b16 %v5781
        %v6125 = vunpack.c.l.b16 %v5782
        %v6126 = vunpack.c.h.b16 %v5782
        %v6127 = vunpack.c.l.b16 %v5783
        %v6128 = vunpack.c.h.b16 %v5783
        %v6129 = vunpack.c.l.b16 %v5784
        %v6130 = vunpack.c.h.b16 %v5784
        %v6131 = vunpack.c.l.b16 %v5785
        %v6132 = vunpack.c.h.b16 %v5785
        %v6133 = vunpack.c.l.b16 %v5786
        %v6134 = vunpack.c.h.b16 %v5786
        %v6135 = vunpack.c.l.b16 %v5787
        %v6136 = vunpack.c.h.b16 %v5787
        %v6137 = vunpack.c.l.b16 %v5788
        %v6138 = vunpack.c.h.b16 %v5788
        %v6139 = vunpack.c.l.b16 %v5789
        %v6140 = vunpack.c.h.b16 %v5789
        %v6141 = vunpack.c.l.b16 %v5790
        %v6142 = vunpack.c.h.b16 %v5790
        %v6143 = vunpack.c.l.b16 %v5791
        %v6144 = vunpack.c.h.b16 %v5791
        %v6145 = vunpack.c.l.b16 %v5792
        %v6146 = vunpack.c.h.b16 %v5792
        %v6147 = vunpack.c.l.b16 %v5793
        %v6148 = vunpack.c.h.b16 %v5793
        %v6149 = vunpack.c.l.b16 %v5794
        %v6150 = vunpack.c.h.b16 %v5794
        %v6151 = vunpack.c.l.b16 %v5795
        %v6152 = vunpack.c.h.b16 %v5795
        %v6153 = vunpack.c.l.b16 %v5796
        %v6154 = vunpack.c.h.b16 %v5796
        %v6155 = vunpack.c.l.b16 %v5797
        %v6156 = vunpack.c.h.b16 %v5797
        %v6157 = vunpack.c.l.b16 %v5798
        %v6158 = vunpack.c.h.b16 %v5798
        %v6159 = vunpack.c.l.b16 %v5799
        %v6160 = vunpack.c.h.b16 %v5799
        %v6161 = vunpack.c.l.b16 %v5800
        %v6162 = vunpack.c.h.b16 %v5800
        %v6163 = vunpack.c.l.b16 %v5801
        %v6164 = vunpack.c.h.b16 %v5801
        %v6165 = vunpack.c.l.b16 %v5802
        %v6166 = vunpack.c.h.b16 %v5802
        %v6167 = vunpack.c.l.b16 %v5803
        %v6168 = vunpack.c.h.b16 %v5803
        %v6169 = vunpack.c.l.b16 %v5804
        %v6170 = vunpack.c.h.b16 %v5804
        %v6171 = vunpack.c.l.b16 %v5805
        %v6172 = vunpack.c.h.b16 %v5805
        %v6173 = vunpack.c.l.b16 %v5806
        %v6174 = vunpack.c.h.b16 %v5806
        %v6175 = vunpack.c.l.b16 %v5807
        %v6176 = vunpack.c.h.b16 %v5807
        %v6177 = vunpack.c.l.b16 %v5808
        %v6178 = vunpack.c.h.b16 %v5808
        %v6179 = vunpack.c.l.b16 %v5809
        %v6180 = vunpack.c.h.b16 %v5809
        %v6181 = vunpack.c.l.b16 %v5810
        %v6182 = vunpack.c.h.b16 %v5810
        %v6183 = vunpack.c.l.b16 %v5811
        %v6184 = vunpack.c.h.b16 %v5811
        %v6185 = vunpack.c.l.b16 %v5812
        %v6186 = vunpack.c.h.b16 %v5812
        %v6187 = vunpack.c.l.b16 %v5813
        %v6188 = vunpack.c.h.b16 %v5813
        %v6189 = vunpack.c.l.b16 %v5814
        %v6190 = vunpack.c.h.b16 %v5814
        %v6191 = vunpack.c.l.b16 %v5815
        %v6192 = vunpack.c.h.b16 %v5815
        %v6193 = vunpack.c.l.b16 %v5816
        %v6194 = vunpack.c.h.b16 %v5816
        %v6195 = vunpack.c.l.b16 %v5817
        %v6196 = vunpack.c.h.b16 %v5817
        %v6197 = vunpack.c.l.b16 %v5818
        %v6198 = vunpack.c.h.b16 %v5818
        %v6199 = vunpack.c.l.b16 %v5819
        %v6200 = vunpack.c.h.b16 %v5819
        %v6201 = vunpack.c.l.b16 %v5820
        %v6202 = vunpack.c.h.b16 %v5820
        %v6203 = vunpack.c.l.b16 %v5821
        %v6204 = vunpack.c.h.b16 %v5821
        %v6205 = vunpack.c.l.b16 %v5822
        %v6206 = vunpack.c.h.b16 %v5822
        %v6207 = vpack.c.b16 %v5959, %v5951
        %v6208 = vpack.c.b16 %v5960, %v5952
        %v6209 = vpack.c.b16 %v5961, %v5953
        %v6210 = vpack.c.b16 %v5962, %v5954
        %v6211 = vpack.c.b16 %v5963, %v5955
        %v6212 = vpack.c.b16 %v5964, %v5956
        %v6213 = vpack.c.b16 %v5965, %v5957
        %v6214 = vpack.c.b16 %v5966, %v5958
        %v6215 = vpack.c.b16 %v5975, %v5967
        %v6216 = vpack.c.b16 %v5976, %v5968
        %v6217 = vpack.c.b16 %v5977, %v5969
        %v6218 = vpack.c.b16 %v5978, %v5970
        %v6219 = vpack.c.b16 %v5979, %v5971
        %v6220 = vpack.c.b16 %v5980, %v5972
        %v6221 = vpack.c.b16 %v5981, %v5973
        %v6222 = vpack.c.b16 %v5982, %v5974
        %v6223 = vpack.c.b16 %v5991, %v5983
        %v6224 = vpack.c.b16 %v5992, %v5984
        %v6225 = vpack.c.b16 %v5993, %v5985
        %v6226 = vpack.c.b16 %v5994, %v5986
        %v6227 = vpack.c.b16 %v5995, %v5987
        %v6228 = vpack.c.b16 %v5996, %v5988
        %v6229 = vpack.c.b16 %v5997, %v5989
        %v6230 = vpack.c.b16 %v5998, %v5990
        %v6231 = vpack.c.b16 %v6007, %v5999
        %v6232 = vpack.c.b16 %v6008, %v6000
        %v6233 = vpack.c.b16 %v6009, %v6001
        %v6234 = vpack.c.b16 %v6010, %v6002
        %v6235 = vpack.c.b16 %v6011, %v6003
        %v6236 = vpack.c.b16 %v6012, %v6004
        %v6237 = vpack.c.b16 %v6013, %v6005
        %v6238 = vpack.c.b16 %v6014, %v6006
        %v6239 = vpack.c.b16 %v6023, %v6015
        %v6240 = vpack.c.b16 %v6024, %v6016
        %v6241 = vpack.c.b16 %v6025, %v6017
        %v6242 = vpack.c.b16 %v6026, %v6018
        %v6243 = vpack.c.b16 %v6027, %v6019
        %v6244 = vpack.c.b16 %v6028, %v6020
        %v6245 = vpack.c.b16 %v6029, %v6021
        %v6246 = vpack.c.b16 %v6030, %v6022
        %v6247 = vpack.c.b16 %v6039, %v6031
        %v6248 = vpack.c.b16 %v6040, %v6032
        %v6249 = vpack.c.b16 %v6041, %v6033
        %v6250 = vpack.c.b16 %v6042, %v6034
        %v6251 = vpack.c.b16 %v6043, %v6035
        %v6252 = vpack.c.b16 %v6044, %v6036
        %v6253 = vpack.c.b16 %v6045, %v6037
        %v6254 = vpack.c.b16 %v6046, %v6038
        %v6255 = vpack.c.b16 %v6055, %v6047
        %v6256 = vpack.c.b16 %v6056, %v6048
        %v6257 = vpack.c.b16 %v6057, %v6049
        %v6258 = vpack.c.b16 %v6058, %v6050
        %v6259 = vpack.c.b16 %v6059, %v6051
        %v6260 = vpack.c.b16 %v6060, %v6052
        %v6261 = vpack.c.b16 %v6061, %v6053
        %v6262 = vpack.c.b16 %v6062, %v6054
        %v6263 = vpack.c.b16 %v6071, %v6063
        %v6264 = vpack.c.b16 %v6072, %v6064
        %v6265 = vpack.c.b16 %v6073, %v6065
        %v6266 = vpack.c.b16 %v6074, %v6066
        %v6267 = vpack.c.b16 %v6075, %v6067
        %v6268 = vpack.c.b16 %v6076, %v6068
        %v6269 = vpack.c.b16 %v6077, %v6069
        %v6270 = vpack.c.b16 %v6078, %v6070
        %v6271 = vpack.c.b16 %v6087, %v6079
        %v6272 = vpack.c.b16 %v6088, %v6080
        %v6273 = vpack.c.b16 %v6089, %v6081
        %v6274 = vpack.c.b16 %v6090, %v6082
        %v6275 = vpack.c.b16 %v6091, %v6083
        %v6276 = vpack.c.b16 %v6092, %v6084
        %v6277 = vpack.c.b16 %v6093, %v6085
        %v6278 = vpack.c.b16 %v6094, %v6086
        %v6279 = vpack.c.b16 %v6103, %v6095
        %v6280 = vpack.c.b16 %v6104, %v6096
        %v6281 = vpack.c.b16 %v6105, %v6097
        %v6282 = vpack.c.b16 %v6106, %v6098
        %v6283 = vpack.c.b16 %v6107, %v6099
        %v6284 = vpack.c.b16 %v6108, %v6100
        %v6285 = vpack.c.b16 %v6109, %v6101
        %v6286 = vpack.c.b16 %v6110, %v6102
        %v6287 = vpack.c.b16 %v6119, %v6111
        %v6288 = vpack.c.b16 %v6120, %v6112
        %v6289 = vpack.c.b16 %v6121, %v6113
        %v6290 = vpack.c.b16 %v6122, %v6114
        %v6291 = vpack.c.b16 %v6123, %v6115
        %v6292 = vpack.c.b16 %v6124, %v6116
        %v6293 = vpack.c.b16 %v6125, %v6117
        %v6294 = vpack.c.b16 %v6126, %v6118
        %v6295 = vpack.c.b16 %v6135, %v6127
        %v6296 = vpack.c.b16 %v6136, %v6128
        %v6297 = vpack.c.b16 %v6137, %v6129
        %v6298 = vpack.c.b16 %v6138, %v6130
        %v6299 = vpack.c.b16 %v6139, %v6131
        %v6300 = vpack.c.b16 %v6140, %v6132
        %v6301 = vpack.c.b16 %v6141, %v6133
        %v6302 = vpack.c.b16 %v6142, %v6134
        %v6303 = vpack.c.b16 %v6151, %v6143
        %v6304 = vpack.c.b16 %v6152, %v6144
        %v6305 = vpack.c.b16 %v6153, %v6145
        %v6306 = vpack.c.b16 %v6154, %v6146
        %v6307 = vpack.c.b16 %v6155, %v6147
        %v6308 = vpack.c.b16 %v6156, %v6148
        %v6309 = vpack.c.b16 %v6157, %v6149
        %v6310 = vpack.c.b16 %v6158, %v6150
        %v6311 = vpack.c.b16 %v6167, %v6159
        %v6312 = vpack.c.b16 %v6168, %v6160
        %v6313 = vpack.c.b16 %v6169, %v6161
        %v6314 = vpack.c.b16 %v6170, %v6162
        %v6315 = vpack.c.b16 %v6171, %v6163
        %v6316 = vpack.c.b16 %v6172, %v6164
        %v6317 = vpack.c.b16 %v6173, %v6165
        %v6318 = vpack.c.b16 %v6174, %v6166
        %v6319 = vpack.c.b16 %v6183, %v6175
        %v6320 = vpack.c.b16 %v6184, %v6176
        %v6321 = vpack.c.b16 %v6185, %v6177
        %v6322 = vpack.c.b16 %v6186, %v6178
        %v6323 = vpack.c.b16 %v6187, %v6179
        %v6324 = vpack.c.b16 %v6188, %v6180
        %v6325 = vpack.c.b16 %v6189, %v6181
        %v6326 = vpack.c.b16 %v6190, %v6182
        %v6327 = vpack.c.b16 %v6199, %v6191
        %v6328 = vpack.c.b16 %v6200, %v6192
        %v6329 = vpack.c.b16 %v6201, %v6193
        %v6330 = vpack.c.b16 %v6202, %v6194
        %v6331 = vpack.c.b16 %v6203, %v6195
        %v6332 = vpack.c.b16 %v6204, %v6196
        %v6333 = vpack.c.b16 %v6205, %v6197
        %v6334 = vpack.c.b16 %v6206, %v6198
        %6463 = vmatpush.bf16.msra.mxu0 %v6263
        %6464 = vmatpush.bf16.msra.mxu0 %v6255
        %6465 = vmatpush.bf16.msra.mxu0 %v6247
        %6466 = vmatpush.bf16.msra.mxu0 %v6239
        %6467 = vmatpush.bf16.msra.mxu0 %v6231
        %6468 = vmatpush.bf16.msra.mxu0 %v6223
        %6469 = vmatpush.bf16.msra.mxu0 %v6215
        %6470 = vmatpush.bf16.msra.mxu0 %v6207
        %6471 = vmatmul.bf16.gmra.mxu0 %v5693
        %v6472 = vpop.f32.mrf.mxu0
        %v6473 = vadd.f32 0.0, %v6472
        %v6474 = vpop.f32.mrf.mxu0
        %6475 = vdwg.mxu0
        %6476 = vmatpush.bf16.msra.mxu0 %v6327
        %6477 = vmatpush.bf16.msra.mxu0 %v6319
        %6478 = vmatpush.bf16.msra.mxu0 %v6311
        %6479 = vmatpush.bf16.msra.mxu0 %v6303
        %6480 = vmatpush.bf16.msra.mxu0 %v6295
        %6481 = vmatpush.bf16.msra.mxu0 %v6287
        %6482 = vmatpush.bf16.msra.mxu0 %v6279
        %6483 = vmatpush.bf16.msra.mxu0 %v6271
        %6484 = vmatmul.bf16.gmra.mxu0 %v5694
        %v6485 = vpop.f32.mrf.mxu0
        %v6486 = vadd.f32 %v6473, %v6485
        %v6487 = vpop.f32.mrf.mxu0
        %6488 = vdwg.mxu0
        %6489 = vmatpush.bf16.msra.mxu0 %v6264
        %6490 = vmatpush.bf16.msra.mxu0 %v6256
        %6491 = vmatpush.bf16.msra.mxu0 %v6248
        %6492 = vmatpush.bf16.msra.mxu0 %v6240
        %6493 = vmatpush.bf16.msra.mxu0 %v6232
        %6494 = vmatpush.bf16.msra.mxu0 %v6224
        %6495 = vmatpush.bf16.msra.mxu0 %v6216
        %6496 = vmatpush.bf16.msra.mxu0 %v6208
        %6497 = vmatmul.bf16.gmra.mxu0 %v5693
        %v6498 = vpop.f32.mrf.mxu0
        %v6499 = vadd.f32 0.0, %v6498
        %v6500 = vpop.f32.mrf.mxu0
        %6501 = vdwg.mxu0
        %6502 = vmatpush.bf16.msra.mxu0 %v6328
        %6503 = vmatpush.bf16.msra.mxu0 %v6320
        %6504 = vmatpush.bf16.msra.mxu0 %v6312
        %6505 = vmatpush.bf16.msra.mxu0 %v6304
        %6506 = vmatpush.bf16.msra.mxu0 %v6296
        %6507 = vmatpush.bf16.msra.mxu0 %v6288
        %6508 = vmatpush.bf16.msra.mxu0 %v6280
        %6509 = vmatpush.bf16.msra.mxu0 %v6272
        %6510 = vmatmul.bf16.gmra.mxu0 %v5694
        %v6511 = vpop.f32.mrf.mxu0
        %v6512 = vadd.f32 %v6499, %v6511
        %v6513 = vpop.f32.mrf.mxu0
        %6514 = vdwg.mxu0
        %6515 = vmatpush.bf16.msra.mxu0 %v6265
        %6516 = vmatpush.bf16.msra.mxu0 %v6257
        %6517 = vmatpush.bf16.msra.mxu0 %v6249
        %6518 = vmatpush.bf16.msra.mxu0 %v6241
        %6519 = vmatpush.bf16.msra.mxu0 %v6233
        %6520 = vmatpush.bf16.msra.mxu0 %v6225
        %6521 = vmatpush.bf16.msra.mxu0 %v6217
        %6522 = vmatpush.bf16.msra.mxu0 %v6209
        %6523 = vmatmul.bf16.gmra.mxu0 %v5693
        %v6524 = vpop.f32.mrf.mxu0
        %v6525 = vadd.f32 0.0, %v6524
        %v6526 = vpop.f32.mrf.mxu0
        %6527 = vdwg.mxu0
        %6528 = vmatpush.bf16.msra.mxu0 %v6329
        %6529 = vmatpush.bf16.msra.mxu0 %v6321
        %6530 = vmatpush.bf16.msra.mxu0 %v6313
        %6531 = vmatpush.bf16.msra.mxu0 %v6305
        %6532 = vmatpush.bf16.msra.mxu0 %v6297
        %6533 = vmatpush.bf16.msra.mxu0 %v6289
        %6534 = vmatpush.bf16.msra.mxu0 %v6281
        %6535 = vmatpush.bf16.msra.mxu0 %v6273
        %6536 = vmatmul.bf16.gmra.mxu0 %v5694
        %v6537 = vpop.f32.mrf.mxu0
        %v6538 = vadd.f32 %v6525, %v6537
        %v6539 = vpop.f32.mrf.mxu0
        %6540 = vdwg.mxu0
        %6541 = vmatpush.bf16.msra.mxu0 %v6266
        %6542 = vmatpush.bf16.msra.mxu0 %v6258
        %6543 = vmatpush.bf16.msra.mxu0 %v6250
        %6544 = vmatpush.bf16.msra.mxu0 %v6242
        %6545 = vmatpush.bf16.msra.mxu0 %v6234
        %6546 = vmatpush.bf16.msra.mxu0 %v6226
        %6547 = vmatpush.bf16.msra.mxu0 %v6218
        %6548 = vmatpush.bf16.msra.mxu0 %v6210
        %6549 = vmatmul.bf16.gmra.mxu0 %v5693
        %v6550 = vpop.f32.mrf.mxu0
        %v6551 = vadd.f32 0.0, %v6550
        %v6552 = vpop.f32.mrf.mxu0
        %6553 = vdwg.mxu0
        %6554 = vmatpush.bf16.msra.mxu0 %v6330
        %6555 = vmatpush.bf16.msra.mxu0 %v6322
        %6556 = vmatpush.bf16.msra.mxu0 %v6314
        %6557 = vmatpush.bf16.msra.mxu0 %v6306
        %6558 = vmatpush.bf16.msra.mxu0 %v6298
        %6559 = vmatpush.bf16.msra.mxu0 %v6290
        %6560 = vmatpush.bf16.msra.mxu0 %v6282
        %6561 = vmatpush.bf16.msra.mxu0 %v6274
        %6562 = vmatmul.bf16.gmra.mxu0 %v5694
        %v6563 = vpop.f32.mrf.mxu0
        %v6564 = vadd.f32 %v6551, %v6563
        %v6565 = vpop.f32.mrf.mxu0
        %6566 = vdwg.mxu0
        %6567 = vmatpush.bf16.msra.mxu0 %v6267
        %6568 = vmatpush.bf16.msra.mxu0 %v6259
        %6569 = vmatpush.bf16.msra.mxu0 %v6251
        %6570 = vmatpush.bf16.msra.mxu0 %v6243
        %6571 = vmatpush.bf16.msra.mxu0 %v6235
        %6572 = vmatpush.bf16.msra.mxu0 %v6227
        %6573 = vmatpush.bf16.msra.mxu0 %v6219
        %6574 = vmatpush.bf16.msra.mxu0 %v6211
        %6575 = vmatmul.bf16.gmra.mxu0 %v5693
        %v6576 = vpop.f32.mrf.mxu0
        %v6577 = vadd.f32 0.0, %v6576
        %v6578 = vpop.f32.mrf.mxu0
        %6579 = vdwg.mxu0
        %6580 = vmatpush.bf16.msra.mxu0 %v6331
        %6581 = vmatpush.bf16.msra.mxu0 %v6323
        %6582 = vmatpush.bf16.msra.mxu0 %v6315
        %6583 = vmatpush.bf16.msra.mxu0 %v6307
        %6584 = vmatpush.bf16.msra.mxu0 %v6299
        %6585 = vmatpush.bf16.msra.mxu0 %v6291
        %6586 = vmatpush.bf16.msra.mxu0 %v6283
        %6587 = vmatpush.bf16.msra.mxu0 %v6275
        %6588 = vmatmul.bf16.gmra.mxu0 %v5694
        %v6589 = vpop.f32.mrf.mxu0
        %v6590 = vadd.f32 %v6577, %v6589
        %v6591 = vpop.f32.mrf.mxu0
        %6592 = vdwg.mxu0
        %6593 = vmatpush.bf16.msra.mxu0 %v6268
        %6594 = vmatpush.bf16.msra.mxu0 %v6260
        %6595 = vmatpush.bf16.msra.mxu0 %v6252
        %6596 = vmatpush.bf16.msra.mxu0 %v6244
        %6597 = vmatpush.bf16.msra.mxu0 %v6236
        %6598 = vmatpush.bf16.msra.mxu0 %v6228
        %6599 = vmatpush.bf16.msra.mxu0 %v6220
        %6600 = vmatpush.bf16.msra.mxu0 %v6212
        %6601 = vmatmul.bf16.gmra.mxu0 %v5693
        %v6602 = vpop.f32.mrf.mxu0
        %v6603 = vadd.f32 0.0, %v6602
        %v6604 = vpop.f32.mrf.mxu0
        %6605 = vdwg.mxu0
        %6606 = vmatpush.bf16.msra.mxu0 %v6332
        %6607 = vmatpush.bf16.msra.mxu0 %v6324
        %6608 = vmatpush.bf16.msra.mxu0 %v6316
        %6609 = vmatpush.bf16.msra.mxu0 %v6308
        %6610 = vmatpush.bf16.msra.mxu0 %v6300
        %6611 = vmatpush.bf16.msra.mxu0 %v6292
        %6612 = vmatpush.bf16.msra.mxu0 %v6284
        %6613 = vmatpush.bf16.msra.mxu0 %v6276
        %6614 = vmatmul.bf16.gmra.mxu0 %v5694
        %v6615 = vpop.f32.mrf.mxu0
        %v6616 = vadd.f32 %v6603, %v6615
        %v6617 = vpop.f32.mrf.mxu0
        %6618 = vdwg.mxu0
        %6619 = vmatpush.bf16.msra.mxu0 %v6269
        %6620 = vmatpush.bf16.msra.mxu0 %v6261
        %6621 = vmatpush.bf16.msra.mxu0 %v6253
        %6622 = vmatpush.bf16.msra.mxu0 %v6245
        %6623 = vmatpush.bf16.msra.mxu0 %v6237
        %6624 = vmatpush.bf16.msra.mxu0 %v6229
        %6625 = vmatpush.bf16.msra.mxu0 %v6221
        %6626 = vmatpush.bf16.msra.mxu0 %v6213
        %6627 = vmatmul.bf16.gmra.mxu0 %v5693
        %v6628 = vpop.f32.mrf.mxu0
        %v6629 = vadd.f32 0.0, %v6628
        %v6630 = vpop.f32.mrf.mxu0
        %6631 = vdwg.mxu0
        %6632 = vmatpush.bf16.msra.mxu0 %v6333
        %6633 = vmatpush.bf16.msra.mxu0 %v6325
        %6634 = vmatpush.bf16.msra.mxu0 %v6317
        %6635 = vmatpush.bf16.msra.mxu0 %v6309
        %6636 = vmatpush.bf16.msra.mxu0 %v6301
        %6637 = vmatpush.bf16.msra.mxu0 %v6293
        %6638 = vmatpush.bf16.msra.mxu0 %v6285
        %6639 = vmatpush.bf16.msra.mxu0 %v6277
        %6640 = vmatmul.bf16.gmra.mxu0 %v5694
        %v6641 = vpop.f32.mrf.mxu0
        %v6642 = vadd.f32 %v6629, %v6641
        %v6643 = vpop.f32.mrf.mxu0
        %6644 = vdwg.mxu0
        %6645 = vmatpush.bf16.msra.mxu0 %v6270
        %6646 = vmatpush.bf16.msra.mxu0 %v6262
        %6647 = vmatpush.bf16.msra.mxu0 %v6254
        %6648 = vmatpush.bf16.msra.mxu0 %v6246
        %6649 = vmatpush.bf16.msra.mxu0 %v6238
        %6650 = vmatpush.bf16.msra.mxu0 %v6230
        %6651 = vmatpush.bf16.msra.mxu0 %v6222
        %6652 = vmatpush.bf16.msra.mxu0 %v6214
        %6653 = vmatmul.bf16.gmra.mxu0 %v5693
        %v6654 = vpop.f32.mrf.mxu0
        %v6655 = vadd.f32 0.0, %v6654
        %v6656 = vpop.f32.mrf.mxu0
        %6657 = vdwg.mxu0
        %6658 = vmatpush.bf16.msra.mxu0 %v6334
        %6659 = vmatpush.bf16.msra.mxu0 %v6326
        %6660 = vmatpush.bf16.msra.mxu0 %v6318
        %6661 = vmatpush.bf16.msra.mxu0 %v6310
        %6662 = vmatpush.bf16.msra.mxu0 %v6302
        %6663 = vmatpush.bf16.msra.mxu0 %v6294
        %6664 = vmatpush.bf16.msra.mxu0 %v6286
        %6665 = vmatpush.bf16.msra.mxu0 %v6278
        %6666 = vmatmul.bf16.gmra.mxu0 %v5694
        %v6667 = vpop.f32.mrf.mxu0
        %v6668 = vadd.f32 %v6655, %v6667
        %v6669 = vpop.f32.mrf.mxu0
        %6670 = vdwg.mxu0
        %v6671 = vadd.f32 %v5599, %v6486
        %v6672 = vadd.f32 %v5612, %v6512
        %v6673 = vadd.f32 %v5625, %v6538
        %v6674 = vadd.f32 %v5638, %v6564
        %v6675 = vadd.f32 %v5651, %v6590
        %v6676 = vadd.f32 %v5664, %v6616
        %v6677 = vadd.f32 %v5677, %v6642
        %v6678 = vadd.f32 %v5690, %v6668
        %s6679 = scalar_lea.vmem [#allocation20], 6
        %v6680 = vld [vmem:[%s6679] ss:$8 sm:$0xf]
        %v6681 = vld [vmem:[%s6679] ss:$8 sm:$0xf0]
        %v6682 = vor.u32 %v6680, %v6681
        %v6684 = vperm.slane %v6682, 0
        %v6685 = vperm.slane %v6682, 1
        %v6686 = vperm.slane %v6682, 2
        %v6687 = vperm.slane %v6682, 3
        %v6688 = vperm.slane %v6682, 4
        %v6689 = vperm.slane %v6682, 5
        %v6690 = vperm.slane %v6682, 6
        %v6691 = vperm.slane %v6682, 7
        %v6700 = vadd.f32 %v6671, %v6684
        %v6701 = vadd.f32 %v6672, %v6685
        %v6702 = vadd.f32 %v6673, %v6686
        %v6703 = vadd.f32 %v6674, %v6687
        %v6704 = vadd.f32 %v6675, %v6688
        %v6705 = vadd.f32 %v6676, %v6689
        %v6706 = vadd.f32 %v6677, %v6690
        %v6707 = vadd.f32 %v6678, %v6691
        %s6708 = scalar_lea.vmem [#allocation20], 7
        %v6709 = vld [vmem:[%s6708] ss:$8 sm:$0xf]
        %v6710 = vld [vmem:[%s6708] ss:$8 sm:$0xf0]
        %v6711 = vor.u32 %v6709, %v6710
        %s6712 = scalar_lea.vmem [#allocation20], 64
        %v6713 = vld [vmem:[%s6712] ss:$8 sm:$0xf]
        %v6714 = vld [vmem:[%s6712] ss:$8 sm:$0xf0]
        %v6715 = vor.u32 %v6713, %v6714
        %v6716 = vadd.f32 %v6700, %v6701
        %v6717 = vadd.f32 %v6716, %v6702
        %v6718 = vadd.f32 %v6717, %v6703
        %v6719 = vadd.f32 %v6718, %v6704
        %v6720 = vadd.f32 %v6719, %v6705
        %v6721 = vadd.f32 %v6720, %v6706
        %v6722 = vadd.f32 %v6721, %v6707
        %6723 = vadd.xlane.f32.xlu0 %v6722
        %v6724 = vpop.xlane.xlu0 %6723
        %v6725 = vrcp.pop 1024.0
        %v6726 = vmul.f32 1024.0, %v6725
        %v6727 = vsub.f32 1.0, %v6726
        %v6728 = vmul.f32 %v6725, %v6727
        %v6729 = vadd.f32 %v6725, %v6728
        %vm6730 = vweird.f32 %v6725
        %v6731 = vsel %vm6730, %v6725, %v6729
        %v6732 = vmul.f32 %v6724, %v6731
        %v6733 = vmul.f32 %v6700, %v6700
        %v6734 = vmul.f32 %v6701, %v6701
        %v6735 = vmul.f32 %v6702, %v6702
        %v6736 = vmul.f32 %v6703, %v6703
        %v6737 = vmul.f32 %v6704, %v6704
        %v6738 = vmul.f32 %v6705, %v6705
        %v6739 = vmul.f32 %v6706, %v6706
        %v6740 = vmul.f32 %v6707, %v6707
        %v6741 = vadd.f32 %v6733, %v6734
        %v6742 = vadd.f32 %v6741, %v6735
        %v6743 = vadd.f32 %v6742, %v6736
        %v6744 = vadd.f32 %v6743, %v6737
        %v6745 = vadd.f32 %v6744, %v6738
        %v6746 = vadd.f32 %v6745, %v6739
        %v6747 = vadd.f32 %v6746, %v6740
        %6748 = vadd.xlane.f32.xlu0 %v6747
        %v6749 = vpop.xlane.xlu0 %6748
        %v6750 = vmul.f32 %v6749, %v6731
        %v6751 = vmul.f32 %v6732, %v6732
        %v6752 = vsub.f32 %v6750, %v6751
        %v6753 = vsub.f32 %v6700, %v6732
        %v6754 = vsub.f32 %v6701, %v6732
        %v6755 = vsub.f32 %v6702, %v6732
        %v6756 = vsub.f32 %v6703, %v6732
        %v6757 = vsub.f32 %v6704, %v6732
        %v6758 = vsub.f32 %v6705, %v6732
        %v6759 = vsub.f32 %v6706, %v6732
        %v6760 = vsub.f32 %v6707, %v6732
        %v6761 = vadd.f32 %v6752, 1e-05
        %v6762 = vrsqrt.pop %v6761
        %v6763 = vmul.f32 %v6762, %v6761
        %v6764 = vmul.f32 %v6763, %v6762
        %v6765 = vmul.f32 0.5, %v6764
        %v6766 = vsub.f32 1.5, %v6765
        %v6767 = vmul.f32 %v6762, %v6766
        %vm6768 = vweird.f32 %v6761
        %vm6769 = vweird.f32 %v6762
        %vm6770 = vmor %vm6768, %vm6769
        %v6771 = vsel %vm6770, %v6762, %v6767
        %v6772 = vmul.f32 %v6753, %v6771
        %v6773 = vmul.f32 %v6754, %v6771
        %v6774 = vmul.f32 %v6755, %v6771
        %v6775 = vmul.f32 %v6756, %v6771
        %v6776 = vmul.f32 %v6757, %v6771
        %v6777 = vmul.f32 %v6758, %v6771
        %v6778 = vmul.f32 %v6759, %v6771
        %v6779 = vmul.f32 %v6760, %v6771
        %v6781 = vperm.slane %v6711, 0
        %v6782 = vperm.slane %v6711, 1
        %v6783 = vperm.slane %v6711, 2
        %v6784 = vperm.slane %v6711, 3
        %v6785 = vperm.slane %v6711, 4
        %v6786 = vperm.slane %v6711, 5
        %v6787 = vperm.slane %v6711, 6
        %v6788 = vperm.slane %v6711, 7
        %v6797 = vmul.f32 %v6772, %v6781
        %v6798 = vmul.f32 %v6773, %v6782
        %v6799 = vmul.f32 %v6774, %v6783
        %v6800 = vmul.f32 %v6775, %v6784
        %v6801 = vmul.f32 %v6776, %v6785
        %v6802 = vmul.f32 %v6777, %v6786
        %v6803 = vmul.f32 %v6778, %v6787
        %v6804 = vmul.f32 %v6779, %v6788
        %v6806 = vperm.slane %v6715, 0
        %v6807 = vperm.slane %v6715, 1
        %v6808 = vperm.slane %v6715, 2
        %v6809 = vperm.slane %v6715, 3
        %v6810 = vperm.slane %v6715, 4
        %v6811 = vperm.slane %v6715, 5
        %v6812 = vperm.slane %v6715, 6
        %v6813 = vperm.slane %v6715, 7
        %v6822 = vadd.f32 %v6797, %v6806
        %v6823 = vadd.f32 %v6798, %v6807
        %v6824 = vadd.f32 %v6799, %v6808
        %v6825 = vadd.f32 %v6800, %v6809
        %v6826 = vadd.f32 %v6801, %v6810
        %v6827 = vadd.f32 %v6802, %v6811
        %v6828 = vadd.f32 %v6803, %v6812
        %v6829 = vadd.f32 %v6804, %v6813
        %v6830 = vxor.u32 %v6822, 2147483648
        %v6831 = vxor.u32 %v6823, 2147483648
        %v6832 = vxor.u32 %v6824, 2147483648
        %v6833 = vxor.u32 %v6825, 2147483648
        %v6834 = vxor.u32 %v6826, 2147483648
        %v6835 = vxor.u32 %v6827, 2147483648
        %v6836 = vxor.u32 %v6828, 2147483648
        %v6837 = vxor.u32 %v6829, 2147483648
        %v6838 = vmul.f32 %v6830, 1.442695
        %v6839 = vpow.pop %v6838
        %v6840 = vmul.f32 %v6831, 1.442695
        %v6841 = vpow.pop %v6840
        %v6842 = vmul.f32 %v6832, 1.442695
        %v6843 = vpow.pop %v6842
        %v6844 = vmul.f32 %v6833, 1.442695
        %v6845 = vpow.pop %v6844
        %v6846 = vmul.f32 %v6834, 1.442695
        %v6847 = vpow.pop %v6846
        %v6848 = vmul.f32 %v6835, 1.442695
        %v6849 = vpow.pop %v6848
        %v6850 = vmul.f32 %v6836, 1.442695
        %v6851 = vpow.pop %v6850
        %v6852 = vmul.f32 %v6837, 1.442695
        %v6853 = vpow.pop %v6852
        %v6854 = vadd.f32 %v6839, 1.0
        %v6855 = vadd.f32 %v6841, 1.0
        %v6856 = vadd.f32 %v6843, 1.0
        %v6857 = vadd.f32 %v6845, 1.0
        %v6858 = vadd.f32 %v6847, 1.0
        %v6859 = vadd.f32 %v6849, 1.0
        %v6860 = vadd.f32 %v6851, 1.0
        %v6861 = vadd.f32 %v6853, 1.0
        %v6862 = vrcp.pop %v6854
        %v6863 = vmul.f32 %v6854, %v6862
        %v6864 = vsub.f32 1.0, %v6863
        %v6865 = vmul.f32 %v6862, %v6864
        %v6866 = vadd.f32 %v6862, %v6865
        %vm6867 = vweird.f32 %v6854
        %vm6868 = vweird.f32 %v6862
        %vm6869 = vmor %vm6867, %vm6868
        %v6870 = vsel %vm6869, %v6862, %v6866
        %v6871 = vand.u32 2147483647, %v6854
        %vm6872 = vcmp.eq.f32.partialorder %v6871, 8.507059e+37
        %v6873 = vand.u32 %v6854, 2147483648
        %v6874 = vor.u32 1.1754944e-38, %v6873
        %v6875 = vsel %vm6872, %v6874, %v6870
        %v6876 = vmul.f32 1.0, %v6875
        %v6877 = vrcp.pop %v6855
        %v6878 = vmul.f32 %v6855, %v6877
        %v6879 = vsub.f32 1.0, %v6878
        %v6880 = vmul.f32 %v6877, %v6879
        %v6881 = vadd.f32 %v6877, %v6880
        %vm6882 = vweird.f32 %v6855
        %vm6883 = vweird.f32 %v6877
        %vm6884 = vmor %vm6882, %vm6883
        %v6885 = vsel %vm6884, %v6877, %v6881
        %v6886 = vand.u32 2147483647, %v6855
        %vm6887 = vcmp.eq.f32.partialorder %v6886, 8.507059e+37
        %v6888 = vand.u32 %v6855, 2147483648
        %v6889 = vor.u32 1.1754944e-38, %v6888
        %v6890 = vsel %vm6887, %v6889, %v6885
        %v6891 = vmul.f32 1.0, %v6890
        %v6892 = vrcp.pop %v6856
        %v6893 = vmul.f32 %v6856, %v6892
        %v6894 = vsub.f32 1.0, %v6893
        %v6895 = vmul.f32 %v6892, %v6894
        %v6896 = vadd.f32 %v6892, %v6895
        %vm6897 = vweird.f32 %v6856
        %vm6898 = vweird.f32 %v6892
        %vm6899 = vmor %vm6897, %vm6898
        %v6900 = vsel %vm6899, %v6892, %v6896
        %v6901 = vand.u32 2147483647, %v6856
        %vm6902 = vcmp.eq.f32.partialorder %v6901, 8.507059e+37
        %v6903 = vand.u32 %v6856, 2147483648
        %v6904 = vor.u32 1.1754944e-38, %v6903
        %v6905 = vsel %vm6902, %v6904, %v6900
        %v6906 = vmul.f32 1.0, %v6905
        %v6907 = vrcp.pop %v6857
        %v6908 = vmul.f32 %v6857, %v6907
        %v6909 = vsub.f32 1.0, %v6908
        %v6910 = vmul.f32 %v6907, %v6909
        %v6911 = vadd.f32 %v6907, %v6910
        %vm6912 = vweird.f32 %v6857
        %vm6913 = vweird.f32 %v6907
        %vm6914 = vmor %vm6912, %vm6913
        %v6915 = vsel %vm6914, %v6907, %v6911
        %v6916 = vand.u32 2147483647, %v6857
        %vm6917 = vcmp.eq.f32.partialorder %v6916, 8.507059e+37
        %v6918 = vand.u32 %v6857, 2147483648
        %v6919 = vor.u32 1.1754944e-38, %v6918
        %v6920 = vsel %vm6917, %v6919, %v6915
        %v6921 = vmul.f32 1.0, %v6920
        %v6922 = vrcp.pop %v6858
        %v6923 = vmul.f32 %v6858, %v6922
        %v6924 = vsub.f32 1.0, %v6923
        %v6925 = vmul.f32 %v6922, %v6924
        %v6926 = vadd.f32 %v6922, %v6925
        %vm6927 = vweird.f32 %v6858
        %vm6928 = vweird.f32 %v6922
        %vm6929 = vmor %vm6927, %vm6928
        %v6930 = vsel %vm6929, %v6922, %v6926
        %v6931 = vand.u32 2147483647, %v6858
        %vm6932 = vcmp.eq.f32.partialorder %v6931, 8.507059e+37
        %v6933 = vand.u32 %v6858, 2147483648
        %v6934 = vor.u32 1.1754944e-38, %v6933
        %v6935 = vsel %vm6932, %v6934, %v6930
        %v6936 = vmul.f32 1.0, %v6935
        %v6937 = vrcp.pop %v6859
        %v6938 = vmul.f32 %v6859, %v6937
        %v6939 = vsub.f32 1.0, %v6938
        %v6940 = vmul.f32 %v6937, %v6939
        %v6941 = vadd.f32 %v6937, %v6940
        %vm6942 = vweird.f32 %v6859
        %vm6943 = vweird.f32 %v6937
        %vm6944 = vmor %vm6942, %vm6943
        %v6945 = vsel %vm6944, %v6937, %v6941
        %v6946 = vand.u32 2147483647, %v6859
        %vm6947 = vcmp.eq.f32.partialorder %v6946, 8.507059e+37
        %v6948 = vand.u32 %v6859, 2147483648
        %v6949 = vor.u32 1.1754944e-38, %v6948
        %v6950 = vsel %vm6947, %v6949, %v6945
        %v6951 = vmul.f32 1.0, %v6950
        %v6952 = vrcp.pop %v6860
        %v6953 = vmul.f32 %v6860, %v6952
        %v6954 = vsub.f32 1.0, %v6953
        %v6955 = vmul.f32 %v6952, %v6954
        %v6956 = vadd.f32 %v6952, %v6955
        %vm6957 = vweird.f32 %v6860
        %vm6958 = vweird.f32 %v6952
        %vm6959 = vmor %vm6957, %vm6958
        %v6960 = vsel %vm6959, %v6952, %v6956
        %v6961 = vand.u32 2147483647, %v6860
        %vm6962 = vcmp.eq.f32.partialorder %v6961, 8.507059e+37
        %v6963 = vand.u32 %v6860, 2147483648
        %v6964 = vor.u32 1.1754944e-38, %v6963
        %v6965 = vsel %vm6962, %v6964, %v6960
        %v6966 = vmul.f32 1.0, %v6965
        %v6967 = vrcp.pop %v6861
        %v6968 = vmul.f32 %v6861, %v6967
        %v6969 = vsub.f32 1.0, %v6968
        %v6970 = vmul.f32 %v6967, %v6969
        %v6971 = vadd.f32 %v6967, %v6970
        %vm6972 = vweird.f32 %v6861
        %vm6973 = vweird.f32 %v6967
        %vm6974 = vmor %vm6972, %vm6973
        %v6975 = vsel %vm6974, %v6967, %v6971
        %v6976 = vand.u32 2147483647, %v6861
        %vm6977 = vcmp.eq.f32.partialorder %v6976, 8.507059e+37
        %v6978 = vand.u32 %v6861, 2147483648
        %v6979 = vor.u32 1.1754944e-38, %v6978
        %v6980 = vsel %vm6977, %v6979, %v6975
        %v6981 = vmul.f32 1.0, %v6980
        %v6982 = vmul.f32 %v6822, %v6876
        %v6983 = vmul.f32 %v6823, %v6891
        %v6984 = vmul.f32 %v6824, %v6906
        %v6985 = vmul.f32 %v6825, %v6921
        %v6986 = vmul.f32 %v6826, %v6936
        %v6987 = vmul.f32 %v6827, %v6951
        %v6988 = vmul.f32 %v6828, %v6966
        %v6989 = vmul.f32 %v6829, %v6981
        %v6990 = vpack.c.bf16 %v6982, %v6982
        %v6991 = vpack.c.bf16 %v6983, %v6983
        %v6992 = vpack.c.bf16 %v6984, %v6984
        %v6993 = vpack.c.bf16 %v6985, %v6985
        %v6994 = vpack.c.bf16 %v6986, %v6986
        %v6995 = vpack.c.bf16 %v6987, %v6987
        %v6996 = vpack.c.bf16 %v6988, %v6988
        %v6997 = vpack.c.bf16 %v6989, %v6989
        %v6998 = vld [vmem:[#allocation19] sm:$0xff]
        %v6999 = vld [vmem:[#allocation19 + $0x8] sm:$0xff]
        %v7000 = vld [vmem:[#allocation19 + $0x10] sm:$0xff]
        %v7001 = vld [vmem:[#allocation19 + $0x18] sm:$0xff]
        %v7002 = vld [vmem:[#allocation19 + $0x20] sm:$0xff]
        %v7003 = vld [vmem:[#allocation19 + $0x28] sm:$0xff]
        %v7004 = vld [vmem:[#allocation19 + $0x30] sm:$0xff]
        %v7005 = vld [vmem:[#allocation19 + $0x38] sm:$0xff]
        %v7006 = vld [vmem:[#allocation19 + $0x40] sm:$0xff]
        %v7007 = vld [vmem:[#allocation19 + $0x48] sm:$0xff]
        %v7008 = vld [vmem:[#allocation19 + $0x50] sm:$0xff]
        %v7009 = vld [vmem:[#allocation19 + $0x58] sm:$0xff]
        %v7010 = vld [vmem:[#allocation19 + $0x60] sm:$0xff]
        %v7011 = vld [vmem:[#allocation19 + $0x68] sm:$0xff]
        %v7012 = vld [vmem:[#allocation19 + $0x70] sm:$0xff]
        %v7013 = vld [vmem:[#allocation19 + $0x78] sm:$0xff]
        %v7014 = vld [vmem:[#allocation19 + $0x80] sm:$0xff]
        %v7015 = vld [vmem:[#allocation19 + $0x88] sm:$0xff]
        %v7016 = vld [vmem:[#allocation19 + $0x90] sm:$0xff]
        %v7017 = vld [vmem:[#allocation19 + $0x98] sm:$0xff]
        %v7018 = vld [vmem:[#allocation19 + $0xa0] sm:$0xff]
        %v7019 = vld [vmem:[#allocation19 + $0xa8] sm:$0xff]
        %v7020 = vld [vmem:[#allocation19 + $0xb0] sm:$0xff]
        %v7021 = vld [vmem:[#allocation19 + $0xb8] sm:$0xff]
        %v7022 = vld [vmem:[#allocation19 + $0xc0] sm:$0xff]
        %v7023 = vld [vmem:[#allocation19 + $0xc8] sm:$0xff]
        %v7024 = vld [vmem:[#allocation19 + $0xd0] sm:$0xff]
        %v7025 = vld [vmem:[#allocation19 + $0xd8] sm:$0xff]
        %v7026 = vld [vmem:[#allocation19 + $0xe0] sm:$0xff]
        %v7027 = vld [vmem:[#allocation19 + $0xe8] sm:$0xff]
        %v7028 = vld [vmem:[#allocation19 + $0xf0] sm:$0xff]
        %v7029 = vld [vmem:[#allocation19 + $0xf8] sm:$0xff]
        %v7030 = vld [vmem:[#allocation19 + $0x100] sm:$0xff]
        %v7031 = vld [vmem:[#allocation19 + $0x108] sm:$0xff]
        %v7032 = vld [vmem:[#allocation19 + $0x110] sm:$0xff]
        %v7033 = vld [vmem:[#allocation19 + $0x118] sm:$0xff]
        %v7034 = vld [vmem:[#allocation19 + $0x120] sm:$0xff]
        %v7035 = vld [vmem:[#allocation19 + $0x128] sm:$0xff]
        %v7036 = vld [vmem:[#allocation19 + $0x130] sm:$0xff]
        %v7037 = vld [vmem:[#allocation19 + $0x138] sm:$0xff]
        %v7038 = vld [vmem:[#allocation19 + $0x140] sm:$0xff]
        %v7039 = vld [vmem:[#allocation19 + $0x148] sm:$0xff]
        %v7040 = vld [vmem:[#allocation19 + $0x150] sm:$0xff]
        %v7041 = vld [vmem:[#allocation19 + $0x158] sm:$0xff]
        %v7042 = vld [vmem:[#allocation19 + $0x160] sm:$0xff]
        %v7043 = vld [vmem:[#allocation19 + $0x168] sm:$0xff]
        %v7044 = vld [vmem:[#allocation19 + $0x170] sm:$0xff]
        %v7045 = vld [vmem:[#allocation19 + $0x178] sm:$0xff]
        %v7046 = vld [vmem:[#allocation19 + $0x180] sm:$0xff]
        %v7047 = vld [vmem:[#allocation19 + $0x188] sm:$0xff]
        %v7048 = vld [vmem:[#allocation19 + $0x190] sm:$0xff]
        %v7049 = vld [vmem:[#allocation19 + $0x198] sm:$0xff]
        %v7050 = vld [vmem:[#allocation19 + $0x1a0] sm:$0xff]
        %v7051 = vld [vmem:[#allocation19 + $0x1a8] sm:$0xff]
        %v7052 = vld [vmem:[#allocation19 + $0x1b0] sm:$0xff]
        %v7053 = vld [vmem:[#allocation19 + $0x1b8] sm:$0xff]
        %v7054 = vld [vmem:[#allocation19 + $0x1c0] sm:$0xff]
        %v7055 = vld [vmem:[#allocation19 + $0x1c8] sm:$0xff]
        %v7056 = vld [vmem:[#allocation19 + $0x1d0] sm:$0xff]
        %v7057 = vld [vmem:[#allocation19 + $0x1d8] sm:$0xff]
        %v7058 = vld [vmem:[#allocation19 + $0x1e0] sm:$0xff]
        %v7059 = vld [vmem:[#allocation19 + $0x1e8] sm:$0xff]
        %v7060 = vld [vmem:[#allocation19 + $0x1f0] sm:$0xff]
        %v7061 = vld [vmem:[#allocation19 + $0x1f8] sm:$0xff]
        %v7062 = vld [vmem:[#allocation19 + $0x200] sm:$0xff]
        %v7063 = vld [vmem:[#allocation19 + $0x208] sm:$0xff]
        %v7064 = vld [vmem:[#allocation19 + $0x210] sm:$0xff]
        %v7065 = vld [vmem:[#allocation19 + $0x218] sm:$0xff]
        %v7066 = vld [vmem:[#allocation19 + $0x220] sm:$0xff]
        %v7067 = vld [vmem:[#allocation19 + $0x228] sm:$0xff]
        %v7068 = vld [vmem:[#allocation19 + $0x230] sm:$0xff]
        %v7069 = vld [vmem:[#allocation19 + $0x238] sm:$0xff]
        %v7070 = vld [vmem:[#allocation19 + $0x240] sm:$0xff]
        %v7071 = vld [vmem:[#allocation19 + $0x248] sm:$0xff]
        %v7072 = vld [vmem:[#allocation19 + $0x250] sm:$0xff]
        %v7073 = vld [vmem:[#allocation19 + $0x258] sm:$0xff]
        %v7074 = vld [vmem:[#allocation19 + $0x260] sm:$0xff]
        %v7075 = vld [vmem:[#allocation19 + $0x268] sm:$0xff]
        %v7076 = vld [vmem:[#allocation19 + $0x270] sm:$0xff]
        %v7077 = vld [vmem:[#allocation19 + $0x278] sm:$0xff]
        %v7078 = vld [vmem:[#allocation19 + $0x280] sm:$0xff]
        %v7079 = vld [vmem:[#allocation19 + $0x288] sm:$0xff]
        %v7080 = vld [vmem:[#allocation19 + $0x290] sm:$0xff]
        %v7081 = vld [vmem:[#allocation19 + $0x298] sm:$0xff]
        %v7082 = vld [vmem:[#allocation19 + $0x2a0] sm:$0xff]
        %v7083 = vld [vmem:[#allocation19 + $0x2a8] sm:$0xff]
        %v7084 = vld [vmem:[#allocation19 + $0x2b0] sm:$0xff]
        %v7085 = vld [vmem:[#allocation19 + $0x2b8] sm:$0xff]
        %v7086 = vld [vmem:[#allocation19 + $0x2c0] sm:$0xff]
        %v7087 = vld [vmem:[#allocation19 + $0x2c8] sm:$0xff]
        %v7088 = vld [vmem:[#allocation19 + $0x2d0] sm:$0xff]
        %v7089 = vld [vmem:[#allocation19 + $0x2d8] sm:$0xff]
        %v7090 = vld [vmem:[#allocation19 + $0x2e0] sm:$0xff]
        %v7091 = vld [vmem:[#allocation19 + $0x2e8] sm:$0xff]
        %v7092 = vld [vmem:[#allocation19 + $0x2f0] sm:$0xff]
        %v7093 = vld [vmem:[#allocation19 + $0x2f8] sm:$0xff]
        %v7094 = vld [vmem:[#allocation19 + $0x300] sm:$0xff]
        %v7095 = vld [vmem:[#allocation19 + $0x308] sm:$0xff]
        %v7096 = vld [vmem:[#allocation19 + $0x310] sm:$0xff]
        %v7097 = vld [vmem:[#allocation19 + $0x318] sm:$0xff]
        %v7098 = vld [vmem:[#allocation19 + $0x320] sm:$0xff]
        %v7099 = vld [vmem:[#allocation19 + $0x328] sm:$0xff]
        %v7100 = vld [vmem:[#allocation19 + $0x330] sm:$0xff]
        %v7101 = vld [vmem:[#allocation19 + $0x338] sm:$0xff]
        %v7102 = vld [vmem:[#allocation19 + $0x340] sm:$0xff]
        %v7103 = vld [vmem:[#allocation19 + $0x348] sm:$0xff]
        %v7104 = vld [vmem:[#allocation19 + $0x350] sm:$0xff]
        %v7105 = vld [vmem:[#allocation19 + $0x358] sm:$0xff]
        %v7106 = vld [vmem:[#allocation19 + $0x360] sm:$0xff]
        %v7107 = vld [vmem:[#allocation19 + $0x368] sm:$0xff]
        %v7108 = vld [vmem:[#allocation19 + $0x370] sm:$0xff]
        %v7109 = vld [vmem:[#allocation19 + $0x378] sm:$0xff]
        %v7110 = vld [vmem:[#allocation19 + $0x380] sm:$0xff]
        %v7111 = vld [vmem:[#allocation19 + $0x388] sm:$0xff]
        %v7112 = vld [vmem:[#allocation19 + $0x390] sm:$0xff]
        %v7113 = vld [vmem:[#allocation19 + $0x398] sm:$0xff]
        %v7114 = vld [vmem:[#allocation19 + $0x3a0] sm:$0xff]
        %v7115 = vld [vmem:[#allocation19 + $0x3a8] sm:$0xff]
        %v7116 = vld [vmem:[#allocation19 + $0x3b0] sm:$0xff]
        %v7117 = vld [vmem:[#allocation19 + $0x3b8] sm:$0xff]
        %v7118 = vld [vmem:[#allocation19 + $0x3c0] sm:$0xff]
        %v7119 = vld [vmem:[#allocation19 + $0x3c8] sm:$0xff]
        %v7120 = vld [vmem:[#allocation19 + $0x3d0] sm:$0xff]
        %v7121 = vld [vmem:[#allocation19 + $0x3d8] sm:$0xff]
        %v7122 = vld [vmem:[#allocation19 + $0x3e0] sm:$0xff]
        %v7123 = vld [vmem:[#allocation19 + $0x3e8] sm:$0xff]
        %v7124 = vld [vmem:[#allocation19 + $0x3f0] sm:$0xff]
        %v7125 = vld [vmem:[#allocation19 + $0x3f8] sm:$0xff]
        %v7126 = vld [vmem:[#allocation19 + $0x400] sm:$0xff]
        %v7127 = vld [vmem:[#allocation19 + $0x408] sm:$0xff]
        %v7128 = vld [vmem:[#allocation19 + $0x410] sm:$0xff]
        %v7129 = vld [vmem:[#allocation19 + $0x418] sm:$0xff]
        %v7130 = vld [vmem:[#allocation19 + $0x420] sm:$0xff]
        %v7131 = vld [vmem:[#allocation19 + $0x428] sm:$0xff]
        %v7132 = vld [vmem:[#allocation19 + $0x430] sm:$0xff]
        %v7133 = vld [vmem:[#allocation19 + $0x438] sm:$0xff]
        %v7134 = vld [vmem:[#allocation19 + $0x440] sm:$0xff]
        %v7135 = vld [vmem:[#allocation19 + $0x448] sm:$0xff]
        %v7136 = vld [vmem:[#allocation19 + $0x450] sm:$0xff]
        %v7137 = vld [vmem:[#allocation19 + $0x458] sm:$0xff]
        %v7138 = vld [vmem:[#allocation19 + $0x460] sm:$0xff]
        %v7139 = vld [vmem:[#allocation19 + $0x468] sm:$0xff]
        %v7140 = vld [vmem:[#allocation19 + $0x470] sm:$0xff]
        %v7141 = vld [vmem:[#allocation19 + $0x478] sm:$0xff]
        %v7142 = vld [vmem:[#allocation19 + $0x480] sm:$0xff]
        %v7143 = vld [vmem:[#allocation19 + $0x488] sm:$0xff]
        %v7144 = vld [vmem:[#allocation19 + $0x490] sm:$0xff]
        %v7145 = vld [vmem:[#allocation19 + $0x498] sm:$0xff]
        %v7146 = vld [vmem:[#allocation19 + $0x4a0] sm:$0xff]
        %v7147 = vld [vmem:[#allocation19 + $0x4a8] sm:$0xff]
        %v7148 = vld [vmem:[#allocation19 + $0x4b0] sm:$0xff]
        %v7149 = vld [vmem:[#allocation19 + $0x4b8] sm:$0xff]
        %v7150 = vld [vmem:[#allocation19 + $0x4c0] sm:$0xff]
        %v7151 = vld [vmem:[#allocation19 + $0x4c8] sm:$0xff]
        %v7152 = vld [vmem:[#allocation19 + $0x4d0] sm:$0xff]
        %v7153 = vld [vmem:[#allocation19 + $0x4d8] sm:$0xff]
        %v7154 = vld [vmem:[#allocation19 + $0x4e0] sm:$0xff]
        %v7155 = vld [vmem:[#allocation19 + $0x4e8] sm:$0xff]
        %v7156 = vld [vmem:[#allocation19 + $0x4f0] sm:$0xff]
        %v7157 = vld [vmem:[#allocation19 + $0x4f8] sm:$0xff]
        %v7158 = vld [vmem:[#allocation19 + $0x500] sm:$0xff]
        %v7159 = vld [vmem:[#allocation19 + $0x508] sm:$0xff]
        %v7160 = vld [vmem:[#allocation19 + $0x510] sm:$0xff]
        %v7161 = vld [vmem:[#allocation19 + $0x518] sm:$0xff]
        %v7162 = vld [vmem:[#allocation19 + $0x520] sm:$0xff]
        %v7163 = vld [vmem:[#allocation19 + $0x528] sm:$0xff]
        %v7164 = vld [vmem:[#allocation19 + $0x530] sm:$0xff]
        %v7165 = vld [vmem:[#allocation19 + $0x538] sm:$0xff]
        %v7166 = vld [vmem:[#allocation19 + $0x540] sm:$0xff]
        %v7167 = vld [vmem:[#allocation19 + $0x548] sm:$0xff]
        %v7168 = vld [vmem:[#allocation19 + $0x550] sm:$0xff]
        %v7169 = vld [vmem:[#allocation19 + $0x558] sm:$0xff]
        %v7170 = vld [vmem:[#allocation19 + $0x560] sm:$0xff]
        %v7171 = vld [vmem:[#allocation19 + $0x568] sm:$0xff]
        %v7172 = vld [vmem:[#allocation19 + $0x570] sm:$0xff]
        %v7173 = vld [vmem:[#allocation19 + $0x578] sm:$0xff]
        %v7174 = vld [vmem:[#allocation19 + $0x580] sm:$0xff]
        %v7175 = vld [vmem:[#allocation19 + $0x588] sm:$0xff]
        %v7176 = vld [vmem:[#allocation19 + $0x590] sm:$0xff]
        %v7177 = vld [vmem:[#allocation19 + $0x598] sm:$0xff]
        %v7178 = vld [vmem:[#allocation19 + $0x5a0] sm:$0xff]
        %v7179 = vld [vmem:[#allocation19 + $0x5a8] sm:$0xff]
        %v7180 = vld [vmem:[#allocation19 + $0x5b0] sm:$0xff]
        %v7181 = vld [vmem:[#allocation19 + $0x5b8] sm:$0xff]
        %v7182 = vld [vmem:[#allocation19 + $0x5c0] sm:$0xff]
        %v7183 = vld [vmem:[#allocation19 + $0x5c8] sm:$0xff]
        %v7184 = vld [vmem:[#allocation19 + $0x5d0] sm:$0xff]
        %v7185 = vld [vmem:[#allocation19 + $0x5d8] sm:$0xff]
        %v7186 = vld [vmem:[#allocation19 + $0x5e0] sm:$0xff]
        %v7187 = vld [vmem:[#allocation19 + $0x5e8] sm:$0xff]
        %v7188 = vld [vmem:[#allocation19 + $0x5f0] sm:$0xff]
        %v7189 = vld [vmem:[#allocation19 + $0x5f8] sm:$0xff]
        %v7190 = vld [vmem:[#allocation19 + $0x600] sm:$0xff]
        %v7191 = vld [vmem:[#allocation19 + $0x608] sm:$0xff]
        %v7192 = vld [vmem:[#allocation19 + $0x610] sm:$0xff]
        %v7193 = vld [vmem:[#allocation19 + $0x618] sm:$0xff]
        %v7194 = vld [vmem:[#allocation19 + $0x620] sm:$0xff]
        %v7195 = vld [vmem:[#allocation19 + $0x628] sm:$0xff]
        %v7196 = vld [vmem:[#allocation19 + $0x630] sm:$0xff]
        %v7197 = vld [vmem:[#allocation19 + $0x638] sm:$0xff]
        %v7198 = vld [vmem:[#allocation19 + $0x640] sm:$0xff]
        %v7199 = vld [vmem:[#allocation19 + $0x648] sm:$0xff]
        %v7200 = vld [vmem:[#allocation19 + $0x650] sm:$0xff]
        %v7201 = vld [vmem:[#allocation19 + $0x658] sm:$0xff]
        %v7202 = vld [vmem:[#allocation19 + $0x660] sm:$0xff]
        %v7203 = vld [vmem:[#allocation19 + $0x668] sm:$0xff]
        %v7204 = vld [vmem:[#allocation19 + $0x670] sm:$0xff]
        %v7205 = vld [vmem:[#allocation19 + $0x678] sm:$0xff]
        %v7206 = vld [vmem:[#allocation19 + $0x680] sm:$0xff]
        %v7207 = vld [vmem:[#allocation19 + $0x688] sm:$0xff]
        %v7208 = vld [vmem:[#allocation19 + $0x690] sm:$0xff]
        %v7209 = vld [vmem:[#allocation19 + $0x698] sm:$0xff]
        %v7210 = vld [vmem:[#allocation19 + $0x6a0] sm:$0xff]
        %v7211 = vld [vmem:[#allocation19 + $0x6a8] sm:$0xff]
        %v7212 = vld [vmem:[#allocation19 + $0x6b0] sm:$0xff]
        %v7213 = vld [vmem:[#allocation19 + $0x6b8] sm:$0xff]
        %v7214 = vld [vmem:[#allocation19 + $0x6c0] sm:$0xff]
        %v7215 = vld [vmem:[#allocation19 + $0x6c8] sm:$0xff]
        %v7216 = vld [vmem:[#allocation19 + $0x6d0] sm:$0xff]
        %v7217 = vld [vmem:[#allocation19 + $0x6d8] sm:$0xff]
        %v7218 = vld [vmem:[#allocation19 + $0x6e0] sm:$0xff]
        %v7219 = vld [vmem:[#allocation19 + $0x6e8] sm:$0xff]
        %v7220 = vld [vmem:[#allocation19 + $0x6f0] sm:$0xff]
        %v7221 = vld [vmem:[#allocation19 + $0x6f8] sm:$0xff]
        %v7222 = vld [vmem:[#allocation19 + $0x700] sm:$0xff]
        %v7223 = vld [vmem:[#allocation19 + $0x708] sm:$0xff]
        %v7224 = vld [vmem:[#allocation19 + $0x710] sm:$0xff]
        %v7225 = vld [vmem:[#allocation19 + $0x718] sm:$0xff]
        %v7226 = vld [vmem:[#allocation19 + $0x720] sm:$0xff]
        %v7227 = vld [vmem:[#allocation19 + $0x728] sm:$0xff]
        %v7228 = vld [vmem:[#allocation19 + $0x730] sm:$0xff]
        %v7229 = vld [vmem:[#allocation19 + $0x738] sm:$0xff]
        %v7230 = vld [vmem:[#allocation19 + $0x740] sm:$0xff]
        %v7231 = vld [vmem:[#allocation19 + $0x748] sm:$0xff]
        %v7232 = vld [vmem:[#allocation19 + $0x750] sm:$0xff]
        %v7233 = vld [vmem:[#allocation19 + $0x758] sm:$0xff]
        %v7234 = vld [vmem:[#allocation19 + $0x760] sm:$0xff]
        %v7235 = vld [vmem:[#allocation19 + $0x768] sm:$0xff]
        %v7236 = vld [vmem:[#allocation19 + $0x770] sm:$0xff]
        %v7237 = vld [vmem:[#allocation19 + $0x778] sm:$0xff]
        %v7238 = vld [vmem:[#allocation19 + $0x780] sm:$0xff]
        %v7239 = vld [vmem:[#allocation19 + $0x788] sm:$0xff]
        %v7240 = vld [vmem:[#allocation19 + $0x790] sm:$0xff]
        %v7241 = vld [vmem:[#allocation19 + $0x798] sm:$0xff]
        %v7242 = vld [vmem:[#allocation19 + $0x7a0] sm:$0xff]
        %v7243 = vld [vmem:[#allocation19 + $0x7a8] sm:$0xff]
        %v7244 = vld [vmem:[#allocation19 + $0x7b0] sm:$0xff]
        %v7245 = vld [vmem:[#allocation19 + $0x7b8] sm:$0xff]
        %v7246 = vld [vmem:[#allocation19 + $0x7c0] sm:$0xff]
        %v7247 = vld [vmem:[#allocation19 + $0x7c8] sm:$0xff]
        %v7248 = vld [vmem:[#allocation19 + $0x7d0] sm:$0xff]
        %v7249 = vld [vmem:[#allocation19 + $0x7d8] sm:$0xff]
        %v7250 = vld [vmem:[#allocation19 + $0x7e0] sm:$0xff]
        %v7251 = vld [vmem:[#allocation19 + $0x7e8] sm:$0xff]
        %v7252 = vld [vmem:[#allocation19 + $0x7f0] sm:$0xff]
        %v7253 = vld [vmem:[#allocation19 + $0x7f8] sm:$0xff]
        %v7254 = vld [vmem:[#allocation19 + $0x800] sm:$0xff]
        %v7255 = vld [vmem:[#allocation19 + $0x808] sm:$0xff]
        %v7256 = vld [vmem:[#allocation19 + $0x810] sm:$0xff]
        %v7257 = vld [vmem:[#allocation19 + $0x818] sm:$0xff]
        %v7258 = vld [vmem:[#allocation19 + $0x820] sm:$0xff]
        %v7259 = vld [vmem:[#allocation19 + $0x828] sm:$0xff]
        %v7260 = vld [vmem:[#allocation19 + $0x830] sm:$0xff]
        %v7261 = vld [vmem:[#allocation19 + $0x838] sm:$0xff]
        %v7262 = vld [vmem:[#allocation19 + $0x840] sm:$0xff]
        %v7263 = vld [vmem:[#allocation19 + $0x848] sm:$0xff]
        %v7264 = vld [vmem:[#allocation19 + $0x850] sm:$0xff]
        %v7265 = vld [vmem:[#allocation19 + $0x858] sm:$0xff]
        %v7266 = vld [vmem:[#allocation19 + $0x860] sm:$0xff]
        %v7267 = vld [vmem:[#allocation19 + $0x868] sm:$0xff]
        %v7268 = vld [vmem:[#allocation19 + $0x870] sm:$0xff]
        %v7269 = vld [vmem:[#allocation19 + $0x878] sm:$0xff]
        %v7270 = vld [vmem:[#allocation19 + $0x880] sm:$0xff]
        %v7271 = vld [vmem:[#allocation19 + $0x888] sm:$0xff]
        %v7272 = vld [vmem:[#allocation19 + $0x890] sm:$0xff]
        %v7273 = vld [vmem:[#allocation19 + $0x898] sm:$0xff]
        %v7274 = vld [vmem:[#allocation19 + $0x8a0] sm:$0xff]
        %v7275 = vld [vmem:[#allocation19 + $0x8a8] sm:$0xff]
        %v7276 = vld [vmem:[#allocation19 + $0x8b0] sm:$0xff]
        %v7277 = vld [vmem:[#allocation19 + $0x8b8] sm:$0xff]
        %v7278 = vld [vmem:[#allocation19 + $0x8c0] sm:$0xff]
        %v7279 = vld [vmem:[#allocation19 + $0x8c8] sm:$0xff]
        %v7280 = vld [vmem:[#allocation19 + $0x8d0] sm:$0xff]
        %v7281 = vld [vmem:[#allocation19 + $0x8d8] sm:$0xff]
        %v7282 = vld [vmem:[#allocation19 + $0x8e0] sm:$0xff]
        %v7283 = vld [vmem:[#allocation19 + $0x8e8] sm:$0xff]
        %v7284 = vld [vmem:[#allocation19 + $0x8f0] sm:$0xff]
        %v7285 = vld [vmem:[#allocation19 + $0x8f8] sm:$0xff]
        %v7286 = vld [vmem:[#allocation19 + $0x900] sm:$0xff]
        %v7287 = vld [vmem:[#allocation19 + $0x908] sm:$0xff]
        %v7288 = vld [vmem:[#allocation19 + $0x910] sm:$0xff]
        %v7289 = vld [vmem:[#allocation19 + $0x918] sm:$0xff]
        %v7290 = vld [vmem:[#allocation19 + $0x920] sm:$0xff]
        %v7291 = vld [vmem:[#allocation19 + $0x928] sm:$0xff]
        %v7292 = vld [vmem:[#allocation19 + $0x930] sm:$0xff]
        %v7293 = vld [vmem:[#allocation19 + $0x938] sm:$0xff]
        %v7294 = vld [vmem:[#allocation19 + $0x940] sm:$0xff]
        %v7295 = vld [vmem:[#allocation19 + $0x948] sm:$0xff]
        %v7296 = vld [vmem:[#allocation19 + $0x950] sm:$0xff]
        %v7297 = vld [vmem:[#allocation19 + $0x958] sm:$0xff]
        %v7298 = vld [vmem:[#allocation19 + $0x960] sm:$0xff]
        %v7299 = vld [vmem:[#allocation19 + $0x968] sm:$0xff]
        %v7300 = vld [vmem:[#allocation19 + $0x970] sm:$0xff]
        %v7301 = vld [vmem:[#allocation19 + $0x978] sm:$0xff]
        %v7302 = vld [vmem:[#allocation19 + $0x980] sm:$0xff]
        %v7303 = vld [vmem:[#allocation19 + $0x988] sm:$0xff]
        %v7304 = vld [vmem:[#allocation19 + $0x990] sm:$0xff]
        %v7305 = vld [vmem:[#allocation19 + $0x998] sm:$0xff]
        %v7306 = vld [vmem:[#allocation19 + $0x9a0] sm:$0xff]
        %v7307 = vld [vmem:[#allocation19 + $0x9a8] sm:$0xff]
        %v7308 = vld [vmem:[#allocation19 + $0x9b0] sm:$0xff]
        %v7309 = vld [vmem:[#allocation19 + $0x9b8] sm:$0xff]
        %v7310 = vld [vmem:[#allocation19 + $0x9c0] sm:$0xff]
        %v7311 = vld [vmem:[#allocation19 + $0x9c8] sm:$0xff]
        %v7312 = vld [vmem:[#allocation19 + $0x9d0] sm:$0xff]
        %v7313 = vld [vmem:[#allocation19 + $0x9d8] sm:$0xff]
        %v7314 = vld [vmem:[#allocation19 + $0x9e0] sm:$0xff]
        %v7315 = vld [vmem:[#allocation19 + $0x9e8] sm:$0xff]
        %v7316 = vld [vmem:[#allocation19 + $0x9f0] sm:$0xff]
        %v7317 = vld [vmem:[#allocation19 + $0x9f8] sm:$0xff]
        %v7318 = vld [vmem:[#allocation19 + $0xa00] sm:$0xff]
        %v7319 = vld [vmem:[#allocation19 + $0xa08] sm:$0xff]
        %v7320 = vld [vmem:[#allocation19 + $0xa10] sm:$0xff]
        %v7321 = vld [vmem:[#allocation19 + $0xa18] sm:$0xff]
        %v7322 = vld [vmem:[#allocation19 + $0xa20] sm:$0xff]
        %v7323 = vld [vmem:[#allocation19 + $0xa28] sm:$0xff]
        %v7324 = vld [vmem:[#allocation19 + $0xa30] sm:$0xff]
        %v7325 = vld [vmem:[#allocation19 + $0xa38] sm:$0xff]
        %v7326 = vld [vmem:[#allocation19 + $0xa40] sm:$0xff]
        %v7327 = vld [vmem:[#allocation19 + $0xa48] sm:$0xff]
        %v7328 = vld [vmem:[#allocation19 + $0xa50] sm:$0xff]
        %v7329 = vld [vmem:[#allocation19 + $0xa58] sm:$0xff]
        %v7330 = vld [vmem:[#allocation19 + $0xa60] sm:$0xff]
        %v7331 = vld [vmem:[#allocation19 + $0xa68] sm:$0xff]
        %v7332 = vld [vmem:[#allocation19 + $0xa70] sm:$0xff]
        %v7333 = vld [vmem:[#allocation19 + $0xa78] sm:$0xff]
        %v7334 = vld [vmem:[#allocation19 + $0xa80] sm:$0xff]
        %v7335 = vld [vmem:[#allocation19 + $0xa88] sm:$0xff]
        %v7336 = vld [vmem:[#allocation19 + $0xa90] sm:$0xff]
        %v7337 = vld [vmem:[#allocation19 + $0xa98] sm:$0xff]
        %v7338 = vld [vmem:[#allocation19 + $0xaa0] sm:$0xff]
        %v7339 = vld [vmem:[#allocation19 + $0xaa8] sm:$0xff]
        %v7340 = vld [vmem:[#allocation19 + $0xab0] sm:$0xff]
        %v7341 = vld [vmem:[#allocation19 + $0xab8] sm:$0xff]
        %v7342 = vld [vmem:[#allocation19 + $0xac0] sm:$0xff]
        %v7343 = vld [vmem:[#allocation19 + $0xac8] sm:$0xff]
        %v7344 = vld [vmem:[#allocation19 + $0xad0] sm:$0xff]
        %v7345 = vld [vmem:[#allocation19 + $0xad8] sm:$0xff]
        %v7346 = vld [vmem:[#allocation19 + $0xae0] sm:$0xff]
        %v7347 = vld [vmem:[#allocation19 + $0xae8] sm:$0xff]
        %v7348 = vld [vmem:[#allocation19 + $0xaf0] sm:$0xff]
        %v7349 = vld [vmem:[#allocation19 + $0xaf8] sm:$0xff]
        %v7350 = vld [vmem:[#allocation19 + $0xb00] sm:$0xff]
        %v7351 = vld [vmem:[#allocation19 + $0xb08] sm:$0xff]
        %v7352 = vld [vmem:[#allocation19 + $0xb10] sm:$0xff]
        %v7353 = vld [vmem:[#allocation19 + $0xb18] sm:$0xff]
        %v7354 = vld [vmem:[#allocation19 + $0xb20] sm:$0xff]
        %v7355 = vld [vmem:[#allocation19 + $0xb28] sm:$0xff]
        %v7356 = vld [vmem:[#allocation19 + $0xb30] sm:$0xff]
        %v7357 = vld [vmem:[#allocation19 + $0xb38] sm:$0xff]
        %v7358 = vld [vmem:[#allocation19 + $0xb40] sm:$0xff]
        %v7359 = vld [vmem:[#allocation19 + $0xb48] sm:$0xff]
        %v7360 = vld [vmem:[#allocation19 + $0xb50] sm:$0xff]
        %v7361 = vld [vmem:[#allocation19 + $0xb58] sm:$0xff]
        %v7362 = vld [vmem:[#allocation19 + $0xb60] sm:$0xff]
        %v7363 = vld [vmem:[#allocation19 + $0xb68] sm:$0xff]
        %v7364 = vld [vmem:[#allocation19 + $0xb70] sm:$0xff]
        %v7365 = vld [vmem:[#allocation19 + $0xb78] sm:$0xff]
        %v7366 = vld [vmem:[#allocation19 + $0xb80] sm:$0xff]
        %v7367 = vld [vmem:[#allocation19 + $0xb88] sm:$0xff]
        %v7368 = vld [vmem:[#allocation19 + $0xb90] sm:$0xff]
        %v7369 = vld [vmem:[#allocation19 + $0xb98] sm:$0xff]
        %v7370 = vld [vmem:[#allocation19 + $0xba0] sm:$0xff]
        %v7371 = vld [vmem:[#allocation19 + $0xba8] sm:$0xff]
        %v7372 = vld [vmem:[#allocation19 + $0xbb0] sm:$0xff]
        %v7373 = vld [vmem:[#allocation19 + $0xbb8] sm:$0xff]
        %v7374 = vld [vmem:[#allocation19 + $0xbc0] sm:$0xff]
        %v7375 = vld [vmem:[#allocation19 + $0xbc8] sm:$0xff]
        %v7376 = vld [vmem:[#allocation19 + $0xbd0] sm:$0xff]
        %v7377 = vld [vmem:[#allocation19 + $0xbd8] sm:$0xff]
        %v7378 = vld [vmem:[#allocation19 + $0xbe0] sm:$0xff]
        %v7379 = vld [vmem:[#allocation19 + $0xbe8] sm:$0xff]
        %v7380 = vld [vmem:[#allocation19 + $0xbf0] sm:$0xff]
        %v7381 = vld [vmem:[#allocation19 + $0xbf8] sm:$0xff]
        %v7382 = vld [vmem:[#allocation19 + $0xc00] sm:$0xff]
        %v7383 = vld [vmem:[#allocation19 + $0xc08] sm:$0xff]
        %v7384 = vld [vmem:[#allocation19 + $0xc10] sm:$0xff]
        %v7385 = vld [vmem:[#allocation19 + $0xc18] sm:$0xff]
        %v7386 = vld [vmem:[#allocation19 + $0xc20] sm:$0xff]
        %v7387 = vld [vmem:[#allocation19 + $0xc28] sm:$0xff]
        %v7388 = vld [vmem:[#allocation19 + $0xc30] sm:$0xff]
        %v7389 = vld [vmem:[#allocation19 + $0xc38] sm:$0xff]
        %v7390 = vld [vmem:[#allocation19 + $0xc40] sm:$0xff]
        %v7391 = vld [vmem:[#allocation19 + $0xc48] sm:$0xff]
        %v7392 = vld [vmem:[#allocation19 + $0xc50] sm:$0xff]
        %v7393 = vld [vmem:[#allocation19 + $0xc58] sm:$0xff]
        %v7394 = vld [vmem:[#allocation19 + $0xc60] sm:$0xff]
        %v7395 = vld [vmem:[#allocation19 + $0xc68] sm:$0xff]
        %v7396 = vld [vmem:[#allocation19 + $0xc70] sm:$0xff]
        %v7397 = vld [vmem:[#allocation19 + $0xc78] sm:$0xff]
        %v7398 = vld [vmem:[#allocation19 + $0xc80] sm:$0xff]
        %v7399 = vld [vmem:[#allocation19 + $0xc88] sm:$0xff]
        %v7400 = vld [vmem:[#allocation19 + $0xc90] sm:$0xff]
        %v7401 = vld [vmem:[#allocation19 + $0xc98] sm:$0xff]
        %v7402 = vld [vmem:[#allocation19 + $0xca0] sm:$0xff]
        %v7403 = vld [vmem:[#allocation19 + $0xca8] sm:$0xff]
        %v7404 = vld [vmem:[#allocation19 + $0xcb0] sm:$0xff]
        %v7405 = vld [vmem:[#allocation19 + $0xcb8] sm:$0xff]
        %v7406 = vld [vmem:[#allocation19 + $0xcc0] sm:$0xff]
        %v7407 = vld [vmem:[#allocation19 + $0xcc8] sm:$0xff]
        %v7408 = vld [vmem:[#allocation19 + $0xcd0] sm:$0xff]
        %v7409 = vld [vmem:[#allocation19 + $0xcd8] sm:$0xff]
        %v7410 = vld [vmem:[#allocation19 + $0xce0] sm:$0xff]
        %v7411 = vld [vmem:[#allocation19 + $0xce8] sm:$0xff]
        %v7412 = vld [vmem:[#allocation19 + $0xcf0] sm:$0xff]
        %v7413 = vld [vmem:[#allocation19 + $0xcf8] sm:$0xff]
        %v7414 = vld [vmem:[#allocation19 + $0xd00] sm:$0xff]
        %v7415 = vld [vmem:[#allocation19 + $0xd08] sm:$0xff]
        %v7416 = vld [vmem:[#allocation19 + $0xd10] sm:$0xff]
        %v7417 = vld [vmem:[#allocation19 + $0xd18] sm:$0xff]
        %v7418 = vld [vmem:[#allocation19 + $0xd20] sm:$0xff]
        %v7419 = vld [vmem:[#allocation19 + $0xd28] sm:$0xff]
        %v7420 = vld [vmem:[#allocation19 + $0xd30] sm:$0xff]
        %v7421 = vld [vmem:[#allocation19 + $0xd38] sm:$0xff]
        %v7422 = vld [vmem:[#allocation19 + $0xd40] sm:$0xff]
        %v7423 = vld [vmem:[#allocation19 + $0xd48] sm:$0xff]
        %v7424 = vld [vmem:[#allocation19 + $0xd50] sm:$0xff]
        %v7425 = vld [vmem:[#allocation19 + $0xd58] sm:$0xff]
        %v7426 = vld [vmem:[#allocation19 + $0xd60] sm:$0xff]
        %v7427 = vld [vmem:[#allocation19 + $0xd68] sm:$0xff]
        %v7428 = vld [vmem:[#allocation19 + $0xd70] sm:$0xff]
        %v7429 = vld [vmem:[#allocation19 + $0xd78] sm:$0xff]
        %v7430 = vld [vmem:[#allocation19 + $0xd80] sm:$0xff]
        %v7431 = vld [vmem:[#allocation19 + $0xd88] sm:$0xff]
        %v7432 = vld [vmem:[#allocation19 + $0xd90] sm:$0xff]
        %v7433 = vld [vmem:[#allocation19 + $0xd98] sm:$0xff]
        %v7434 = vld [vmem:[#allocation19 + $0xda0] sm:$0xff]
        %v7435 = vld [vmem:[#allocation19 + $0xda8] sm:$0xff]
        %v7436 = vld [vmem:[#allocation19 + $0xdb0] sm:$0xff]
        %v7437 = vld [vmem:[#allocation19 + $0xdb8] sm:$0xff]
        %v7438 = vld [vmem:[#allocation19 + $0xdc0] sm:$0xff]
        %v7439 = vld [vmem:[#allocation19 + $0xdc8] sm:$0xff]
        %v7440 = vld [vmem:[#allocation19 + $0xdd0] sm:$0xff]
        %v7441 = vld [vmem:[#allocation19 + $0xdd8] sm:$0xff]
        %v7442 = vld [vmem:[#allocation19 + $0xde0] sm:$0xff]
        %v7443 = vld [vmem:[#allocation19 + $0xde8] sm:$0xff]
        %v7444 = vld [vmem:[#allocation19 + $0xdf0] sm:$0xff]
        %v7445 = vld [vmem:[#allocation19 + $0xdf8] sm:$0xff]
        %v7446 = vld [vmem:[#allocation19 + $0xe00] sm:$0xff]
        %v7447 = vld [vmem:[#allocation19 + $0xe08] sm:$0xff]
        %v7448 = vld [vmem:[#allocation19 + $0xe10] sm:$0xff]
        %v7449 = vld [vmem:[#allocation19 + $0xe18] sm:$0xff]
        %v7450 = vld [vmem:[#allocation19 + $0xe20] sm:$0xff]
        %v7451 = vld [vmem:[#allocation19 + $0xe28] sm:$0xff]
        %v7452 = vld [vmem:[#allocation19 + $0xe30] sm:$0xff]
        %v7453 = vld [vmem:[#allocation19 + $0xe38] sm:$0xff]
        %v7454 = vld [vmem:[#allocation19 + $0xe40] sm:$0xff]
        %v7455 = vld [vmem:[#allocation19 + $0xe48] sm:$0xff]
        %v7456 = vld [vmem:[#allocation19 + $0xe50] sm:$0xff]
        %v7457 = vld [vmem:[#allocation19 + $0xe58] sm:$0xff]
        %v7458 = vld [vmem:[#allocation19 + $0xe60] sm:$0xff]
        %v7459 = vld [vmem:[#allocation19 + $0xe68] sm:$0xff]
        %v7460 = vld [vmem:[#allocation19 + $0xe70] sm:$0xff]
        %v7461 = vld [vmem:[#allocation19 + $0xe78] sm:$0xff]
        %v7462 = vld [vmem:[#allocation19 + $0xe80] sm:$0xff]
        %v7463 = vld [vmem:[#allocation19 + $0xe88] sm:$0xff]
        %v7464 = vld [vmem:[#allocation19 + $0xe90] sm:$0xff]
        %v7465 = vld [vmem:[#allocation19 + $0xe98] sm:$0xff]
        %v7466 = vld [vmem:[#allocation19 + $0xea0] sm:$0xff]
        %v7467 = vld [vmem:[#allocation19 + $0xea8] sm:$0xff]
        %v7468 = vld [vmem:[#allocation19 + $0xeb0] sm:$0xff]
        %v7469 = vld [vmem:[#allocation19 + $0xeb8] sm:$0xff]
        %v7470 = vld [vmem:[#allocation19 + $0xec0] sm:$0xff]
        %v7471 = vld [vmem:[#allocation19 + $0xec8] sm:$0xff]
        %v7472 = vld [vmem:[#allocation19 + $0xed0] sm:$0xff]
        %v7473 = vld [vmem:[#allocation19 + $0xed8] sm:$0xff]
        %v7474 = vld [vmem:[#allocation19 + $0xee0] sm:$0xff]
        %v7475 = vld [vmem:[#allocation19 + $0xee8] sm:$0xff]
        %v7476 = vld [vmem:[#allocation19 + $0xef0] sm:$0xff]
        %v7477 = vld [vmem:[#allocation19 + $0xef8] sm:$0xff]
        %v7478 = vld [vmem:[#allocation19 + $0xf00] sm:$0xff]
        %v7479 = vld [vmem:[#allocation19 + $0xf08] sm:$0xff]
        %v7480 = vld [vmem:[#allocation19 + $0xf10] sm:$0xff]
        %v7481 = vld [vmem:[#allocation19 + $0xf18] sm:$0xff]
        %v7482 = vld [vmem:[#allocation19 + $0xf20] sm:$0xff]
        %v7483 = vld [vmem:[#allocation19 + $0xf28] sm:$0xff]
        %v7484 = vld [vmem:[#allocation19 + $0xf30] sm:$0xff]
        %v7485 = vld [vmem:[#allocation19 + $0xf38] sm:$0xff]
        %v7486 = vld [vmem:[#allocation19 + $0xf40] sm:$0xff]
        %v7487 = vld [vmem:[#allocation19 + $0xf48] sm:$0xff]
        %v7488 = vld [vmem:[#allocation19 + $0xf50] sm:$0xff]
        %v7489 = vld [vmem:[#allocation19 + $0xf58] sm:$0xff]
        %v7490 = vld [vmem:[#allocation19 + $0xf60] sm:$0xff]
        %v7491 = vld [vmem:[#allocation19 + $0xf68] sm:$0xff]
        %v7492 = vld [vmem:[#allocation19 + $0xf70] sm:$0xff]
        %v7493 = vld [vmem:[#allocation19 + $0xf78] sm:$0xff]
        %v7494 = vld [vmem:[#allocation19 + $0xf80] sm:$0xff]
        %v7495 = vld [vmem:[#allocation19 + $0xf88] sm:$0xff]
        %v7496 = vld [vmem:[#allocation19 + $0xf90] sm:$0xff]
        %v7497 = vld [vmem:[#allocation19 + $0xf98] sm:$0xff]
        %v7498 = vld [vmem:[#allocation19 + $0xfa0] sm:$0xff]
        %v7499 = vld [vmem:[#allocation19 + $0xfa8] sm:$0xff]
        %v7500 = vld [vmem:[#allocation19 + $0xfb0] sm:$0xff]
        %v7501 = vld [vmem:[#allocation19 + $0xfb8] sm:$0xff]
        %v7502 = vld [vmem:[#allocation19 + $0xfc0] sm:$0xff]
        %v7503 = vld [vmem:[#allocation19 + $0xfc8] sm:$0xff]
        %v7504 = vld [vmem:[#allocation19 + $0xfd0] sm:$0xff]
        %v7505 = vld [vmem:[#allocation19 + $0xfd8] sm:$0xff]
        %v7506 = vld [vmem:[#allocation19 + $0xfe0] sm:$0xff]
        %v7507 = vld [vmem:[#allocation19 + $0xfe8] sm:$0xff]
        %v7508 = vld [vmem:[#allocation19 + $0xff0] sm:$0xff]
        %v7509 = vld [vmem:[#allocation19 + $0xff8] sm:$0xff]
        %s7510 = scalar_lea.vmem [#allocation20], 65
        %v7511 = vld [vmem:[%s7510] ss:$8 sm:$0xf]
        %v7512 = vld [vmem:[%s7510] ss:$8 sm:$0xf0]
        %v7513 = vor.u32 %v7511, %v7512
        %v7515 = vperm.slane %v7513, 0
        %v7516 = vperm.slane %v7513, 1
        %v7517 = vperm.slane %v7513, 2
        %v7518 = vperm.slane %v7513, 3
        %v7519 = vperm.slane %v7513, 4
        %v7520 = vperm.slane %v7513, 5
        %v7521 = vperm.slane %v7513, 6
        %v7522 = vperm.slane %v7513, 7
        %v8043 = vunpack.c.l.b16 %v6998
        %v8044 = vunpack.c.h.b16 %v6998
        %v8045 = vunpack.c.l.b16 %v6999
        %v8046 = vunpack.c.h.b16 %v6999
        %v8047 = vunpack.c.l.b16 %v7000
        %v8048 = vunpack.c.h.b16 %v7000
        %v8049 = vunpack.c.l.b16 %v7001
        %v8050 = vunpack.c.h.b16 %v7001
        %v8051 = vunpack.c.l.b16 %v7002
        %v8052 = vunpack.c.h.b16 %v7002
        %v8053 = vunpack.c.l.b16 %v7003
        %v8054 = vunpack.c.h.b16 %v7003
        %v8055 = vunpack.c.l.b16 %v7004
        %v8056 = vunpack.c.h.b16 %v7004
        %v8057 = vunpack.c.l.b16 %v7005
        %v8058 = vunpack.c.h.b16 %v7005
        %v8059 = vunpack.c.l.b16 %v7006
        %v8060 = vunpack.c.h.b16 %v7006
        %v8061 = vunpack.c.l.b16 %v7007
        %v8062 = vunpack.c.h.b16 %v7007
        %v8063 = vunpack.c.l.b16 %v7008
        %v8064 = vunpack.c.h.b16 %v7008
        %v8065 = vunpack.c.l.b16 %v7009
        %v8066 = vunpack.c.h.b16 %v7009
        %v8067 = vunpack.c.l.b16 %v7010
        %v8068 = vunpack.c.h.b16 %v7010
        %v8069 = vunpack.c.l.b16 %v7011
        %v8070 = vunpack.c.h.b16 %v7011
        %v8071 = vunpack.c.l.b16 %v7012
        %v8072 = vunpack.c.h.b16 %v7012
        %v8073 = vunpack.c.l.b16 %v7013
        %v8074 = vunpack.c.h.b16 %v7013
        %v8075 = vunpack.c.l.b16 %v7014
        %v8076 = vunpack.c.h.b16 %v7014
        %v8077 = vunpack.c.l.b16 %v7015
        %v8078 = vunpack.c.h.b16 %v7015
        %v8079 = vunpack.c.l.b16 %v7016
        %v8080 = vunpack.c.h.b16 %v7016
        %v8081 = vunpack.c.l.b16 %v7017
        %v8082 = vunpack.c.h.b16 %v7017
        %v8083 = vunpack.c.l.b16 %v7018
        %v8084 = vunpack.c.h.b16 %v7018
        %v8085 = vunpack.c.l.b16 %v7019
        %v8086 = vunpack.c.h.b16 %v7019
        %v8087 = vunpack.c.l.b16 %v7020
        %v8088 = vunpack.c.h.b16 %v7020
        %v8089 = vunpack.c.l.b16 %v7021
        %v8090 = vunpack.c.h.b16 %v7021
        %v8091 = vunpack.c.l.b16 %v7022
        %v8092 = vunpack.c.h.b16 %v7022
        %v8093 = vunpack.c.l.b16 %v7023
        %v8094 = vunpack.c.h.b16 %v7023
        %v8095 = vunpack.c.l.b16 %v7024
        %v8096 = vunpack.c.h.b16 %v7024
        %v8097 = vunpack.c.l.b16 %v7025
        %v8098 = vunpack.c.h.b16 %v7025
        %v8099 = vunpack.c.l.b16 %v7026
        %v8100 = vunpack.c.h.b16 %v7026
        %v8101 = vunpack.c.l.b16 %v7027
        %v8102 = vunpack.c.h.b16 %v7027
        %v8103 = vunpack.c.l.b16 %v7028
        %v8104 = vunpack.c.h.b16 %v7028
        %v8105 = vunpack.c.l.b16 %v7029
        %v8106 = vunpack.c.h.b16 %v7029
        %v8107 = vunpack.c.l.b16 %v7030
        %v8108 = vunpack.c.h.b16 %v7030
        %v8109 = vunpack.c.l.b16 %v7031
        %v8110 = vunpack.c.h.b16 %v7031
        %v8111 = vunpack.c.l.b16 %v7032
        %v8112 = vunpack.c.h.b16 %v7032
        %v8113 = vunpack.c.l.b16 %v7033
        %v8114 = vunpack.c.h.b16 %v7033
        %v8115 = vunpack.c.l.b16 %v7034
        %v8116 = vunpack.c.h.b16 %v7034
        %v8117 = vunpack.c.l.b16 %v7035
        %v8118 = vunpack.c.h.b16 %v7035
        %v8119 = vunpack.c.l.b16 %v7036
        %v8120 = vunpack.c.h.b16 %v7036
        %v8121 = vunpack.c.l.b16 %v7037
        %v8122 = vunpack.c.h.b16 %v7037
        %v8123 = vunpack.c.l.b16 %v7038
        %v8124 = vunpack.c.h.b16 %v7038
        %v8125 = vunpack.c.l.b16 %v7039
        %v8126 = vunpack.c.h.b16 %v7039
        %v8127 = vunpack.c.l.b16 %v7040
        %v8128 = vunpack.c.h.b16 %v7040
        %v8129 = vunpack.c.l.b16 %v7041
        %v8130 = vunpack.c.h.b16 %v7041
        %v8131 = vunpack.c.l.b16 %v7042
        %v8132 = vunpack.c.h.b16 %v7042
        %v8133 = vunpack.c.l.b16 %v7043
        %v8134 = vunpack.c.h.b16 %v7043
        %v8135 = vunpack.c.l.b16 %v7044
        %v8136 = vunpack.c.h.b16 %v7044
        %v8137 = vunpack.c.l.b16 %v7045
        %v8138 = vunpack.c.h.b16 %v7045
        %v8139 = vunpack.c.l.b16 %v7046
        %v8140 = vunpack.c.h.b16 %v7046
        %v8141 = vunpack.c.l.b16 %v7047
        %v8142 = vunpack.c.h.b16 %v7047
        %v8143 = vunpack.c.l.b16 %v7048
        %v8144 = vunpack.c.h.b16 %v7048
        %v8145 = vunpack.c.l.b16 %v7049
        %v8146 = vunpack.c.h.b16 %v7049
        %v8147 = vunpack.c.l.b16 %v7050
        %v8148 = vunpack.c.h.b16 %v7050
        %v8149 = vunpack.c.l.b16 %v7051
        %v8150 = vunpack.c.h.b16 %v7051
        %v8151 = vunpack.c.l.b16 %v7052
        %v8152 = vunpack.c.h.b16 %v7052
        %v8153 = vunpack.c.l.b16 %v7053
        %v8154 = vunpack.c.h.b16 %v7053
        %v8155 = vunpack.c.l.b16 %v7054
        %v8156 = vunpack.c.h.b16 %v7054
        %v8157 = vunpack.c.l.b16 %v7055
        %v8158 = vunpack.c.h.b16 %v7055
        %v8159 = vunpack.c.l.b16 %v7056
        %v8160 = vunpack.c.h.b16 %v7056
        %v8161 = vunpack.c.l.b16 %v7057
        %v8162 = vunpack.c.h.b16 %v7057
        %v8163 = vunpack.c.l.b16 %v7058
        %v8164 = vunpack.c.h.b16 %v7058
        %v8165 = vunpack.c.l.b16 %v7059
        %v8166 = vunpack.c.h.b16 %v7059
        %v8167 = vunpack.c.l.b16 %v7060
        %v8168 = vunpack.c.h.b16 %v7060
        %v8169 = vunpack.c.l.b16 %v7061
        %v8170 = vunpack.c.h.b16 %v7061
        %v8171 = vunpack.c.l.b16 %v7062
        %v8172 = vunpack.c.h.b16 %v7062
        %v8173 = vunpack.c.l.b16 %v7063
        %v8174 = vunpack.c.h.b16 %v7063
        %v8175 = vunpack.c.l.b16 %v7064
        %v8176 = vunpack.c.h.b16 %v7064
        %v8177 = vunpack.c.l.b16 %v7065
        %v8178 = vunpack.c.h.b16 %v7065
        %v8179 = vunpack.c.l.b16 %v7066
        %v8180 = vunpack.c.h.b16 %v7066
        %v8181 = vunpack.c.l.b16 %v7067
        %v8182 = vunpack.c.h.b16 %v7067
        %v8183 = vunpack.c.l.b16 %v7068
        %v8184 = vunpack.c.h.b16 %v7068
        %v8185 = vunpack.c.l.b16 %v7069
        %v8186 = vunpack.c.h.b16 %v7069
        %v8187 = vunpack.c.l.b16 %v7070
        %v8188 = vunpack.c.h.b16 %v7070
        %v8189 = vunpack.c.l.b16 %v7071
        %v8190 = vunpack.c.h.b16 %v7071
        %v8191 = vunpack.c.l.b16 %v7072
        %v8192 = vunpack.c.h.b16 %v7072
        %v8193 = vunpack.c.l.b16 %v7073
        %v8194 = vunpack.c.h.b16 %v7073
        %v8195 = vunpack.c.l.b16 %v7074
        %v8196 = vunpack.c.h.b16 %v7074
        %v8197 = vunpack.c.l.b16 %v7075
        %v8198 = vunpack.c.h.b16 %v7075
        %v8199 = vunpack.c.l.b16 %v7076
        %v8200 = vunpack.c.h.b16 %v7076
        %v8201 = vunpack.c.l.b16 %v7077
        %v8202 = vunpack.c.h.b16 %v7077
        %v8203 = vunpack.c.l.b16 %v7078
        %v8204 = vunpack.c.h.b16 %v7078
        %v8205 = vunpack.c.l.b16 %v7079
        %v8206 = vunpack.c.h.b16 %v7079
        %v8207 = vunpack.c.l.b16 %v7080
        %v8208 = vunpack.c.h.b16 %v7080
        %v8209 = vunpack.c.l.b16 %v7081
        %v8210 = vunpack.c.h.b16 %v7081
        %v8211 = vunpack.c.l.b16 %v7082
        %v8212 = vunpack.c.h.b16 %v7082
        %v8213 = vunpack.c.l.b16 %v7083
        %v8214 = vunpack.c.h.b16 %v7083
        %v8215 = vunpack.c.l.b16 %v7084
        %v8216 = vunpack.c.h.b16 %v7084
        %v8217 = vunpack.c.l.b16 %v7085
        %v8218 = vunpack.c.h.b16 %v7085
        %v8219 = vunpack.c.l.b16 %v7086
        %v8220 = vunpack.c.h.b16 %v7086
        %v8221 = vunpack.c.l.b16 %v7087
        %v8222 = vunpack.c.h.b16 %v7087
        %v8223 = vunpack.c.l.b16 %v7088
        %v8224 = vunpack.c.h.b16 %v7088
        %v8225 = vunpack.c.l.b16 %v7089
        %v8226 = vunpack.c.h.b16 %v7089
        %v8227 = vunpack.c.l.b16 %v7090
        %v8228 = vunpack.c.h.b16 %v7090
        %v8229 = vunpack.c.l.b16 %v7091
        %v8230 = vunpack.c.h.b16 %v7091
        %v8231 = vunpack.c.l.b16 %v7092
        %v8232 = vunpack.c.h.b16 %v7092
        %v8233 = vunpack.c.l.b16 %v7093
        %v8234 = vunpack.c.h.b16 %v7093
        %v8235 = vunpack.c.l.b16 %v7094
        %v8236 = vunpack.c.h.b16 %v7094
        %v8237 = vunpack.c.l.b16 %v7095
        %v8238 = vunpack.c.h.b16 %v7095
        %v8239 = vunpack.c.l.b16 %v7096
        %v8240 = vunpack.c.h.b16 %v7096
        %v8241 = vunpack.c.l.b16 %v7097
        %v8242 = vunpack.c.h.b16 %v7097
        %v8243 = vunpack.c.l.b16 %v7098
        %v8244 = vunpack.c.h.b16 %v7098
        %v8245 = vunpack.c.l.b16 %v7099
        %v8246 = vunpack.c.h.b16 %v7099
        %v8247 = vunpack.c.l.b16 %v7100
        %v8248 = vunpack.c.h.b16 %v7100
        %v8249 = vunpack.c.l.b16 %v7101
        %v8250 = vunpack.c.h.b16 %v7101
        %v8251 = vunpack.c.l.b16 %v7102
        %v8252 = vunpack.c.h.b16 %v7102
        %v8253 = vunpack.c.l.b16 %v7103
        %v8254 = vunpack.c.h.b16 %v7103
        %v8255 = vunpack.c.l.b16 %v7104
        %v8256 = vunpack.c.h.b16 %v7104
        %v8257 = vunpack.c.l.b16 %v7105
        %v8258 = vunpack.c.h.b16 %v7105
        %v8259 = vunpack.c.l.b16 %v7106
        %v8260 = vunpack.c.h.b16 %v7106
        %v8261 = vunpack.c.l.b16 %v7107
        %v8262 = vunpack.c.h.b16 %v7107
        %v8263 = vunpack.c.l.b16 %v7108
        %v8264 = vunpack.c.h.b16 %v7108
        %v8265 = vunpack.c.l.b16 %v7109
        %v8266 = vunpack.c.h.b16 %v7109
        %v8267 = vunpack.c.l.b16 %v7110
        %v8268 = vunpack.c.h.b16 %v7110
        %v8269 = vunpack.c.l.b16 %v7111
        %v8270 = vunpack.c.h.b16 %v7111
        %v8271 = vunpack.c.l.b16 %v7112
        %v8272 = vunpack.c.h.b16 %v7112
        %v8273 = vunpack.c.l.b16 %v7113
        %v8274 = vunpack.c.h.b16 %v7113
        %v8275 = vunpack.c.l.b16 %v7114
        %v8276 = vunpack.c.h.b16 %v7114
        %v8277 = vunpack.c.l.b16 %v7115
        %v8278 = vunpack.c.h.b16 %v7115
        %v8279 = vunpack.c.l.b16 %v7116
        %v8280 = vunpack.c.h.b16 %v7116
        %v8281 = vunpack.c.l.b16 %v7117
        %v8282 = vunpack.c.h.b16 %v7117
        %v8283 = vunpack.c.l.b16 %v7118
        %v8284 = vunpack.c.h.b16 %v7118
        %v8285 = vunpack.c.l.b16 %v7119
        %v8286 = vunpack.c.h.b16 %v7119
        %v8287 = vunpack.c.l.b16 %v7120
        %v8288 = vunpack.c.h.b16 %v7120
        %v8289 = vunpack.c.l.b16 %v7121
        %v8290 = vunpack.c.h.b16 %v7121
        %v8291 = vunpack.c.l.b16 %v7122
        %v8292 = vunpack.c.h.b16 %v7122
        %v8293 = vunpack.c.l.b16 %v7123
        %v8294 = vunpack.c.h.b16 %v7123
        %v8295 = vunpack.c.l.b16 %v7124
        %v8296 = vunpack.c.h.b16 %v7124
        %v8297 = vunpack.c.l.b16 %v7125
        %v8298 = vunpack.c.h.b16 %v7125
        %v8299 = vunpack.c.l.b16 %v7126
        %v8300 = vunpack.c.h.b16 %v7126
        %v8301 = vunpack.c.l.b16 %v7127
        %v8302 = vunpack.c.h.b16 %v7127
        %v8303 = vunpack.c.l.b16 %v7128
        %v8304 = vunpack.c.h.b16 %v7128
        %v8305 = vunpack.c.l.b16 %v7129
        %v8306 = vunpack.c.h.b16 %v7129
        %v8307 = vunpack.c.l.b16 %v7130
        %v8308 = vunpack.c.h.b16 %v7130
        %v8309 = vunpack.c.l.b16 %v7131
        %v8310 = vunpack.c.h.b16 %v7131
        %v8311 = vunpack.c.l.b16 %v7132
        %v8312 = vunpack.c.h.b16 %v7132
        %v8313 = vunpack.c.l.b16 %v7133
        %v8314 = vunpack.c.h.b16 %v7133
        %v8315 = vunpack.c.l.b16 %v7134
        %v8316 = vunpack.c.h.b16 %v7134
        %v8317 = vunpack.c.l.b16 %v7135
        %v8318 = vunpack.c.h.b16 %v7135
        %v8319 = vunpack.c.l.b16 %v7136
        %v8320 = vunpack.c.h.b16 %v7136
        %v8321 = vunpack.c.l.b16 %v7137
        %v8322 = vunpack.c.h.b16 %v7137
        %v8323 = vunpack.c.l.b16 %v7138
        %v8324 = vunpack.c.h.b16 %v7138
        %v8325 = vunpack.c.l.b16 %v7139
        %v8326 = vunpack.c.h.b16 %v7139
        %v8327 = vunpack.c.l.b16 %v7140
        %v8328 = vunpack.c.h.b16 %v7140
        %v8329 = vunpack.c.l.b16 %v7141
        %v8330 = vunpack.c.h.b16 %v7141
        %v8331 = vunpack.c.l.b16 %v7142
        %v8332 = vunpack.c.h.b16 %v7142
        %v8333 = vunpack.c.l.b16 %v7143
        %v8334 = vunpack.c.h.b16 %v7143
        %v8335 = vunpack.c.l.b16 %v7144
        %v8336 = vunpack.c.h.b16 %v7144
        %v8337 = vunpack.c.l.b16 %v7145
        %v8338 = vunpack.c.h.b16 %v7145
        %v8339 = vunpack.c.l.b16 %v7146
        %v8340 = vunpack.c.h.b16 %v7146
        %v8341 = vunpack.c.l.b16 %v7147
        %v8342 = vunpack.c.h.b16 %v7147
        %v8343 = vunpack.c.l.b16 %v7148
        %v8344 = vunpack.c.h.b16 %v7148
        %v8345 = vunpack.c.l.b16 %v7149
        %v8346 = vunpack.c.h.b16 %v7149
        %v8347 = vunpack.c.l.b16 %v7150
        %v8348 = vunpack.c.h.b16 %v7150
        %v8349 = vunpack.c.l.b16 %v7151
        %v8350 = vunpack.c.h.b16 %v7151
        %v8351 = vunpack.c.l.b16 %v7152
        %v8352 = vunpack.c.h.b16 %v7152
        %v8353 = vunpack.c.l.b16 %v7153
        %v8354 = vunpack.c.h.b16 %v7153
        %v8355 = vunpack.c.l.b16 %v7154
        %v8356 = vunpack.c.h.b16 %v7154
        %v8357 = vunpack.c.l.b16 %v7155
        %v8358 = vunpack.c.h.b16 %v7155
        %v8359 = vunpack.c.l.b16 %v7156
        %v8360 = vunpack.c.h.b16 %v7156
        %v8361 = vunpack.c.l.b16 %v7157
        %v8362 = vunpack.c.h.b16 %v7157
        %v8363 = vunpack.c.l.b16 %v7158
        %v8364 = vunpack.c.h.b16 %v7158
        %v8365 = vunpack.c.l.b16 %v7159
        %v8366 = vunpack.c.h.b16 %v7159
        %v8367 = vunpack.c.l.b16 %v7160
        %v8368 = vunpack.c.h.b16 %v7160
        %v8369 = vunpack.c.l.b16 %v7161
        %v8370 = vunpack.c.h.b16 %v7161
        %v8371 = vunpack.c.l.b16 %v7162
        %v8372 = vunpack.c.h.b16 %v7162
        %v8373 = vunpack.c.l.b16 %v7163
        %v8374 = vunpack.c.h.b16 %v7163
        %v8375 = vunpack.c.l.b16 %v7164
        %v8376 = vunpack.c.h.b16 %v7164
        %v8377 = vunpack.c.l.b16 %v7165
        %v8378 = vunpack.c.h.b16 %v7165
        %v8379 = vunpack.c.l.b16 %v7166
        %v8380 = vunpack.c.h.b16 %v7166
        %v8381 = vunpack.c.l.b16 %v7167
        %v8382 = vunpack.c.h.b16 %v7167
        %v8383 = vunpack.c.l.b16 %v7168
        %v8384 = vunpack.c.h.b16 %v7168
        %v8385 = vunpack.c.l.b16 %v7169
        %v8386 = vunpack.c.h.b16 %v7169
        %v8387 = vunpack.c.l.b16 %v7170
        %v8388 = vunpack.c.h.b16 %v7170
        %v8389 = vunpack.c.l.b16 %v7171
        %v8390 = vunpack.c.h.b16 %v7171
        %v8391 = vunpack.c.l.b16 %v7172
        %v8392 = vunpack.c.h.b16 %v7172
        %v8393 = vunpack.c.l.b16 %v7173
        %v8394 = vunpack.c.h.b16 %v7173
        %v8395 = vunpack.c.l.b16 %v7174
        %v8396 = vunpack.c.h.b16 %v7174
        %v8397 = vunpack.c.l.b16 %v7175
        %v8398 = vunpack.c.h.b16 %v7175
        %v8399 = vunpack.c.l.b16 %v7176
        %v8400 = vunpack.c.h.b16 %v7176
        %v8401 = vunpack.c.l.b16 %v7177
        %v8402 = vunpack.c.h.b16 %v7177
        %v8403 = vunpack.c.l.b16 %v7178
        %v8404 = vunpack.c.h.b16 %v7178
        %v8405 = vunpack.c.l.b16 %v7179
        %v8406 = vunpack.c.h.b16 %v7179
        %v8407 = vunpack.c.l.b16 %v7180
        %v8408 = vunpack.c.h.b16 %v7180
        %v8409 = vunpack.c.l.b16 %v7181
        %v8410 = vunpack.c.h.b16 %v7181
        %v8411 = vunpack.c.l.b16 %v7182
        %v8412 = vunpack.c.h.b16 %v7182
        %v8413 = vunpack.c.l.b16 %v7183
        %v8414 = vunpack.c.h.b16 %v7183
        %v8415 = vunpack.c.l.b16 %v7184
        %v8416 = vunpack.c.h.b16 %v7184
        %v8417 = vunpack.c.l.b16 %v7185
        %v8418 = vunpack.c.h.b16 %v7185
        %v8419 = vunpack.c.l.b16 %v7186
        %v8420 = vunpack.c.h.b16 %v7186
        %v8421 = vunpack.c.l.b16 %v7187
        %v8422 = vunpack.c.h.b16 %v7187
        %v8423 = vunpack.c.l.b16 %v7188
        %v8424 = vunpack.c.h.b16 %v7188
        %v8425 = vunpack.c.l.b16 %v7189
        %v8426 = vunpack.c.h.b16 %v7189
        %v8427 = vunpack.c.l.b16 %v7190
        %v8428 = vunpack.c.h.b16 %v7190
        %v8429 = vunpack.c.l.b16 %v7191
        %v8430 = vunpack.c.h.b16 %v7191
        %v8431 = vunpack.c.l.b16 %v7192
        %v8432 = vunpack.c.h.b16 %v7192
        %v8433 = vunpack.c.l.b16 %v7193
        %v8434 = vunpack.c.h.b16 %v7193
        %v8435 = vunpack.c.l.b16 %v7194
        %v8436 = vunpack.c.h.b16 %v7194
        %v8437 = vunpack.c.l.b16 %v7195
        %v8438 = vunpack.c.h.b16 %v7195
        %v8439 = vunpack.c.l.b16 %v7196
        %v8440 = vunpack.c.h.b16 %v7196
        %v8441 = vunpack.c.l.b16 %v7197
        %v8442 = vunpack.c.h.b16 %v7197
        %v8443 = vunpack.c.l.b16 %v7198
        %v8444 = vunpack.c.h.b16 %v7198
        %v8445 = vunpack.c.l.b16 %v7199
        %v8446 = vunpack.c.h.b16 %v7199
        %v8447 = vunpack.c.l.b16 %v7200
        %v8448 = vunpack.c.h.b16 %v7200
        %v8449 = vunpack.c.l.b16 %v7201
        %v8450 = vunpack.c.h.b16 %v7201
        %v8451 = vunpack.c.l.b16 %v7202
        %v8452 = vunpack.c.h.b16 %v7202
        %v8453 = vunpack.c.l.b16 %v7203
        %v8454 = vunpack.c.h.b16 %v7203
        %v8455 = vunpack.c.l.b16 %v7204
        %v8456 = vunpack.c.h.b16 %v7204
        %v8457 = vunpack.c.l.b16 %v7205
        %v8458 = vunpack.c.h.b16 %v7205
        %v8459 = vunpack.c.l.b16 %v7206
        %v8460 = vunpack.c.h.b16 %v7206
        %v8461 = vunpack.c.l.b16 %v7207
        %v8462 = vunpack.c.h.b16 %v7207
        %v8463 = vunpack.c.l.b16 %v7208
        %v8464 = vunpack.c.h.b16 %v7208
        %v8465 = vunpack.c.l.b16 %v7209
        %v8466 = vunpack.c.h.b16 %v7209
        %v8467 = vunpack.c.l.b16 %v7210
        %v8468 = vunpack.c.h.b16 %v7210
        %v8469 = vunpack.c.l.b16 %v7211
        %v8470 = vunpack.c.h.b16 %v7211
        %v8471 = vunpack.c.l.b16 %v7212
        %v8472 = vunpack.c.h.b16 %v7212
        %v8473 = vunpack.c.l.b16 %v7213
        %v8474 = vunpack.c.h.b16 %v7213
        %v8475 = vunpack.c.l.b16 %v7214
        %v8476 = vunpack.c.h.b16 %v7214
        %v8477 = vunpack.c.l.b16 %v7215
        %v8478 = vunpack.c.h.b16 %v7215
        %v8479 = vunpack.c.l.b16 %v7216
        %v8480 = vunpack.c.h.b16 %v7216
        %v8481 = vunpack.c.l.b16 %v7217
        %v8482 = vunpack.c.h.b16 %v7217
        %v8483 = vunpack.c.l.b16 %v7218
        %v8484 = vunpack.c.h.b16 %v7218
        %v8485 = vunpack.c.l.b16 %v7219
        %v8486 = vunpack.c.h.b16 %v7219
        %v8487 = vunpack.c.l.b16 %v7220
        %v8488 = vunpack.c.h.b16 %v7220
        %v8489 = vunpack.c.l.b16 %v7221
        %v8490 = vunpack.c.h.b16 %v7221
        %v8491 = vunpack.c.l.b16 %v7222
        %v8492 = vunpack.c.h.b16 %v7222
        %v8493 = vunpack.c.l.b16 %v7223
        %v8494 = vunpack.c.h.b16 %v7223
        %v8495 = vunpack.c.l.b16 %v7224
        %v8496 = vunpack.c.h.b16 %v7224
        %v8497 = vunpack.c.l.b16 %v7225
        %v8498 = vunpack.c.h.b16 %v7225
        %v8499 = vunpack.c.l.b16 %v7226
        %v8500 = vunpack.c.h.b16 %v7226
        %v8501 = vunpack.c.l.b16 %v7227
        %v8502 = vunpack.c.h.b16 %v7227
        %v8503 = vunpack.c.l.b16 %v7228
        %v8504 = vunpack.c.h.b16 %v7228
        %v8505 = vunpack.c.l.b16 %v7229
        %v8506 = vunpack.c.h.b16 %v7229
        %v8507 = vunpack.c.l.b16 %v7230
        %v8508 = vunpack.c.h.b16 %v7230
        %v8509 = vunpack.c.l.b16 %v7231
        %v8510 = vunpack.c.h.b16 %v7231
        %v8511 = vunpack.c.l.b16 %v7232
        %v8512 = vunpack.c.h.b16 %v7232
        %v8513 = vunpack.c.l.b16 %v7233
        %v8514 = vunpack.c.h.b16 %v7233
        %v8515 = vunpack.c.l.b16 %v7234
        %v8516 = vunpack.c.h.b16 %v7234
        %v8517 = vunpack.c.l.b16 %v7235
        %v8518 = vunpack.c.h.b16 %v7235
        %v8519 = vunpack.c.l.b16 %v7236
        %v8520 = vunpack.c.h.b16 %v7236
        %v8521 = vunpack.c.l.b16 %v7237
        %v8522 = vunpack.c.h.b16 %v7237
        %v8523 = vunpack.c.l.b16 %v7238
        %v8524 = vunpack.c.h.b16 %v7238
        %v8525 = vunpack.c.l.b16 %v7239
        %v8526 = vunpack.c.h.b16 %v7239
        %v8527 = vunpack.c.l.b16 %v7240
        %v8528 = vunpack.c.h.b16 %v7240
        %v8529 = vunpack.c.l.b16 %v7241
        %v8530 = vunpack.c.h.b16 %v7241
        %v8531 = vunpack.c.l.b16 %v7242
        %v8532 = vunpack.c.h.b16 %v7242
        %v8533 = vunpack.c.l.b16 %v7243
        %v8534 = vunpack.c.h.b16 %v7243
        %v8535 = vunpack.c.l.b16 %v7244
        %v8536 = vunpack.c.h.b16 %v7244
        %v8537 = vunpack.c.l.b16 %v7245
        %v8538 = vunpack.c.h.b16 %v7245
        %v8539 = vunpack.c.l.b16 %v7246
        %v8540 = vunpack.c.h.b16 %v7246
        %v8541 = vunpack.c.l.b16 %v7247
        %v8542 = vunpack.c.h.b16 %v7247
        %v8543 = vunpack.c.l.b16 %v7248
        %v8544 = vunpack.c.h.b16 %v7248
        %v8545 = vunpack.c.l.b16 %v7249
        %v8546 = vunpack.c.h.b16 %v7249
        %v8547 = vunpack.c.l.b16 %v7250
        %v8548 = vunpack.c.h.b16 %v7250
        %v8549 = vunpack.c.l.b16 %v7251
        %v8550 = vunpack.c.h.b16 %v7251
        %v8551 = vunpack.c.l.b16 %v7252
        %v8552 = vunpack.c.h.b16 %v7252
        %v8553 = vunpack.c.l.b16 %v7253
        %v8554 = vunpack.c.h.b16 %v7253
        %v8555 = vunpack.c.l.b16 %v7254
        %v8556 = vunpack.c.h.b16 %v7254
        %v8557 = vunpack.c.l.b16 %v7255
        %v8558 = vunpack.c.h.b16 %v7255
        %v8559 = vunpack.c.l.b16 %v7256
        %v8560 = vunpack.c.h.b16 %v7256
        %v8561 = vunpack.c.l.b16 %v7257
        %v8562 = vunpack.c.h.b16 %v7257
        %v8563 = vunpack.c.l.b16 %v7258
        %v8564 = vunpack.c.h.b16 %v7258
        %v8565 = vunpack.c.l.b16 %v7259
        %v8566 = vunpack.c.h.b16 %v7259
        %v8567 = vunpack.c.l.b16 %v7260
        %v8568 = vunpack.c.h.b16 %v7260
        %v8569 = vunpack.c.l.b16 %v7261
        %v8570 = vunpack.c.h.b16 %v7261
        %v8571 = vunpack.c.l.b16 %v7262
        %v8572 = vunpack.c.h.b16 %v7262
        %v8573 = vunpack.c.l.b16 %v7263
        %v8574 = vunpack.c.h.b16 %v7263
        %v8575 = vunpack.c.l.b16 %v7264
        %v8576 = vunpack.c.h.b16 %v7264
        %v8577 = vunpack.c.l.b16 %v7265
        %v8578 = vunpack.c.h.b16 %v7265
        %v8579 = vunpack.c.l.b16 %v7266
        %v8580 = vunpack.c.h.b16 %v7266
        %v8581 = vunpack.c.l.b16 %v7267
        %v8582 = vunpack.c.h.b16 %v7267
        %v8583 = vunpack.c.l.b16 %v7268
        %v8584 = vunpack.c.h.b16 %v7268
        %v8585 = vunpack.c.l.b16 %v7269
        %v8586 = vunpack.c.h.b16 %v7269
        %v8587 = vunpack.c.l.b16 %v7270
        %v8588 = vunpack.c.h.b16 %v7270
        %v8589 = vunpack.c.l.b16 %v7271
        %v8590 = vunpack.c.h.b16 %v7271
        %v8591 = vunpack.c.l.b16 %v7272
        %v8592 = vunpack.c.h.b16 %v7272
        %v8593 = vunpack.c.l.b16 %v7273
        %v8594 = vunpack.c.h.b16 %v7273
        %v8595 = vunpack.c.l.b16 %v7274
        %v8596 = vunpack.c.h.b16 %v7274
        %v8597 = vunpack.c.l.b16 %v7275
        %v8598 = vunpack.c.h.b16 %v7275
        %v8599 = vunpack.c.l.b16 %v7276
        %v8600 = vunpack.c.h.b16 %v7276
        %v8601 = vunpack.c.l.b16 %v7277
        %v8602 = vunpack.c.h.b16 %v7277
        %v8603 = vunpack.c.l.b16 %v7278
        %v8604 = vunpack.c.h.b16 %v7278
        %v8605 = vunpack.c.l.b16 %v7279
        %v8606 = vunpack.c.h.b16 %v7279
        %v8607 = vunpack.c.l.b16 %v7280
        %v8608 = vunpack.c.h.b16 %v7280
        %v8609 = vunpack.c.l.b16 %v7281
        %v8610 = vunpack.c.h.b16 %v7281
        %v8611 = vunpack.c.l.b16 %v7282
        %v8612 = vunpack.c.h.b16 %v7282
        %v8613 = vunpack.c.l.b16 %v7283
        %v8614 = vunpack.c.h.b16 %v7283
        %v8615 = vunpack.c.l.b16 %v7284
        %v8616 = vunpack.c.h.b16 %v7284
        %v8617 = vunpack.c.l.b16 %v7285
        %v8618 = vunpack.c.h.b16 %v7285
        %v8619 = vunpack.c.l.b16 %v7286
        %v8620 = vunpack.c.h.b16 %v7286
        %v8621 = vunpack.c.l.b16 %v7287
        %v8622 = vunpack.c.h.b16 %v7287
        %v8623 = vunpack.c.l.b16 %v7288
        %v8624 = vunpack.c.h.b16 %v7288
        %v8625 = vunpack.c.l.b16 %v7289
        %v8626 = vunpack.c.h.b16 %v7289
        %v8627 = vunpack.c.l.b16 %v7290
        %v8628 = vunpack.c.h.b16 %v7290
        %v8629 = vunpack.c.l.b16 %v7291
        %v8630 = vunpack.c.h.b16 %v7291
        %v8631 = vunpack.c.l.b16 %v7292
        %v8632 = vunpack.c.h.b16 %v7292
        %v8633 = vunpack.c.l.b16 %v7293
        %v8634 = vunpack.c.h.b16 %v7293
        %v8635 = vunpack.c.l.b16 %v7294
        %v8636 = vunpack.c.h.b16 %v7294
        %v8637 = vunpack.c.l.b16 %v7295
        %v8638 = vunpack.c.h.b16 %v7295
        %v8639 = vunpack.c.l.b16 %v7296
        %v8640 = vunpack.c.h.b16 %v7296
        %v8641 = vunpack.c.l.b16 %v7297
        %v8642 = vunpack.c.h.b16 %v7297
        %v8643 = vunpack.c.l.b16 %v7298
        %v8644 = vunpack.c.h.b16 %v7298
        %v8645 = vunpack.c.l.b16 %v7299
        %v8646 = vunpack.c.h.b16 %v7299
        %v8647 = vunpack.c.l.b16 %v7300
        %v8648 = vunpack.c.h.b16 %v7300
        %v8649 = vunpack.c.l.b16 %v7301
        %v8650 = vunpack.c.h.b16 %v7301
        %v8651 = vunpack.c.l.b16 %v7302
        %v8652 = vunpack.c.h.b16 %v7302
        %v8653 = vunpack.c.l.b16 %v7303
        %v8654 = vunpack.c.h.b16 %v7303
        %v8655 = vunpack.c.l.b16 %v7304
        %v8656 = vunpack.c.h.b16 %v7304
        %v8657 = vunpack.c.l.b16 %v7305
        %v8658 = vunpack.c.h.b16 %v7305
        %v8659 = vunpack.c.l.b16 %v7306
        %v8660 = vunpack.c.h.b16 %v7306
        %v8661 = vunpack.c.l.b16 %v7307
        %v8662 = vunpack.c.h.b16 %v7307
        %v8663 = vunpack.c.l.b16 %v7308
        %v8664 = vunpack.c.h.b16 %v7308
        %v8665 = vunpack.c.l.b16 %v7309
        %v8666 = vunpack.c.h.b16 %v7309
        %v8667 = vunpack.c.l.b16 %v7310
        %v8668 = vunpack.c.h.b16 %v7310
        %v8669 = vunpack.c.l.b16 %v7311
        %v8670 = vunpack.c.h.b16 %v7311
        %v8671 = vunpack.c.l.b16 %v7312
        %v8672 = vunpack.c.h.b16 %v7312
        %v8673 = vunpack.c.l.b16 %v7313
        %v8674 = vunpack.c.h.b16 %v7313
        %v8675 = vunpack.c.l.b16 %v7314
        %v8676 = vunpack.c.h.b16 %v7314
        %v8677 = vunpack.c.l.b16 %v7315
        %v8678 = vunpack.c.h.b16 %v7315
        %v8679 = vunpack.c.l.b16 %v7316
        %v8680 = vunpack.c.h.b16 %v7316
        %v8681 = vunpack.c.l.b16 %v7317
        %v8682 = vunpack.c.h.b16 %v7317
        %v8683 = vunpack.c.l.b16 %v7318
        %v8684 = vunpack.c.h.b16 %v7318
        %v8685 = vunpack.c.l.b16 %v7319
        %v8686 = vunpack.c.h.b16 %v7319
        %v8687 = vunpack.c.l.b16 %v7320
        %v8688 = vunpack.c.h.b16 %v7320
        %v8689 = vunpack.c.l.b16 %v7321
        %v8690 = vunpack.c.h.b16 %v7321
        %v8691 = vunpack.c.l.b16 %v7322
        %v8692 = vunpack.c.h.b16 %v7322
        %v8693 = vunpack.c.l.b16 %v7323
        %v8694 = vunpack.c.h.b16 %v7323
        %v8695 = vunpack.c.l.b16 %v7324
        %v8696 = vunpack.c.h.b16 %v7324
        %v8697 = vunpack.c.l.b16 %v7325
        %v8698 = vunpack.c.h.b16 %v7325
        %v8699 = vunpack.c.l.b16 %v7326
        %v8700 = vunpack.c.h.b16 %v7326
        %v8701 = vunpack.c.l.b16 %v7327
        %v8702 = vunpack.c.h.b16 %v7327
        %v8703 = vunpack.c.l.b16 %v7328
        %v8704 = vunpack.c.h.b16 %v7328
        %v8705 = vunpack.c.l.b16 %v7329
        %v8706 = vunpack.c.h.b16 %v7329
        %v8707 = vunpack.c.l.b16 %v7330
        %v8708 = vunpack.c.h.b16 %v7330
        %v8709 = vunpack.c.l.b16 %v7331
        %v8710 = vunpack.c.h.b16 %v7331
        %v8711 = vunpack.c.l.b16 %v7332
        %v8712 = vunpack.c.h.b16 %v7332
        %v8713 = vunpack.c.l.b16 %v7333
        %v8714 = vunpack.c.h.b16 %v7333
        %v8715 = vunpack.c.l.b16 %v7334
        %v8716 = vunpack.c.h.b16 %v7334
        %v8717 = vunpack.c.l.b16 %v7335
        %v8718 = vunpack.c.h.b16 %v7335
        %v8719 = vunpack.c.l.b16 %v7336
        %v8720 = vunpack.c.h.b16 %v7336
        %v8721 = vunpack.c.l.b16 %v7337
        %v8722 = vunpack.c.h.b16 %v7337
        %v8723 = vunpack.c.l.b16 %v7338
        %v8724 = vunpack.c.h.b16 %v7338
        %v8725 = vunpack.c.l.b16 %v7339
        %v8726 = vunpack.c.h.b16 %v7339
        %v8727 = vunpack.c.l.b16 %v7340
        %v8728 = vunpack.c.h.b16 %v7340
        %v8729 = vunpack.c.l.b16 %v7341
        %v8730 = vunpack.c.h.b16 %v7341
        %v8731 = vunpack.c.l.b16 %v7342
        %v8732 = vunpack.c.h.b16 %v7342
        %v8733 = vunpack.c.l.b16 %v7343
        %v8734 = vunpack.c.h.b16 %v7343
        %v8735 = vunpack.c.l.b16 %v7344
        %v8736 = vunpack.c.h.b16 %v7344
        %v8737 = vunpack.c.l.b16 %v7345
        %v8738 = vunpack.c.h.b16 %v7345
        %v8739 = vunpack.c.l.b16 %v7346
        %v8740 = vunpack.c.h.b16 %v7346
        %v8741 = vunpack.c.l.b16 %v7347
        %v8742 = vunpack.c.h.b16 %v7347
        %v8743 = vunpack.c.l.b16 %v7348
        %v8744 = vunpack.c.h.b16 %v7348
        %v8745 = vunpack.c.l.b16 %v7349
        %v8746 = vunpack.c.h.b16 %v7349
        %v8747 = vunpack.c.l.b16 %v7350
        %v8748 = vunpack.c.h.b16 %v7350
        %v8749 = vunpack.c.l.b16 %v7351
        %v8750 = vunpack.c.h.b16 %v7351
        %v8751 = vunpack.c.l.b16 %v7352
        %v8752 = vunpack.c.h.b16 %v7352
        %v8753 = vunpack.c.l.b16 %v7353
        %v8754 = vunpack.c.h.b16 %v7353
        %v8755 = vunpack.c.l.b16 %v7354
        %v8756 = vunpack.c.h.b16 %v7354
        %v8757 = vunpack.c.l.b16 %v7355
        %v8758 = vunpack.c.h.b16 %v7355
        %v8759 = vunpack.c.l.b16 %v7356
        %v8760 = vunpack.c.h.b16 %v7356
        %v8761 = vunpack.c.l.b16 %v7357
        %v8762 = vunpack.c.h.b16 %v7357
        %v8763 = vunpack.c.l.b16 %v7358
        %v8764 = vunpack.c.h.b16 %v7358
        %v8765 = vunpack.c.l.b16 %v7359
        %v8766 = vunpack.c.h.b16 %v7359
        %v8767 = vunpack.c.l.b16 %v7360
        %v8768 = vunpack.c.h.b16 %v7360
        %v8769 = vunpack.c.l.b16 %v7361
        %v8770 = vunpack.c.h.b16 %v7361
        %v8771 = vunpack.c.l.b16 %v7362
        %v8772 = vunpack.c.h.b16 %v7362
        %v8773 = vunpack.c.l.b16 %v7363
        %v8774 = vunpack.c.h.b16 %v7363
        %v8775 = vunpack.c.l.b16 %v7364
        %v8776 = vunpack.c.h.b16 %v7364
        %v8777 = vunpack.c.l.b16 %v7365
        %v8778 = vunpack.c.h.b16 %v7365
        %v8779 = vunpack.c.l.b16 %v7366
        %v8780 = vunpack.c.h.b16 %v7366
        %v8781 = vunpack.c.l.b16 %v7367
        %v8782 = vunpack.c.h.b16 %v7367
        %v8783 = vunpack.c.l.b16 %v7368
        %v8784 = vunpack.c.h.b16 %v7368
        %v8785 = vunpack.c.l.b16 %v7369
        %v8786 = vunpack.c.h.b16 %v7369
        %v8787 = vunpack.c.l.b16 %v7370
        %v8788 = vunpack.c.h.b16 %v7370
        %v8789 = vunpack.c.l.b16 %v7371
        %v8790 = vunpack.c.h.b16 %v7371
        %v8791 = vunpack.c.l.b16 %v7372
        %v8792 = vunpack.c.h.b16 %v7372
        %v8793 = vunpack.c.l.b16 %v7373
        %v8794 = vunpack.c.h.b16 %v7373
        %v8795 = vunpack.c.l.b16 %v7374
        %v8796 = vunpack.c.h.b16 %v7374
        %v8797 = vunpack.c.l.b16 %v7375
        %v8798 = vunpack.c.h.b16 %v7375
        %v8799 = vunpack.c.l.b16 %v7376
        %v8800 = vunpack.c.h.b16 %v7376
        %v8801 = vunpack.c.l.b16 %v7377
        %v8802 = vunpack.c.h.b16 %v7377
        %v8803 = vunpack.c.l.b16 %v7378
        %v8804 = vunpack.c.h.b16 %v7378
        %v8805 = vunpack.c.l.b16 %v7379
        %v8806 = vunpack.c.h.b16 %v7379
        %v8807 = vunpack.c.l.b16 %v7380
        %v8808 = vunpack.c.h.b16 %v7380
        %v8809 = vunpack.c.l.b16 %v7381
        %v8810 = vunpack.c.h.b16 %v7381
        %v8811 = vunpack.c.l.b16 %v7382
        %v8812 = vunpack.c.h.b16 %v7382
        %v8813 = vunpack.c.l.b16 %v7383
        %v8814 = vunpack.c.h.b16 %v7383
        %v8815 = vunpack.c.l.b16 %v7384
        %v8816 = vunpack.c.h.b16 %v7384
        %v8817 = vunpack.c.l.b16 %v7385
        %v8818 = vunpack.c.h.b16 %v7385
        %v8819 = vunpack.c.l.b16 %v7386
        %v8820 = vunpack.c.h.b16 %v7386
        %v8821 = vunpack.c.l.b16 %v7387
        %v8822 = vunpack.c.h.b16 %v7387
        %v8823 = vunpack.c.l.b16 %v7388
        %v8824 = vunpack.c.h.b16 %v7388
        %v8825 = vunpack.c.l.b16 %v7389
        %v8826 = vunpack.c.h.b16 %v7389
        %v8827 = vunpack.c.l.b16 %v7390
        %v8828 = vunpack.c.h.b16 %v7390
        %v8829 = vunpack.c.l.b16 %v7391
        %v8830 = vunpack.c.h.b16 %v7391
        %v8831 = vunpack.c.l.b16 %v7392
        %v8832 = vunpack.c.h.b16 %v7392
        %v8833 = vunpack.c.l.b16 %v7393
        %v8834 = vunpack.c.h.b16 %v7393
        %v8835 = vunpack.c.l.b16 %v7394
        %v8836 = vunpack.c.h.b16 %v7394
        %v8837 = vunpack.c.l.b16 %v7395
        %v8838 = vunpack.c.h.b16 %v7395
        %v8839 = vunpack.c.l.b16 %v7396
        %v8840 = vunpack.c.h.b16 %v7396
        %v8841 = vunpack.c.l.b16 %v7397
        %v8842 = vunpack.c.h.b16 %v7397
        %v8843 = vunpack.c.l.b16 %v7398
        %v8844 = vunpack.c.h.b16 %v7398
        %v8845 = vunpack.c.l.b16 %v7399
        %v8846 = vunpack.c.h.b16 %v7399
        %v8847 = vunpack.c.l.b16 %v7400
        %v8848 = vunpack.c.h.b16 %v7400
        %v8849 = vunpack.c.l.b16 %v7401
        %v8850 = vunpack.c.h.b16 %v7401
        %v8851 = vunpack.c.l.b16 %v7402
        %v8852 = vunpack.c.h.b16 %v7402
        %v8853 = vunpack.c.l.b16 %v7403
        %v8854 = vunpack.c.h.b16 %v7403
        %v8855 = vunpack.c.l.b16 %v7404
        %v8856 = vunpack.c.h.b16 %v7404
        %v8857 = vunpack.c.l.b16 %v7405
        %v8858 = vunpack.c.h.b16 %v7405
        %v8859 = vunpack.c.l.b16 %v7406
        %v8860 = vunpack.c.h.b16 %v7406
        %v8861 = vunpack.c.l.b16 %v7407
        %v8862 = vunpack.c.h.b16 %v7407
        %v8863 = vunpack.c.l.b16 %v7408
        %v8864 = vunpack.c.h.b16 %v7408
        %v8865 = vunpack.c.l.b16 %v7409
        %v8866 = vunpack.c.h.b16 %v7409
        %v8867 = vunpack.c.l.b16 %v7410
        %v8868 = vunpack.c.h.b16 %v7410
        %v8869 = vunpack.c.l.b16 %v7411
        %v8870 = vunpack.c.h.b16 %v7411
        %v8871 = vunpack.c.l.b16 %v7412
        %v8872 = vunpack.c.h.b16 %v7412
        %v8873 = vunpack.c.l.b16 %v7413
        %v8874 = vunpack.c.h.b16 %v7413
        %v8875 = vunpack.c.l.b16 %v7414
        %v8876 = vunpack.c.h.b16 %v7414
        %v8877 = vunpack.c.l.b16 %v7415
        %v8878 = vunpack.c.h.b16 %v7415
        %v8879 = vunpack.c.l.b16 %v7416
        %v8880 = vunpack.c.h.b16 %v7416
        %v8881 = vunpack.c.l.b16 %v7417
        %v8882 = vunpack.c.h.b16 %v7417
        %v8883 = vunpack.c.l.b16 %v7418
        %v8884 = vunpack.c.h.b16 %v7418
        %v8885 = vunpack.c.l.b16 %v7419
        %v8886 = vunpack.c.h.b16 %v7419
        %v8887 = vunpack.c.l.b16 %v7420
        %v8888 = vunpack.c.h.b16 %v7420
        %v8889 = vunpack.c.l.b16 %v7421
        %v8890 = vunpack.c.h.b16 %v7421
        %v8891 = vunpack.c.l.b16 %v7422
        %v8892 = vunpack.c.h.b16 %v7422
        %v8893 = vunpack.c.l.b16 %v7423
        %v8894 = vunpack.c.h.b16 %v7423
        %v8895 = vunpack.c.l.b16 %v7424
        %v8896 = vunpack.c.h.b16 %v7424
        %v8897 = vunpack.c.l.b16 %v7425
        %v8898 = vunpack.c.h.b16 %v7425
        %v8899 = vunpack.c.l.b16 %v7426
        %v8900 = vunpack.c.h.b16 %v7426
        %v8901 = vunpack.c.l.b16 %v7427
        %v8902 = vunpack.c.h.b16 %v7427
        %v8903 = vunpack.c.l.b16 %v7428
        %v8904 = vunpack.c.h.b16 %v7428
        %v8905 = vunpack.c.l.b16 %v7429
        %v8906 = vunpack.c.h.b16 %v7429
        %v8907 = vunpack.c.l.b16 %v7430
        %v8908 = vunpack.c.h.b16 %v7430
        %v8909 = vunpack.c.l.b16 %v7431
        %v8910 = vunpack.c.h.b16 %v7431
        %v8911 = vunpack.c.l.b16 %v7432
        %v8912 = vunpack.c.h.b16 %v7432
        %v8913 = vunpack.c.l.b16 %v7433
        %v8914 = vunpack.c.h.b16 %v7433
        %v8915 = vunpack.c.l.b16 %v7434
        %v8916 = vunpack.c.h.b16 %v7434
        %v8917 = vunpack.c.l.b16 %v7435
        %v8918 = vunpack.c.h.b16 %v7435
        %v8919 = vunpack.c.l.b16 %v7436
        %v8920 = vunpack.c.h.b16 %v7436
        %v8921 = vunpack.c.l.b16 %v7437
        %v8922 = vunpack.c.h.b16 %v7437
        %v8923 = vunpack.c.l.b16 %v7438
        %v8924 = vunpack.c.h.b16 %v7438
        %v8925 = vunpack.c.l.b16 %v7439
        %v8926 = vunpack.c.h.b16 %v7439
        %v8927 = vunpack.c.l.b16 %v7440
        %v8928 = vunpack.c.h.b16 %v7440
        %v8929 = vunpack.c.l.b16 %v7441
        %v8930 = vunpack.c.h.b16 %v7441
        %v8931 = vunpack.c.l.b16 %v7442
        %v8932 = vunpack.c.h.b16 %v7442
        %v8933 = vunpack.c.l.b16 %v7443
        %v8934 = vunpack.c.h.b16 %v7443
        %v8935 = vunpack.c.l.b16 %v7444
        %v8936 = vunpack.c.h.b16 %v7444
        %v8937 = vunpack.c.l.b16 %v7445
        %v8938 = vunpack.c.h.b16 %v7445
        %v8939 = vunpack.c.l.b16 %v7446
        %v8940 = vunpack.c.h.b16 %v7446
        %v8941 = vunpack.c.l.b16 %v7447
        %v8942 = vunpack.c.h.b16 %v7447
        %v8943 = vunpack.c.l.b16 %v7448
        %v8944 = vunpack.c.h.b16 %v7448
        %v8945 = vunpack.c.l.b16 %v7449
        %v8946 = vunpack.c.h.b16 %v7449
        %v8947 = vunpack.c.l.b16 %v7450
        %v8948 = vunpack.c.h.b16 %v7450
        %v8949 = vunpack.c.l.b16 %v7451
        %v8950 = vunpack.c.h.b16 %v7451
        %v8951 = vunpack.c.l.b16 %v7452
        %v8952 = vunpack.c.h.b16 %v7452
        %v8953 = vunpack.c.l.b16 %v7453
        %v8954 = vunpack.c.h.b16 %v7453
        %v8955 = vunpack.c.l.b16 %v7454
        %v8956 = vunpack.c.h.b16 %v7454
        %v8957 = vunpack.c.l.b16 %v7455
        %v8958 = vunpack.c.h.b16 %v7455
        %v8959 = vunpack.c.l.b16 %v7456
        %v8960 = vunpack.c.h.b16 %v7456
        %v8961 = vunpack.c.l.b16 %v7457
        %v8962 = vunpack.c.h.b16 %v7457
        %v8963 = vunpack.c.l.b16 %v7458
        %v8964 = vunpack.c.h.b16 %v7458
        %v8965 = vunpack.c.l.b16 %v7459
        %v8966 = vunpack.c.h.b16 %v7459
        %v8967 = vunpack.c.l.b16 %v7460
        %v8968 = vunpack.c.h.b16 %v7460
        %v8969 = vunpack.c.l.b16 %v7461
        %v8970 = vunpack.c.h.b16 %v7461
        %v8971 = vunpack.c.l.b16 %v7462
        %v8972 = vunpack.c.h.b16 %v7462
        %v8973 = vunpack.c.l.b16 %v7463
        %v8974 = vunpack.c.h.b16 %v7463
        %v8975 = vunpack.c.l.b16 %v7464
        %v8976 = vunpack.c.h.b16 %v7464
        %v8977 = vunpack.c.l.b16 %v7465
        %v8978 = vunpack.c.h.b16 %v7465
        %v8979 = vunpack.c.l.b16 %v7466
        %v8980 = vunpack.c.h.b16 %v7466
        %v8981 = vunpack.c.l.b16 %v7467
        %v8982 = vunpack.c.h.b16 %v7467
        %v8983 = vunpack.c.l.b16 %v7468
        %v8984 = vunpack.c.h.b16 %v7468
        %v8985 = vunpack.c.l.b16 %v7469
        %v8986 = vunpack.c.h.b16 %v7469
        %v8987 = vunpack.c.l.b16 %v7470
        %v8988 = vunpack.c.h.b16 %v7470
        %v8989 = vunpack.c.l.b16 %v7471
        %v8990 = vunpack.c.h.b16 %v7471
        %v8991 = vunpack.c.l.b16 %v7472
        %v8992 = vunpack.c.h.b16 %v7472
        %v8993 = vunpack.c.l.b16 %v7473
        %v8994 = vunpack.c.h.b16 %v7473
        %v8995 = vunpack.c.l.b16 %v7474
        %v8996 = vunpack.c.h.b16 %v7474
        %v8997 = vunpack.c.l.b16 %v7475
        %v8998 = vunpack.c.h.b16 %v7475
        %v8999 = vunpack.c.l.b16 %v7476
        %v9000 = vunpack.c.h.b16 %v7476
        %v9001 = vunpack.c.l.b16 %v7477
        %v9002 = vunpack.c.h.b16 %v7477
        %v9003 = vunpack.c.l.b16 %v7478
        %v9004 = vunpack.c.h.b16 %v7478
        %v9005 = vunpack.c.l.b16 %v7479
        %v9006 = vunpack.c.h.b16 %v7479
        %v9007 = vunpack.c.l.b16 %v7480
        %v9008 = vunpack.c.h.b16 %v7480
        %v9009 = vunpack.c.l.b16 %v7481
        %v9010 = vunpack.c.h.b16 %v7481
        %v9011 = vunpack.c.l.b16 %v7482
        %v9012 = vunpack.c.h.b16 %v7482
        %v9013 = vunpack.c.l.b16 %v7483
        %v9014 = vunpack.c.h.b16 %v7483
        %v9015 = vunpack.c.l.b16 %v7484
        %v9016 = vunpack.c.h.b16 %v7484
        %v9017 = vunpack.c.l.b16 %v7485
        %v9018 = vunpack.c.h.b16 %v7485
        %v9019 = vunpack.c.l.b16 %v7486
        %v9020 = vunpack.c.h.b16 %v7486
        %v9021 = vunpack.c.l.b16 %v7487
        %v9022 = vunpack.c.h.b16 %v7487
        %v9023 = vunpack.c.l.b16 %v7488
        %v9024 = vunpack.c.h.b16 %v7488
        %v9025 = vunpack.c.l.b16 %v7489
        %v9026 = vunpack.c.h.b16 %v7489
        %v9027 = vunpack.c.l.b16 %v7490
        %v9028 = vunpack.c.h.b16 %v7490
        %v9029 = vunpack.c.l.b16 %v7491
        %v9030 = vunpack.c.h.b16 %v7491
        %v9031 = vunpack.c.l.b16 %v7492
        %v9032 = vunpack.c.h.b16 %v7492
        %v9033 = vunpack.c.l.b16 %v7493
        %v9034 = vunpack.c.h.b16 %v7493
        %v9035 = vunpack.c.l.b16 %v7494
        %v9036 = vunpack.c.h.b16 %v7494
        %v9037 = vunpack.c.l.b16 %v7495
        %v9038 = vunpack.c.h.b16 %v7495
        %v9039 = vunpack.c.l.b16 %v7496
        %v9040 = vunpack.c.h.b16 %v7496
        %v9041 = vunpack.c.l.b16 %v7497
        %v9042 = vunpack.c.h.b16 %v7497
        %v9043 = vunpack.c.l.b16 %v7498
        %v9044 = vunpack.c.h.b16 %v7498
        %v9045 = vunpack.c.l.b16 %v7499
        %v9046 = vunpack.c.h.b16 %v7499
        %v9047 = vunpack.c.l.b16 %v7500
        %v9048 = vunpack.c.h.b16 %v7500
        %v9049 = vunpack.c.l.b16 %v7501
        %v9050 = vunpack.c.h.b16 %v7501
        %v9051 = vunpack.c.l.b16 %v7502
        %v9052 = vunpack.c.h.b16 %v7502
        %v9053 = vunpack.c.l.b16 %v7503
        %v9054 = vunpack.c.h.b16 %v7503
        %v9055 = vunpack.c.l.b16 %v7504
        %v9056 = vunpack.c.h.b16 %v7504
        %v9057 = vunpack.c.l.b16 %v7505
        %v9058 = vunpack.c.h.b16 %v7505
        %v9059 = vunpack.c.l.b16 %v7506
        %v9060 = vunpack.c.h.b16 %v7506
        %v9061 = vunpack.c.l.b16 %v7507
        %v9062 = vunpack.c.h.b16 %v7507
        %v9063 = vunpack.c.l.b16 %v7508
        %v9064 = vunpack.c.h.b16 %v7508
        %v9065 = vunpack.c.l.b16 %v7509
        %v9066 = vunpack.c.h.b16 %v7509
        %v9067 = vpack.c.b16 %v8051, %v8043
        %v9068 = vpack.c.b16 %v8052, %v8044
        %v9069 = vpack.c.b16 %v8053, %v8045
        %v9070 = vpack.c.b16 %v8054, %v8046
        %v9071 = vpack.c.b16 %v8055, %v8047
        %v9072 = vpack.c.b16 %v8056, %v8048
        %v9073 = vpack.c.b16 %v8057, %v8049
        %v9074 = vpack.c.b16 %v8058, %v8050
        %v9075 = vpack.c.b16 %v8067, %v8059
        %v9076 = vpack.c.b16 %v8068, %v8060
        %v9077 = vpack.c.b16 %v8069, %v8061
        %v9078 = vpack.c.b16 %v8070, %v8062
        %v9079 = vpack.c.b16 %v8071, %v8063
        %v9080 = vpack.c.b16 %v8072, %v8064
        %v9081 = vpack.c.b16 %v8073, %v8065
        %v9082 = vpack.c.b16 %v8074, %v8066
        %v9083 = vpack.c.b16 %v8083, %v8075
        %v9084 = vpack.c.b16 %v8084, %v8076
        %v9085 = vpack.c.b16 %v8085, %v8077
        %v9086 = vpack.c.b16 %v8086, %v8078
        %v9087 = vpack.c.b16 %v8087, %v8079
        %v9088 = vpack.c.b16 %v8088, %v8080
        %v9089 = vpack.c.b16 %v8089, %v8081
        %v9090 = vpack.c.b16 %v8090, %v8082
        %v9091 = vpack.c.b16 %v8099, %v8091
        %v9092 = vpack.c.b16 %v8100, %v8092
        %v9093 = vpack.c.b16 %v8101, %v8093
        %v9094 = vpack.c.b16 %v8102, %v8094
        %v9095 = vpack.c.b16 %v8103, %v8095
        %v9096 = vpack.c.b16 %v8104, %v8096
        %v9097 = vpack.c.b16 %v8105, %v8097
        %v9098 = vpack.c.b16 %v8106, %v8098
        %v9099 = vpack.c.b16 %v8115, %v8107
        %v9100 = vpack.c.b16 %v8116, %v8108
        %v9101 = vpack.c.b16 %v8117, %v8109
        %v9102 = vpack.c.b16 %v8118, %v8110
        %v9103 = vpack.c.b16 %v8119, %v8111
        %v9104 = vpack.c.b16 %v8120, %v8112
        %v9105 = vpack.c.b16 %v8121, %v8113
        %v9106 = vpack.c.b16 %v8122, %v8114
        %v9107 = vpack.c.b16 %v8131, %v8123
        %v9108 = vpack.c.b16 %v8132, %v8124
        %v9109 = vpack.c.b16 %v8133, %v8125
        %v9110 = vpack.c.b16 %v8134, %v8126
        %v9111 = vpack.c.b16 %v8135, %v8127
        %v9112 = vpack.c.b16 %v8136, %v8128
        %v9113 = vpack.c.b16 %v8137, %v8129
        %v9114 = vpack.c.b16 %v8138, %v8130
        %v9115 = vpack.c.b16 %v8147, %v8139
        %v9116 = vpack.c.b16 %v8148, %v8140
        %v9117 = vpack.c.b16 %v8149, %v8141
        %v9118 = vpack.c.b16 %v8150, %v8142
        %v9119 = vpack.c.b16 %v8151, %v8143
        %v9120 = vpack.c.b16 %v8152, %v8144
        %v9121 = vpack.c.b16 %v8153, %v8145
        %v9122 = vpack.c.b16 %v8154, %v8146
        %v9123 = vpack.c.b16 %v8163, %v8155
        %v9124 = vpack.c.b16 %v8164, %v8156
        %v9125 = vpack.c.b16 %v8165, %v8157
        %v9126 = vpack.c.b16 %v8166, %v8158
        %v9127 = vpack.c.b16 %v8167, %v8159
        %v9128 = vpack.c.b16 %v8168, %v8160
        %v9129 = vpack.c.b16 %v8169, %v8161
        %v9130 = vpack.c.b16 %v8170, %v8162
        %v9131 = vpack.c.b16 %v8179, %v8171
        %v9132 = vpack.c.b16 %v8180, %v8172
        %v9133 = vpack.c.b16 %v8181, %v8173
        %v9134 = vpack.c.b16 %v8182, %v8174
        %v9135 = vpack.c.b16 %v8183, %v8175
        %v9136 = vpack.c.b16 %v8184, %v8176
        %v9137 = vpack.c.b16 %v8185, %v8177
        %v9138 = vpack.c.b16 %v8186, %v8178
        %v9139 = vpack.c.b16 %v8195, %v8187
        %v9140 = vpack.c.b16 %v8196, %v8188
        %v9141 = vpack.c.b16 %v8197, %v8189
        %v9142 = vpack.c.b16 %v8198, %v8190
        %v9143 = vpack.c.b16 %v8199, %v8191
        %v9144 = vpack.c.b16 %v8200, %v8192
        %v9145 = vpack.c.b16 %v8201, %v8193
        %v9146 = vpack.c.b16 %v8202, %v8194
        %v9147 = vpack.c.b16 %v8211, %v8203
        %v9148 = vpack.c.b16 %v8212, %v8204
        %v9149 = vpack.c.b16 %v8213, %v8205
        %v9150 = vpack.c.b16 %v8214, %v8206
        %v9151 = vpack.c.b16 %v8215, %v8207
        %v9152 = vpack.c.b16 %v8216, %v8208
        %v9153 = vpack.c.b16 %v8217, %v8209
        %v9154 = vpack.c.b16 %v8218, %v8210
        %v9155 = vpack.c.b16 %v8227, %v8219
        %v9156 = vpack.c.b16 %v8228, %v8220
        %v9157 = vpack.c.b16 %v8229, %v8221
        %v9158 = vpack.c.b16 %v8230, %v8222
        %v9159 = vpack.c.b16 %v8231, %v8223
        %v9160 = vpack.c.b16 %v8232, %v8224
        %v9161 = vpack.c.b16 %v8233, %v8225
        %v9162 = vpack.c.b16 %v8234, %v8226
        %v9163 = vpack.c.b16 %v8243, %v8235
        %v9164 = vpack.c.b16 %v8244, %v8236
        %v9165 = vpack.c.b16 %v8245, %v8237
        %v9166 = vpack.c.b16 %v8246, %v8238
        %v9167 = vpack.c.b16 %v8247, %v8239
        %v9168 = vpack.c.b16 %v8248, %v8240
        %v9169 = vpack.c.b16 %v8249, %v8241
        %v9170 = vpack.c.b16 %v8250, %v8242
        %v9171 = vpack.c.b16 %v8259, %v8251
        %v9172 = vpack.c.b16 %v8260, %v8252
        %v9173 = vpack.c.b16 %v8261, %v8253
        %v9174 = vpack.c.b16 %v8262, %v8254
        %v9175 = vpack.c.b16 %v8263, %v8255
        %v9176 = vpack.c.b16 %v8264, %v8256
        %v9177 = vpack.c.b16 %v8265, %v8257
        %v9178 = vpack.c.b16 %v8266, %v8258
        %v9179 = vpack.c.b16 %v8275, %v8267
        %v9180 = vpack.c.b16 %v8276, %v8268
        %v9181 = vpack.c.b16 %v8277, %v8269
        %v9182 = vpack.c.b16 %v8278, %v8270
        %v9183 = vpack.c.b16 %v8279, %v8271
        %v9184 = vpack.c.b16 %v8280, %v8272
        %v9185 = vpack.c.b16 %v8281, %v8273
        %v9186 = vpack.c.b16 %v8282, %v8274
        %v9187 = vpack.c.b16 %v8291, %v8283
        %v9188 = vpack.c.b16 %v8292, %v8284
        %v9189 = vpack.c.b16 %v8293, %v8285
        %v9190 = vpack.c.b16 %v8294, %v8286
        %v9191 = vpack.c.b16 %v8295, %v8287
        %v9192 = vpack.c.b16 %v8296, %v8288
        %v9193 = vpack.c.b16 %v8297, %v8289
        %v9194 = vpack.c.b16 %v8298, %v8290
        %v9195 = vpack.c.b16 %v8307, %v8299
        %v9196 = vpack.c.b16 %v8308, %v8300
        %v9197 = vpack.c.b16 %v8309, %v8301
        %v9198 = vpack.c.b16 %v8310, %v8302
        %v9199 = vpack.c.b16 %v8311, %v8303
        %v9200 = vpack.c.b16 %v8312, %v8304
        %v9201 = vpack.c.b16 %v8313, %v8305
        %v9202 = vpack.c.b16 %v8314, %v8306
        %v9203 = vpack.c.b16 %v8323, %v8315
        %v9204 = vpack.c.b16 %v8324, %v8316
        %v9205 = vpack.c.b16 %v8325, %v8317
        %v9206 = vpack.c.b16 %v8326, %v8318
        %v9207 = vpack.c.b16 %v8327, %v8319
        %v9208 = vpack.c.b16 %v8328, %v8320
        %v9209 = vpack.c.b16 %v8329, %v8321
        %v9210 = vpack.c.b16 %v8330, %v8322
        %v9211 = vpack.c.b16 %v8339, %v8331
        %v9212 = vpack.c.b16 %v8340, %v8332
        %v9213 = vpack.c.b16 %v8341, %v8333
        %v9214 = vpack.c.b16 %v8342, %v8334
        %v9215 = vpack.c.b16 %v8343, %v8335
        %v9216 = vpack.c.b16 %v8344, %v8336
        %v9217 = vpack.c.b16 %v8345, %v8337
        %v9218 = vpack.c.b16 %v8346, %v8338
        %v9219 = vpack.c.b16 %v8355, %v8347
        %v9220 = vpack.c.b16 %v8356, %v8348
        %v9221 = vpack.c.b16 %v8357, %v8349
        %v9222 = vpack.c.b16 %v8358, %v8350
        %v9223 = vpack.c.b16 %v8359, %v8351
        %v9224 = vpack.c.b16 %v8360, %v8352
        %v9225 = vpack.c.b16 %v8361, %v8353
        %v9226 = vpack.c.b16 %v8362, %v8354
        %v9227 = vpack.c.b16 %v8371, %v8363
        %v9228 = vpack.c.b16 %v8372, %v8364
        %v9229 = vpack.c.b16 %v8373, %v8365
        %v9230 = vpack.c.b16 %v8374, %v8366
        %v9231 = vpack.c.b16 %v8375, %v8367
        %v9232 = vpack.c.b16 %v8376, %v8368
        %v9233 = vpack.c.b16 %v8377, %v8369
        %v9234 = vpack.c.b16 %v8378, %v8370
        %v9235 = vpack.c.b16 %v8387, %v8379
        %v9236 = vpack.c.b16 %v8388, %v8380
        %v9237 = vpack.c.b16 %v8389, %v8381
        %v9238 = vpack.c.b16 %v8390, %v8382
        %v9239 = vpack.c.b16 %v8391, %v8383
        %v9240 = vpack.c.b16 %v8392, %v8384
        %v9241 = vpack.c.b16 %v8393, %v8385
        %v9242 = vpack.c.b16 %v8394, %v8386
        %v9243 = vpack.c.b16 %v8403, %v8395
        %v9244 = vpack.c.b16 %v8404, %v8396
        %v9245 = vpack.c.b16 %v8405, %v8397
        %v9246 = vpack.c.b16 %v8406, %v8398
        %v9247 = vpack.c.b16 %v8407, %v8399
        %v9248 = vpack.c.b16 %v8408, %v8400
        %v9249 = vpack.c.b16 %v8409, %v8401
        %v9250 = vpack.c.b16 %v8410, %v8402
        %v9251 = vpack.c.b16 %v8419, %v8411
        %v9252 = vpack.c.b16 %v8420, %v8412
        %v9253 = vpack.c.b16 %v8421, %v8413
        %v9254 = vpack.c.b16 %v8422, %v8414
        %v9255 = vpack.c.b16 %v8423, %v8415
        %v9256 = vpack.c.b16 %v8424, %v8416
        %v9257 = vpack.c.b16 %v8425, %v8417
        %v9258 = vpack.c.b16 %v8426, %v8418
        %v9259 = vpack.c.b16 %v8435, %v8427
        %v9260 = vpack.c.b16 %v8436, %v8428
        %v9261 = vpack.c.b16 %v8437, %v8429
        %v9262 = vpack.c.b16 %v8438, %v8430
        %v9263 = vpack.c.b16 %v8439, %v8431
        %v9264 = vpack.c.b16 %v8440, %v8432
        %v9265 = vpack.c.b16 %v8441, %v8433
        %v9266 = vpack.c.b16 %v8442, %v8434
        %v9267 = vpack.c.b16 %v8451, %v8443
        %v9268 = vpack.c.b16 %v8452, %v8444
        %v9269 = vpack.c.b16 %v8453, %v8445
        %v9270 = vpack.c.b16 %v8454, %v8446
        %v9271 = vpack.c.b16 %v8455, %v8447
        %v9272 = vpack.c.b16 %v8456, %v8448
        %v9273 = vpack.c.b16 %v8457, %v8449
        %v9274 = vpack.c.b16 %v8458, %v8450
        %v9275 = vpack.c.b16 %v8467, %v8459
        %v9276 = vpack.c.b16 %v8468, %v8460
        %v9277 = vpack.c.b16 %v8469, %v8461
        %v9278 = vpack.c.b16 %v8470, %v8462
        %v9279 = vpack.c.b16 %v8471, %v8463
        %v9280 = vpack.c.b16 %v8472, %v8464
        %v9281 = vpack.c.b16 %v8473, %v8465
        %v9282 = vpack.c.b16 %v8474, %v8466
        %v9283 = vpack.c.b16 %v8483, %v8475
        %v9284 = vpack.c.b16 %v8484, %v8476
        %v9285 = vpack.c.b16 %v8485, %v8477
        %v9286 = vpack.c.b16 %v8486, %v8478
        %v9287 = vpack.c.b16 %v8487, %v8479
        %v9288 = vpack.c.b16 %v8488, %v8480
        %v9289 = vpack.c.b16 %v8489, %v8481
        %v9290 = vpack.c.b16 %v8490, %v8482
        %v9291 = vpack.c.b16 %v8499, %v8491
        %v9292 = vpack.c.b16 %v8500, %v8492
        %v9293 = vpack.c.b16 %v8501, %v8493
        %v9294 = vpack.c.b16 %v8502, %v8494
        %v9295 = vpack.c.b16 %v8503, %v8495
        %v9296 = vpack.c.b16 %v8504, %v8496
        %v9297 = vpack.c.b16 %v8505, %v8497
        %v9298 = vpack.c.b16 %v8506, %v8498
        %v9299 = vpack.c.b16 %v8515, %v8507
        %v9300 = vpack.c.b16 %v8516, %v8508
        %v9301 = vpack.c.b16 %v8517, %v8509
        %v9302 = vpack.c.b16 %v8518, %v8510
        %v9303 = vpack.c.b16 %v8519, %v8511
        %v9304 = vpack.c.b16 %v8520, %v8512
        %v9305 = vpack.c.b16 %v8521, %v8513
        %v9306 = vpack.c.b16 %v8522, %v8514
        %v9307 = vpack.c.b16 %v8531, %v8523
        %v9308 = vpack.c.b16 %v8532, %v8524
        %v9309 = vpack.c.b16 %v8533, %v8525
        %v9310 = vpack.c.b16 %v8534, %v8526
        %v9311 = vpack.c.b16 %v8535, %v8527
        %v9312 = vpack.c.b16 %v8536, %v8528
        %v9313 = vpack.c.b16 %v8537, %v8529
        %v9314 = vpack.c.b16 %v8538, %v8530
        %v9315 = vpack.c.b16 %v8547, %v8539
        %v9316 = vpack.c.b16 %v8548, %v8540
        %v9317 = vpack.c.b16 %v8549, %v8541
        %v9318 = vpack.c.b16 %v8550, %v8542
        %v9319 = vpack.c.b16 %v8551, %v8543
        %v9320 = vpack.c.b16 %v8552, %v8544
        %v9321 = vpack.c.b16 %v8553, %v8545
        %v9322 = vpack.c.b16 %v8554, %v8546
        %v9323 = vpack.c.b16 %v8563, %v8555
        %v9324 = vpack.c.b16 %v8564, %v8556
        %v9325 = vpack.c.b16 %v8565, %v8557
        %v9326 = vpack.c.b16 %v8566, %v8558
        %v9327 = vpack.c.b16 %v8567, %v8559
        %v9328 = vpack.c.b16 %v8568, %v8560
        %v9329 = vpack.c.b16 %v8569, %v8561
        %v9330 = vpack.c.b16 %v8570, %v8562
        %v9331 = vpack.c.b16 %v8579, %v8571
        %v9332 = vpack.c.b16 %v8580, %v8572
        %v9333 = vpack.c.b16 %v8581, %v8573
        %v9334 = vpack.c.b16 %v8582, %v8574
        %v9335 = vpack.c.b16 %v8583, %v8575
        %v9336 = vpack.c.b16 %v8584, %v8576
        %v9337 = vpack.c.b16 %v8585, %v8577
        %v9338 = vpack.c.b16 %v8586, %v8578
        %v9339 = vpack.c.b16 %v8595, %v8587
        %v9340 = vpack.c.b16 %v8596, %v8588
        %v9341 = vpack.c.b16 %v8597, %v8589
        %v9342 = vpack.c.b16 %v8598, %v8590
        %v9343 = vpack.c.b16 %v8599, %v8591
        %v9344 = vpack.c.b16 %v8600, %v8592
        %v9345 = vpack.c.b16 %v8601, %v8593
        %v9346 = vpack.c.b16 %v8602, %v8594
        %v9347 = vpack.c.b16 %v8611, %v8603
        %v9348 = vpack.c.b16 %v8612, %v8604
        %v9349 = vpack.c.b16 %v8613, %v8605
        %v9350 = vpack.c.b16 %v8614, %v8606
        %v9351 = vpack.c.b16 %v8615, %v8607
        %v9352 = vpack.c.b16 %v8616, %v8608
        %v9353 = vpack.c.b16 %v8617, %v8609
        %v9354 = vpack.c.b16 %v8618, %v8610
        %v9355 = vpack.c.b16 %v8627, %v8619
        %v9356 = vpack.c.b16 %v8628, %v8620
        %v9357 = vpack.c.b16 %v8629, %v8621
        %v9358 = vpack.c.b16 %v8630, %v8622
        %v9359 = vpack.c.b16 %v8631, %v8623
        %v9360 = vpack.c.b16 %v8632, %v8624
        %v9361 = vpack.c.b16 %v8633, %v8625
        %v9362 = vpack.c.b16 %v8634, %v8626
        %v9363 = vpack.c.b16 %v8643, %v8635
        %v9364 = vpack.c.b16 %v8644, %v8636
        %v9365 = vpack.c.b16 %v8645, %v8637
        %v9366 = vpack.c.b16 %v8646, %v8638
        %v9367 = vpack.c.b16 %v8647, %v8639
        %v9368 = vpack.c.b16 %v8648, %v8640
        %v9369 = vpack.c.b16 %v8649, %v8641
        %v9370 = vpack.c.b16 %v8650, %v8642
        %v9371 = vpack.c.b16 %v8659, %v8651
        %v9372 = vpack.c.b16 %v8660, %v8652
        %v9373 = vpack.c.b16 %v8661, %v8653
        %v9374 = vpack.c.b16 %v8662, %v8654
        %v9375 = vpack.c.b16 %v8663, %v8655
        %v9376 = vpack.c.b16 %v8664, %v8656
        %v9377 = vpack.c.b16 %v8665, %v8657
        %v9378 = vpack.c.b16 %v8666, %v8658
        %v9379 = vpack.c.b16 %v8675, %v8667
        %v9380 = vpack.c.b16 %v8676, %v8668
        %v9381 = vpack.c.b16 %v8677, %v8669
        %v9382 = vpack.c.b16 %v8678, %v8670
        %v9383 = vpack.c.b16 %v8679, %v8671
        %v9384 = vpack.c.b16 %v8680, %v8672
        %v9385 = vpack.c.b16 %v8681, %v8673
        %v9386 = vpack.c.b16 %v8682, %v8674
        %v9387 = vpack.c.b16 %v8691, %v8683
        %v9388 = vpack.c.b16 %v8692, %v8684
        %v9389 = vpack.c.b16 %v8693, %v8685
        %v9390 = vpack.c.b16 %v8694, %v8686
        %v9391 = vpack.c.b16 %v8695, %v8687
        %v9392 = vpack.c.b16 %v8696, %v8688
        %v9393 = vpack.c.b16 %v8697, %v8689
        %v9394 = vpack.c.b16 %v8698, %v8690
        %v9395 = vpack.c.b16 %v8707, %v8699
        %v9396 = vpack.c.b16 %v8708, %v8700
        %v9397 = vpack.c.b16 %v8709, %v8701
        %v9398 = vpack.c.b16 %v8710, %v8702
        %v9399 = vpack.c.b16 %v8711, %v8703
        %v9400 = vpack.c.b16 %v8712, %v8704
        %v9401 = vpack.c.b16 %v8713, %v8705
        %v9402 = vpack.c.b16 %v8714, %v8706
        %v9403 = vpack.c.b16 %v8723, %v8715
        %v9404 = vpack.c.b16 %v8724, %v8716
        %v9405 = vpack.c.b16 %v8725, %v8717
        %v9406 = vpack.c.b16 %v8726, %v8718
        %v9407 = vpack.c.b16 %v8727, %v8719
        %v9408 = vpack.c.b16 %v8728, %v8720
        %v9409 = vpack.c.b16 %v8729, %v8721
        %v9410 = vpack.c.b16 %v8730, %v8722
        %v9411 = vpack.c.b16 %v8739, %v8731
        %v9412 = vpack.c.b16 %v8740, %v8732
        %v9413 = vpack.c.b16 %v8741, %v8733
        %v9414 = vpack.c.b16 %v8742, %v8734
        %v9415 = vpack.c.b16 %v8743, %v8735
        %v9416 = vpack.c.b16 %v8744, %v8736
        %v9417 = vpack.c.b16 %v8745, %v8737
        %v9418 = vpack.c.b16 %v8746, %v8738
        %v9419 = vpack.c.b16 %v8755, %v8747
        %v9420 = vpack.c.b16 %v8756, %v8748
        %v9421 = vpack.c.b16 %v8757, %v8749
        %v9422 = vpack.c.b16 %v8758, %v8750
        %v9423 = vpack.c.b16 %v8759, %v8751
        %v9424 = vpack.c.b16 %v8760, %v8752
        %v9425 = vpack.c.b16 %v8761, %v8753
        %v9426 = vpack.c.b16 %v8762, %v8754
        %v9427 = vpack.c.b16 %v8771, %v8763
        %v9428 = vpack.c.b16 %v8772, %v8764
        %v9429 = vpack.c.b16 %v8773, %v8765
        %v9430 = vpack.c.b16 %v8774, %v8766
        %v9431 = vpack.c.b16 %v8775, %v8767
        %v9432 = vpack.c.b16 %v8776, %v8768
        %v9433 = vpack.c.b16 %v8777, %v8769
        %v9434 = vpack.c.b16 %v8778, %v8770
        %v9435 = vpack.c.b16 %v8787, %v8779
        %v9436 = vpack.c.b16 %v8788, %v8780
        %v9437 = vpack.c.b16 %v8789, %v8781
        %v9438 = vpack.c.b16 %v8790, %v8782
        %v9439 = vpack.c.b16 %v8791, %v8783
        %v9440 = vpack.c.b16 %v8792, %v8784
        %v9441 = vpack.c.b16 %v8793, %v8785
        %v9442 = vpack.c.b16 %v8794, %v8786
        %v9443 = vpack.c.b16 %v8803, %v8795
        %v9444 = vpack.c.b16 %v8804, %v8796
        %v9445 = vpack.c.b16 %v8805, %v8797
        %v9446 = vpack.c.b16 %v8806, %v8798
        %v9447 = vpack.c.b16 %v8807, %v8799
        %v9448 = vpack.c.b16 %v8808, %v8800
        %v9449 = vpack.c.b16 %v8809, %v8801
        %v9450 = vpack.c.b16 %v8810, %v8802
        %v9451 = vpack.c.b16 %v8819, %v8811
        %v9452 = vpack.c.b16 %v8820, %v8812
        %v9453 = vpack.c.b16 %v8821, %v8813
        %v9454 = vpack.c.b16 %v8822, %v8814
        %v9455 = vpack.c.b16 %v8823, %v8815
        %v9456 = vpack.c.b16 %v8824, %v8816
        %v9457 = vpack.c.b16 %v8825, %v8817
        %v9458 = vpack.c.b16 %v8826, %v8818
        %v9459 = vpack.c.b16 %v8835, %v8827
        %v9460 = vpack.c.b16 %v8836, %v8828
        %v9461 = vpack.c.b16 %v8837, %v8829
        %v9462 = vpack.c.b16 %v8838, %v8830
        %v9463 = vpack.c.b16 %v8839, %v8831
        %v9464 = vpack.c.b16 %v8840, %v8832
        %v9465 = vpack.c.b16 %v8841, %v8833
        %v9466 = vpack.c.b16 %v8842, %v8834
        %v9467 = vpack.c.b16 %v8851, %v8843
        %v9468 = vpack.c.b16 %v8852, %v8844
        %v9469 = vpack.c.b16 %v8853, %v8845
        %v9470 = vpack.c.b16 %v8854, %v8846
        %v9471 = vpack.c.b16 %v8855, %v8847
        %v9472 = vpack.c.b16 %v8856, %v8848
        %v9473 = vpack.c.b16 %v8857, %v8849
        %v9474 = vpack.c.b16 %v8858, %v8850
        %v9475 = vpack.c.b16 %v8867, %v8859
        %v9476 = vpack.c.b16 %v8868, %v8860
        %v9477 = vpack.c.b16 %v8869, %v8861
        %v9478 = vpack.c.b16 %v8870, %v8862
        %v9479 = vpack.c.b16 %v8871, %v8863
        %v9480 = vpack.c.b16 %v8872, %v8864
        %v9481 = vpack.c.b16 %v8873, %v8865
        %v9482 = vpack.c.b16 %v8874, %v8866
        %v9483 = vpack.c.b16 %v8883, %v8875
        %v9484 = vpack.c.b16 %v8884, %v8876
        %v9485 = vpack.c.b16 %v8885, %v8877
        %v9486 = vpack.c.b16 %v8886, %v8878
        %v9487 = vpack.c.b16 %v8887, %v8879
        %v9488 = vpack.c.b16 %v8888, %v8880
        %v9489 = vpack.c.b16 %v8889, %v8881
        %v9490 = vpack.c.b16 %v8890, %v8882
        %v9491 = vpack.c.b16 %v8899, %v8891
        %v9492 = vpack.c.b16 %v8900, %v8892
        %v9493 = vpack.c.b16 %v8901, %v8893
        %v9494 = vpack.c.b16 %v8902, %v8894
        %v9495 = vpack.c.b16 %v8903, %v8895
        %v9496 = vpack.c.b16 %v8904, %v8896
        %v9497 = vpack.c.b16 %v8905, %v8897
        %v9498 = vpack.c.b16 %v8906, %v8898
        %v9499 = vpack.c.b16 %v8915, %v8907
        %v9500 = vpack.c.b16 %v8916, %v8908
        %v9501 = vpack.c.b16 %v8917, %v8909
        %v9502 = vpack.c.b16 %v8918, %v8910
        %v9503 = vpack.c.b16 %v8919, %v8911
        %v9504 = vpack.c.b16 %v8920, %v8912
        %v9505 = vpack.c.b16 %v8921, %v8913
        %v9506 = vpack.c.b16 %v8922, %v8914
        %v9507 = vpack.c.b16 %v8931, %v8923
        %v9508 = vpack.c.b16 %v8932, %v8924
        %v9509 = vpack.c.b16 %v8933, %v8925
        %v9510 = vpack.c.b16 %v8934, %v8926
        %v9511 = vpack.c.b16 %v8935, %v8927
        %v9512 = vpack.c.b16 %v8936, %v8928
        %v9513 = vpack.c.b16 %v8937, %v8929
        %v9514 = vpack.c.b16 %v8938, %v8930
        %v9515 = vpack.c.b16 %v8947, %v8939
        %v9516 = vpack.c.b16 %v8948, %v8940
        %v9517 = vpack.c.b16 %v8949, %v8941
        %v9518 = vpack.c.b16 %v8950, %v8942
        %v9519 = vpack.c.b16 %v8951, %v8943
        %v9520 = vpack.c.b16 %v8952, %v8944
        %v9521 = vpack.c.b16 %v8953, %v8945
        %v9522 = vpack.c.b16 %v8954, %v8946
        %v9523 = vpack.c.b16 %v8963, %v8955
        %v9524 = vpack.c.b16 %v8964, %v8956
        %v9525 = vpack.c.b16 %v8965, %v8957
        %v9526 = vpack.c.b16 %v8966, %v8958
        %v9527 = vpack.c.b16 %v8967, %v8959
        %v9528 = vpack.c.b16 %v8968, %v8960
        %v9529 = vpack.c.b16 %v8969, %v8961
        %v9530 = vpack.c.b16 %v8970, %v8962
        %v9531 = vpack.c.b16 %v8979, %v8971
        %v9532 = vpack.c.b16 %v8980, %v8972
        %v9533 = vpack.c.b16 %v8981, %v8973
        %v9534 = vpack.c.b16 %v8982, %v8974
        %v9535 = vpack.c.b16 %v8983, %v8975
        %v9536 = vpack.c.b16 %v8984, %v8976
        %v9537 = vpack.c.b16 %v8985, %v8977
        %v9538 = vpack.c.b16 %v8986, %v8978
        %v9539 = vpack.c.b16 %v8995, %v8987
        %v9540 = vpack.c.b16 %v8996, %v8988
        %v9541 = vpack.c.b16 %v8997, %v8989
        %v9542 = vpack.c.b16 %v8998, %v8990
        %v9543 = vpack.c.b16 %v8999, %v8991
        %v9544 = vpack.c.b16 %v9000, %v8992
        %v9545 = vpack.c.b16 %v9001, %v8993
        %v9546 = vpack.c.b16 %v9002, %v8994
        %v9547 = vpack.c.b16 %v9011, %v9003
        %v9548 = vpack.c.b16 %v9012, %v9004
        %v9549 = vpack.c.b16 %v9013, %v9005
        %v9550 = vpack.c.b16 %v9014, %v9006
        %v9551 = vpack.c.b16 %v9015, %v9007
        %v9552 = vpack.c.b16 %v9016, %v9008
        %v9553 = vpack.c.b16 %v9017, %v9009
        %v9554 = vpack.c.b16 %v9018, %v9010
        %v9555 = vpack.c.b16 %v9027, %v9019
        %v9556 = vpack.c.b16 %v9028, %v9020
        %v9557 = vpack.c.b16 %v9029, %v9021
        %v9558 = vpack.c.b16 %v9030, %v9022
        %v9559 = vpack.c.b16 %v9031, %v9023
        %v9560 = vpack.c.b16 %v9032, %v9024
        %v9561 = vpack.c.b16 %v9033, %v9025
        %v9562 = vpack.c.b16 %v9034, %v9026
        %v9563 = vpack.c.b16 %v9043, %v9035
        %v9564 = vpack.c.b16 %v9044, %v9036
        %v9565 = vpack.c.b16 %v9045, %v9037
        %v9566 = vpack.c.b16 %v9046, %v9038
        %v9567 = vpack.c.b16 %v9047, %v9039
        %v9568 = vpack.c.b16 %v9048, %v9040
        %v9569 = vpack.c.b16 %v9049, %v9041
        %v9570 = vpack.c.b16 %v9050, %v9042
        %v9571 = vpack.c.b16 %v9059, %v9051
        %v9572 = vpack.c.b16 %v9060, %v9052
        %v9573 = vpack.c.b16 %v9061, %v9053
        %v9574 = vpack.c.b16 %v9062, %v9054
        %v9575 = vpack.c.b16 %v9063, %v9055
        %v9576 = vpack.c.b16 %v9064, %v9056
        %v9577 = vpack.c.b16 %v9065, %v9057
        %v9578 = vpack.c.b16 %v9066, %v9058
        %10091 = vmatpush.bf16.msra.mxu0 %v9123
        %10092 = vmatpush.bf16.msra.mxu0 %v9115
        %10093 = vmatpush.bf16.msra.mxu0 %v9107
        %10094 = vmatpush.bf16.msra.mxu0 %v9099
        %10095 = vmatpush.bf16.msra.mxu0 %v9091
        %10096 = vmatpush.bf16.msra.mxu0 %v9083
        %10097 = vmatpush.bf16.msra.mxu0 %v9075
        %10098 = vmatpush.bf16.msra.mxu0 %v9067
        %10099 = vmatmul.bf16.gmra.mxu0 %v6990
        %v10100 = vpop.f32.mrf.mxu0
        %v10101 = vadd.f32 %v7515, %v10100
        %v10102 = vpop.f32.mrf.mxu0
        %10103 = vdwg.mxu0
        %10104 = vmatpush.bf16.msra.mxu0 %v9187
        %10105 = vmatpush.bf16.msra.mxu0 %v9179
        %10106 = vmatpush.bf16.msra.mxu0 %v9171
        %10107 = vmatpush.bf16.msra.mxu0 %v9163
        %10108 = vmatpush.bf16.msra.mxu0 %v9155
        %10109 = vmatpush.bf16.msra.mxu0 %v9147
        %10110 = vmatpush.bf16.msra.mxu0 %v9139
        %10111 = vmatpush.bf16.msra.mxu0 %v9131
        %10112 = vmatmul.bf16.gmra.mxu0 %v6991
        %v10113 = vpop.f32.mrf.mxu0
        %v10114 = vadd.f32 %v10101, %v10113
        %v10115 = vpop.f32.mrf.mxu0
        %10116 = vdwg.mxu0
        %10117 = vmatpush.bf16.msra.mxu0 %v9251
        %10118 = vmatpush.bf16.msra.mxu0 %v9243
        %10119 = vmatpush.bf16.msra.mxu0 %v9235
        %10120 = vmatpush.bf16.msra.mxu0 %v9227
        %10121 = vmatpush.bf16.msra.mxu0 %v9219
        %10122 = vmatpush.bf16.msra.mxu0 %v9211
        %10123 = vmatpush.bf16.msra.mxu0 %v9203
        %10124 = vmatpush.bf16.msra.mxu0 %v9195
        %10125 = vmatmul.bf16.gmra.mxu0 %v6992
        %v10126 = vpop.f32.mrf.mxu0
        %v10127 = vadd.f32 %v10114, %v10126
        %v10128 = vpop.f32.mrf.mxu0
        %10129 = vdwg.mxu0
        %10130 = vmatpush.bf16.msra.mxu0 %v9315
        %10131 = vmatpush.bf16.msra.mxu0 %v9307
        %10132 = vmatpush.bf16.msra.mxu0 %v9299
        %10133 = vmatpush.bf16.msra.mxu0 %v9291
        %10134 = vmatpush.bf16.msra.mxu0 %v9283
        %10135 = vmatpush.bf16.msra.mxu0 %v9275
        %10136 = vmatpush.bf16.msra.mxu0 %v9267
        %10137 = vmatpush.bf16.msra.mxu0 %v9259
        %10138 = vmatmul.bf16.gmra.mxu0 %v6993
        %v10139 = vpop.f32.mrf.mxu0
        %v10140 = vadd.f32 %v10127, %v10139
        %v10141 = vpop.f32.mrf.mxu0
        %10142 = vdwg.mxu0
        %10143 = vmatpush.bf16.msra.mxu0 %v9379
        %10144 = vmatpush.bf16.msra.mxu0 %v9371
        %10145 = vmatpush.bf16.msra.mxu0 %v9363
        %10146 = vmatpush.bf16.msra.mxu0 %v9355
        %10147 = vmatpush.bf16.msra.mxu0 %v9347
        %10148 = vmatpush.bf16.msra.mxu0 %v9339
        %10149 = vmatpush.bf16.msra.mxu0 %v9331
        %10150 = vmatpush.bf16.msra.mxu0 %v9323
        %10151 = vmatmul.bf16.gmra.mxu0 %v6994
        %v10152 = vpop.f32.mrf.mxu0
        %v10153 = vadd.f32 %v10140, %v10152
        %v10154 = vpop.f32.mrf.mxu0
        %10155 = vdwg.mxu0
        %10156 = vmatpush.bf16.msra.mxu0 %v9443
        %10157 = vmatpush.bf16.msra.mxu0 %v9435
        %10158 = vmatpush.bf16.msra.mxu0 %v9427
        %10159 = vmatpush.bf16.msra.mxu0 %v9419
        %10160 = vmatpush.bf16.msra.mxu0 %v9411
        %10161 = vmatpush.bf16.msra.mxu0 %v9403
        %10162 = vmatpush.bf16.msra.mxu0 %v9395
        %10163 = vmatpush.bf16.msra.mxu0 %v9387
        %10164 = vmatmul.bf16.gmra.mxu0 %v6995
        %v10165 = vpop.f32.mrf.mxu0
        %v10166 = vadd.f32 %v10153, %v10165
        %v10167 = vpop.f32.mrf.mxu0
        %10168 = vdwg.mxu0
        %10169 = vmatpush.bf16.msra.mxu0 %v9507
        %10170 = vmatpush.bf16.msra.mxu0 %v9499
        %10171 = vmatpush.bf16.msra.mxu0 %v9491
        %10172 = vmatpush.bf16.msra.mxu0 %v9483
        %10173 = vmatpush.bf16.msra.mxu0 %v9475
        %10174 = vmatpush.bf16.msra.mxu0 %v9467
        %10175 = vmatpush.bf16.msra.mxu0 %v9459
        %10176 = vmatpush.bf16.msra.mxu0 %v9451
        %10177 = vmatmul.bf16.gmra.mxu0 %v6996
        %v10178 = vpop.f32.mrf.mxu0
        %v10179 = vadd.f32 %v10166, %v10178
        %v10180 = vpop.f32.mrf.mxu0
        %10181 = vdwg.mxu0
        %10182 = vmatpush.bf16.msra.mxu0 %v9571
        %10183 = vmatpush.bf16.msra.mxu0 %v9563
        %10184 = vmatpush.bf16.msra.mxu0 %v9555
        %10185 = vmatpush.bf16.msra.mxu0 %v9547
        %10186 = vmatpush.bf16.msra.mxu0 %v9539
        %10187 = vmatpush.bf16.msra.mxu0 %v9531
        %10188 = vmatpush.bf16.msra.mxu0 %v9523
        %10189 = vmatpush.bf16.msra.mxu0 %v9515
        %10190 = vmatmul.bf16.gmra.mxu0 %v6997
        %v10191 = vpop.f32.mrf.mxu0
        %v10192 = vadd.f32 %v10179, %v10191
        %v10193 = vpop.f32.mrf.mxu0
        %10194 = vdwg.mxu0
        %10195 = vmatpush.bf16.msra.mxu0 %v9124
        %10196 = vmatpush.bf16.msra.mxu0 %v9116
        %10197 = vmatpush.bf16.msra.mxu0 %v9108
        %10198 = vmatpush.bf16.msra.mxu0 %v9100
        %10199 = vmatpush.bf16.msra.mxu0 %v9092
        %10200 = vmatpush.bf16.msra.mxu0 %v9084
        %10201 = vmatpush.bf16.msra.mxu0 %v9076
        %10202 = vmatpush.bf16.msra.mxu0 %v9068
        %10203 = vmatmul.bf16.gmra.mxu0 %v6990
        %v10204 = vpop.f32.mrf.mxu0
        %v10205 = vadd.f32 %v7516, %v10204
        %v10206 = vpop.f32.mrf.mxu0
        %10207 = vdwg.mxu0
        %10208 = vmatpush.bf16.msra.mxu0 %v9188
        %10209 = vmatpush.bf16.msra.mxu0 %v9180
        %10210 = vmatpush.bf16.msra.mxu0 %v9172
        %10211 = vmatpush.bf16.msra.mxu0 %v9164
        %10212 = vmatpush.bf16.msra.mxu0 %v9156
        %10213 = vmatpush.bf16.msra.mxu0 %v9148
        %10214 = vmatpush.bf16.msra.mxu0 %v9140
        %10215 = vmatpush.bf16.msra.mxu0 %v9132
        %10216 = vmatmul.bf16.gmra.mxu0 %v6991
        %v10217 = vpop.f32.mrf.mxu0
        %v10218 = vadd.f32 %v10205, %v10217
        %v10219 = vpop.f32.mrf.mxu0
        %10220 = vdwg.mxu0
        %10221 = vmatpush.bf16.msra.mxu0 %v9252
        %10222 = vmatpush.bf16.msra.mxu0 %v9244
        %10223 = vmatpush.bf16.msra.mxu0 %v9236
        %10224 = vmatpush.bf16.msra.mxu0 %v9228
        %10225 = vmatpush.bf16.msra.mxu0 %v9220
        %10226 = vmatpush.bf16.msra.mxu0 %v9212
        %10227 = vmatpush.bf16.msra.mxu0 %v9204
        %10228 = vmatpush.bf16.msra.mxu0 %v9196
        %10229 = vmatmul.bf16.gmra.mxu0 %v6992
        %v10230 = vpop.f32.mrf.mxu0
        %v10231 = vadd.f32 %v10218, %v10230
        %v10232 = vpop.f32.mrf.mxu0
        %10233 = vdwg.mxu0
        %10234 = vmatpush.bf16.msra.mxu0 %v9316
        %10235 = vmatpush.bf16.msra.mxu0 %v9308
        %10236 = vmatpush.bf16.msra.mxu0 %v9300
        %10237 = vmatpush.bf16.msra.mxu0 %v9292
        %10238 = vmatpush.bf16.msra.mxu0 %v9284
        %10239 = vmatpush.bf16.msra.mxu0 %v9276
        %10240 = vmatpush.bf16.msra.mxu0 %v9268
        %10241 = vmatpush.bf16.msra.mxu0 %v9260
        %10242 = vmatmul.bf16.gmra.mxu0 %v6993
        %v10243 = vpop.f32.mrf.mxu0
        %v10244 = vadd.f32 %v10231, %v10243
        %v10245 = vpop.f32.mrf.mxu0
        %10246 = vdwg.mxu0
        %10247 = vmatpush.bf16.msra.mxu0 %v9380
        %10248 = vmatpush.bf16.msra.mxu0 %v9372
        %10249 = vmatpush.bf16.msra.mxu0 %v9364
        %10250 = vmatpush.bf16.msra.mxu0 %v9356
        %10251 = vmatpush.bf16.msra.mxu0 %v9348
        %10252 = vmatpush.bf16.msra.mxu0 %v9340
        %10253 = vmatpush.bf16.msra.mxu0 %v9332
        %10254 = vmatpush.bf16.msra.mxu0 %v9324
        %10255 = vmatmul.bf16.gmra.mxu0 %v6994
        %v10256 = vpop.f32.mrf.mxu0
        %v10257 = vadd.f32 %v10244, %v10256
        %v10258 = vpop.f32.mrf.mxu0
        %10259 = vdwg.mxu0
        %10260 = vmatpush.bf16.msra.mxu0 %v9444
        %10261 = vmatpush.bf16.msra.mxu0 %v9436
        %10262 = vmatpush.bf16.msra.mxu0 %v9428
        %10263 = vmatpush.bf16.msra.mxu0 %v9420
        %10264 = vmatpush.bf16.msra.mxu0 %v9412
        %10265 = vmatpush.bf16.msra.mxu0 %v9404
        %10266 = vmatpush.bf16.msra.mxu0 %v9396
        %10267 = vmatpush.bf16.msra.mxu0 %v9388
        %10268 = vmatmul.bf16.gmra.mxu0 %v6995
        %v10269 = vpop.f32.mrf.mxu0
        %v10270 = vadd.f32 %v10257, %v10269
        %v10271 = vpop.f32.mrf.mxu0
        %10272 = vdwg.mxu0
        %10273 = vmatpush.bf16.msra.mxu0 %v9508
        %10274 = vmatpush.bf16.msra.mxu0 %v9500
        %10275 = vmatpush.bf16.msra.mxu0 %v9492
        %10276 = vmatpush.bf16.msra.mxu0 %v9484
        %10277 = vmatpush.bf16.msra.mxu0 %v9476
        %10278 = vmatpush.bf16.msra.mxu0 %v9468
        %10279 = vmatpush.bf16.msra.mxu0 %v9460
        %10280 = vmatpush.bf16.msra.mxu0 %v9452
        %10281 = vmatmul.bf16.gmra.mxu0 %v6996
        %v10282 = vpop.f32.mrf.mxu0
        %v10283 = vadd.f32 %v10270, %v10282
        %v10284 = vpop.f32.mrf.mxu0
        %10285 = vdwg.mxu0
        %10286 = vmatpush.bf16.msra.mxu0 %v9572
        %10287 = vmatpush.bf16.msra.mxu0 %v9564
        %10288 = vmatpush.bf16.msra.mxu0 %v9556
        %10289 = vmatpush.bf16.msra.mxu0 %v9548
        %10290 = vmatpush.bf16.msra.mxu0 %v9540
        %10291 = vmatpush.bf16.msra.mxu0 %v9532
        %10292 = vmatpush.bf16.msra.mxu0 %v9524
        %10293 = vmatpush.bf16.msra.mxu0 %v9516
        %10294 = vmatmul.bf16.gmra.mxu0 %v6997
        %v10295 = vpop.f32.mrf.mxu0
        %v10296 = vadd.f32 %v10283, %v10295
        %v10297 = vpop.f32.mrf.mxu0
        %10298 = vdwg.mxu0
        %10299 = vmatpush.bf16.msra.mxu0 %v9125
        %10300 = vmatpush.bf16.msra.mxu0 %v9117
        %10301 = vmatpush.bf16.msra.mxu0 %v9109
        %10302 = vmatpush.bf16.msra.mxu0 %v9101
        %10303 = vmatpush.bf16.msra.mxu0 %v9093
        %10304 = vmatpush.bf16.msra.mxu0 %v9085
        %10305 = vmatpush.bf16.msra.mxu0 %v9077
        %10306 = vmatpush.bf16.msra.mxu0 %v9069
        %10307 = vmatmul.bf16.gmra.mxu0 %v6990
        %v10308 = vpop.f32.mrf.mxu0
        %v10309 = vadd.f32 %v7517, %v10308
        %v10310 = vpop.f32.mrf.mxu0
        %10311 = vdwg.mxu0
        %10312 = vmatpush.bf16.msra.mxu0 %v9189
        %10313 = vmatpush.bf16.msra.mxu0 %v9181
        %10314 = vmatpush.bf16.msra.mxu0 %v9173
        %10315 = vmatpush.bf16.msra.mxu0 %v9165
        %10316 = vmatpush.bf16.msra.mxu0 %v9157
        %10317 = vmatpush.bf16.msra.mxu0 %v9149
        %10318 = vmatpush.bf16.msra.mxu0 %v9141
        %10319 = vmatpush.bf16.msra.mxu0 %v9133
        %10320 = vmatmul.bf16.gmra.mxu0 %v6991
        %v10321 = vpop.f32.mrf.mxu0
        %v10322 = vadd.f32 %v10309, %v10321
        %v10323 = vpop.f32.mrf.mxu0
        %10324 = vdwg.mxu0
        %10325 = vmatpush.bf16.msra.mxu0 %v9253
        %10326 = vmatpush.bf16.msra.mxu0 %v9245
        %10327 = vmatpush.bf16.msra.mxu0 %v9237
        %10328 = vmatpush.bf16.msra.mxu0 %v9229
        %10329 = vmatpush.bf16.msra.mxu0 %v9221
        %10330 = vmatpush.bf16.msra.mxu0 %v9213
        %10331 = vmatpush.bf16.msra.mxu0 %v9205
        %10332 = vmatpush.bf16.msra.mxu0 %v9197
        %10333 = vmatmul.bf16.gmra.mxu0 %v6992
        %v10334 = vpop.f32.mrf.mxu0
        %v10335 = vadd.f32 %v10322, %v10334
        %v10336 = vpop.f32.mrf.mxu0
        %10337 = vdwg.mxu0
        %10338 = vmatpush.bf16.msra.mxu0 %v9317
        %10339 = vmatpush.bf16.msra.mxu0 %v9309
        %10340 = vmatpush.bf16.msra.mxu0 %v9301
        %10341 = vmatpush.bf16.msra.mxu0 %v9293
        %10342 = vmatpush.bf16.msra.mxu0 %v9285
        %10343 = vmatpush.bf16.msra.mxu0 %v9277
        %10344 = vmatpush.bf16.msra.mxu0 %v9269
        %10345 = vmatpush.bf16.msra.mxu0 %v9261
        %10346 = vmatmul.bf16.gmra.mxu0 %v6993
        %v10347 = vpop.f32.mrf.mxu0
        %v10348 = vadd.f32 %v10335, %v10347
        %v10349 = vpop.f32.mrf.mxu0
        %10350 = vdwg.mxu0
        %10351 = vmatpush.bf16.msra.mxu0 %v9381
        %10352 = vmatpush.bf16.msra.mxu0 %v9373
        %10353 = vmatpush.bf16.msra.mxu0 %v9365
        %10354 = vmatpush.bf16.msra.mxu0 %v9357
        %10355 = vmatpush.bf16.msra.mxu0 %v9349
        %10356 = vmatpush.bf16.msra.mxu0 %v9341
        %10357 = vmatpush.bf16.msra.mxu0 %v9333
        %10358 = vmatpush.bf16.msra.mxu0 %v9325
        %10359 = vmatmul.bf16.gmra.mxu0 %v6994
        %v10360 = vpop.f32.mrf.mxu0
        %v10361 = vadd.f32 %v10348, %v10360
        %v10362 = vpop.f32.mrf.mxu0
        %10363 = vdwg.mxu0
        %10364 = vmatpush.bf16.msra.mxu0 %v9445
        %10365 = vmatpush.bf16.msra.mxu0 %v9437
        %10366 = vmatpush.bf16.msra.mxu0 %v9429
        %10367 = vmatpush.bf16.msra.mxu0 %v9421
        %10368 = vmatpush.bf16.msra.mxu0 %v9413
        %10369 = vmatpush.bf16.msra.mxu0 %v9405
        %10370 = vmatpush.bf16.msra.mxu0 %v9397
        %10371 = vmatpush.bf16.msra.mxu0 %v9389
        %10372 = vmatmul.bf16.gmra.mxu0 %v6995
        %v10373 = vpop.f32.mrf.mxu0
        %v10374 = vadd.f32 %v10361, %v10373
        %v10375 = vpop.f32.mrf.mxu0
        %10376 = vdwg.mxu0
        %10377 = vmatpush.bf16.msra.mxu0 %v9509
        %10378 = vmatpush.bf16.msra.mxu0 %v9501
        %10379 = vmatpush.bf16.msra.mxu0 %v9493
        %10380 = vmatpush.bf16.msra.mxu0 %v9485
        %10381 = vmatpush.bf16.msra.mxu0 %v9477
        %10382 = vmatpush.bf16.msra.mxu0 %v9469
        %10383 = vmatpush.bf16.msra.mxu0 %v9461
        %10384 = vmatpush.bf16.msra.mxu0 %v9453
        %10385 = vmatmul.bf16.gmra.mxu0 %v6996
        %v10386 = vpop.f32.mrf.mxu0
        %v10387 = vadd.f32 %v10374, %v10386
        %v10388 = vpop.f32.mrf.mxu0
        %10389 = vdwg.mxu0
        %10390 = vmatpush.bf16.msra.mxu0 %v9573
        %10391 = vmatpush.bf16.msra.mxu0 %v9565
        %10392 = vmatpush.bf16.msra.mxu0 %v9557
        %10393 = vmatpush.bf16.msra.mxu0 %v9549
        %10394 = vmatpush.bf16.msra.mxu0 %v9541
        %10395 = vmatpush.bf16.msra.mxu0 %v9533
        %10396 = vmatpush.bf16.msra.mxu0 %v9525
        %10397 = vmatpush.bf16.msra.mxu0 %v9517
        %10398 = vmatmul.bf16.gmra.mxu0 %v6997
        %v10399 = vpop.f32.mrf.mxu0
        %v10400 = vadd.f32 %v10387, %v10399
        %v10401 = vpop.f32.mrf.mxu0
        %10402 = vdwg.mxu0
        %10403 = vmatpush.bf16.msra.mxu0 %v9126
        %10404 = vmatpush.bf16.msra.mxu0 %v9118
        %10405 = vmatpush.bf16.msra.mxu0 %v9110
        %10406 = vmatpush.bf16.msra.mxu0 %v9102
        %10407 = vmatpush.bf16.msra.mxu0 %v9094
        %10408 = vmatpush.bf16.msra.mxu0 %v9086
        %10409 = vmatpush.bf16.msra.mxu0 %v9078
        %10410 = vmatpush.bf16.msra.mxu0 %v9070
        %10411 = vmatmul.bf16.gmra.mxu0 %v6990
        %v10412 = vpop.f32.mrf.mxu0
        %v10413 = vadd.f32 %v7518, %v10412
        %v10414 = vpop.f32.mrf.mxu0
        %10415 = vdwg.mxu0
        %10416 = vmatpush.bf16.msra.mxu0 %v9190
        %10417 = vmatpush.bf16.msra.mxu0 %v9182
        %10418 = vmatpush.bf16.msra.mxu0 %v9174
        %10419 = vmatpush.bf16.msra.mxu0 %v9166
        %10420 = vmatpush.bf16.msra.mxu0 %v9158
        %10421 = vmatpush.bf16.msra.mxu0 %v9150
        %10422 = vmatpush.bf16.msra.mxu0 %v9142
        %10423 = vmatpush.bf16.msra.mxu0 %v9134
        %10424 = vmatmul.bf16.gmra.mxu0 %v6991
        %v10425 = vpop.f32.mrf.mxu0
        %v10426 = vadd.f32 %v10413, %v10425
        %v10427 = vpop.f32.mrf.mxu0
        %10428 = vdwg.mxu0
        %10429 = vmatpush.bf16.msra.mxu0 %v9254
        %10430 = vmatpush.bf16.msra.mxu0 %v9246
        %10431 = vmatpush.bf16.msra.mxu0 %v9238
        %10432 = vmatpush.bf16.msra.mxu0 %v9230
        %10433 = vmatpush.bf16.msra.mxu0 %v9222
        %10434 = vmatpush.bf16.msra.mxu0 %v9214
        %10435 = vmatpush.bf16.msra.mxu0 %v9206
        %10436 = vmatpush.bf16.msra.mxu0 %v9198
        %10437 = vmatmul.bf16.gmra.mxu0 %v6992
        %v10438 = vpop.f32.mrf.mxu0
        %v10439 = vadd.f32 %v10426, %v10438
        %v10440 = vpop.f32.mrf.mxu0
        %10441 = vdwg.mxu0
        %10442 = vmatpush.bf16.msra.mxu0 %v9318
        %10443 = vmatpush.bf16.msra.mxu0 %v9310
        %10444 = vmatpush.bf16.msra.mxu0 %v9302
        %10445 = vmatpush.bf16.msra.mxu0 %v9294
        %10446 = vmatpush.bf16.msra.mxu0 %v9286
        %10447 = vmatpush.bf16.msra.mxu0 %v9278
        %10448 = vmatpush.bf16.msra.mxu0 %v9270
        %10449 = vmatpush.bf16.msra.mxu0 %v9262
        %10450 = vmatmul.bf16.gmra.mxu0 %v6993
        %v10451 = vpop.f32.mrf.mxu0
        %v10452 = vadd.f32 %v10439, %v10451
        %v10453 = vpop.f32.mrf.mxu0
        %10454 = vdwg.mxu0
        %10455 = vmatpush.bf16.msra.mxu0 %v9382
        %10456 = vmatpush.bf16.msra.mxu0 %v9374
        %10457 = vmatpush.bf16.msra.mxu0 %v9366
        %10458 = vmatpush.bf16.msra.mxu0 %v9358
        %10459 = vmatpush.bf16.msra.mxu0 %v9350
        %10460 = vmatpush.bf16.msra.mxu0 %v9342
        %10461 = vmatpush.bf16.msra.mxu0 %v9334
        %10462 = vmatpush.bf16.msra.mxu0 %v9326
        %10463 = vmatmul.bf16.gmra.mxu0 %v6994
        %v10464 = vpop.f32.mrf.mxu0
        %v10465 = vadd.f32 %v10452, %v10464
        %v10466 = vpop.f32.mrf.mxu0
        %10467 = vdwg.mxu0
        %10468 = vmatpush.bf16.msra.mxu0 %v9446
        %10469 = vmatpush.bf16.msra.mxu0 %v9438
        %10470 = vmatpush.bf16.msra.mxu0 %v9430
        %10471 = vmatpush.bf16.msra.mxu0 %v9422
        %10472 = vmatpush.bf16.msra.mxu0 %v9414
        %10473 = vmatpush.bf16.msra.mxu0 %v9406
        %10474 = vmatpush.bf16.msra.mxu0 %v9398
        %10475 = vmatpush.bf16.msra.mxu0 %v9390
        %10476 = vmatmul.bf16.gmra.mxu0 %v6995
        %v10477 = vpop.f32.mrf.mxu0
        %v10478 = vadd.f32 %v10465, %v10477
        %v10479 = vpop.f32.mrf.mxu0
        %10480 = vdwg.mxu0
        %10481 = vmatpush.bf16.msra.mxu0 %v9510
        %10482 = vmatpush.bf16.msra.mxu0 %v9502
        %10483 = vmatpush.bf16.msra.mxu0 %v9494
        %10484 = vmatpush.bf16.msra.mxu0 %v9486
        %10485 = vmatpush.bf16.msra.mxu0 %v9478
        %10486 = vmatpush.bf16.msra.mxu0 %v9470
        %10487 = vmatpush.bf16.msra.mxu0 %v9462
        %10488 = vmatpush.bf16.msra.mxu0 %v9454
        %10489 = vmatmul.bf16.gmra.mxu0 %v6996
        %v10490 = vpop.f32.mrf.mxu0
        %v10491 = vadd.f32 %v10478, %v10490
        %v10492 = vpop.f32.mrf.mxu0
        %10493 = vdwg.mxu0
        %10494 = vmatpush.bf16.msra.mxu0 %v9574
        %10495 = vmatpush.bf16.msra.mxu0 %v9566
        %10496 = vmatpush.bf16.msra.mxu0 %v9558
        %10497 = vmatpush.bf16.msra.mxu0 %v9550
        %10498 = vmatpush.bf16.msra.mxu0 %v9542
        %10499 = vmatpush.bf16.msra.mxu0 %v9534
        %10500 = vmatpush.bf16.msra.mxu0 %v9526
        %10501 = vmatpush.bf16.msra.mxu0 %v9518
        %10502 = vmatmul.bf16.gmra.mxu0 %v6997
        %v10503 = vpop.f32.mrf.mxu0
        %v10504 = vadd.f32 %v10491, %v10503
        %v10505 = vpop.f32.mrf.mxu0
        %10506 = vdwg.mxu0
        %10507 = vmatpush.bf16.msra.mxu0 %v9127
        %10508 = vmatpush.bf16.msra.mxu0 %v9119
        %10509 = vmatpush.bf16.msra.mxu0 %v9111
        %10510 = vmatpush.bf16.msra.mxu0 %v9103
        %10511 = vmatpush.bf16.msra.mxu0 %v9095
        %10512 = vmatpush.bf16.msra.mxu0 %v9087
        %10513 = vmatpush.bf16.msra.mxu0 %v9079
        %10514 = vmatpush.bf16.msra.mxu0 %v9071
        %10515 = vmatmul.bf16.gmra.mxu0 %v6990
        %v10516 = vpop.f32.mrf.mxu0
        %v10517 = vadd.f32 %v7519, %v10516
        %v10518 = vpop.f32.mrf.mxu0
        %10519 = vdwg.mxu0
        %10520 = vmatpush.bf16.msra.mxu0 %v9191
        %10521 = vmatpush.bf16.msra.mxu0 %v9183
        %10522 = vmatpush.bf16.msra.mxu0 %v9175
        %10523 = vmatpush.bf16.msra.mxu0 %v9167
        %10524 = vmatpush.bf16.msra.mxu0 %v9159
        %10525 = vmatpush.bf16.msra.mxu0 %v9151
        %10526 = vmatpush.bf16.msra.mxu0 %v9143
        %10527 = vmatpush.bf16.msra.mxu0 %v9135
        %10528 = vmatmul.bf16.gmra.mxu0 %v6991
        %v10529 = vpop.f32.mrf.mxu0
        %v10530 = vadd.f32 %v10517, %v10529
        %v10531 = vpop.f32.mrf.mxu0
        %10532 = vdwg.mxu0
        %10533 = vmatpush.bf16.msra.mxu0 %v9255
        %10534 = vmatpush.bf16.msra.mxu0 %v9247
        %10535 = vmatpush.bf16.msra.mxu0 %v9239
        %10536 = vmatpush.bf16.msra.mxu0 %v9231
        %10537 = vmatpush.bf16.msra.mxu0 %v9223
        %10538 = vmatpush.bf16.msra.mxu0 %v9215
        %10539 = vmatpush.bf16.msra.mxu0 %v9207
        %10540 = vmatpush.bf16.msra.mxu0 %v9199
        %10541 = vmatmul.bf16.gmra.mxu0 %v6992
        %v10542 = vpop.f32.mrf.mxu0
        %v10543 = vadd.f32 %v10530, %v10542
        %v10544 = vpop.f32.mrf.mxu0
        %10545 = vdwg.mxu0
        %10546 = vmatpush.bf16.msra.mxu0 %v9319
        %10547 = vmatpush.bf16.msra.mxu0 %v9311
        %10548 = vmatpush.bf16.msra.mxu0 %v9303
        %10549 = vmatpush.bf16.msra.mxu0 %v9295
        %10550 = vmatpush.bf16.msra.mxu0 %v9287
        %10551 = vmatpush.bf16.msra.mxu0 %v9279
        %10552 = vmatpush.bf16.msra.mxu0 %v9271
        %10553 = vmatpush.bf16.msra.mxu0 %v9263
        %10554 = vmatmul.bf16.gmra.mxu0 %v6993
        %v10555 = vpop.f32.mrf.mxu0
        %v10556 = vadd.f32 %v10543, %v10555
        %v10557 = vpop.f32.mrf.mxu0
        %10558 = vdwg.mxu0
        %10559 = vmatpush.bf16.msra.mxu0 %v9383
        %10560 = vmatpush.bf16.msra.mxu0 %v9375
        %10561 = vmatpush.bf16.msra.mxu0 %v9367
        %10562 = vmatpush.bf16.msra.mxu0 %v9359
        %10563 = vmatpush.bf16.msra.mxu0 %v9351
        %10564 = vmatpush.bf16.msra.mxu0 %v9343
        %10565 = vmatpush.bf16.msra.mxu0 %v9335
        %10566 = vmatpush.bf16.msra.mxu0 %v9327
        %10567 = vmatmul.bf16.gmra.mxu0 %v6994
        %v10568 = vpop.f32.mrf.mxu0
        %v10569 = vadd.f32 %v10556, %v10568
        %v10570 = vpop.f32.mrf.mxu0
        %10571 = vdwg.mxu0
        %10572 = vmatpush.bf16.msra.mxu0 %v9447
        %10573 = vmatpush.bf16.msra.mxu0 %v9439
        %10574 = vmatpush.bf16.msra.mxu0 %v9431
        %10575 = vmatpush.bf16.msra.mxu0 %v9423
        %10576 = vmatpush.bf16.msra.mxu0 %v9415
        %10577 = vmatpush.bf16.msra.mxu0 %v9407
        %10578 = vmatpush.bf16.msra.mxu0 %v9399
        %10579 = vmatpush.bf16.msra.mxu0 %v9391
        %10580 = vmatmul.bf16.gmra.mxu0 %v6995
        %v10581 = vpop.f32.mrf.mxu0
        %v10582 = vadd.f32 %v10569, %v10581
        %v10583 = vpop.f32.mrf.mxu0
        %10584 = vdwg.mxu0
        %10585 = vmatpush.bf16.msra.mxu0 %v9511
        %10586 = vmatpush.bf16.msra.mxu0 %v9503
        %10587 = vmatpush.bf16.msra.mxu0 %v9495
        %10588 = vmatpush.bf16.msra.mxu0 %v9487
        %10589 = vmatpush.bf16.msra.mxu0 %v9479
        %10590 = vmatpush.bf16.msra.mxu0 %v9471
        %10591 = vmatpush.bf16.msra.mxu0 %v9463
        %10592 = vmatpush.bf16.msra.mxu0 %v9455
        %10593 = vmatmul.bf16.gmra.mxu0 %v6996
        %v10594 = vpop.f32.mrf.mxu0
        %v10595 = vadd.f32 %v10582, %v10594
        %v10596 = vpop.f32.mrf.mxu0
        %10597 = vdwg.mxu0
        %10598 = vmatpush.bf16.msra.mxu0 %v9575
        %10599 = vmatpush.bf16.msra.mxu0 %v9567
        %10600 = vmatpush.bf16.msra.mxu0 %v9559
        %10601 = vmatpush.bf16.msra.mxu0 %v9551
        %10602 = vmatpush.bf16.msra.mxu0 %v9543
        %10603 = vmatpush.bf16.msra.mxu0 %v9535
        %10604 = vmatpush.bf16.msra.mxu0 %v9527
        %10605 = vmatpush.bf16.msra.mxu0 %v9519
        %10606 = vmatmul.bf16.gmra.mxu0 %v6997
        %v10607 = vpop.f32.mrf.mxu0
        %v10608 = vadd.f32 %v10595, %v10607
        %v10609 = vpop.f32.mrf.mxu0
        %10610 = vdwg.mxu0
        %10611 = vmatpush.bf16.msra.mxu0 %v9128
        %10612 = vmatpush.bf16.msra.mxu0 %v9120
        %10613 = vmatpush.bf16.msra.mxu0 %v9112
        %10614 = vmatpush.bf16.msra.mxu0 %v9104
        %10615 = vmatpush.bf16.msra.mxu0 %v9096
        %10616 = vmatpush.bf16.msra.mxu0 %v9088
        %10617 = vmatpush.bf16.msra.mxu0 %v9080
        %10618 = vmatpush.bf16.msra.mxu0 %v9072
        %10619 = vmatmul.bf16.gmra.mxu0 %v6990
        %v10620 = vpop.f32.mrf.mxu0
        %v10621 = vadd.f32 %v7520, %v10620
        %v10622 = vpop.f32.mrf.mxu0
        %10623 = vdwg.mxu0
        %10624 = vmatpush.bf16.msra.mxu0 %v9192
        %10625 = vmatpush.bf16.msra.mxu0 %v9184
        %10626 = vmatpush.bf16.msra.mxu0 %v9176
        %10627 = vmatpush.bf16.msra.mxu0 %v9168
        %10628 = vmatpush.bf16.msra.mxu0 %v9160
        %10629 = vmatpush.bf16.msra.mxu0 %v9152
        %10630 = vmatpush.bf16.msra.mxu0 %v9144
        %10631 = vmatpush.bf16.msra.mxu0 %v9136
        %10632 = vmatmul.bf16.gmra.mxu0 %v6991
        %v10633 = vpop.f32.mrf.mxu0
        %v10634 = vadd.f32 %v10621, %v10633
        %v10635 = vpop.f32.mrf.mxu0
        %10636 = vdwg.mxu0
        %10637 = vmatpush.bf16.msra.mxu0 %v9256
        %10638 = vmatpush.bf16.msra.mxu0 %v9248
        %10639 = vmatpush.bf16.msra.mxu0 %v9240
        %10640 = vmatpush.bf16.msra.mxu0 %v9232
        %10641 = vmatpush.bf16.msra.mxu0 %v9224
        %10642 = vmatpush.bf16.msra.mxu0 %v9216
        %10643 = vmatpush.bf16.msra.mxu0 %v9208
        %10644 = vmatpush.bf16.msra.mxu0 %v9200
        %10645 = vmatmul.bf16.gmra.mxu0 %v6992
        %v10646 = vpop.f32.mrf.mxu0
        %v10647 = vadd.f32 %v10634, %v10646
        %v10648 = vpop.f32.mrf.mxu0
        %10649 = vdwg.mxu0
        %10650 = vmatpush.bf16.msra.mxu0 %v9320
        %10651 = vmatpush.bf16.msra.mxu0 %v9312
        %10652 = vmatpush.bf16.msra.mxu0 %v9304
        %10653 = vmatpush.bf16.msra.mxu0 %v9296
        %10654 = vmatpush.bf16.msra.mxu0 %v9288
        %10655 = vmatpush.bf16.msra.mxu0 %v9280
        %10656 = vmatpush.bf16.msra.mxu0 %v9272
        %10657 = vmatpush.bf16.msra.mxu0 %v9264
        %10658 = vmatmul.bf16.gmra.mxu0 %v6993
        %v10659 = vpop.f32.mrf.mxu0
        %v10660 = vadd.f32 %v10647, %v10659
        %v10661 = vpop.f32.mrf.mxu0
        %10662 = vdwg.mxu0
        %10663 = vmatpush.bf16.msra.mxu0 %v9384
        %10664 = vmatpush.bf16.msra.mxu0 %v9376
        %10665 = vmatpush.bf16.msra.mxu0 %v9368
        %10666 = vmatpush.bf16.msra.mxu0 %v9360
        %10667 = vmatpush.bf16.msra.mxu0 %v9352
        %10668 = vmatpush.bf16.msra.mxu0 %v9344
        %10669 = vmatpush.bf16.msra.mxu0 %v9336
        %10670 = vmatpush.bf16.msra.mxu0 %v9328
        %10671 = vmatmul.bf16.gmra.mxu0 %v6994
        %v10672 = vpop.f32.mrf.mxu0
        %v10673 = vadd.f32 %v10660, %v10672
        %v10674 = vpop.f32.mrf.mxu0
        %10675 = vdwg.mxu0
        %10676 = vmatpush.bf16.msra.mxu0 %v9448
        %10677 = vmatpush.bf16.msra.mxu0 %v9440
        %10678 = vmatpush.bf16.msra.mxu0 %v9432
        %10679 = vmatpush.bf16.msra.mxu0 %v9424
        %10680 = vmatpush.bf16.msra.mxu0 %v9416
        %10681 = vmatpush.bf16.msra.mxu0 %v9408
        %10682 = vmatpush.bf16.msra.mxu0 %v9400
        %10683 = vmatpush.bf16.msra.mxu0 %v9392
        %10684 = vmatmul.bf16.gmra.mxu0 %v6995
        %v10685 = vpop.f32.mrf.mxu0
        %v10686 = vadd.f32 %v10673, %v10685
        %v10687 = vpop.f32.mrf.mxu0
        %10688 = vdwg.mxu0
        %10689 = vmatpush.bf16.msra.mxu0 %v9512
        %10690 = vmatpush.bf16.msra.mxu0 %v9504
        %10691 = vmatpush.bf16.msra.mxu0 %v9496
        %10692 = vmatpush.bf16.msra.mxu0 %v9488
        %10693 = vmatpush.bf16.msra.mxu0 %v9480
        %10694 = vmatpush.bf16.msra.mxu0 %v9472
        %10695 = vmatpush.bf16.msra.mxu0 %v9464
        %10696 = vmatpush.bf16.msra.mxu0 %v9456
        %10697 = vmatmul.bf16.gmra.mxu0 %v6996
        %v10698 = vpop.f32.mrf.mxu0
        %v10699 = vadd.f32 %v10686, %v10698
        %v10700 = vpop.f32.mrf.mxu0
        %10701 = vdwg.mxu0
        %10702 = vmatpush.bf16.msra.mxu0 %v9576
        %10703 = vmatpush.bf16.msra.mxu0 %v9568
        %10704 = vmatpush.bf16.msra.mxu0 %v9560
        %10705 = vmatpush.bf16.msra.mxu0 %v9552
        %10706 = vmatpush.bf16.msra.mxu0 %v9544
        %10707 = vmatpush.bf16.msra.mxu0 %v9536
        %10708 = vmatpush.bf16.msra.mxu0 %v9528
        %10709 = vmatpush.bf16.msra.mxu0 %v9520
        %10710 = vmatmul.bf16.gmra.mxu0 %v6997
        %v10711 = vpop.f32.mrf.mxu0
        %v10712 = vadd.f32 %v10699, %v10711
        %v10713 = vpop.f32.mrf.mxu0
        %10714 = vdwg.mxu0
        %10715 = vmatpush.bf16.msra.mxu0 %v9129
        %10716 = vmatpush.bf16.msra.mxu0 %v9121
        %10717 = vmatpush.bf16.msra.mxu0 %v9113
        %10718 = vmatpush.bf16.msra.mxu0 %v9105
        %10719 = vmatpush.bf16.msra.mxu0 %v9097
        %10720 = vmatpush.bf16.msra.mxu0 %v9089
        %10721 = vmatpush.bf16.msra.mxu0 %v9081
        %10722 = vmatpush.bf16.msra.mxu0 %v9073
        %10723 = vmatmul.bf16.gmra.mxu0 %v6990
        %v10724 = vpop.f32.mrf.mxu0
        %v10725 = vadd.f32 %v7521, %v10724
        %v10726 = vpop.f32.mrf.mxu0
        %10727 = vdwg.mxu0
        %10728 = vmatpush.bf16.msra.mxu0 %v9193
        %10729 = vmatpush.bf16.msra.mxu0 %v9185
        %10730 = vmatpush.bf16.msra.mxu0 %v9177
        %10731 = vmatpush.bf16.msra.mxu0 %v9169
        %10732 = vmatpush.bf16.msra.mxu0 %v9161
        %10733 = vmatpush.bf16.msra.mxu0 %v9153
        %10734 = vmatpush.bf16.msra.mxu0 %v9145
        %10735 = vmatpush.bf16.msra.mxu0 %v9137
        %10736 = vmatmul.bf16.gmra.mxu0 %v6991
        %v10737 = vpop.f32.mrf.mxu0
        %v10738 = vadd.f32 %v10725, %v10737
        %v10739 = vpop.f32.mrf.mxu0
        %10740 = vdwg.mxu0
        %10741 = vmatpush.bf16.msra.mxu0 %v9257
        %10742 = vmatpush.bf16.msra.mxu0 %v9249
        %10743 = vmatpush.bf16.msra.mxu0 %v9241
        %10744 = vmatpush.bf16.msra.mxu0 %v9233
        %10745 = vmatpush.bf16.msra.mxu0 %v9225
        %10746 = vmatpush.bf16.msra.mxu0 %v9217
        %10747 = vmatpush.bf16.msra.mxu0 %v9209
        %10748 = vmatpush.bf16.msra.mxu0 %v9201
        %10749 = vmatmul.bf16.gmra.mxu0 %v6992
        %v10750 = vpop.f32.mrf.mxu0
        %v10751 = vadd.f32 %v10738, %v10750
        %v10752 = vpop.f32.mrf.mxu0
        %10753 = vdwg.mxu0
        %10754 = vmatpush.bf16.msra.mxu0 %v9321
        %10755 = vmatpush.bf16.msra.mxu0 %v9313
        %10756 = vmatpush.bf16.msra.mxu0 %v9305
        %10757 = vmatpush.bf16.msra.mxu0 %v9297
        %10758 = vmatpush.bf16.msra.mxu0 %v9289
        %10759 = vmatpush.bf16.msra.mxu0 %v9281
        %10760 = vmatpush.bf16.msra.mxu0 %v9273
        %10761 = vmatpush.bf16.msra.mxu0 %v9265
        %10762 = vmatmul.bf16.gmra.mxu0 %v6993
        %v10763 = vpop.f32.mrf.mxu0
        %v10764 = vadd.f32 %v10751, %v10763
        %v10765 = vpop.f32.mrf.mxu0
        %10766 = vdwg.mxu0
        %10767 = vmatpush.bf16.msra.mxu0 %v9385
        %10768 = vmatpush.bf16.msra.mxu0 %v9377
        %10769 = vmatpush.bf16.msra.mxu0 %v9369
        %10770 = vmatpush.bf16.msra.mxu0 %v9361
        %10771 = vmatpush.bf16.msra.mxu0 %v9353
        %10772 = vmatpush.bf16.msra.mxu0 %v9345
        %10773 = vmatpush.bf16.msra.mxu0 %v9337
        %10774 = vmatpush.bf16.msra.mxu0 %v9329
        %10775 = vmatmul.bf16.gmra.mxu0 %v6994
        %v10776 = vpop.f32.mrf.mxu0
        %v10777 = vadd.f32 %v10764, %v10776
        %v10778 = vpop.f32.mrf.mxu0
        %10779 = vdwg.mxu0
        %10780 = vmatpush.bf16.msra.mxu0 %v9449
        %10781 = vmatpush.bf16.msra.mxu0 %v9441
        %10782 = vmatpush.bf16.msra.mxu0 %v9433
        %10783 = vmatpush.bf16.msra.mxu0 %v9425
        %10784 = vmatpush.bf16.msra.mxu0 %v9417
        %10785 = vmatpush.bf16.msra.mxu0 %v9409
        %10786 = vmatpush.bf16.msra.mxu0 %v9401
        %10787 = vmatpush.bf16.msra.mxu0 %v9393
        %10788 = vmatmul.bf16.gmra.mxu0 %v6995
        %v10789 = vpop.f32.mrf.mxu0
        %v10790 = vadd.f32 %v10777, %v10789
        %v10791 = vpop.f32.mrf.mxu0
        %10792 = vdwg.mxu0
        %10793 = vmatpush.bf16.msra.mxu0 %v9513
        %10794 = vmatpush.bf16.msra.mxu0 %v9505
        %10795 = vmatpush.bf16.msra.mxu0 %v9497
        %10796 = vmatpush.bf16.msra.mxu0 %v9489
        %10797 = vmatpush.bf16.msra.mxu0 %v9481
        %10798 = vmatpush.bf16.msra.mxu0 %v9473
        %10799 = vmatpush.bf16.msra.mxu0 %v9465
        %10800 = vmatpush.bf16.msra.mxu0 %v9457
        %10801 = vmatmul.bf16.gmra.mxu0 %v6996
        %v10802 = vpop.f32.mrf.mxu0
        %v10803 = vadd.f32 %v10790, %v10802
        %v10804 = vpop.f32.mrf.mxu0
        %10805 = vdwg.mxu0
        %10806 = vmatpush.bf16.msra.mxu0 %v9577
        %10807 = vmatpush.bf16.msra.mxu0 %v9569
        %10808 = vmatpush.bf16.msra.mxu0 %v9561
        %10809 = vmatpush.bf16.msra.mxu0 %v9553
        %10810 = vmatpush.bf16.msra.mxu0 %v9545
        %10811 = vmatpush.bf16.msra.mxu0 %v9537
        %10812 = vmatpush.bf16.msra.mxu0 %v9529
        %10813 = vmatpush.bf16.msra.mxu0 %v9521
        %10814 = vmatmul.bf16.gmra.mxu0 %v6997
        %v10815 = vpop.f32.mrf.mxu0
        %v10816 = vadd.f32 %v10803, %v10815
        %v10817 = vpop.f32.mrf.mxu0
        %10818 = vdwg.mxu0
        %10819 = vmatpush.bf16.msra.mxu0 %v9130
        %10820 = vmatpush.bf16.msra.mxu0 %v9122
        %10821 = vmatpush.bf16.msra.mxu0 %v9114
        %10822 = vmatpush.bf16.msra.mxu0 %v9106
        %10823 = vmatpush.bf16.msra.mxu0 %v9098
        %10824 = vmatpush.bf16.msra.mxu0 %v9090
        %10825 = vmatpush.bf16.msra.mxu0 %v9082
        %10826 = vmatpush.bf16.msra.mxu0 %v9074
        %10827 = vmatmul.bf16.gmra.mxu0 %v6990
        %v10828 = vpop.f32.mrf.mxu0
        %v10829 = vadd.f32 %v7522, %v10828
        %v10830 = vpop.f32.mrf.mxu0
        %10831 = vdwg.mxu0
        %10832 = vmatpush.bf16.msra.mxu0 %v9194
        %10833 = vmatpush.bf16.msra.mxu0 %v9186
        %10834 = vmatpush.bf16.msra.mxu0 %v9178
        %10835 = vmatpush.bf16.msra.mxu0 %v9170
        %10836 = vmatpush.bf16.msra.mxu0 %v9162
        %10837 = vmatpush.bf16.msra.mxu0 %v9154
        %10838 = vmatpush.bf16.msra.mxu0 %v9146
        %10839 = vmatpush.bf16.msra.mxu0 %v9138
        %10840 = vmatmul.bf16.gmra.mxu0 %v6991
        %v10841 = vpop.f32.mrf.mxu0
        %v10842 = vadd.f32 %v10829, %v10841
        %v10843 = vpop.f32.mrf.mxu0
        %10844 = vdwg.mxu0
        %10845 = vmatpush.bf16.msra.mxu0 %v9258
        %10846 = vmatpush.bf16.msra.mxu0 %v9250
        %10847 = vmatpush.bf16.msra.mxu0 %v9242
        %10848 = vmatpush.bf16.msra.mxu0 %v9234
        %10849 = vmatpush.bf16.msra.mxu0 %v9226
        %10850 = vmatpush.bf16.msra.mxu0 %v9218
        %10851 = vmatpush.bf16.msra.mxu0 %v9210
        %10852 = vmatpush.bf16.msra.mxu0 %v9202
        %10853 = vmatmul.bf16.gmra.mxu0 %v6992
        %v10854 = vpop.f32.mrf.mxu0
        %v10855 = vadd.f32 %v10842, %v10854
        %v10856 = vpop.f32.mrf.mxu0
        %10857 = vdwg.mxu0
        %10858 = vmatpush.bf16.msra.mxu0 %v9322
        %10859 = vmatpush.bf16.msra.mxu0 %v9314
        %10860 = vmatpush.bf16.msra.mxu0 %v9306
        %10861 = vmatpush.bf16.msra.mxu0 %v9298
        %10862 = vmatpush.bf16.msra.mxu0 %v9290
        %10863 = vmatpush.bf16.msra.mxu0 %v9282
        %10864 = vmatpush.bf16.msra.mxu0 %v9274
        %10865 = vmatpush.bf16.msra.mxu0 %v9266
        %10866 = vmatmul.bf16.gmra.mxu0 %v6993
        %v10867 = vpop.f32.mrf.mxu0
        %v10868 = vadd.f32 %v10855, %v10867
        %v10869 = vpop.f32.mrf.mxu0
        %10870 = vdwg.mxu0
        %10871 = vmatpush.bf16.msra.mxu0 %v9386
        %10872 = vmatpush.bf16.msra.mxu0 %v9378
        %10873 = vmatpush.bf16.msra.mxu0 %v9370
        %10874 = vmatpush.bf16.msra.mxu0 %v9362
        %10875 = vmatpush.bf16.msra.mxu0 %v9354
        %10876 = vmatpush.bf16.msra.mxu0 %v9346
        %10877 = vmatpush.bf16.msra.mxu0 %v9338
        %10878 = vmatpush.bf16.msra.mxu0 %v9330
        %10879 = vmatmul.bf16.gmra.mxu0 %v6994
        %v10880 = vpop.f32.mrf.mxu0
        %v10881 = vadd.f32 %v10868, %v10880
        %v10882 = vpop.f32.mrf.mxu0
        %10883 = vdwg.mxu0
        %10884 = vmatpush.bf16.msra.mxu0 %v9450
        %10885 = vmatpush.bf16.msra.mxu0 %v9442
        %10886 = vmatpush.bf16.msra.mxu0 %v9434
        %10887 = vmatpush.bf16.msra.mxu0 %v9426
        %10888 = vmatpush.bf16.msra.mxu0 %v9418
        %10889 = vmatpush.bf16.msra.mxu0 %v9410
        %10890 = vmatpush.bf16.msra.mxu0 %v9402
        %10891 = vmatpush.bf16.msra.mxu0 %v9394
        %10892 = vmatmul.bf16.gmra.mxu0 %v6995
        %v10893 = vpop.f32.mrf.mxu0
        %v10894 = vadd.f32 %v10881, %v10893
        %v10895 = vpop.f32.mrf.mxu0
        %10896 = vdwg.mxu0
        %10897 = vmatpush.bf16.msra.mxu0 %v9514
        %10898 = vmatpush.bf16.msra.mxu0 %v9506
        %10899 = vmatpush.bf16.msra.mxu0 %v9498
        %10900 = vmatpush.bf16.msra.mxu0 %v9490
        %10901 = vmatpush.bf16.msra.mxu0 %v9482
        %10902 = vmatpush.bf16.msra.mxu0 %v9474
        %10903 = vmatpush.bf16.msra.mxu0 %v9466
        %10904 = vmatpush.bf16.msra.mxu0 %v9458
        %10905 = vmatmul.bf16.gmra.mxu0 %v6996
        %v10906 = vpop.f32.mrf.mxu0
        %v10907 = vadd.f32 %v10894, %v10906
        %v10908 = vpop.f32.mrf.mxu0
        %10909 = vdwg.mxu0
        %10910 = vmatpush.bf16.msra.mxu0 %v9578
        %10911 = vmatpush.bf16.msra.mxu0 %v9570
        %10912 = vmatpush.bf16.msra.mxu0 %v9562
        %10913 = vmatpush.bf16.msra.mxu0 %v9554
        %10914 = vmatpush.bf16.msra.mxu0 %v9546
        %10915 = vmatpush.bf16.msra.mxu0 %v9538
        %10916 = vmatpush.bf16.msra.mxu0 %v9530
        %10917 = vmatpush.bf16.msra.mxu0 %v9522
        %10918 = vmatmul.bf16.gmra.mxu0 %v6997
        %v10919 = vpop.f32.mrf.mxu0
        %v10920 = vadd.f32 %v10907, %v10919
        %v10921 = vpop.f32.mrf.mxu0
        %10922 = vdwg.mxu0
        %s10923 = scalar_lea.vmem [#allocation20], 66
        %v10924 = vld [vmem:[%s10923] ss:$8 sm:$0xf]
        %v10925 = vld [vmem:[%s10923] ss:$8 sm:$0xf0]
        %v10926 = vor.u32 %v10924, %v10925
        %s10927 = scalar_lea.vmem [#allocation20], 67
        %v10928 = vld [vmem:[%s10927] ss:$8 sm:$0xf]
        %v10929 = vld [vmem:[%s10927] ss:$8 sm:$0xf0]
        %v10930 = vor.u32 %v10928, %v10929
        %v10931 = vadd.f32 %v10192, %v10296
        %v10932 = vadd.f32 %v10931, %v10400
        %v10933 = vadd.f32 %v10932, %v10504
        %v10934 = vadd.f32 %v10933, %v10608
        %v10935 = vadd.f32 %v10934, %v10712
        %v10936 = vadd.f32 %v10935, %v10816
        %v10937 = vadd.f32 %v10936, %v10920
        %10938 = vadd.xlane.f32.xlu0 %v10937
        %v10939 = vpop.xlane.xlu0 %10938
        %v10940 = vmul.f32 %v10939, %v6731
        %v10941 = vmul.f32 %v10192, %v10192
        %v10942 = vmul.f32 %v10296, %v10296
        %v10943 = vmul.f32 %v10400, %v10400
        %v10944 = vmul.f32 %v10504, %v10504
        %v10945 = vmul.f32 %v10608, %v10608
        %v10946 = vmul.f32 %v10712, %v10712
        %v10947 = vmul.f32 %v10816, %v10816
        %v10948 = vmul.f32 %v10920, %v10920
        %v10949 = vadd.f32 %v10941, %v10942
        %v10950 = vadd.f32 %v10949, %v10943
        %v10951 = vadd.f32 %v10950, %v10944
        %v10952 = vadd.f32 %v10951, %v10945
        %v10953 = vadd.f32 %v10952, %v10946
        %v10954 = vadd.f32 %v10953, %v10947
        %v10955 = vadd.f32 %v10954, %v10948
        %10956 = vadd.xlane.f32.xlu0 %v10955
        %v10957 = vpop.xlane.xlu0 %10956
        %v10958 = vmul.f32 %v10957, %v6731
        %v10959 = vmul.f32 %v10940, %v10940
        %v10960 = vsub.f32 %v10958, %v10959
        %v10961 = vsub.f32 %v10192, %v10940
        %v10962 = vsub.f32 %v10296, %v10940
        %v10963 = vsub.f32 %v10400, %v10940
        %v10964 = vsub.f32 %v10504, %v10940
        %v10965 = vsub.f32 %v10608, %v10940
        %v10966 = vsub.f32 %v10712, %v10940
        %v10967 = vsub.f32 %v10816, %v10940
        %v10968 = vsub.f32 %v10920, %v10940
        %v10969 = vadd.f32 %v10960, 1e-05
        %v10970 = vrsqrt.pop %v10969
        %v10971 = vmul.f32 %v10970, %v10969
        %v10972 = vmul.f32 %v10971, %v10970
        %v10973 = vmul.f32 0.5, %v10972
        %v10974 = vsub.f32 1.5, %v10973
        %v10975 = vmul.f32 %v10970, %v10974
        %vm10976 = vweird.f32 %v10969
        %vm10977 = vweird.f32 %v10970
        %vm10978 = vmor %vm10976, %vm10977
        %v10979 = vsel %vm10978, %v10970, %v10975
        %v10980 = vmul.f32 %v10961, %v10979
        %v10981 = vmul.f32 %v10962, %v10979
        %v10982 = vmul.f32 %v10963, %v10979
        %v10983 = vmul.f32 %v10964, %v10979
        %v10984 = vmul.f32 %v10965, %v10979
        %v10985 = vmul.f32 %v10966, %v10979
        %v10986 = vmul.f32 %v10967, %v10979
        %v10987 = vmul.f32 %v10968, %v10979
        %v10989 = vperm.slane %v10926, 0
        %v10990 = vperm.slane %v10926, 1
        %v10991 = vperm.slane %v10926, 2
        %v10992 = vperm.slane %v10926, 3
        %v10993 = vperm.slane %v10926, 4
        %v10994 = vperm.slane %v10926, 5
        %v10995 = vperm.slane %v10926, 6
        %v10996 = vperm.slane %v10926, 7
        %v11005 = vmul.f32 %v10980, %v10989
        %v11006 = vmul.f32 %v10981, %v10990
        %v11007 = vmul.f32 %v10982, %v10991
        %v11008 = vmul.f32 %v10983, %v10992
        %v11009 = vmul.f32 %v10984, %v10993
        %v11010 = vmul.f32 %v10985, %v10994
        %v11011 = vmul.f32 %v10986, %v10995
        %v11012 = vmul.f32 %v10987, %v10996
        %v11014 = vperm.slane %v10930, 0
        %v11015 = vperm.slane %v10930, 1
        %v11016 = vperm.slane %v10930, 2
        %v11017 = vperm.slane %v10930, 3
        %v11018 = vperm.slane %v10930, 4
        %v11019 = vperm.slane %v10930, 5
        %v11020 = vperm.slane %v10930, 6
        %v11021 = vperm.slane %v10930, 7
        %v11030 = vadd.f32 %v11005, %v11014
        %v11031 = vadd.f32 %v11006, %v11015
        %v11032 = vadd.f32 %v11007, %v11016
        %v11033 = vadd.f32 %v11008, %v11017
        %v11034 = vadd.f32 %v11009, %v11018
        %v11035 = vadd.f32 %v11010, %v11019
        %v11036 = vadd.f32 %v11011, %v11020
        %v11037 = vadd.f32 %v11012, %v11021
        %v11038 = vxor.u32 %v11030, 2147483648
        %v11039 = vxor.u32 %v11031, 2147483648
        %v11040 = vxor.u32 %v11032, 2147483648
        %v11041 = vxor.u32 %v11033, 2147483648
        %v11042 = vxor.u32 %v11034, 2147483648
        %v11043 = vxor.u32 %v11035, 2147483648
        %v11044 = vxor.u32 %v11036, 2147483648
        %v11045 = vxor.u32 %v11037, 2147483648
        %v11046 = vmul.f32 %v11038, 1.442695
        %v11047 = vpow.pop %v11046
        %v11048 = vmul.f32 %v11039, 1.442695
        %v11049 = vpow.pop %v11048
        %v11050 = vmul.f32 %v11040, 1.442695
        %v11051 = vpow.pop %v11050
        %v11052 = vmul.f32 %v11041, 1.442695
        %v11053 = vpow.pop %v11052
        %v11054 = vmul.f32 %v11042, 1.442695
        %v11055 = vpow.pop %v11054
        %v11056 = vmul.f32 %v11043, 1.442695
        %v11057 = vpow.pop %v11056
        %v11058 = vmul.f32 %v11044, 1.442695
        %v11059 = vpow.pop %v11058
        %v11060 = vmul.f32 %v11045, 1.442695
        %v11061 = vpow.pop %v11060
        %v11062 = vadd.f32 %v11047, 1.0
        %v11063 = vadd.f32 %v11049, 1.0
        %v11064 = vadd.f32 %v11051, 1.0
        %v11065 = vadd.f32 %v11053, 1.0
        %v11066 = vadd.f32 %v11055, 1.0
        %v11067 = vadd.f32 %v11057, 1.0
        %v11068 = vadd.f32 %v11059, 1.0
        %v11069 = vadd.f32 %v11061, 1.0
        %v11070 = vrcp.pop %v11062
        %v11071 = vmul.f32 %v11062, %v11070
        %v11072 = vsub.f32 1.0, %v11071
        %v11073 = vmul.f32 %v11070, %v11072
        %v11074 = vadd.f32 %v11070, %v11073
        %vm11075 = vweird.f32 %v11062
        %vm11076 = vweird.f32 %v11070
        %vm11077 = vmor %vm11075, %vm11076
        %v11078 = vsel %vm11077, %v11070, %v11074
        %v11079 = vand.u32 2147483647, %v11062
        %vm11080 = vcmp.eq.f32.partialorder %v11079, 8.507059e+37
        %v11081 = vand.u32 %v11062, 2147483648
        %v11082 = vor.u32 1.1754944e-38, %v11081
        %v11083 = vsel %vm11080, %v11082, %v11078
        %v11084 = vmul.f32 1.0, %v11083
        %v11085 = vrcp.pop %v11063
        %v11086 = vmul.f32 %v11063, %v11085
        %v11087 = vsub.f32 1.0, %v11086
        %v11088 = vmul.f32 %v11085, %v11087
        %v11089 = vadd.f32 %v11085, %v11088
        %vm11090 = vweird.f32 %v11063
        %vm11091 = vweird.f32 %v11085
        %vm11092 = vmor %vm11090, %vm11091
        %v11093 = vsel %vm11092, %v11085, %v11089
        %v11094 = vand.u32 2147483647, %v11063
        %vm11095 = vcmp.eq.f32.partialorder %v11094, 8.507059e+37
        %v11096 = vand.u32 %v11063, 2147483648
        %v11097 = vor.u32 1.1754944e-38, %v11096
        %v11098 = vsel %vm11095, %v11097, %v11093
        %v11099 = vmul.f32 1.0, %v11098
        %v11100 = vrcp.pop %v11064
        %v11101 = vmul.f32 %v11064, %v11100
        %v11102 = vsub.f32 1.0, %v11101
        %v11103 = vmul.f32 %v11100, %v11102
        %v11104 = vadd.f32 %v11100, %v11103
        %vm11105 = vweird.f32 %v11064
        %vm11106 = vweird.f32 %v11100
        %vm11107 = vmor %vm11105, %vm11106
        %v11108 = vsel %vm11107, %v11100, %v11104
        %v11109 = vand.u32 2147483647, %v11064
        %vm11110 = vcmp.eq.f32.partialorder %v11109, 8.507059e+37
        %v11111 = vand.u32 %v11064, 2147483648
        %v11112 = vor.u32 1.1754944e-38, %v11111
        %v11113 = vsel %vm11110, %v11112, %v11108
        %v11114 = vmul.f32 1.0, %v11113
        %v11115 = vrcp.pop %v11065
        %v11116 = vmul.f32 %v11065, %v11115
        %v11117 = vsub.f32 1.0, %v11116
        %v11118 = vmul.f32 %v11115, %v11117
        %v11119 = vadd.f32 %v11115, %v11118
        %vm11120 = vweird.f32 %v11065
        %vm11121 = vweird.f32 %v11115
        %vm11122 = vmor %vm11120, %vm11121
        %v11123 = vsel %vm11122, %v11115, %v11119
        %v11124 = vand.u32 2147483647, %v11065
        %vm11125 = vcmp.eq.f32.partialorder %v11124, 8.507059e+37
        %v11126 = vand.u32 %v11065, 2147483648
        %v11127 = vor.u32 1.1754944e-38, %v11126
        %v11128 = vsel %vm11125, %v11127, %v11123
        %v11129 = vmul.f32 1.0, %v11128
        %v11130 = vrcp.pop %v11066
        %v11131 = vmul.f32 %v11066, %v11130
        %v11132 = vsub.f32 1.0, %v11131
        %v11133 = vmul.f32 %v11130, %v11132
        %v11134 = vadd.f32 %v11130, %v11133
        %vm11135 = vweird.f32 %v11066
        %vm11136 = vweird.f32 %v11130
        %vm11137 = vmor %vm11135, %vm11136
        %v11138 = vsel %vm11137, %v11130, %v11134
        %v11139 = vand.u32 2147483647, %v11066
        %vm11140 = vcmp.eq.f32.partialorder %v11139, 8.507059e+37
        %v11141 = vand.u32 %v11066, 2147483648
        %v11142 = vor.u32 1.1754944e-38, %v11141
        %v11143 = vsel %vm11140, %v11142, %v11138
        %v11144 = vmul.f32 1.0, %v11143
        %v11145 = vrcp.pop %v11067
        %v11146 = vmul.f32 %v11067, %v11145
        %v11147 = vsub.f32 1.0, %v11146
        %v11148 = vmul.f32 %v11145, %v11147
        %v11149 = vadd.f32 %v11145, %v11148
        %vm11150 = vweird.f32 %v11067
        %vm11151 = vweird.f32 %v11145
        %vm11152 = vmor %vm11150, %vm11151
        %v11153 = vsel %vm11152, %v11145, %v11149
        %v11154 = vand.u32 2147483647, %v11067
        %vm11155 = vcmp.eq.f32.partialorder %v11154, 8.507059e+37
        %v11156 = vand.u32 %v11067, 2147483648
        %v11157 = vor.u32 1.1754944e-38, %v11156
        %v11158 = vsel %vm11155, %v11157, %v11153
        %v11159 = vmul.f32 1.0, %v11158
        %v11160 = vrcp.pop %v11068
        %v11161 = vmul.f32 %v11068, %v11160
        %v11162 = vsub.f32 1.0, %v11161
        %v11163 = vmul.f32 %v11160, %v11162
        %v11164 = vadd.f32 %v11160, %v11163
        %vm11165 = vweird.f32 %v11068
        %vm11166 = vweird.f32 %v11160
        %vm11167 = vmor %vm11165, %vm11166
        %v11168 = vsel %vm11167, %v11160, %v11164
        %v11169 = vand.u32 2147483647, %v11068
        %vm11170 = vcmp.eq.f32.partialorder %v11169, 8.507059e+37
        %v11171 = vand.u32 %v11068, 2147483648
        %v11172 = vor.u32 1.1754944e-38, %v11171
        %v11173 = vsel %vm11170, %v11172, %v11168
        %v11174 = vmul.f32 1.0, %v11173
        %v11175 = vrcp.pop %v11069
        %v11176 = vmul.f32 %v11069, %v11175
        %v11177 = vsub.f32 1.0, %v11176
        %v11178 = vmul.f32 %v11175, %v11177
        %v11179 = vadd.f32 %v11175, %v11178
        %vm11180 = vweird.f32 %v11069
        %vm11181 = vweird.f32 %v11175
        %vm11182 = vmor %vm11180, %vm11181
        %v11183 = vsel %vm11182, %v11175, %v11179
        %v11184 = vand.u32 2147483647, %v11069
        %vm11185 = vcmp.eq.f32.partialorder %v11184, 8.507059e+37
        %v11186 = vand.u32 %v11069, 2147483648
        %v11187 = vor.u32 1.1754944e-38, %v11186
        %v11188 = vsel %vm11185, %v11187, %v11183
        %v11189 = vmul.f32 1.0, %v11188
        %v11190 = vmul.f32 %v11030, %v11084
        %v11191 = vmul.f32 %v11031, %v11099
        %v11192 = vmul.f32 %v11032, %v11114
        %v11193 = vmul.f32 %v11033, %v11129
        %v11194 = vmul.f32 %v11034, %v11144
        %v11195 = vmul.f32 %v11035, %v11159
        %v11196 = vmul.f32 %v11036, %v11174
        %v11197 = vmul.f32 %v11037, %v11189
        %v11198 = vpack.c.bf16 %v11190, %v11190
        %v11199 = vpack.c.bf16 %v11191, %v11191
        %v11200 = vpack.c.bf16 %v11192, %v11192
        %v11201 = vpack.c.bf16 %v11193, %v11193
        %v11202 = vpack.c.bf16 %v11194, %v11194
        %v11203 = vpack.c.bf16 %v11195, %v11195
        %v11204 = vpack.c.bf16 %v11196, %v11196
        %v11205 = vpack.c.bf16 %v11197, %v11197
        %v11206 = vld [vmem:[%s12] sm:$0xf]
        %v11207 = vld [vmem:[%s12 + $0x4] sm:$0xf]
        %v11208 = vld [vmem:[%s12 + $0x8] sm:$0xf]
        %v11209 = vld [vmem:[%s12 + $0xc] sm:$0xf]
        %v11210 = vld [vmem:[%s12 + $0x10] sm:$0xf]
        %v11211 = vld [vmem:[%s12 + $0x14] sm:$0xf]
        %v11212 = vld [vmem:[%s12 + $0x18] sm:$0xf]
        %v11213 = vld [vmem:[%s12 + $0x1c] sm:$0xf]
        %v11214 = vld [vmem:[%s12 + $0x20] sm:$0xf]
        %v11215 = vld [vmem:[%s12 + $0x24] sm:$0xf]
        %v11216 = vld [vmem:[%s12 + $0x28] sm:$0xf]
        %v11217 = vld [vmem:[%s12 + $0x2c] sm:$0xf]
        %v11218 = vld [vmem:[%s12 + $0x30] sm:$0xf]
        %v11219 = vld [vmem:[%s12 + $0x34] sm:$0xf]
        %v11220 = vld [vmem:[%s12 + $0x38] sm:$0xf]
        %v11221 = vld [vmem:[%s12 + $0x3c] sm:$0xf]
        %v11222 = vld [vmem:[%s12 + $0x40] sm:$0xf]
        %v11223 = vld [vmem:[%s12 + $0x44] sm:$0xf]
        %v11224 = vld [vmem:[%s12 + $0x48] sm:$0xf]
        %v11225 = vld [vmem:[%s12 + $0x4c] sm:$0xf]
        %v11226 = vld [vmem:[%s12 + $0x50] sm:$0xf]
        %v11227 = vld [vmem:[%s12 + $0x54] sm:$0xf]
        %v11228 = vld [vmem:[%s12 + $0x58] sm:$0xf]
        %v11229 = vld [vmem:[%s12 + $0x5c] sm:$0xf]
        %v11230 = vld [vmem:[%s12 + $0x60] sm:$0xf]
        %v11231 = vld [vmem:[%s12 + $0x64] sm:$0xf]
        %v11232 = vld [vmem:[%s12 + $0x68] sm:$0xf]
        %v11233 = vld [vmem:[%s12 + $0x6c] sm:$0xf]
        %v11234 = vld [vmem:[%s12 + $0x70] sm:$0xf]
        %v11235 = vld [vmem:[%s12 + $0x74] sm:$0xf]
        %v11236 = vld [vmem:[%s12 + $0x78] sm:$0xf]
        %v11237 = vld [vmem:[%s12 + $0x7c] sm:$0xf]
        %v11238 = vld [vmem:[%s12 + $0x80] sm:$0xf]
        %v11239 = vld [vmem:[%s12 + $0x84] sm:$0xf]
        %v11240 = vld [vmem:[%s12 + $0x88] sm:$0xf]
        %v11241 = vld [vmem:[%s12 + $0x8c] sm:$0xf]
        %v11242 = vld [vmem:[%s12 + $0x90] sm:$0xf]
        %v11243 = vld [vmem:[%s12 + $0x94] sm:$0xf]
        %v11244 = vld [vmem:[%s12 + $0x98] sm:$0xf]
        %v11245 = vld [vmem:[%s12 + $0x9c] sm:$0xf]
        %v11246 = vld [vmem:[%s12 + $0xa0] sm:$0xf]
        %v11247 = vld [vmem:[%s12 + $0xa4] sm:$0xf]
        %v11248 = vld [vmem:[%s12 + $0xa8] sm:$0xf]
        %v11249 = vld [vmem:[%s12 + $0xac] sm:$0xf]
        %v11250 = vld [vmem:[%s12 + $0xb0] sm:$0xf]
        %v11251 = vld [vmem:[%s12 + $0xb4] sm:$0xf]
        %v11252 = vld [vmem:[%s12 + $0xb8] sm:$0xf]
        %v11253 = vld [vmem:[%s12 + $0xbc] sm:$0xf]
        %v11254 = vld [vmem:[%s12 + $0xc0] sm:$0xf]
        %v11255 = vld [vmem:[%s12 + $0xc4] sm:$0xf]
        %v11256 = vld [vmem:[%s12 + $0xc8] sm:$0xf]
        %v11257 = vld [vmem:[%s12 + $0xcc] sm:$0xf]
        %v11258 = vld [vmem:[%s12 + $0xd0] sm:$0xf]
        %v11259 = vld [vmem:[%s12 + $0xd4] sm:$0xf]
        %v11260 = vld [vmem:[%s12 + $0xd8] sm:$0xf]
        %v11261 = vld [vmem:[%s12 + $0xdc] sm:$0xf]
        %v11262 = vld [vmem:[%s12 + $0xe0] sm:$0xf]
        %v11263 = vld [vmem:[%s12 + $0xe4] sm:$0xf]
        %v11264 = vld [vmem:[%s12 + $0xe8] sm:$0xf]
        %v11265 = vld [vmem:[%s12 + $0xec] sm:$0xf]
        %v11266 = vld [vmem:[%s12 + $0xf0] sm:$0xf]
        %v11267 = vld [vmem:[%s12 + $0xf4] sm:$0xf]
        %v11268 = vld [vmem:[%s12 + $0xf8] sm:$0xf]
        %v11269 = vld [vmem:[%s12 + $0xfc] sm:$0xf]
        %v11270 = vld [vmem:[%s12 + $0x100] sm:$0xf]
        %v11271 = vld [vmem:[%s12 + $0x104] sm:$0xf]
        %v11272 = vld [vmem:[%s12 + $0x108] sm:$0xf]
        %v11273 = vld [vmem:[%s12 + $0x10c] sm:$0xf]
        %v11274 = vld [vmem:[%s12 + $0x110] sm:$0xf]
        %v11275 = vld [vmem:[%s12 + $0x114] sm:$0xf]
        %v11276 = vld [vmem:[%s12 + $0x118] sm:$0xf]
        %v11277 = vld [vmem:[%s12 + $0x11c] sm:$0xf]
        %v11278 = vld [vmem:[%s12 + $0x120] sm:$0xf]
        %v11279 = vld [vmem:[%s12 + $0x124] sm:$0xf]
        %v11280 = vld [vmem:[%s12 + $0x128] sm:$0xf]
        %v11281 = vld [vmem:[%s12 + $0x12c] sm:$0xf]
        %v11282 = vld [vmem:[%s12 + $0x130] sm:$0xf]
        %v11283 = vld [vmem:[%s12 + $0x134] sm:$0xf]
        %v11284 = vld [vmem:[%s12 + $0x138] sm:$0xf]
        %v11285 = vld [vmem:[%s12 + $0x13c] sm:$0xf]
        %v11286 = vld [vmem:[%s12 + $0x140] sm:$0xf]
        %v11287 = vld [vmem:[%s12 + $0x144] sm:$0xf]
        %v11288 = vld [vmem:[%s12 + $0x148] sm:$0xf]
        %v11289 = vld [vmem:[%s12 + $0x14c] sm:$0xf]
        %v11290 = vld [vmem:[%s12 + $0x150] sm:$0xf]
        %v11291 = vld [vmem:[%s12 + $0x154] sm:$0xf]
        %v11292 = vld [vmem:[%s12 + $0x158] sm:$0xf]
        %v11293 = vld [vmem:[%s12 + $0x15c] sm:$0xf]
        %v11294 = vld [vmem:[%s12 + $0x160] sm:$0xf]
        %v11295 = vld [vmem:[%s12 + $0x164] sm:$0xf]
        %v11296 = vld [vmem:[%s12 + $0x168] sm:$0xf]
        %v11297 = vld [vmem:[%s12 + $0x16c] sm:$0xf]
        %v11298 = vld [vmem:[%s12 + $0x170] sm:$0xf]
        %v11299 = vld [vmem:[%s12 + $0x174] sm:$0xf]
        %v11300 = vld [vmem:[%s12 + $0x178] sm:$0xf]
        %v11301 = vld [vmem:[%s12 + $0x17c] sm:$0xf]
        %v11302 = vld [vmem:[%s12 + $0x180] sm:$0xf]
        %v11303 = vld [vmem:[%s12 + $0x184] sm:$0xf]
        %v11304 = vld [vmem:[%s12 + $0x188] sm:$0xf]
        %v11305 = vld [vmem:[%s12 + $0x18c] sm:$0xf]
        %v11306 = vld [vmem:[%s12 + $0x190] sm:$0xf]
        %v11307 = vld [vmem:[%s12 + $0x194] sm:$0xf]
        %v11308 = vld [vmem:[%s12 + $0x198] sm:$0xf]
        %v11309 = vld [vmem:[%s12 + $0x19c] sm:$0xf]
        %v11310 = vld [vmem:[%s12 + $0x1a0] sm:$0xf]
        %v11311 = vld [vmem:[%s12 + $0x1a4] sm:$0xf]
        %v11312 = vld [vmem:[%s12 + $0x1a8] sm:$0xf]
        %v11313 = vld [vmem:[%s12 + $0x1ac] sm:$0xf]
        %v11314 = vld [vmem:[%s12 + $0x1b0] sm:$0xf]
        %v11315 = vld [vmem:[%s12 + $0x1b4] sm:$0xf]
        %v11316 = vld [vmem:[%s12 + $0x1b8] sm:$0xf]
        %v11317 = vld [vmem:[%s12 + $0x1bc] sm:$0xf]
        %v11318 = vld [vmem:[%s12 + $0x1c0] sm:$0xf]
        %v11319 = vld [vmem:[%s12 + $0x1c4] sm:$0xf]
        %v11320 = vld [vmem:[%s12 + $0x1c8] sm:$0xf]
        %v11321 = vld [vmem:[%s12 + $0x1cc] sm:$0xf]
        %v11322 = vld [vmem:[%s12 + $0x1d0] sm:$0xf]
        %v11323 = vld [vmem:[%s12 + $0x1d4] sm:$0xf]
        %v11324 = vld [vmem:[%s12 + $0x1d8] sm:$0xf]
        %v11325 = vld [vmem:[%s12 + $0x1dc] sm:$0xf]
        %v11326 = vld [vmem:[%s12 + $0x1e0] sm:$0xf]
        %v11327 = vld [vmem:[%s12 + $0x1e4] sm:$0xf]
        %v11328 = vld [vmem:[%s12 + $0x1e8] sm:$0xf]
        %v11329 = vld [vmem:[%s12 + $0x1ec] sm:$0xf]
        %v11330 = vld [vmem:[%s12 + $0x1f0] sm:$0xf]
        %v11331 = vld [vmem:[%s12 + $0x1f4] sm:$0xf]
        %v11332 = vld [vmem:[%s12 + $0x1f8] sm:$0xf]
        %v11333 = vld [vmem:[%s12 + $0x1fc] sm:$0xf]
        %v11334 = vld [vmem:[#allocation20 + $0x44] ss:$0 sm:$0xff]
        %v11463 = vunpack.c.l.b16 %v11206
        %v11464 = vunpack.c.l.b16 %v11207
        %v11465 = vunpack.c.l.b16 %v11208
        %v11466 = vunpack.c.l.b16 %v11209
        %v11467 = vunpack.c.l.b16 %v11210
        %v11468 = vunpack.c.l.b16 %v11211
        %v11469 = vunpack.c.l.b16 %v11212
        %v11470 = vunpack.c.l.b16 %v11213
        %v11471 = vunpack.c.l.b16 %v11214
        %v11472 = vunpack.c.l.b16 %v11215
        %v11473 = vunpack.c.l.b16 %v11216
        %v11474 = vunpack.c.l.b16 %v11217
        %v11475 = vunpack.c.l.b16 %v11218
        %v11476 = vunpack.c.l.b16 %v11219
        %v11477 = vunpack.c.l.b16 %v11220
        %v11478 = vunpack.c.l.b16 %v11221
        %v11479 = vunpack.c.l.b16 %v11222
        %v11480 = vunpack.c.l.b16 %v11223
        %v11481 = vunpack.c.l.b16 %v11224
        %v11482 = vunpack.c.l.b16 %v11225
        %v11483 = vunpack.c.l.b16 %v11226
        %v11484 = vunpack.c.l.b16 %v11227
        %v11485 = vunpack.c.l.b16 %v11228
        %v11486 = vunpack.c.l.b16 %v11229
        %v11487 = vunpack.c.l.b16 %v11230
        %v11488 = vunpack.c.l.b16 %v11231
        %v11489 = vunpack.c.l.b16 %v11232
        %v11490 = vunpack.c.l.b16 %v11233
        %v11491 = vunpack.c.l.b16 %v11234
        %v11492 = vunpack.c.l.b16 %v11235
        %v11493 = vunpack.c.l.b16 %v11236
        %v11494 = vunpack.c.l.b16 %v11237
        %v11495 = vunpack.c.l.b16 %v11238
        %v11496 = vunpack.c.l.b16 %v11239
        %v11497 = vunpack.c.l.b16 %v11240
        %v11498 = vunpack.c.l.b16 %v11241
        %v11499 = vunpack.c.l.b16 %v11242
        %v11500 = vunpack.c.l.b16 %v11243
        %v11501 = vunpack.c.l.b16 %v11244
        %v11502 = vunpack.c.l.b16 %v11245
        %v11503 = vunpack.c.l.b16 %v11246
        %v11504 = vunpack.c.l.b16 %v11247
        %v11505 = vunpack.c.l.b16 %v11248
        %v11506 = vunpack.c.l.b16 %v11249
        %v11507 = vunpack.c.l.b16 %v11250
        %v11508 = vunpack.c.l.b16 %v11251
        %v11509 = vunpack.c.l.b16 %v11252
        %v11510 = vunpack.c.l.b16 %v11253
        %v11511 = vunpack.c.l.b16 %v11254
        %v11512 = vunpack.c.l.b16 %v11255
        %v11513 = vunpack.c.l.b16 %v11256
        %v11514 = vunpack.c.l.b16 %v11257
        %v11515 = vunpack.c.l.b16 %v11258
        %v11516 = vunpack.c.l.b16 %v11259
        %v11517 = vunpack.c.l.b16 %v11260
        %v11518 = vunpack.c.l.b16 %v11261
        %v11519 = vunpack.c.l.b16 %v11262
        %v11520 = vunpack.c.l.b16 %v11263
        %v11521 = vunpack.c.l.b16 %v11264
        %v11522 = vunpack.c.l.b16 %v11265
        %v11523 = vunpack.c.l.b16 %v11266
        %v11524 = vunpack.c.l.b16 %v11267
        %v11525 = vunpack.c.l.b16 %v11268
        %v11526 = vunpack.c.l.b16 %v11269
        %v11527 = vunpack.c.l.b16 %v11270
        %v11528 = vunpack.c.l.b16 %v11271
        %v11529 = vunpack.c.l.b16 %v11272
        %v11530 = vunpack.c.l.b16 %v11273
        %v11531 = vunpack.c.l.b16 %v11274
        %v11532 = vunpack.c.l.b16 %v11275
        %v11533 = vunpack.c.l.b16 %v11276
        %v11534 = vunpack.c.l.b16 %v11277
        %v11535 = vunpack.c.l.b16 %v11278
        %v11536 = vunpack.c.l.b16 %v11279
        %v11537 = vunpack.c.l.b16 %v11280
        %v11538 = vunpack.c.l.b16 %v11281
        %v11539 = vunpack.c.l.b16 %v11282
        %v11540 = vunpack.c.l.b16 %v11283
        %v11541 = vunpack.c.l.b16 %v11284
        %v11542 = vunpack.c.l.b16 %v11285
        %v11543 = vunpack.c.l.b16 %v11286
        %v11544 = vunpack.c.l.b16 %v11287
        %v11545 = vunpack.c.l.b16 %v11288
        %v11546 = vunpack.c.l.b16 %v11289
        %v11547 = vunpack.c.l.b16 %v11290
        %v11548 = vunpack.c.l.b16 %v11291
        %v11549 = vunpack.c.l.b16 %v11292
        %v11550 = vunpack.c.l.b16 %v11293
        %v11551 = vunpack.c.l.b16 %v11294
        %v11552 = vunpack.c.l.b16 %v11295
        %v11553 = vunpack.c.l.b16 %v11296
        %v11554 = vunpack.c.l.b16 %v11297
        %v11555 = vunpack.c.l.b16 %v11298
        %v11556 = vunpack.c.l.b16 %v11299
        %v11557 = vunpack.c.l.b16 %v11300
        %v11558 = vunpack.c.l.b16 %v11301
        %v11559 = vunpack.c.l.b16 %v11302
        %v11560 = vunpack.c.l.b16 %v11303
        %v11561 = vunpack.c.l.b16 %v11304
        %v11562 = vunpack.c.l.b16 %v11305
        %v11563 = vunpack.c.l.b16 %v11306
        %v11564 = vunpack.c.l.b16 %v11307
        %v11565 = vunpack.c.l.b16 %v11308
        %v11566 = vunpack.c.l.b16 %v11309
        %v11567 = vunpack.c.l.b16 %v11310
        %v11568 = vunpack.c.l.b16 %v11311
        %v11569 = vunpack.c.l.b16 %v11312
        %v11570 = vunpack.c.l.b16 %v11313
        %v11571 = vunpack.c.l.b16 %v11314
        %v11572 = vunpack.c.l.b16 %v11315
        %v11573 = vunpack.c.l.b16 %v11316
        %v11574 = vunpack.c.l.b16 %v11317
        %v11575 = vunpack.c.l.b16 %v11318
        %v11576 = vunpack.c.l.b16 %v11319
        %v11577 = vunpack.c.l.b16 %v11320
        %v11578 = vunpack.c.l.b16 %v11321
        %v11579 = vunpack.c.l.b16 %v11322
        %v11580 = vunpack.c.l.b16 %v11323
        %v11581 = vunpack.c.l.b16 %v11324
        %v11582 = vunpack.c.l.b16 %v11325
        %v11583 = vunpack.c.l.b16 %v11326
        %v11584 = vunpack.c.l.b16 %v11327
        %v11585 = vunpack.c.l.b16 %v11328
        %v11586 = vunpack.c.l.b16 %v11329
        %v11587 = vunpack.c.l.b16 %v11330
        %v11588 = vunpack.c.l.b16 %v11331
        %v11589 = vunpack.c.l.b16 %v11332
        %v11590 = vunpack.c.l.b16 %v11333
        %v11591 = vpack.c.b16 %v11464, %v11463
        %v11592 = vpack.c.b16 %v11466, %v11465
        %v11593 = vpack.c.b16 %v11468, %v11467
        %v11594 = vpack.c.b16 %v11470, %v11469
        %v11595 = vpack.c.b16 %v11472, %v11471
        %v11596 = vpack.c.b16 %v11474, %v11473
        %v11597 = vpack.c.b16 %v11476, %v11475
        %v11598 = vpack.c.b16 %v11478, %v11477
        %v11599 = vpack.c.b16 %v11480, %v11479
        %v11600 = vpack.c.b16 %v11482, %v11481
        %v11601 = vpack.c.b16 %v11484, %v11483
        %v11602 = vpack.c.b16 %v11486, %v11485
        %v11603 = vpack.c.b16 %v11488, %v11487
        %v11604 = vpack.c.b16 %v11490, %v11489
        %v11605 = vpack.c.b16 %v11492, %v11491
        %v11606 = vpack.c.b16 %v11494, %v11493
        %v11607 = vpack.c.b16 %v11496, %v11495
        %v11608 = vpack.c.b16 %v11498, %v11497
        %v11609 = vpack.c.b16 %v11500, %v11499
        %v11610 = vpack.c.b16 %v11502, %v11501
        %v11611 = vpack.c.b16 %v11504, %v11503
        %v11612 = vpack.c.b16 %v11506, %v11505
        %v11613 = vpack.c.b16 %v11508, %v11507
        %v11614 = vpack.c.b16 %v11510, %v11509
        %v11615 = vpack.c.b16 %v11512, %v11511
        %v11616 = vpack.c.b16 %v11514, %v11513
        %v11617 = vpack.c.b16 %v11516, %v11515
        %v11618 = vpack.c.b16 %v11518, %v11517
        %v11619 = vpack.c.b16 %v11520, %v11519
        %v11620 = vpack.c.b16 %v11522, %v11521
        %v11621 = vpack.c.b16 %v11524, %v11523
        %v11622 = vpack.c.b16 %v11526, %v11525
        %v11623 = vpack.c.b16 %v11528, %v11527
        %v11624 = vpack.c.b16 %v11530, %v11529
        %v11625 = vpack.c.b16 %v11532, %v11531
        %v11626 = vpack.c.b16 %v11534, %v11533
        %v11627 = vpack.c.b16 %v11536, %v11535
        %v11628 = vpack.c.b16 %v11538, %v11537
        %v11629 = vpack.c.b16 %v11540, %v11539
        %v11630 = vpack.c.b16 %v11542, %v11541
        %v11631 = vpack.c.b16 %v11544, %v11543
        %v11632 = vpack.c.b16 %v11546, %v11545
        %v11633 = vpack.c.b16 %v11548, %v11547
        %v11634 = vpack.c.b16 %v11550, %v11549
        %v11635 = vpack.c.b16 %v11552, %v11551
        %v11636 = vpack.c.b16 %v11554, %v11553
        %v11637 = vpack.c.b16 %v11556, %v11555
        %v11638 = vpack.c.b16 %v11558, %v11557
        %v11639 = vpack.c.b16 %v11560, %v11559
        %v11640 = vpack.c.b16 %v11562, %v11561
        %v11641 = vpack.c.b16 %v11564, %v11563
        %v11642 = vpack.c.b16 %v11566, %v11565
        %v11643 = vpack.c.b16 %v11568, %v11567
        %v11644 = vpack.c.b16 %v11570, %v11569
        %v11645 = vpack.c.b16 %v11572, %v11571
        %v11646 = vpack.c.b16 %v11574, %v11573
        %v11647 = vpack.c.b16 %v11576, %v11575
        %v11648 = vpack.c.b16 %v11578, %v11577
        %v11649 = vpack.c.b16 %v11580, %v11579
        %v11650 = vpack.c.b16 %v11582, %v11581
        %v11651 = vpack.c.b16 %v11584, %v11583
        %v11652 = vpack.c.b16 %v11586, %v11585
        %v11653 = vpack.c.b16 %v11588, %v11587
        %v11654 = vpack.c.b16 %v11590, %v11589
        %11719 = vmatpush.bf16.msra.mxu0 %v11598
        %11720 = vmatpush.bf16.msra.mxu0 %v11597
        %11721 = vmatpush.bf16.msra.mxu0 %v11596
        %11722 = vmatpush.bf16.msra.mxu0 %v11595
        %11723 = vmatpush.bf16.msra.mxu0 %v11594
        %11724 = vmatpush.bf16.msra.mxu0 %v11593
        %11725 = vmatpush.bf16.msra.mxu0 %v11592
        %11726 = vmatpush.bf16.msra.mxu0 %v11591
        %11727 = vmatmul.bf16.gmra.mxu0 %v11198
        %v11728 = vpop.f32.mrf.mxu0
        %v11729 = vadd.f32 %v11334, %v11728
        %v11730 = vpop.f32.mrf.mxu0
        %11731 = vdwg.mxu0
        %11732 = vmatpush.bf16.msra.mxu0 %v11606
        %11733 = vmatpush.bf16.msra.mxu0 %v11605
        %11734 = vmatpush.bf16.msra.mxu0 %v11604
        %11735 = vmatpush.bf16.msra.mxu0 %v11603
        %11736 = vmatpush.bf16.msra.mxu0 %v11602
        %11737 = vmatpush.bf16.msra.mxu0 %v11601
        %11738 = vmatpush.bf16.msra.mxu0 %v11600
        %11739 = vmatpush.bf16.msra.mxu0 %v11599
        %11740 = vmatmul.bf16.gmra.mxu0 %v11199
        %v11741 = vpop.f32.mrf.mxu0
        %v11742 = vadd.f32 %v11729, %v11741
        %v11743 = vpop.f32.mrf.mxu0
        %11744 = vdwg.mxu0
        %11745 = vmatpush.bf16.msra.mxu0 %v11614
        %11746 = vmatpush.bf16.msra.mxu0 %v11613
        %11747 = vmatpush.bf16.msra.mxu0 %v11612
        %11748 = vmatpush.bf16.msra.mxu0 %v11611
        %11749 = vmatpush.bf16.msra.mxu0 %v11610
        %11750 = vmatpush.bf16.msra.mxu0 %v11609
        %11751 = vmatpush.bf16.msra.mxu0 %v11608
        %11752 = vmatpush.bf16.msra.mxu0 %v11607
        %11753 = vmatmul.bf16.gmra.mxu0 %v11200
        %v11754 = vpop.f32.mrf.mxu0
        %v11755 = vadd.f32 %v11742, %v11754
        %v11756 = vpop.f32.mrf.mxu0
        %11757 = vdwg.mxu0
        %11758 = vmatpush.bf16.msra.mxu0 %v11622
        %11759 = vmatpush.bf16.msra.mxu0 %v11621
        %11760 = vmatpush.bf16.msra.mxu0 %v11620
        %11761 = vmatpush.bf16.msra.mxu0 %v11619
        %11762 = vmatpush.bf16.msra.mxu0 %v11618
        %11763 = vmatpush.bf16.msra.mxu0 %v11617
        %11764 = vmatpush.bf16.msra.mxu0 %v11616
        %11765 = vmatpush.bf16.msra.mxu0 %v11615
        %11766 = vmatmul.bf16.gmra.mxu0 %v11201
        %v11767 = vpop.f32.mrf.mxu0
        %v11768 = vadd.f32 %v11755, %v11767
        %v11769 = vpop.f32.mrf.mxu0
        %11770 = vdwg.mxu0
        %11771 = vmatpush.bf16.msra.mxu0 %v11630
        %11772 = vmatpush.bf16.msra.mxu0 %v11629
        %11773 = vmatpush.bf16.msra.mxu0 %v11628
        %11774 = vmatpush.bf16.msra.mxu0 %v11627
        %11775 = vmatpush.bf16.msra.mxu0 %v11626
        %11776 = vmatpush.bf16.msra.mxu0 %v11625
        %11777 = vmatpush.bf16.msra.mxu0 %v11624
        %11778 = vmatpush.bf16.msra.mxu0 %v11623
        %11779 = vmatmul.bf16.gmra.mxu0 %v11202
        %v11780 = vpop.f32.mrf.mxu0
        %v11781 = vadd.f32 %v11768, %v11780
        %v11782 = vpop.f32.mrf.mxu0
        %11783 = vdwg.mxu0
        %11784 = vmatpush.bf16.msra.mxu0 %v11638
        %11785 = vmatpush.bf16.msra.mxu0 %v11637
        %11786 = vmatpush.bf16.msra.mxu0 %v11636
        %11787 = vmatpush.bf16.msra.mxu0 %v11635
        %11788 = vmatpush.bf16.msra.mxu0 %v11634
        %11789 = vmatpush.bf16.msra.mxu0 %v11633
        %11790 = vmatpush.bf16.msra.mxu0 %v11632
        %11791 = vmatpush.bf16.msra.mxu0 %v11631
        %11792 = vmatmul.bf16.gmra.mxu0 %v11203
        %v11793 = vpop.f32.mrf.mxu0
        %v11794 = vadd.f32 %v11781, %v11793
        %v11795 = vpop.f32.mrf.mxu0
        %11796 = vdwg.mxu0
        %11797 = vmatpush.bf16.msra.mxu0 %v11646
        %11798 = vmatpush.bf16.msra.mxu0 %v11645
        %11799 = vmatpush.bf16.msra.mxu0 %v11644
        %11800 = vmatpush.bf16.msra.mxu0 %v11643
        %11801 = vmatpush.bf16.msra.mxu0 %v11642
        %11802 = vmatpush.bf16.msra.mxu0 %v11641
        %11803 = vmatpush.bf16.msra.mxu0 %v11640
        %11804 = vmatpush.bf16.msra.mxu0 %v11639
        %11805 = vmatmul.bf16.gmra.mxu0 %v11204
        %v11806 = vpop.f32.mrf.mxu0
        %v11807 = vadd.f32 %v11794, %v11806
        %v11808 = vpop.f32.mrf.mxu0
        %11809 = vdwg.mxu0
        %11810 = vmatpush.bf16.msra.mxu0 %v11654
        %11811 = vmatpush.bf16.msra.mxu0 %v11653
        %11812 = vmatpush.bf16.msra.mxu0 %v11652
        %11813 = vmatpush.bf16.msra.mxu0 %v11651
        %11814 = vmatpush.bf16.msra.mxu0 %v11650
        %11815 = vmatpush.bf16.msra.mxu0 %v11649
        %11816 = vmatpush.bf16.msra.mxu0 %v11648
        %11817 = vmatpush.bf16.msra.mxu0 %v11647
        %11818 = vmatmul.bf16.gmra.mxu0 %v11205
        %v11819 = vpop.f32.mrf.mxu0
        %v11820 = vadd.f32 %v11807, %v11819
        %v11821 = vpop.f32.mrf.mxu0
        %11822 = vdwg.mxu0
        %11823 = vst.msk [vmem:[%s702] sm:$0xff] %vm5585, %v11820
        %s11824 = sand.u32 %s356, 1
        %s11825 = scalar_lea.sflag [#allocation4], %s11824
        %s11826 = sand.u32 %s356, 1
        %s11827 = smul.addr %s11826, 8
        %s11828 = scalar_lea.vmem [#allocation22], %s11827
        // Predicated region
        $region125: #{tpu_custom_call.1} parent=75 // pred_check
          %p11829 = pneg %p366
        $region126: #{tpu_custom_call.1} parent=75 // pred_check_branch
          %11831 = sbr.rel (%p11829) target = $region128
        $region127: #{tpu_custom_call.1} parent=75 // pred_region
          %11833 = vsyncadd %s11825, 0
          %s11834 = smul.addr %s39, 8
          %s11835 = scalar_lea.hbm %s14, %s11834
          %s11837 = sshll.u32 %s11828, 4
          %s11838 = int_to_ptr.vmem [resolvable:$true] %s11837
          %s11839 = sshll.u32 %s11835, 4
          %s11840 = int_to_ptr.hbm [resolvable:$true] %s11839
          %11842 = dma.vmem_to_hbm [thread:$0]  %s11838, 128, %s11840, %s11825
        $region128: #{tpu_custom_call.1} parent=75 // pred_fallthru
          _
      $region76: #{tpu_custom_call.1} parent=5 // pred_fallthru
        _
      %p11843 = scmp.le.s32.totalorder 2, %s34
      // Predicated region
      $region129: #{tpu_custom_call.1} parent=5 // pred_check
        %p11844 = pneg %p11843
      $region130: #{tpu_custom_call.1} parent=5 // pred_check_branch
        %11846 = sbr.rel (%p11844) target = $region132
      $region131: #{tpu_custom_call.1} parent=5 // pred_region
        %s11847 = ssub.s32 %s34, 2
        // Predicated region
        $region133: #{tpu_custom_call.1} parent=131 // pred_check
          %p11848 = pneg %p372
        $region134: #{tpu_custom_call.1} parent=131 // pred_check_branch
          %11850 = sbr.rel (%p11848) target = $region136
        $region135: #{tpu_custom_call.1} parent=131 // pred_region
          %s11851 = sand.u32 %s357, 1
          %s11852 = scalar_lea.sflag [#allocation4], %s11851
          %s11853 = sand.u32 %s357, 1
          %s11854 = smul.addr %s11853, 8
          %s11855 = scalar_lea.vmem [#allocation22], %s11854
          %11857 = dma.done %s11852, 128
        $region136: #{tpu_custom_call.1} parent=131 // pred_fallthru
          _
      $region132: #{tpu_custom_call.1} parent=5 // pred_fallthru
        _
    $region6: #{tpu_custom_call.1} parent=1 // loop_footer
      %s38 = sadd.s32 1, %s34
    $region7: #{tpu_custom_call.1} parent=1 // loop_footer_branch
      %33 = sbr.rel target = $region3
    $region8: #{tpu_custom_call.1} parent=1 // loop_exit
      _
    %11858 = vsyncpa [#allocation3], 1
    %s11859 = scalar_lea.sflag [#allocation3], 1
    %11860 = vsyncpa %s11859, 1
    %11861 = vsyncpa [#allocation6], 1
    %s11862 = scalar_lea.sflag [#allocation6], 1
    %11863 = vsyncpa %s11862, 1
    %11864 = vsyncpa [#allocation9], 1
    %11865 = vsyncpa [#allocation12], 1
    %11866 = vsyncpa [#allocation15], 1
    %11867 = vsyncpa [#allocation18], 1
    %11868 = vsyncpa [#allocation21], 1
    %11869 = vsyncpa [#allocation4], 1
    %s11870 = scalar_lea.sflag [#allocation4], 1
    %11871 = vsyncpa %s11870, 1

</llo_original>
